<compile_context>
chip_gen: v7x
topology: tpu7x:2x2x1
jax: 0.10.0
libtpu: 0.0.40
codegen_flags: <defaults>
</compile_context>

<pallas_src>
import math
import numpy as np

import jax
import jax.numpy as jnp
from jax import lax
from jax.experimental import pallas as pl
from jax.experimental.pallas import tpu as pltpu

# ---- model hyper-parameters (small, consistent with the module) ----
FEATURE_SIZE = 16      # "vocab_size" of FeatureTransform (input feature dim)
D_MODEL = 32
N_LAYERS = 2
HEADS = 4
D_FF = 2048            # FeedForward default d_ff
MAX_SEQ_LEN = 80
EPS = 1e-6
MATMUL_DTYPE = jnp.bfloat16   # MXU input dtype; accumulation stays f32


# ---------------------------- fused encoder kernel ----------------------------

def _encoder_kernel(src_ref, pe_ref, mbias_ref,
                    we_ref, be_ref,
                    n1a_ref, n1b_ref, n2a_ref, n2b_ref,
                    wq_ref, bq_ref, wk_ref, bk_ref,
                    wv_ref, bv_ref, wo_ref, bo_ref,
                    w1_ref, c1_ref, w2_ref, c2_ref,
                    nfa_ref, nfb_ref,
                    out_ref, attn_scratch):
    B = mbias_ref.shape[0]
    S = mbias_ref.shape[2]
    D = out_ref.shape[1]
    H = HEADS
    dk = D // H
    n_layers = wq_ref.shape[0]
    inv_sqrt_dk = 1.0 / math.sqrt(dk)

    def lnorm(x, alpha, bias):
        # matches torch: alpha * (x - mean) / (std_unbiased + eps) + bias
        d = x.shape[-1]
        mean = jnp.mean(x, axis=-1, keepdims=True)
        diff = x - mean
        var = jnp.sum(diff * diff, axis=-1, keepdims=True) / (d - 1)
        inv = pl.reciprocal(jnp.sqrt(var) + EPS, approx=True)
        return alpha * diff * inv + bias

    def lin(x, w, b):
        # bf16 MXU inputs, f32 accumulation, f32 bias add
        return jnp.dot(x.astype(w.dtype), w,
                       preferred_element_type=jnp.float32) + b

    # embed (FeatureTransform) with sqrt(d_model) scale pre-folded, + positional enc.
    x = lin(src_ref[...], we_ref[...], be_ref[...]) + pe_ref[...]        # (B*S, D) f32

    for l in range(n_layers):
        # ---- self-attention sublayer ----
        x2 = lnorm(x, n1a_ref[l], n1b_ref[l])
        q = lin(x2, wq_ref[l], bq_ref[l])                                # (B*S, D) f32
        k = lin(x2, wk_ref[l], bk_ref[l])
        v = lin(x2, wv_ref[l], bv_ref[l])

        # per-(batch, head) attention on static VMEM slices (no HBM round trips,
        # no 4-D transposes); results written into the concat scratch in place.
        for b in range(B):
            bias_b = mbias_ref[b]                                        # (1, S) additive
            r0, r1 = b * S, (b + 1) * S
            for h in range(H):
                c0, c1 = h * dk, (h + 1) * dk
                qs = q[r0:r1, c0:c1]                                     # (S, dk)
                ks = k[r0:r1, c0:c1]
                vs = v[r0:r1, c0:c1]
                sc = lax.dot_general(qs, ks, (((1,), (1,)), ((), ())),
                                     preferred_element_type=jnp.float32)
                sc = sc * inv_sqrt_dk + bias_b                           # (S, S)
                sc_max = jnp.max(sc, axis=-1, keepdims=True)
                e = jnp.exp(sc - sc_max)
                p = e * pl.reciprocal(jnp.sum(e, axis=-1, keepdims=True),
                                      approx=True)
                attn_scratch[r0:r1, c0:c1] = jnp.dot(
                    p, vs, preferred_element_type=jnp.float32)

        x = x + lin(attn_scratch[...], wo_ref[l], bo_ref[l])             # residual

        # ---- feed-forward sublayer ----
        x2 = lnorm(x, n2a_ref[l], n2b_ref[l])
        hmid = jnp.maximum(lin(x2, w1_ref[l], c1_ref[l]), 0.0)           # (B*S, D_FF)
        x = x + lin(hmid, w2_ref[l], c2_ref[l])                          # residual

    out_ref[...] = lnorm(x, nfa_ref[...], nfb_ref[...])


# ---------------------------- parameters ----------------------------

def make_pe_buffer(max_seq_len, d_model):
    # exact replication of PositionalEncoder.__init__ formula
    pe = np.zeros((max_seq_len, d_model), dtype=np.float32)
    for pos in range(max_seq_len):
        for i in range(0, d_model, 2):
            pe[pos, i] = math.sin(pos / 10000 ** (2 * i / d_model))
            pe[pos, i + 1] = math.cos(pos / 10000 ** (2 * (i + 1) / d_model))
    return jnp.asarray(pe)[None]        # (1, max_seq_len, d_model)


def init_params(key):
    def lin_init(k, fan_in, fan_out):
        kw, kb = jax.random.split(k)
        w = jax.random.normal(kw, (fan_in, fan_out), jnp.float32) * 0.02
        b = jax.random.normal(kb, (1, fan_out), jnp.float32) * 0.02
        return w, b

    k_embed, k_layers = jax.random.split(key)
    we, be = lin_init(k_embed, FEATURE_SIZE, D_MODEL)
    # fold the PositionalEncoder's sqrt(d_model) scale into the embed linear
    scale = math.sqrt(D_MODEL)
    we = we * scale
    be = be * scale

    stacks = {n: [] for n in ('wq', 'bq', 'wk', 'bk', 'wv', 'bv',
                              'wo', 'bo', 'w1', 'c1', 'w2', 'c2')}
    layer_keys = jax.random.split(k_layers, N_LAYERS)
    for l in range(N_LAYERS):
        lk = jax.random.split(layer_keys[l], 6)
        for (wn, bn), (fi, fo), kk in (
            (('wq', 'bq'), (D_MODEL, D_MODEL), lk[0]),
            (('wk', 'bk'), (D_MODEL, D_MODEL), lk[1]),
            (('wv', 'bv'), (D_MODEL, D_MODEL), lk[2]),
            (('wo', 'bo'), (D_MODEL, D_MODEL), lk[3]),
            (('w1', 'c1'), (D_MODEL, D_FF),    lk[4]),
            (('w2', 'c2'), (D_FF, D_MODEL),    lk[5]),
        ):
            w, b = lin_init(kk, fi, fo)
            stacks[wn].append(w)
            stacks[bn].append(b)

    params = {
        'we': we.astype(MATMUL_DTYPE),
        'be': be,                                                    # (1, D) f32
        'pe': make_pe_buffer(MAX_SEQ_LEN, D_MODEL),                  # (1, L, D) f32
        'n1a': jnp.ones((N_LAYERS, 1, D_MODEL), jnp.float32),
        'n1b': jnp.zeros((N_LAYERS, 1, D_MODEL), jnp.float32),
        'n2a': jnp.ones((N_LAYERS, 1, D_MODEL), jnp.float32),
        'n2b': jnp.zeros((N_LAYERS, 1, D_MODEL), jnp.float32),
        'nfa': jnp.ones((1, D_MODEL), jnp.float32),
        'nfb': jnp.zeros((1, D_MODEL), jnp.float32),
    }
    for n in ('wq', 'wk', 'wv', 'wo', 'w1', 'w2'):
        params[n] = jnp.stack(stacks[n]).astype(MATMUL_DTYPE)        # (N, fi, fo) bf16
    for n in ('bq', 'bk', 'bv', 'bo', 'c1', 'c2'):
        params[n] = jnp.stack(stacks[n])                             # (N, 1, fo) f32
    return params


# ---------------------------- forward pass ----------------------------

def encoder_forward(src, mask, params):
    B, S, F = src.shape
    D = D_MODEL

    src2d = src.reshape(B * S, F)
    # positional encoding slice, tiled per batch (one-time tiny broadcast)
    pe = jnp.broadcast_to(params['pe'][0, :S, :], (B, S, D)).reshape(B * S, D)
    # additive attention-mask bias, built once and reused by every layer in-kernel
    mbias = (1.0 - mask.astype(jnp.float32)) * (-1000000000.0)       # (B, 1, S)

    vmem = pl.BlockSpec(memory_space=pltpu.MemorySpace.VMEM)
    out2d = pl.pallas_call(
        _encoder_kernel,
        out_shape=jax.ShapeDtypeStruct((B * S, D), jnp.float32),
        in_specs=[vmem] * 23,
        out_specs=vmem,
        scratch_shapes=[pltpu.VMEM((B * S, D), jnp.float32)],        # attention concat
    )(src2d, pe, mbias,
      params['we'], params['be'],
      params['n1a'], params['n1b'], params['n2a'], params['n2b'],
      params['wq'], params['bq'], params['wk'], params['bk'],
      params['wv'], params['bv'], params['wo'], params['bo'],
      params['w1'], params['c1'], params['w2'], params['c2'],
      params['nfa'], params['nfb'])

    return out2d.reshape(B, S, D)


encoder_forward = jax.jit(encoder_forward)

# TODO(synk): for large B*S, add a "parallel" token-grid axis (v7x megacore) and
# lane-dense (>=128) output slabs; at B*S=16 the single fused call is already optimal.


# ---------------------------- main ----------------------------

if __name__ == "__main__":
    key = jax.random.PRNGKey(0)
    kp, kx = jax.random.split(key)
    params = init_params(kp)

    B, S = 2, 8
    src = jax.random.normal(kx, (B, S, FEATURE_SIZE), jnp.float32)
    # padding-style mask: (B, 1, S); last position of batch 1 is masked out
    mask = jnp.ones((B, 1, S), jnp.float32).at[1, 0, S - 1].set(0.0)

    out = encoder_forward(src, mask, params)
    out = jax.block_until_ready(out)

    assert out.shape == (B, S, D_MODEL), out.shape
    assert bool(jnp.all(jnp.isfinite(out)))
    print("KERNEL_OK")
</pallas_src>

<mosaic_0001>
module attributes {stable_mosaic.version = 11 : i64} {
  func.func @_encoder_kernel(%arg0: memref<16x16xf32, #tpu.memory_space<vmem>>, %arg1: memref<16x32xf32, #tpu.memory_space<vmem>>, %arg2: memref<2x1x8xf32, #tpu.memory_space<vmem>>, %arg3: memref<16x32xbf16, #tpu.memory_space<vmem>>, %arg4: memref<1x32xf32, #tpu.memory_space<vmem>>, %arg5: memref<2x1x32xf32, #tpu.memory_space<vmem>>, %arg6: memref<2x1x32xf32, #tpu.memory_space<vmem>>, %arg7: memref<2x1x32xf32, #tpu.memory_space<vmem>>, %arg8: memref<2x1x32xf32, #tpu.memory_space<vmem>>, %arg9: memref<2x32x32xbf16, #tpu.memory_space<vmem>>, %arg10: memref<2x1x32xf32, #tpu.memory_space<vmem>>, %arg11: memref<2x32x32xbf16, #tpu.memory_space<vmem>>, %arg12: memref<2x1x32xf32, #tpu.memory_space<vmem>>, %arg13: memref<2x32x32xbf16, #tpu.memory_space<vmem>>, %arg14: memref<2x1x32xf32, #tpu.memory_space<vmem>>, %arg15: memref<2x32x32xbf16, #tpu.memory_space<vmem>>, %arg16: memref<2x1x32xf32, #tpu.memory_space<vmem>>, %arg17: memref<2x32x2048xbf16, #tpu.memory_space<vmem>>, %arg18: memref<2x1x2048xf32, #tpu.memory_space<vmem>>, %arg19: memref<2x2048x32xbf16, #tpu.memory_space<vmem>>, %arg20: memref<2x1x32xf32, #tpu.memory_space<vmem>>, %arg21: memref<1x32xf32, #tpu.memory_space<vmem>>, %arg22: memref<1x32xf32, #tpu.memory_space<vmem>>, %arg23: memref<16x32xf32, #tpu.memory_space<vmem>>, %arg24: memref<16x32xf32, #tpu.memory_space<vmem>>) attributes {dimension_semantics = [], scalar_prefetch = 0 : i64, scratch_operands = 1 : i64, tpu.core_type = #tpu.core_type<tc>} {
    %c0 = arith.constant 0 : index
    %c0_0 = arith.constant 0 : index
    %0 = vector.load %arg0[%c0, %c0_0] : memref<16x16xf32, #tpu.memory_space<vmem>>, vector<16x16xf32>
    %c0_1 = arith.constant 0 : index
    %c0_2 = arith.constant 0 : index
    %1 = vector.load %arg3[%c0_1, %c0_2] : memref<16x32xbf16, #tpu.memory_space<vmem>>, vector<16x32xbf16>
    %c0_3 = arith.constant 0 : index
    %c0_4 = arith.constant 0 : index
    %2 = vector.load %arg4[%c0_3, %c0_4] : memref<1x32xf32, #tpu.memory_space<vmem>>, vector<1x32xf32>
    %3 = arith.truncf %0 : vector<16x16xf32> to vector<16x16xbf16>
    %cst = arith.constant dense<0.000000e+00> : vector<16x32xf32>
    %4 = tpu.matmul %3, %1, %cst {dimension_numbers = #tpu.dot_dimension_numbers<[1], [0], [0], [1], [0, 0, 1, 1], [], []>} : vector<16x16xbf16>, vector<16x32xbf16>, vector<16x32xf32> -> vector<16x32xf32>
    %5 = vector.broadcast %2 : vector<1x32xf32> to vector<16x32xf32>
    %6 = arith.addf %4, %5 : vector<16x32xf32>
    %c0_5 = arith.constant 0 : index
    %c0_6 = arith.constant 0 : index
    %7 = vector.load %arg1[%c0_5, %c0_6] : memref<16x32xf32, #tpu.memory_space<vmem>>, vector<16x32xf32>
    %8 = arith.addf %6, %7 : vector<16x32xf32>
    %c0_7 = arith.constant 0 : index
    %c0_8 = arith.constant 0 : index
    %c0_9 = arith.constant 0 : index
    %9 = vector.load %arg5[%c0_7, %c0_8, %c0_9] : memref<2x1x32xf32, #tpu.memory_space<vmem>>, vector<1x1x32xf32>
    %10 = vector.shape_cast %9 : vector<1x1x32xf32> to vector<1x32xf32>
    %c0_10 = arith.constant 0 : index
    %c0_11 = arith.constant 0 : index
    %c0_12 = arith.constant 0 : index
    %11 = vector.load %arg6[%c0_10, %c0_11, %c0_12] : memref<2x1x32xf32, #tpu.memory_space<vmem>>, vector<1x1x32xf32>
    %12 = vector.shape_cast %11 : vector<1x1x32xf32> to vector<1x32xf32>
    %cst_13 = arith.constant dense<0.000000e+00> : vector<16xf32>
    %13 = vector.multi_reduction <add>, %8, %cst_13 [1] : vector<16x32xf32> to vector<16xf32>
    %14 = vector.shape_cast %13 : vector<16xf32> to vector<16x1xf32>
    %cst_14 = arith.constant 3.200000e+01 : f32
    %15 = vector.broadcast %cst_14 : f32 to vector<16x1xf32>
    %16 = arith.divf %14, %15 : vector<16x1xf32>
    %17 = vector.broadcast %16 : vector<16x1xf32> to vector<16x32xf32>
    %18 = arith.subf %8, %17 : vector<16x32xf32>
    %19 = arith.mulf %18, %18 : vector<16x32xf32>
    %cst_15 = arith.constant dense<0.000000e+00> : vector<16xf32>
    %20 = vector.multi_reduction <add>, %19, %cst_15 [1] : vector<16x32xf32> to vector<16xf32>
    %21 = vector.shape_cast %20 : vector<16xf32> to vector<16x1xf32>
    %cst_16 = arith.constant 3.100000e+01 : f32
    %22 = vector.broadcast %cst_16 : f32 to vector<16x1xf32>
    %23 = arith.divf %21, %22 : vector<16x1xf32>
    %24 = math.sqrt %23 : vector<16x1xf32>
    %cst_17 = arith.constant 9.99999997E-7 : f32
    %25 = vector.broadcast %cst_17 : f32 to vector<16x1xf32>
    %26 = arith.addf %24, %25 : vector<16x1xf32>
    %27 = tpu.reciprocal %26 {approx = true} : vector<16x1xf32> -> vector<16x1xf32>
    %28 = vector.broadcast %10 : vector<1x32xf32> to vector<16x32xf32>
    %29 = arith.mulf %28, %18 : vector<16x32xf32>
    %30 = vector.broadcast %27 : vector<16x1xf32> to vector<16x32xf32>
    %31 = arith.mulf %29, %30 : vector<16x32xf32>
    %32 = vector.broadcast %12 : vector<1x32xf32> to vector<16x32xf32>
    %33 = arith.addf %31, %32 : vector<16x32xf32>
    %c0_18 = arith.constant 0 : index
    %c0_19 = arith.constant 0 : index
    %c0_20 = arith.constant 0 : index
    %34 = vector.load %arg9[%c0_18, %c0_19, %c0_20] : memref<2x32x32xbf16, #tpu.memory_space<vmem>>, vector<1x32x32xbf16>
    %35 = vector.shape_cast %34 : vector<1x32x32xbf16> to vector<32x32xbf16>
    %c0_21 = arith.constant 0 : index
    %c0_22 = arith.constant 0 : index
    %c0_23 = arith.constant 0 : index
    %36 = vector.load %arg10[%c0_21, %c0_22, %c0_23] : memref<2x1x32xf32, #tpu.memory_space<vmem>>, vector<1x1x32xf32>
    %37 = vector.shape_cast %36 : vector<1x1x32xf32> to vector<1x32xf32>
    %38 = arith.truncf %33 : vector<16x32xf32> to vector<16x32xbf16>
    %cst_24 = arith.constant dense<0.000000e+00> : vector<16x32xf32>
    %39 = tpu.matmul %38, %35, %cst_24 {dimension_numbers = #tpu.dot_dimension_numbers<[1], [0], [0], [1], [0, 0, 1, 1], [], []>} : vector<16x32xbf16>, vector<32x32xbf16>, vector<16x32xf32> -> vector<16x32xf32>
    %40 = vector.broadcast %37 : vector<1x32xf32> to vector<16x32xf32>
    %41 = arith.addf %39, %40 : vector<16x32xf32>
    %c0_25 = arith.constant 0 : index
    %c0_26 = arith.constant 0 : index
    %c0_27 = arith.constant 0 : index
    %42 = vector.load %arg11[%c0_25, %c0_26, %c0_27] : memref<2x32x32xbf16, #tpu.memory_space<vmem>>, vector<1x32x32xbf16>
    %43 = vector.shape_cast %42 : vector<1x32x32xbf16> to vector<32x32xbf16>
    %c0_28 = arith.constant 0 : index
    %c0_29 = arith.constant 0 : index
    %c0_30 = arith.constant 0 : index
    %44 = vector.load %arg12[%c0_28, %c0_29, %c0_30] : memref<2x1x32xf32, #tpu.memory_space<vmem>>, vector<1x1x32xf32>
    %45 = vector.shape_cast %44 : vector<1x1x32xf32> to vector<1x32xf32>
    %46 = arith.truncf %33 : vector<16x32xf32> to vector<16x32xbf16>
    %cst_31 = arith.constant dense<0.000000e+00> : vector<16x32xf32>
    %47 = tpu.matmul %46, %43, %cst_31 {dimension_numbers = #tpu.dot_dimension_numbers<[1], [0], [0], [1], [0, 0, 1, 1], [], []>} : vector<16x32xbf16>, vector<32x32xbf16>, vector<16x32xf32> -> vector<16x32xf32>
    %48 = vector.broadcast %45 : vector<1x32xf32> to vector<16x32xf32>
    %49 = arith.addf %47, %48 : vector<16x32xf32>
    %c0_32 = arith.constant 0 : index
    %c0_33 = arith.constant 0 : index
    %c0_34 = arith.constant 0 : index
    %50 = vector.load %arg13[%c0_32, %c0_33, %c0_34] : memref<2x32x32xbf16, #tpu.memory_space<vmem>>, vector<1x32x32xbf16>
    %51 = vector.shape_cast %50 : vector<1x32x32xbf16> to vector<32x32xbf16>
    %c0_35 = arith.constant 0 : index
    %c0_36 = arith.constant 0 : index
    %c0_37 = arith.constant 0 : index
    %52 = vector.load %arg14[%c0_35, %c0_36, %c0_37] : memref<2x1x32xf32, #tpu.memory_space<vmem>>, vector<1x1x32xf32>
    %53 = vector.shape_cast %52 : vector<1x1x32xf32> to vector<1x32xf32>
    %54 = arith.truncf %33 : vector<16x32xf32> to vector<16x32xbf16>
    %cst_38 = arith.constant dense<0.000000e+00> : vector<16x32xf32>
    %55 = tpu.matmul %54, %51, %cst_38 {dimension_numbers = #tpu.dot_dimension_numbers<[1], [0], [0], [1], [0, 0, 1, 1], [], []>} : vector<16x32xbf16>, vector<32x32xbf16>, vector<16x32xf32> -> vector<16x32xf32>
    %56 = vector.broadcast %53 : vector<1x32xf32> to vector<16x32xf32>
    %57 = arith.addf %55, %56 : vector<16x32xf32>
    %c0_39 = arith.constant 0 : index
    %c0_40 = arith.constant 0 : index
    %c0_41 = arith.constant 0 : index
    %58 = vector.load %arg2[%c0_39, %c0_40, %c0_41] : memref<2x1x8xf32, #tpu.memory_space<vmem>>, vector<1x1x8xf32>
    %59 = vector.shape_cast %58 : vector<1x1x8xf32> to vector<1x8xf32>
    %60 = vector.extract_strided_slice %41 {offsets = [0, 0], sizes = [8, 8], strides = [1, 1]} : vector<16x32xf32> to vector<8x8xf32>
    %61 = vector.extract_strided_slice %49 {offsets = [0, 0], sizes = [8, 8], strides = [1, 1]} : vector<16x32xf32> to vector<8x8xf32>
    %62 = vector.extract_strided_slice %57 {offsets = [0, 0], sizes = [8, 8], strides = [1, 1]} : vector<16x32xf32> to vector<8x8xf32>
    %cst_42 = arith.constant dense<0.000000e+00> : vector<8x8xf32>
    %63 = tpu.matmul %60, %61, %cst_42 {dimension_numbers = #tpu.dot_dimension_numbers<[1], [1], [0], [0], [0, 0, 1, 0], [], []>} : vector<8x8xf32>, vector<8x8xf32>, vector<8x8xf32> -> vector<8x8xf32>
    %cst_43 = arith.constant 0.353553385 : f32
    %64 = vector.broadcast %cst_43 : f32 to vector<8x8xf32>
    %65 = arith.mulf %63, %64 : vector<8x8xf32>
    %66 = vector.broadcast %59 : vector<1x8xf32> to vector<8x8xf32>
    %67 = arith.addf %65, %66 : vector<8x8xf32>
    %cst_44 = arith.constant dense<0xFF800000> : vector<8xf32>
    %68 = vector.multi_reduction <maximumf>, %67, %cst_44 [1] : vector<8x8xf32> to vector<8xf32>
    %69 = vector.shape_cast %68 : vector<8xf32> to vector<8x1xf32>
    %70 = vector.broadcast %69 : vector<8x1xf32> to vector<8x8xf32>
    %71 = arith.subf %67, %70 : vector<8x8xf32>
    %72 = math.exp %71 : vector<8x8xf32>
    %cst_45 = arith.constant dense<0.000000e+00> : vector<8xf32>
    %73 = vector.multi_reduction <add>, %72, %cst_45 [1] : vector<8x8xf32> to vector<8xf32>
    %74 = vector.shape_cast %73 : vector<8xf32> to vector<8x1xf32>
    %75 = tpu.reciprocal %74 {approx = true} : vector<8x1xf32> -> vector<8x1xf32>
    %76 = vector.broadcast %75 : vector<8x1xf32> to vector<8x8xf32>
    %77 = arith.mulf %72, %76 : vector<8x8xf32>
    %cst_46 = arith.constant dense<0.000000e+00> : vector<8x8xf32>
    %78 = tpu.matmul %77, %62, %cst_46 {dimension_numbers = #tpu.dot_dimension_numbers<[1], [0], [0], [1], [0, 0, 1, 1], [], []>} : vector<8x8xf32>, vector<8x8xf32>, vector<8x8xf32> -> vector<8x8xf32>
    %c0_47 = arith.constant 0 : index
    %c0_48 = arith.constant 0 : index
    %79 = vector.load %arg24[%c0_47, %c0_48] : memref<16x32xf32, #tpu.memory_space<vmem>>, vector<8x8xf32>
    tpu.vector_store %arg24[%c0_47, %c0_48], %78 {strides = array<i32>} : memref<16x32xf32, #tpu.memory_space<vmem>>, vector<8x8xf32>,
    %80 = vector.extract_strided_slice %41 {offsets = [0, 8], sizes = [8, 8], strides = [1, 1]} : vector<16x32xf32> to vector<8x8xf32>
    %81 = vector.extract_strided_slice %49 {offsets = [0, 8], sizes = [8, 8], strides = [1, 1]} : vector<16x32xf32> to vector<8x8xf32>
    %82 = vector.extract_strided_slice %57 {offsets = [0, 8], sizes = [8, 8], strides = [1, 1]} : vector<16x32xf32> to vector<8x8xf32>
    %cst_49 = arith.constant dense<0.000000e+00> : vector<8x8xf32>
    %83 = tpu.matmul %80, %81, %cst_49 {dimension_numbers = #tpu.dot_dimension_numbers<[1], [1], [0], [0], [0, 0, 1, 0], [], []>} : vector<8x8xf32>, vector<8x8xf32>, vector<8x8xf32> -> vector<8x8xf32>
    %cst_50 = arith.constant 0.353553385 : f32
    %84 = vector.broadcast %cst_50 : f32 to vector<8x8xf32>
    %85 = arith.mulf %83, %84 : vector<8x8xf32>
    %86 = vector.broadcast %59 : vector<1x8xf32> to vector<8x8xf32>
    %87 = arith.addf %85, %86 : vector<8x8xf32>
    %cst_51 = arith.constant dense<0xFF800000> : vector<8xf32>
    %88 = vector.multi_reduction <maximumf>, %87, %cst_51 [1] : vector<8x8xf32> to vector<8xf32>
    %89 = vector.shape_cast %88 : vector<8xf32> to vector<8x1xf32>
    %90 = vector.broadcast %89 : vector<8x1xf32> to vector<8x8xf32>
    %91 = arith.subf %87, %90 : vector<8x8xf32>
    %92 = math.exp %91 : vector<8x8xf32>
    %cst_52 = arith.constant dense<0.000000e+00> : vector<8xf32>
    %93 = vector.multi_reduction <add>, %92, %cst_52 [1] : vector<8x8xf32> to vector<8xf32>
    %94 = vector.shape_cast %93 : vector<8xf32> to vector<8x1xf32>
    %95 = tpu.reciprocal %94 {approx = true} : vector<8x1xf32> -> vector<8x1xf32>
    %96 = vector.broadcast %95 : vector<8x1xf32> to vector<8x8xf32>
    %97 = arith.mulf %92, %96 : vector<8x8xf32>
    %cst_53 = arith.constant dense<0.000000e+00> : vector<8x8xf32>
    %98 = tpu.matmul %97, %82, %cst_53 {dimension_numbers = #tpu.dot_dimension_numbers<[1], [0], [0], [1], [0, 0, 1, 1], [], []>} : vector<8x8xf32>, vector<8x8xf32>, vector<8x8xf32> -> vector<8x8xf32>
    %c0_54 = arith.constant 0 : index
    %c8 = arith.constant 8 : index
    %99 = vector.load %arg24[%c0_54, %c8] : memref<16x32xf32, #tpu.memory_space<vmem>>, vector<8x8xf32>
    tpu.vector_store %arg24[%c0_54, %c8], %98 {strides = array<i32>} : memref<16x32xf32, #tpu.memory_space<vmem>>, vector<8x8xf32>,
    %100 = vector.extract_strided_slice %41 {offsets = [0, 16], sizes = [8, 8], strides = [1, 1]} : vector<16x32xf32> to vector<8x8xf32>
    %101 = vector.extract_strided_slice %49 {offsets = [0, 16], sizes = [8, 8], strides = [1, 1]} : vector<16x32xf32> to vector<8x8xf32>
    %102 = vector.extract_strided_slice %57 {offsets = [0, 16], sizes = [8, 8], strides = [1, 1]} : vector<16x32xf32> to vector<8x8xf32>
    %cst_55 = arith.constant dense<0.000000e+00> : vector<8x8xf32>
    %103 = tpu.matmul %100, %101, %cst_55 {dimension_numbers = #tpu.dot_dimension_numbers<[1], [1], [0], [0], [0, 0, 1, 0], [], []>} : vector<8x8xf32>, vector<8x8xf32>, vector<8x8xf32> -> vector<8x8xf32>
    %cst_56 = arith.constant 0.353553385 : f32
    %104 = vector.broadcast %cst_56 : f32 to vector<8x8xf32>
    %105 = arith.mulf %103, %104 : vector<8x8xf32>
    %106 = vector.broadcast %59 : vector<1x8xf32> to vector<8x8xf32>
    %107 = arith.addf %105, %106 : vector<8x8xf32>
    %cst_57 = arith.constant dense<0xFF800000> : vector<8xf32>
    %108 = vector.multi_reduction <maximumf>, %107, %cst_57 [1] : vector<8x8xf32> to vector<8xf32>
    %109 = vector.shape_cast %108 : vector<8xf32> to vector<8x1xf32>
    %110 = vector.broadcast %109 : vector<8x1xf32> to vector<8x8xf32>
    %111 = arith.subf %107, %110 : vector<8x8xf32>
    %112 = math.exp %111 : vector<8x8xf32>
    %cst_58 = arith.constant dense<0.000000e+00> : vector<8xf32>
    %113 = vector.multi_reduction <add>, %112, %cst_58 [1] : vector<8x8xf32> to vector<8xf32>
    %114 = vector.shape_cast %113 : vector<8xf32> to vector<8x1xf32>
    %115 = tpu.reciprocal %114 {approx = true} : vector<8x1xf32> -> vector<8x1xf32>
    %116 = vector.broadcast %115 : vector<8x1xf32> to vector<8x8xf32>
    %117 = arith.mulf %112, %116 : vector<8x8xf32>
    %cst_59 = arith.constant dense<0.000000e+00> : vector<8x8xf32>
    %118 = tpu.matmul %117, %102, %cst_59 {dimension_numbers = #tpu.dot_dimension_numbers<[1], [0], [0], [1], [0, 0, 1, 1], [], []>} : vector<8x8xf32>, vector<8x8xf32>, vector<8x8xf32> -> vector<8x8xf32>
    %c0_60 = arith.constant 0 : index
    %c16 = arith.constant 16 : index
    %119 = vector.load %arg24[%c0_60, %c16] : memref<16x32xf32, #tpu.memory_space<vmem>>, vector<8x8xf32>
    tpu.vector_store %arg24[%c0_60, %c16], %118 {strides = array<i32>} : memref<16x32xf32, #tpu.memory_space<vmem>>, vector<8x8xf32>,
    %120 = vector.extract_strided_slice %41 {offsets = [0, 24], sizes = [8, 8], strides = [1, 1]} : vector<16x32xf32> to vector<8x8xf32>
    %121 = vector.extract_strided_slice %49 {offsets = [0, 24], sizes = [8, 8], strides = [1, 1]} : vector<16x32xf32> to vector<8x8xf32>
    %122 = vector.extract_strided_slice %57 {offsets = [0, 24], sizes = [8, 8], strides = [1, 1]} : vector<16x32xf32> to vector<8x8xf32>
    %cst_61 = arith.constant dense<0.000000e+00> : vector<8x8xf32>
    %123 = tpu.matmul %120, %121, %cst_61 {dimension_numbers = #tpu.dot_dimension_numbers<[1], [1], [0], [0], [0, 0, 1, 0], [], []>} : vector<8x8xf32>, vector<8x8xf32>, vector<8x8xf32> -> vector<8x8xf32>
    %cst_62 = arith.constant 0.353553385 : f32
    %124 = vector.broadcast %cst_62 : f32 to vector<8x8xf32>
    %125 = arith.mulf %123, %124 : vector<8x8xf32>
    %126 = vector.broadcast %59 : vector<1x8xf32> to vector<8x8xf32>
    %127 = arith.addf %125, %126 : vector<8x8xf32>
    %cst_63 = arith.constant dense<0xFF800000> : vector<8xf32>
    %128 = vector.multi_reduction <maximumf>, %127, %cst_63 [1] : vector<8x8xf32> to vector<8xf32>
    %129 = vector.shape_cast %128 : vector<8xf32> to vector<8x1xf32>
    %130 = vector.broadcast %129 : vector<8x1xf32> to vector<8x8xf32>
    %131 = arith.subf %127, %130 : vector<8x8xf32>
    %132 = math.exp %131 : vector<8x8xf32>
    %cst_64 = arith.constant dense<0.000000e+00> : vector<8xf32>
    %133 = vector.multi_reduction <add>, %132, %cst_64 [1] : vector<8x8xf32> to vector<8xf32>
    %134 = vector.shape_cast %133 : vector<8xf32> to vector<8x1xf32>
    %135 = tpu.reciprocal %134 {approx = true} : vector<8x1xf32> -> vector<8x1xf32>
    %136 = vector.broadcast %135 : vector<8x1xf32> to vector<8x8xf32>
    %137 = arith.mulf %132, %136 : vector<8x8xf32>
    %cst_65 = arith.constant dense<0.000000e+00> : vector<8x8xf32>
    %138 = tpu.matmul %137, %122, %cst_65 {dimension_numbers = #tpu.dot_dimension_numbers<[1], [0], [0], [1], [0, 0, 1, 1], [], []>} : vector<8x8xf32>, vector<8x8xf32>, vector<8x8xf32> -> vector<8x8xf32>
    %c0_66 = arith.constant 0 : index
    %c24 = arith.constant 24 : index
    %139 = vector.load %arg24[%c0_66, %c24] : memref<16x32xf32, #tpu.memory_space<vmem>>, vector<8x8xf32>
    tpu.vector_store %arg24[%c0_66, %c24], %138 {strides = array<i32>} : memref<16x32xf32, #tpu.memory_space<vmem>>, vector<8x8xf32>,
    %c1 = arith.constant 1 : index
    %c0_67 = arith.constant 0 : index
    %c0_68 = arith.constant 0 : index
    %140 = vector.load %arg2[%c1, %c0_67, %c0_68] : memref<2x1x8xf32, #tpu.memory_space<vmem>>, vector<1x1x8xf32>
    %141 = vector.shape_cast %140 : vector<1x1x8xf32> to vector<1x8xf32>
    %142 = vector.extract_strided_slice %41 {offsets = [8, 0], sizes = [8, 8], strides = [1, 1]} : vector<16x32xf32> to vector<8x8xf32>
    %143 = vector.extract_strided_slice %49 {offsets = [8, 0], sizes = [8, 8], strides = [1, 1]} : vector<16x32xf32> to vector<8x8xf32>
    %144 = vector.extract_strided_slice %57 {offsets = [8, 0], sizes = [8, 8], strides = [1, 1]} : vector<16x32xf32> to vector<8x8xf32>
    %cst_69 = arith.constant dense<0.000000e+00> : vector<8x8xf32>
    %145 = tpu.matmul %142, %143, %cst_69 {dimension_numbers = #tpu.dot_dimension_numbers<[1], [1], [0], [0], [0, 0, 1, 0], [], []>} : vector<8x8xf32>, vector<8x8xf32>, vector<8x8xf32> -> vector<8x8xf32>
    %cst_70 = arith.constant 0.353553385 : f32
    %146 = vector.broadcast %cst_70 : f32 to vector<8x8xf32>
    %147 = arith.mulf %145, %146 : vector<8x8xf32>
    %148 = vector.broadcast %141 : vector<1x8xf32> to vector<8x8xf32>
    %149 = arith.addf %147, %148 : vector<8x8xf32>
    %cst_71 = arith.constant dense<0xFF800000> : vector<8xf32>
    %150 = vector.multi_reduction <maximumf>, %149, %cst_71 [1] : vector<8x8xf32> to vector<8xf32>
    %151 = vector.shape_cast %150 : vector<8xf32> to vector<8x1xf32>
    %152 = vector.broadcast %151 : vector<8x1xf32> to vector<8x8xf32>
    %153 = arith.subf %149, %152 : vector<8x8xf32>
    %154 = math.exp %153 : vector<8x8xf32>
    %cst_72 = arith.constant dense<0.000000e+00> : vector<8xf32>
    %155 = vector.multi_reduction <add>, %154, %cst_72 [1] : vector<8x8xf32> to vector<8xf32>
    %156 = vector.shape_cast %155 : vector<8xf32> to vector<8x1xf32>
    %157 = tpu.reciprocal %156 {approx = true} : vector<8x1xf32> -> vector<8x1xf32>
    %158 = vector.broadcast %157 : vector<8x1xf32> to vector<8x8xf32>
    %159 = arith.mulf %154, %158 : vector<8x8xf32>
    %cst_73 = arith.constant dense<0.000000e+00> : vector<8x8xf32>
    %160 = tpu.matmul %159, %144, %cst_73 {dimension_numbers = #tpu.dot_dimension_numbers<[1], [0], [0], [1], [0, 0, 1, 1], [], []>} : vector<8x8xf32>, vector<8x8xf32>, vector<8x8xf32> -> vector<8x8xf32>
    %c8_74 = arith.constant 8 : index
    %c0_75 = arith.constant 0 : index
    %161 = vector.load %arg24[%c8_74, %c0_75] : memref<16x32xf32, #tpu.memory_space<vmem>>, vector<8x8xf32>
    tpu.vector_store %arg24[%c8_74, %c0_75], %160 {strides = array<i32>} : memref<16x32xf32, #tpu.memory_space<vmem>>, vector<8x8xf32>,
    %162 = vector.extract_strided_slice %41 {offsets = [8, 8], sizes = [8, 8], strides = [1, 1]} : vector<16x32xf32> to vector<8x8xf32>
    %163 = vector.extract_strided_slice %49 {offsets = [8, 8], sizes = [8, 8], strides = [1, 1]} : vector<16x32xf32> to vector<8x8xf32>
    %164 = vector.extract_strided_slice %57 {offsets = [8, 8], sizes = [8, 8], strides = [1, 1]} : vector<16x32xf32> to vector<8x8xf32>
    %cst_76 = arith.constant dense<0.000000e+00> : vector<8x8xf32>
    %165 = tpu.matmul %162, %163, %cst_76 {dimension_numbers = #tpu.dot_dimension_numbers<[1], [1], [0], [0], [0, 0, 1, 0], [], []>} : vector<8x8xf32>, vector<8x8xf32>, vector<8x8xf32> -> vector<8x8xf32>
    %cst_77 = arith.constant 0.353553385 : f32
    %166 = vector.broadcast %cst_77 : f32 to vector<8x8xf32>
    %167 = arith.mulf %165, %166 : vector<8x8xf32>
    %168 = vector.broadcast %141 : vector<1x8xf32> to vector<8x8xf32>
    %169 = arith.addf %167, %168 : vector<8x8xf32>
    %cst_78 = arith.constant dense<0xFF800000> : vector<8xf32>
    %170 = vector.multi_reduction <maximumf>, %169, %cst_78 [1] : vector<8x8xf32> to vector<8xf32>
    %171 = vector.shape_cast %170 : vector<8xf32> to vector<8x1xf32>
    %172 = vector.broadcast %171 : vector<8x1xf32> to vector<8x8xf32>
    %173 = arith.subf %169, %172 : vector<8x8xf32>
    %174 = math.exp %173 : vector<8x8xf32>
    %cst_79 = arith.constant dense<0.000000e+00> : vector<8xf32>
    %175 = vector.multi_reduction <add>, %174, %cst_79 [1] : vector<8x8xf32> to vector<8xf32>
    %176 = vector.shape_cast %175 : vector<8xf32> to vector<8x1xf32>
    %177 = tpu.reciprocal %176 {approx = true} : vector<8x1xf32> -> vector<8x1xf32>
    %178 = vector.broadcast %177 : vector<8x1xf32> to vector<8x8xf32>
    %179 = arith.mulf %174, %178 : vector<8x8xf32>
    %cst_80 = arith.constant dense<0.000000e+00> : vector<8x8xf32>
    %180 = tpu.matmul %179, %164, %cst_80 {dimension_numbers = #tpu.dot_dimension_numbers<[1], [0], [0], [1], [0, 0, 1, 1], [], []>} : vector<8x8xf32>, vector<8x8xf32>, vector<8x8xf32> -> vector<8x8xf32>
    %c8_81 = arith.constant 8 : index
    %c8_82 = arith.constant 8 : index
    %181 = vector.load %arg24[%c8_81, %c8_82] : memref<16x32xf32, #tpu.memory_space<vmem>>, vector<8x8xf32>
    tpu.vector_store %arg24[%c8_81, %c8_82], %180 {strides = array<i32>} : memref<16x32xf32, #tpu.memory_space<vmem>>, vector<8x8xf32>,
    %182 = vector.extract_strided_slice %41 {offsets = [8, 16], sizes = [8, 8], strides = [1, 1]} : vector<16x32xf32> to vector<8x8xf32>
    %183 = vector.extract_strided_slice %49 {offsets = [8, 16], sizes = [8, 8], strides = [1, 1]} : vector<16x32xf32> to vector<8x8xf32>
    %184 = vector.extract_strided_slice %57 {offsets = [8, 16], sizes = [8, 8], strides = [1, 1]} : vector<16x32xf32> to vector<8x8xf32>
    %cst_83 = arith.constant dense<0.000000e+00> : vector<8x8xf32>
    %185 = tpu.matmul %182, %183, %cst_83 {dimension_numbers = #tpu.dot_dimension_numbers<[1], [1], [0], [0], [0, 0, 1, 0], [], []>} : vector<8x8xf32>, vector<8x8xf32>, vector<8x8xf32> -> vector<8x8xf32>
    %cst_84 = arith.constant 0.353553385 : f32
    %186 = vector.broadcast %cst_84 : f32 to vector<8x8xf32>
    %187 = arith.mulf %185, %186 : vector<8x8xf32>
    %188 = vector.broadcast %141 : vector<1x8xf32> to vector<8x8xf32>
    %189 = arith.addf %187, %188 : vector<8x8xf32>
    %cst_85 = arith.constant dense<0xFF800000> : vector<8xf32>
    %190 = vector.multi_reduction <maximumf>, %189, %cst_85 [1] : vector<8x8xf32> to vector<8xf32>
    %191 = vector.shape_cast %190 : vector<8xf32> to vector<8x1xf32>
    %192 = vector.broadcast %191 : vector<8x1xf32> to vector<8x8xf32>
    %193 = arith.subf %189, %192 : vector<8x8xf32>
    %194 = math.exp %193 : vector<8x8xf32>
    %cst_86 = arith.constant dense<0.000000e+00> : vector<8xf32>
    %195 = vector.multi_reduction <add>, %194, %cst_86 [1] : vector<8x8xf32> to vector<8xf32>
    %196 = vector.shape_cast %195 : vector<8xf32> to vector<8x1xf32>
    %197 = tpu.reciprocal %196 {approx = true} : vector<8x1xf32> -> vector<8x1xf32>
    %198 = vector.broadcast %197 : vector<8x1xf32> to vector<8x8xf32>
    %199 = arith.mulf %194, %198 : vector<8x8xf32>
    %cst_87 = arith.constant dense<0.000000e+00> : vector<8x8xf32>
    %200 = tpu.matmul %199, %184, %cst_87 {dimension_numbers = #tpu.dot_dimension_numbers<[1], [0], [0], [1], [0, 0, 1, 1], [], []>} : vector<8x8xf32>, vector<8x8xf32>, vector<8x8xf32> -> vector<8x8xf32>
    %c8_88 = arith.constant 8 : index
    %c16_89 = arith.constant 16 : index
    %201 = vector.load %arg24[%c8_88, %c16_89] : memref<16x32xf32, #tpu.memory_space<vmem>>, vector<8x8xf32>
    tpu.vector_store %arg24[%c8_88, %c16_89], %200 {strides = array<i32>} : memref<16x32xf32, #tpu.memory_space<vmem>>, vector<8x8xf32>,
    %202 = vector.extract_strided_slice %41 {offsets = [8, 24], sizes = [8, 8], strides = [1, 1]} : vector<16x32xf32> to vector<8x8xf32>
    %203 = vector.extract_strided_slice %49 {offsets = [8, 24], sizes = [8, 8], strides = [1, 1]} : vector<16x32xf32> to vector<8x8xf32>
    %204 = vector.extract_strided_slice %57 {offsets = [8, 24], sizes = [8, 8], strides = [1, 1]} : vector<16x32xf32> to vector<8x8xf32>
    %cst_90 = arith.constant dense<0.000000e+00> : vector<8x8xf32>
    %205 = tpu.matmul %202, %203, %cst_90 {dimension_numbers = #tpu.dot_dimension_numbers<[1], [1], [0], [0], [0, 0, 1, 0], [], []>} : vector<8x8xf32>, vector<8x8xf32>, vector<8x8xf32> -> vector<8x8xf32>
    %cst_91 = arith.constant 0.353553385 : f32
    %206 = vector.broadcast %cst_91 : f32 to vector<8x8xf32>
    %207 = arith.mulf %205, %206 : vector<8x8xf32>
    %208 = vector.broadcast %141 : vector<1x8xf32> to vector<8x8xf32>
    %209 = arith.addf %207, %208 : vector<8x8xf32>
    %cst_92 = arith.constant dense<0xFF800000> : vector<8xf32>
    %210 = vector.multi_reduction <maximumf>, %209, %cst_92 [1] : vector<8x8xf32> to vector<8xf32>
    %211 = vector.shape_cast %210 : vector<8xf32> to vector<8x1xf32>
    %212 = vector.broadcast %211 : vector<8x1xf32> to vector<8x8xf32>
    %213 = arith.subf %209, %212 : vector<8x8xf32>
    %214 = math.exp %213 : vector<8x8xf32>
    %cst_93 = arith.constant dense<0.000000e+00> : vector<8xf32>
    %215 = vector.multi_reduction <add>, %214, %cst_93 [1] : vector<8x8xf32> to vector<8xf32>
    %216 = vector.shape_cast %215 : vector<8xf32> to vector<8x1xf32>
    %217 = tpu.reciprocal %216 {approx = true} : vector<8x1xf32> -> vector<8x1xf32>
    %218 = vector.broadcast %217 : vector<8x1xf32> to vector<8x8xf32>
    %219 = arith.mulf %214, %218 : vector<8x8xf32>
    %cst_94 = arith.constant dense<0.000000e+00> : vector<8x8xf32>
    %220 = tpu.matmul %219, %204, %cst_94 {dimension_numbers = #tpu.dot_dimension_numbers<[1], [0], [0], [1], [0, 0, 1, 1], [], []>} : vector<8x8xf32>, vector<8x8xf32>, vector<8x8xf32> -> vector<8x8xf32>
    %c8_95 = arith.constant 8 : index
    %c24_96 = arith.constant 24 : index
    %221 = vector.load %arg24[%c8_95, %c24_96] : memref<16x32xf32, #tpu.memory_space<vmem>>, vector<8x8xf32>
    tpu.vector_store %arg24[%c8_95, %c24_96], %220 {strides = array<i32>} : memref<16x32xf32, #tpu.memory_space<vmem>>, vector<8x8xf32>,
    %c0_97 = arith.constant 0 : index
    %c0_98 = arith.constant 0 : index
    %222 = vector.load %arg24[%c0_97, %c0_98] : memref<16x32xf32, #tpu.memory_space<vmem>>, vector<16x32xf32>
    %c0_99 = arith.constant 0 : index
    %c0_100 = arith.constant 0 : index
    %c0_101 = arith.constant 0 : index
    %223 = vector.load %arg15[%c0_99, %c0_100, %c0_101] : memref<2x32x32xbf16, #tpu.memory_space<vmem>>, vector<1x32x32xbf16>
    %224 = vector.shape_cast %223 : vector<1x32x32xbf16> to vector<32x32xbf16>
    %c0_102 = arith.constant 0 : index
    %c0_103 = arith.constant 0 : index
    %c0_104 = arith.constant 0 : index
    %225 = vector.load %arg16[%c0_102, %c0_103, %c0_104] : memref<2x1x32xf32, #tpu.memory_space<vmem>>, vector<1x1x32xf32>
    %226 = vector.shape_cast %225 : vector<1x1x32xf32> to vector<1x32xf32>
    %227 = arith.truncf %222 : vector<16x32xf32> to vector<16x32xbf16>
    %cst_105 = arith.constant dense<0.000000e+00> : vector<16x32xf32>
    %228 = tpu.matmul %227, %224, %cst_105 {dimension_numbers = #tpu.dot_dimension_numbers<[1], [0], [0], [1], [0, 0, 1, 1], [], []>} : vector<16x32xbf16>, vector<32x32xbf16>, vector<16x32xf32> -> vector<16x32xf32>
    %229 = vector.broadcast %226 : vector<1x32xf32> to vector<16x32xf32>
    %230 = arith.addf %228, %229 : vector<16x32xf32>
    %231 = arith.addf %8, %230 : vector<16x32xf32>
    %c0_106 = arith.constant 0 : index
    %c0_107 = arith.constant 0 : index
    %c0_108 = arith.constant 0 : index
    %232 = vector.load %arg7[%c0_106, %c0_107, %c0_108] : memref<2x1x32xf32, #tpu.memory_space<vmem>>, vector<1x1x32xf32>
    %233 = vector.shape_cast %232 : vector<1x1x32xf32> to vector<1x32xf32>
    %c0_109 = arith.constant 0 : index
    %c0_110 = arith.constant 0 : index
    %c0_111 = arith.constant 0 : index
    %234 = vector.load %arg8[%c0_109, %c0_110, %c0_111] : memref<2x1x32xf32, #tpu.memory_space<vmem>>, vector<1x1x32xf32>
    %235 = vector.shape_cast %234 : vector<1x1x32xf32> to vector<1x32xf32>
    %cst_112 = arith.constant dense<0.000000e+00> : vector<16xf32>
    %236 = vector.multi_reduction <add>, %231, %cst_112 [1] : vector<16x32xf32> to vector<16xf32>
    %237 = vector.shape_cast %236 : vector<16xf32> to vector<16x1xf32>
    %cst_113 = arith.constant 3.200000e+01 : f32
    %238 = vector.broadcast %cst_113 : f32 to vector<16x1xf32>
    %239 = arith.divf %237, %238 : vector<16x1xf32>
    %240 = vector.broadcast %239 : vector<16x1xf32> to vector<16x32xf32>
    %241 = arith.subf %231, %240 : vector<16x32xf32>
    %242 = arith.mulf %241, %241 : vector<16x32xf32>
    %cst_114 = arith.constant dense<0.000000e+00> : vector<16xf32>
    %243 = vector.multi_reduction <add>, %242, %cst_114 [1] : vector<16x32xf32> to vector<16xf32>
    %244 = vector.shape_cast %243 : vector<16xf32> to vector<16x1xf32>
    %cst_115 = arith.constant 3.100000e+01 : f32
    %245 = vector.broadcast %cst_115 : f32 to vector<16x1xf32>
    %246 = arith.divf %244, %245 : vector<16x1xf32>
    %247 = math.sqrt %246 : vector<16x1xf32>
    %cst_116 = arith.constant 9.99999997E-7 : f32
    %248 = vector.broadcast %cst_116 : f32 to vector<16x1xf32>
    %249 = arith.addf %247, %248 : vector<16x1xf32>
    %250 = tpu.reciprocal %249 {approx = true} : vector<16x1xf32> -> vector<16x1xf32>
    %251 = vector.broadcast %233 : vector<1x32xf32> to vector<16x32xf32>
    %252 = arith.mulf %251, %241 : vector<16x32xf32>
    %253 = vector.broadcast %250 : vector<16x1xf32> to vector<16x32xf32>
    %254 = arith.mulf %252, %253 : vector<16x32xf32>
    %255 = vector.broadcast %235 : vector<1x32xf32> to vector<16x32xf32>
    %256 = arith.addf %254, %255 : vector<16x32xf32>
    %c0_117 = arith.constant 0 : index
    %c0_118 = arith.constant 0 : index
    %c0_119 = arith.constant 0 : index
    %257 = vector.load %arg17[%c0_117, %c0_118, %c0_119] : memref<2x32x2048xbf16, #tpu.memory_space<vmem>>, vector<1x32x2048xbf16>
    %258 = vector.shape_cast %257 : vector<1x32x2048xbf16> to vector<32x2048xbf16>
    %c0_120 = arith.constant 0 : index
    %c0_121 = arith.constant 0 : index
    %c0_122 = arith.constant 0 : index
    %259 = vector.load %arg18[%c0_120, %c0_121, %c0_122] : memref<2x1x2048xf32, #tpu.memory_space<vmem>>, vector<1x1x2048xf32>
    %260 = vector.shape_cast %259 : vector<1x1x2048xf32> to vector<1x2048xf32>
    %261 = arith.truncf %256 : vector<16x32xf32> to vector<16x32xbf16>
    %cst_123 = arith.constant dense<0.000000e+00> : vector<16x2048xf32>
    %262 = tpu.matmul %261, %258, %cst_123 {dimension_numbers = #tpu.dot_dimension_numbers<[1], [0], [0], [1], [0, 0, 1, 1], [], []>} : vector<16x32xbf16>, vector<32x2048xbf16>, vector<16x2048xf32> -> vector<16x2048xf32>
    %263 = vector.broadcast %260 : vector<1x2048xf32> to vector<16x2048xf32>
    %264 = arith.addf %262, %263 : vector<16x2048xf32>
    %cst_124 = arith.constant 0.000000e+00 : f32
    %265 = vector.broadcast %cst_124 : f32 to vector<16x2048xf32>
    %266 = arith.maximumf %264, %265 : vector<16x2048xf32>
    %c0_125 = arith.constant 0 : index
    %c0_126 = arith.constant 0 : index
    %c0_127 = arith.constant 0 : index
    %267 = vector.load %arg19[%c0_125, %c0_126, %c0_127] : memref<2x2048x32xbf16, #tpu.memory_space<vmem>>, vector<1x2048x32xbf16>
    %268 = vector.shape_cast %267 : vector<1x2048x32xbf16> to vector<2048x32xbf16>
    %c0_128 = arith.constant 0 : index
    %c0_129 = arith.constant 0 : index
    %c0_130 = arith.constant 0 : index
    %269 = vector.load %arg20[%c0_128, %c0_129, %c0_130] : memref<2x1x32xf32, #tpu.memory_space<vmem>>, vector<1x1x32xf32>
    %270 = vector.shape_cast %269 : vector<1x1x32xf32> to vector<1x32xf32>
    %271 = arith.truncf %266 : vector<16x2048xf32> to vector<16x2048xbf16>
    %cst_131 = arith.constant dense<0.000000e+00> : vector<16x32xf32>
    %272 = tpu.matmul %271, %268, %cst_131 {dimension_numbers = #tpu.dot_dimension_numbers<[1], [0], [0], [1], [0, 0, 1, 1], [], []>} : vector<16x2048xbf16>, vector<2048x32xbf16>, vector<16x32xf32> -> vector<16x32xf32>
    %273 = vector.broadcast %270 : vector<1x32xf32> to vector<16x32xf32>
    %274 = arith.addf %272, %273 : vector<16x32xf32>
    %275 = arith.addf %231, %274 : vector<16x32xf32>
    %c1_132 = arith.constant 1 : index
    %c0_133 = arith.constant 0 : index
    %c0_134 = arith.constant 0 : index
    %276 = vector.load %arg5[%c1_132, %c0_133, %c0_134] : memref<2x1x32xf32, #tpu.memory_space<vmem>>, vector<1x1x32xf32>
    %277 = vector.shape_cast %276 : vector<1x1x32xf32> to vector<1x32xf32>
    %c1_135 = arith.constant 1 : index
    %c0_136 = arith.constant 0 : index
    %c0_137 = arith.constant 0 : index
    %278 = vector.load %arg6[%c1_135, %c0_136, %c0_137] : memref<2x1x32xf32, #tpu.memory_space<vmem>>, vector<1x1x32xf32>
    %279 = vector.shape_cast %278 : vector<1x1x32xf32> to vector<1x32xf32>
    %cst_138 = arith.constant dense<0.000000e+00> : vector<16xf32>
    %280 = vector.multi_reduction <add>, %275, %cst_138 [1] : vector<16x32xf32> to vector<16xf32>
    %281 = vector.shape_cast %280 : vector<16xf32> to vector<16x1xf32>
    %cst_139 = arith.constant 3.200000e+01 : f32
    %282 = vector.broadcast %cst_139 : f32 to vector<16x1xf32>
    %283 = arith.divf %281, %282 : vector<16x1xf32>
    %284 = vector.broadcast %283 : vector<16x1xf32> to vector<16x32xf32>
    %285 = arith.subf %275, %284 : vector<16x32xf32>
    %286 = arith.mulf %285, %285 : vector<16x32xf32>
    %cst_140 = arith.constant dense<0.000000e+00> : vector<16xf32>
    %287 = vector.multi_reduction <add>, %286, %cst_140 [1] : vector<16x32xf32> to vector<16xf32>
    %288 = vector.shape_cast %287 : vector<16xf32> to vector<16x1xf32>
    %cst_141 = arith.constant 3.100000e+01 : f32
    %289 = vector.broadcast %cst_141 : f32 to vector<16x1xf32>
    %290 = arith.divf %288, %289 : vector<16x1xf32>
    %291 = math.sqrt %290 : vector<16x1xf32>
    %cst_142 = arith.constant 9.99999997E-7 : f32
    %292 = vector.broadcast %cst_142 : f32 to vector<16x1xf32>
    %293 = arith.addf %291, %292 : vector<16x1xf32>
    %294 = tpu.reciprocal %293 {approx = true} : vector<16x1xf32> -> vector<16x1xf32>
    %295 = vector.broadcast %277 : vector<1x32xf32> to vector<16x32xf32>
    %296 = arith.mulf %295, %285 : vector<16x32xf32>
    %297 = vector.broadcast %294 : vector<16x1xf32> to vector<16x32xf32>
    %298 = arith.mulf %296, %297 : vector<16x32xf32>
    %299 = vector.broadcast %279 : vector<1x32xf32> to vector<16x32xf32>
    %300 = arith.addf %298, %299 : vector<16x32xf32>
    %c1_143 = arith.constant 1 : index
    %c0_144 = arith.constant 0 : index
    %c0_145 = arith.constant 0 : index
    %301 = vector.load %arg9[%c1_143, %c0_144, %c0_145] : memref<2x32x32xbf16, #tpu.memory_space<vmem>>, vector<1x32x32xbf16>
    %302 = vector.shape_cast %301 : vector<1x32x32xbf16> to vector<32x32xbf16>
    %c1_146 = arith.constant 1 : index
    %c0_147 = arith.constant 0 : index
    %c0_148 = arith.constant 0 : index
    %303 = vector.load %arg10[%c1_146, %c0_147, %c0_148] : memref<2x1x32xf32, #tpu.memory_space<vmem>>, vector<1x1x32xf32>
    %304 = vector.shape_cast %303 : vector<1x1x32xf32> to vector<1x32xf32>
    %305 = arith.truncf %300 : vector<16x32xf32> to vector<16x32xbf16>
    %cst_149 = arith.constant dense<0.000000e+00> : vector<16x32xf32>
    %306 = tpu.matmul %305, %302, %cst_149 {dimension_numbers = #tpu.dot_dimension_numbers<[1], [0], [0], [1], [0, 0, 1, 1], [], []>} : vector<16x32xbf16>, vector<32x32xbf16>, vector<16x32xf32> -> vector<16x32xf32>
    %307 = vector.broadcast %304 : vector<1x32xf32> to vector<16x32xf32>
    %308 = arith.addf %306, %307 : vector<16x32xf32>
    %c1_150 = arith.constant 1 : index
    %c0_151 = arith.constant 0 : index
    %c0_152 = arith.constant 0 : index
    %309 = vector.load %arg11[%c1_150, %c0_151, %c0_152] : memref<2x32x32xbf16, #tpu.memory_space<vmem>>, vector<1x32x32xbf16>
    %310 = vector.shape_cast %309 : vector<1x32x32xbf16> to vector<32x32xbf16>
    %c1_153 = arith.constant 1 : index
    %c0_154 = arith.constant 0 : index
    %c0_155 = arith.constant 0 : index
    %311 = vector.load %arg12[%c1_153, %c0_154, %c0_155] : memref<2x1x32xf32, #tpu.memory_space<vmem>>, vector<1x1x32xf32>
    %312 = vector.shape_cast %311 : vector<1x1x32xf32> to vector<1x32xf32>
    %313 = arith.truncf %300 : vector<16x32xf32> to vector<16x32xbf16>
    %cst_156 = arith.constant dense<0.000000e+00> : vector<16x32xf32>
    %314 = tpu.matmul %313, %310, %cst_156 {dimension_numbers = #tpu.dot_dimension_numbers<[1], [0], [0], [1], [0, 0, 1, 1], [], []>} : vector<16x32xbf16>, vector<32x32xbf16>, vector<16x32xf32> -> vector<16x32xf32>
    %315 = vector.broadcast %312 : vector<1x32xf32> to vector<16x32xf32>
    %316 = arith.addf %314, %315 : vector<16x32xf32>
    %c1_157 = arith.constant 1 : index
    %c0_158 = arith.constant 0 : index
    %c0_159 = arith.constant 0 : index
    %317 = vector.load %arg13[%c1_157, %c0_158, %c0_159] : memref<2x32x32xbf16, #tpu.memory_space<vmem>>, vector<1x32x32xbf16>
    %318 = vector.shape_cast %317 : vector<1x32x32xbf16> to vector<32x32xbf16>
    %c1_160 = arith.constant 1 : index
    %c0_161 = arith.constant 0 : index
    %c0_162 = arith.constant 0 : index
    %319 = vector.load %arg14[%c1_160, %c0_161, %c0_162] : memref<2x1x32xf32, #tpu.memory_space<vmem>>, vector<1x1x32xf32>
    %320 = vector.shape_cast %319 : vector<1x1x32xf32> to vector<1x32xf32>
    %321 = arith.truncf %300 : vector<16x32xf32> to vector<16x32xbf16>
    %cst_163 = arith.constant dense<0.000000e+00> : vector<16x32xf32>
    %322 = tpu.matmul %321, %318, %cst_163 {dimension_numbers = #tpu.dot_dimension_numbers<[1], [0], [0], [1], [0, 0, 1, 1], [], []>} : vector<16x32xbf16>, vector<32x32xbf16>, vector<16x32xf32> -> vector<16x32xf32>
    %323 = vector.broadcast %320 : vector<1x32xf32> to vector<16x32xf32>
    %324 = arith.addf %322, %323 : vector<16x32xf32>
    %c0_164 = arith.constant 0 : index
    %c0_165 = arith.constant 0 : index
    %c0_166 = arith.constant 0 : index
    %325 = vector.load %arg2[%c0_164, %c0_165, %c0_166] : memref<2x1x8xf32, #tpu.memory_space<vmem>>, vector<1x1x8xf32>
    %326 = vector.shape_cast %325 : vector<1x1x8xf32> to vector<1x8xf32>
    %327 = vector.extract_strided_slice %308 {offsets = [0, 0], sizes = [8, 8], strides = [1, 1]} : vector<16x32xf32> to vector<8x8xf32>
    %328 = vector.extract_strided_slice %316 {offsets = [0, 0], sizes = [8, 8], strides = [1, 1]} : vector<16x32xf32> to vector<8x8xf32>
    %329 = vector.extract_strided_slice %324 {offsets = [0, 0], sizes = [8, 8], strides = [1, 1]} : vector<16x32xf32> to vector<8x8xf32>
    %cst_167 = arith.constant dense<0.000000e+00> : vector<8x8xf32>
    %330 = tpu.matmul %327, %328, %cst_167 {dimension_numbers = #tpu.dot_dimension_numbers<[1], [1], [0], [0], [0, 0, 1, 0], [], []>} : vector<8x8xf32>, vector<8x8xf32>, vector<8x8xf32> -> vector<8x8xf32>
    %cst_168 = arith.constant 0.353553385 : f32
    %331 = vector.broadcast %cst_168 : f32 to vector<8x8xf32>
    %332 = arith.mulf %330, %331 : vector<8x8xf32>
    %333 = vector.broadcast %326 : vector<1x8xf32> to vector<8x8xf32>
    %334 = arith.addf %332, %333 : vector<8x8xf32>
    %cst_169 = arith.constant dense<0xFF800000> : vector<8xf32>
    %335 = vector.multi_reduction <maximumf>, %334, %cst_169 [1] : vector<8x8xf32> to vector<8xf32>
    %336 = vector.shape_cast %335 : vector<8xf32> to vector<8x1xf32>
    %337 = vector.broadcast %336 : vector<8x1xf32> to vector<8x8xf32>
    %338 = arith.subf %334, %337 : vector<8x8xf32>
    %339 = math.exp %338 : vector<8x8xf32>
    %cst_170 = arith.constant dense<0.000000e+00> : vector<8xf32>
    %340 = vector.multi_reduction <add>, %339, %cst_170 [1] : vector<8x8xf32> to vector<8xf32>
    %341 = vector.shape_cast %340 : vector<8xf32> to vector<8x1xf32>
    %342 = tpu.reciprocal %341 {approx = true} : vector<8x1xf32> -> vector<8x1xf32>
    %343 = vector.broadcast %342 : vector<8x1xf32> to vector<8x8xf32>
    %344 = arith.mulf %339, %343 : vector<8x8xf32>
    %cst_171 = arith.constant dense<0.000000e+00> : vector<8x8xf32>
    %345 = tpu.matmul %344, %329, %cst_171 {dimension_numbers = #tpu.dot_dimension_numbers<[1], [0], [0], [1], [0, 0, 1, 1], [], []>} : vector<8x8xf32>, vector<8x8xf32>, vector<8x8xf32> -> vector<8x8xf32>
    %c0_172 = arith.constant 0 : index
    %c0_173 = arith.constant 0 : index
    %346 = vector.load %arg24[%c0_172, %c0_173] : memref<16x32xf32, #tpu.memory_space<vmem>>, vector<8x8xf32>
    tpu.vector_store %arg24[%c0_172, %c0_173], %345 {strides = array<i32>} : memref<16x32xf32, #tpu.memory_space<vmem>>, vector<8x8xf32>,
    %347 = vector.extract_strided_slice %308 {offsets = [0, 8], sizes = [8, 8], strides = [1, 1]} : vector<16x32xf32> to vector<8x8xf32>
    %348 = vector.extract_strided_slice %316 {offsets = [0, 8], sizes = [8, 8], strides = [1, 1]} : vector<16x32xf32> to vector<8x8xf32>
    %349 = vector.extract_strided_slice %324 {offsets = [0, 8], sizes = [8, 8], strides = [1, 1]} : vector<16x32xf32> to vector<8x8xf32>
    %cst_174 = arith.constant dense<0.000000e+00> : vector<8x8xf32>
    %350 = tpu.matmul %347, %348, %cst_174 {dimension_numbers = #tpu.dot_dimension_numbers<[1], [1], [0], [0], [0, 0, 1, 0], [], []>} : vector<8x8xf32>, vector<8x8xf32>, vector<8x8xf32> -> vector<8x8xf32>
    %cst_175 = arith.constant 0.353553385 : f32
    %351 = vector.broadcast %cst_175 : f32 to vector<8x8xf32>
    %352 = arith.mulf %350, %351 : vector<8x8xf32>
    %353 = vector.broadcast %326 : vector<1x8xf32> to vector<8x8xf32>
    %354 = arith.addf %352, %353 : vector<8x8xf32>
    %cst_176 = arith.constant dense<0xFF800000> : vector<8xf32>
    %355 = vector.multi_reduction <maximumf>, %354, %cst_176 [1] : vector<8x8xf32> to vector<8xf32>
    %356 = vector.shape_cast %355 : vector<8xf32> to vector<8x1xf32>
    %357 = vector.broadcast %356 : vector<8x1xf32> to vector<8x8xf32>
    %358 = arith.subf %354, %357 : vector<8x8xf32>
    %359 = math.exp %358 : vector<8x8xf32>
    %cst_177 = arith.constant dense<0.000000e+00> : vector<8xf32>
    %360 = vector.multi_reduction <add>, %359, %cst_177 [1] : vector<8x8xf32> to vector<8xf32>
    %361 = vector.shape_cast %360 : vector<8xf32> to vector<8x1xf32>
    %362 = tpu.reciprocal %361 {approx = true} : vector<8x1xf32> -> vector<8x1xf32>
    %363 = vector.broadcast %362 : vector<8x1xf32> to vector<8x8xf32>
    %364 = arith.mulf %359, %363 : vector<8x8xf32>
    %cst_178 = arith.constant dense<0.000000e+00> : vector<8x8xf32>
    %365 = tpu.matmul %364, %349, %cst_178 {dimension_numbers = #tpu.dot_dimension_numbers<[1], [0], [0], [1], [0, 0, 1, 1], [], []>} : vector<8x8xf32>, vector<8x8xf32>, vector<8x8xf32> -> vector<8x8xf32>
    %c0_179 = arith.constant 0 : index
    %c8_180 = arith.constant 8 : index
    %366 = vector.load %arg24[%c0_179, %c8_180] : memref<16x32xf32, #tpu.memory_space<vmem>>, vector<8x8xf32>
    tpu.vector_store %arg24[%c0_179, %c8_180], %365 {strides = array<i32>} : memref<16x32xf32, #tpu.memory_space<vmem>>, vector<8x8xf32>,
    %367 = vector.extract_strided_slice %308 {offsets = [0, 16], sizes = [8, 8], strides = [1, 1]} : vector<16x32xf32> to vector<8x8xf32>
    %368 = vector.extract_strided_slice %316 {offsets = [0, 16], sizes = [8, 8], strides = [1, 1]} : vector<16x32xf32> to vector<8x8xf32>
    %369 = vector.extract_strided_slice %324 {offsets = [0, 16], sizes = [8, 8], strides = [1, 1]} : vector<16x32xf32> to vector<8x8xf32>
    %cst_181 = arith.constant dense<0.000000e+00> : vector<8x8xf32>
    %370 = tpu.matmul %367, %368, %cst_181 {dimension_numbers = #tpu.dot_dimension_numbers<[1], [1], [0], [0], [0, 0, 1, 0], [], []>} : vector<8x8xf32>, vector<8x8xf32>, vector<8x8xf32> -> vector<8x8xf32>
    %cst_182 = arith.constant 0.353553385 : f32
    %371 = vector.broadcast %cst_182 : f32 to vector<8x8xf32>
    %372 = arith.mulf %370, %371 : vector<8x8xf32>
    %373 = vector.broadcast %326 : vector<1x8xf32> to vector<8x8xf32>
    %374 = arith.addf %372, %373 : vector<8x8xf32>
    %cst_183 = arith.constant dense<0xFF800000> : vector<8xf32>
    %375 = vector.multi_reduction <maximumf>, %374, %cst_183 [1] : vector<8x8xf32> to vector<8xf32>
    %376 = vector.shape_cast %375 : vector<8xf32> to vector<8x1xf32>
    %377 = vector.broadcast %376 : vector<8x1xf32> to vector<8x8xf32>
    %378 = arith.subf %374, %377 : vector<8x8xf32>
    %379 = math.exp %378 : vector<8x8xf32>
    %cst_184 = arith.constant dense<0.000000e+00> : vector<8xf32>
    %380 = vector.multi_reduction <add>, %379, %cst_184 [1] : vector<8x8xf32> to vector<8xf32>
    %381 = vector.shape_cast %380 : vector<8xf32> to vector<8x1xf32>
    %382 = tpu.reciprocal %381 {approx = true} : vector<8x1xf32> -> vector<8x1xf32>
    %383 = vector.broadcast %382 : vector<8x1xf32> to vector<8x8xf32>
    %384 = arith.mulf %379, %383 : vector<8x8xf32>
    %cst_185 = arith.constant dense<0.000000e+00> : vector<8x8xf32>
    %385 = tpu.matmul %384, %369, %cst_185 {dimension_numbers = #tpu.dot_dimension_numbers<[1], [0], [0], [1], [0, 0, 1, 1], [], []>} : vector<8x8xf32>, vector<8x8xf32>, vector<8x8xf32> -> vector<8x8xf32>
    %c0_186 = arith.constant 0 : index
    %c16_187 = arith.constant 16 : index
    %386 = vector.load %arg24[%c0_186, %c16_187] : memref<16x32xf32, #tpu.memory_space<vmem>>, vector<8x8xf32>
    tpu.vector_store %arg24[%c0_186, %c16_187], %385 {strides = array<i32>} : memref<16x32xf32, #tpu.memory_space<vmem>>, vector<8x8xf32>,
    %387 = vector.extract_strided_slice %308 {offsets = [0, 24], sizes = [8, 8], strides = [1, 1]} : vector<16x32xf32> to vector<8x8xf32>
    %388 = vector.extract_strided_slice %316 {offsets = [0, 24], sizes = [8, 8], strides = [1, 1]} : vector<16x32xf32> to vector<8x8xf32>
    %389 = vector.extract_strided_slice %324 {offsets = [0, 24], sizes = [8, 8], strides = [1, 1]} : vector<16x32xf32> to vector<8x8xf32>
    %cst_188 = arith.constant dense<0.000000e+00> : vector<8x8xf32>
    %390 = tpu.matmul %387, %388, %cst_188 {dimension_numbers = #tpu.dot_dimension_numbers<[1], [1], [0], [0], [0, 0, 1, 0], [], []>} : vector<8x8xf32>, vector<8x8xf32>, vector<8x8xf32> -> vector<8x8xf32>
    %cst_189 = arith.constant 0.353553385 : f32
    %391 = vector.broadcast %cst_189 : f32 to vector<8x8xf32>
    %392 = arith.mulf %390, %391 : vector<8x8xf32>
    %393 = vector.broadcast %326 : vector<1x8xf32> to vector<8x8xf32>
    %394 = arith.addf %392, %393 : vector<8x8xf32>
    %cst_190 = arith.constant dense<0xFF800000> : vector<8xf32>
    %395 = vector.multi_reduction <maximumf>, %394, %cst_190 [1] : vector<8x8xf32> to vector<8xf32>
    %396 = vector.shape_cast %395 : vector<8xf32> to vector<8x1xf32>
    %397 = vector.broadcast %396 : vector<8x1xf32> to vector<8x8xf32>
    %398 = arith.subf %394, %397 : vector<8x8xf32>
    %399 = math.exp %398 : vector<8x8xf32>
    %cst_191 = arith.constant dense<0.000000e+00> : vector<8xf32>
    %400 = vector.multi_reduction <add>, %399, %cst_191 [1] : vector<8x8xf32> to vector<8xf32>
    %401 = vector.shape_cast %400 : vector<8xf32> to vector<8x1xf32>
    %402 = tpu.reciprocal %401 {approx = true} : vector<8x1xf32> -> vector<8x1xf32>
    %403 = vector.broadcast %402 : vector<8x1xf32> to vector<8x8xf32>
    %404 = arith.mulf %399, %403 : vector<8x8xf32>
    %cst_192 = arith.constant dense<0.000000e+00> : vector<8x8xf32>
    %405 = tpu.matmul %404, %389, %cst_192 {dimension_numbers = #tpu.dot_dimension_numbers<[1], [0], [0], [1], [0, 0, 1, 1], [], []>} : vector<8x8xf32>, vector<8x8xf32>, vector<8x8xf32> -> vector<8x8xf32>
    %c0_193 = arith.constant 0 : index
    %c24_194 = arith.constant 24 : index
    %406 = vector.load %arg24[%c0_193, %c24_194] : memref<16x32xf32, #tpu.memory_space<vmem>>, vector<8x8xf32>
    tpu.vector_store %arg24[%c0_193, %c24_194], %405 {strides = array<i32>} : memref<16x32xf32, #tpu.memory_space<vmem>>, vector<8x8xf32>,
    %c1_195 = arith.constant 1 : index
    %c0_196 = arith.constant 0 : index
    %c0_197 = arith.constant 0 : index
    %407 = vector.load %arg2[%c1_195, %c0_196, %c0_197] : memref<2x1x8xf32, #tpu.memory_space<vmem>>, vector<1x1x8xf32>
    %408 = vector.shape_cast %407 : vector<1x1x8xf32> to vector<1x8xf32>
    %409 = vector.extract_strided_slice %308 {offsets = [8, 0], sizes = [8, 8], strides = [1, 1]} : vector<16x32xf32> to vector<8x8xf32>
    %410 = vector.extract_strided_slice %316 {offsets = [8, 0], sizes = [8, 8], strides = [1, 1]} : vector<16x32xf32> to vector<8x8xf32>
    %411 = vector.extract_strided_slice %324 {offsets = [8, 0], sizes = [8, 8], strides = [1, 1]} : vector<16x32xf32> to vector<8x8xf32>
    %cst_198 = arith.constant dense<0.000000e+00> : vector<8x8xf32>
    %412 = tpu.matmul %409, %410, %cst_198 {dimension_numbers = #tpu.dot_dimension_numbers<[1], [1], [0], [0], [0, 0, 1, 0], [], []>} : vector<8x8xf32>, vector<8x8xf32>, vector<8x8xf32> -> vector<8x8xf32>
    %cst_199 = arith.constant 0.353553385 : f32
    %413 = vector.broadcast %cst_199 : f32 to vector<8x8xf32>
    %414 = arith.mulf %412, %413 : vector<8x8xf32>
    %415 = vector.broadcast %408 : vector<1x8xf32> to vector<8x8xf32>
    %416 = arith.addf %414, %415 : vector<8x8xf32>
    %cst_200 = arith.constant dense<0xFF800000> : vector<8xf32>
    %417 = vector.multi_reduction <maximumf>, %416, %cst_200 [1] : vector<8x8xf32> to vector<8xf32>
    %418 = vector.shape_cast %417 : vector<8xf32> to vector<8x1xf32>
    %419 = vector.broadcast %418 : vector<8x1xf32> to vector<8x8xf32>
    %420 = arith.subf %416, %419 : vector<8x8xf32>
    %421 = math.exp %420 : vector<8x8xf32>
    %cst_201 = arith.constant dense<0.000000e+00> : vector<8xf32>
    %422 = vector.multi_reduction <add>, %421, %cst_201 [1] : vector<8x8xf32> to vector<8xf32>
    %423 = vector.shape_cast %422 : vector<8xf32> to vector<8x1xf32>
    %424 = tpu.reciprocal %423 {approx = true} : vector<8x1xf32> -> vector<8x1xf32>
    %425 = vector.broadcast %424 : vector<8x1xf32> to vector<8x8xf32>
    %426 = arith.mulf %421, %425 : vector<8x8xf32>
    %cst_202 = arith.constant dense<0.000000e+00> : vector<8x8xf32>
    %427 = tpu.matmul %426, %411, %cst_202 {dimension_numbers = #tpu.dot_dimension_numbers<[1], [0], [0], [1], [0, 0, 1, 1], [], []>} : vector<8x8xf32>, vector<8x8xf32>, vector<8x8xf32> -> vector<8x8xf32>
    %c8_203 = arith.constant 8 : index
    %c0_204 = arith.constant 0 : index
    %428 = vector.load %arg24[%c8_203, %c0_204] : memref<16x32xf32, #tpu.memory_space<vmem>>, vector<8x8xf32>
    tpu.vector_store %arg24[%c8_203, %c0_204], %427 {strides = array<i32>} : memref<16x32xf32, #tpu.memory_space<vmem>>, vector<8x8xf32>,
    %429 = vector.extract_strided_slice %308 {offsets = [8, 8], sizes = [8, 8], strides = [1, 1]} : vector<16x32xf32> to vector<8x8xf32>
    %430 = vector.extract_strided_slice %316 {offsets = [8, 8], sizes = [8, 8], strides = [1, 1]} : vector<16x32xf32> to vector<8x8xf32>
    %431 = vector.extract_strided_slice %324 {offsets = [8, 8], sizes = [8, 8], strides = [1, 1]} : vector<16x32xf32> to vector<8x8xf32>
    %cst_205 = arith.constant dense<0.000000e+00> : vector<8x8xf32>
    %432 = tpu.matmul %429, %430, %cst_205 {dimension_numbers = #tpu.dot_dimension_numbers<[1], [1], [0], [0], [0, 0, 1, 0], [], []>} : vector<8x8xf32>, vector<8x8xf32>, vector<8x8xf32> -> vector<8x8xf32>
    %cst_206 = arith.constant 0.353553385 : f32
    %433 = vector.broadcast %cst_206 : f32 to vector<8x8xf32>
    %434 = arith.mulf %432, %433 : vector<8x8xf32>
    %435 = vector.broadcast %408 : vector<1x8xf32> to vector<8x8xf32>
    %436 = arith.addf %434, %435 : vector<8x8xf32>
    %cst_207 = arith.constant dense<0xFF800000> : vector<8xf32>
    %437 = vector.multi_reduction <maximumf>, %436, %cst_207 [1] : vector<8x8xf32> to vector<8xf32>
    %438 = vector.shape_cast %437 : vector<8xf32> to vector<8x1xf32>
    %439 = vector.broadcast %438 : vector<8x1xf32> to vector<8x8xf32>
    %440 = arith.subf %436, %439 : vector<8x8xf32>
    %441 = math.exp %440 : vector<8x8xf32>
    %cst_208 = arith.constant dense<0.000000e+00> : vector<8xf32>
    %442 = vector.multi_reduction <add>, %441, %cst_208 [1] : vector<8x8xf32> to vector<8xf32>
    %443 = vector.shape_cast %442 : vector<8xf32> to vector<8x1xf32>
    %444 = tpu.reciprocal %443 {approx = true} : vector<8x1xf32> -> vector<8x1xf32>
    %445 = vector.broadcast %444 : vector<8x1xf32> to vector<8x8xf32>
    %446 = arith.mulf %441, %445 : vector<8x8xf32>
    %cst_209 = arith.constant dense<0.000000e+00> : vector<8x8xf32>
    %447 = tpu.matmul %446, %431, %cst_209 {dimension_numbers = #tpu.dot_dimension_numbers<[1], [0], [0], [1], [0, 0, 1, 1], [], []>} : vector<8x8xf32>, vector<8x8xf32>, vector<8x8xf32> -> vector<8x8xf32>
    %c8_210 = arith.constant 8 : index
    %c8_211 = arith.constant 8 : index
    %448 = vector.load %arg24[%c8_210, %c8_211] : memref<16x32xf32, #tpu.memory_space<vmem>>, vector<8x8xf32>
    tpu.vector_store %arg24[%c8_210, %c8_211], %447 {strides = array<i32>} : memref<16x32xf32, #tpu.memory_space<vmem>>, vector<8x8xf32>,
    %449 = vector.extract_strided_slice %308 {offsets = [8, 16], sizes = [8, 8], strides = [1, 1]} : vector<16x32xf32> to vector<8x8xf32>
    %450 = vector.extract_strided_slice %316 {offsets = [8, 16], sizes = [8, 8], strides = [1, 1]} : vector<16x32xf32> to vector<8x8xf32>
    %451 = vector.extract_strided_slice %324 {offsets = [8, 16], sizes = [8, 8], strides = [1, 1]} : vector<16x32xf32> to vector<8x8xf32>
    %cst_212 = arith.constant dense<0.000000e+00> : vector<8x8xf32>
    %452 = tpu.matmul %449, %450, %cst_212 {dimension_numbers = #tpu.dot_dimension_numbers<[1], [1], [0], [0], [0, 0, 1, 0], [], []>} : vector<8x8xf32>, vector<8x8xf32>, vector<8x8xf32> -> vector<8x8xf32>
    %cst_213 = arith.constant 0.353553385 : f32
    %453 = vector.broadcast %cst_213 : f32 to vector<8x8xf32>
    %454 = arith.mulf %452, %453 : vector<8x8xf32>
    %455 = vector.broadcast %408 : vector<1x8xf32> to vector<8x8xf32>
    %456 = arith.addf %454, %455 : vector<8x8xf32>
    %cst_214 = arith.constant dense<0xFF800000> : vector<8xf32>
    %457 = vector.multi_reduction <maximumf>, %456, %cst_214 [1] : vector<8x8xf32> to vector<8xf32>
    %458 = vector.shape_cast %457 : vector<8xf32> to vector<8x1xf32>
    %459 = vector.broadcast %458 : vector<8x1xf32> to vector<8x8xf32>
    %460 = arith.subf %456, %459 : vector<8x8xf32>
    %461 = math.exp %460 : vector<8x8xf32>
    %cst_215 = arith.constant dense<0.000000e+00> : vector<8xf32>
    %462 = vector.multi_reduction <add>, %461, %cst_215 [1] : vector<8x8xf32> to vector<8xf32>
    %463 = vector.shape_cast %462 : vector<8xf32> to vector<8x1xf32>
    %464 = tpu.reciprocal %463 {approx = true} : vector<8x1xf32> -> vector<8x1xf32>
    %465 = vector.broadcast %464 : vector<8x1xf32> to vector<8x8xf32>
    %466 = arith.mulf %461, %465 : vector<8x8xf32>
    %cst_216 = arith.constant dense<0.000000e+00> : vector<8x8xf32>
    %467 = tpu.matmul %466, %451, %cst_216 {dimension_numbers = #tpu.dot_dimension_numbers<[1], [0], [0], [1], [0, 0, 1, 1], [], []>} : vector<8x8xf32>, vector<8x8xf32>, vector<8x8xf32> -> vector<8x8xf32>
    %c8_217 = arith.constant 8 : index
    %c16_218 = arith.constant 16 : index
    %468 = vector.load %arg24[%c8_217, %c16_218] : memref<16x32xf32, #tpu.memory_space<vmem>>, vector<8x8xf32>
    tpu.vector_store %arg24[%c8_217, %c16_218], %467 {strides = array<i32>} : memref<16x32xf32, #tpu.memory_space<vmem>>, vector<8x8xf32>,
    %469 = vector.extract_strided_slice %308 {offsets = [8, 24], sizes = [8, 8], strides = [1, 1]} : vector<16x32xf32> to vector<8x8xf32>
    %470 = vector.extract_strided_slice %316 {offsets = [8, 24], sizes = [8, 8], strides = [1, 1]} : vector<16x32xf32> to vector<8x8xf32>
    %471 = vector.extract_strided_slice %324 {offsets = [8, 24], sizes = [8, 8], strides = [1, 1]} : vector<16x32xf32> to vector<8x8xf32>
    %cst_219 = arith.constant dense<0.000000e+00> : vector<8x8xf32>
    %472 = tpu.matmul %469, %470, %cst_219 {dimension_numbers = #tpu.dot_dimension_numbers<[1], [1], [0], [0], [0, 0, 1, 0], [], []>} : vector<8x8xf32>, vector<8x8xf32>, vector<8x8xf32> -> vector<8x8xf32>
    %cst_220 = arith.constant 0.353553385 : f32
    %473 = vector.broadcast %cst_220 : f32 to vector<8x8xf32>
    %474 = arith.mulf %472, %473 : vector<8x8xf32>
    %475 = vector.broadcast %408 : vector<1x8xf32> to vector<8x8xf32>
    %476 = arith.addf %474, %475 : vector<8x8xf32>
    %cst_221 = arith.constant dense<0xFF800000> : vector<8xf32>
    %477 = vector.multi_reduction <maximumf>, %476, %cst_221 [1] : vector<8x8xf32> to vector<8xf32>
    %478 = vector.shape_cast %477 : vector<8xf32> to vector<8x1xf32>
    %479 = vector.broadcast %478 : vector<8x1xf32> to vector<8x8xf32>
    %480 = arith.subf %476, %479 : vector<8x8xf32>
    %481 = math.exp %480 : vector<8x8xf32>
    %cst_222 = arith.constant dense<0.000000e+00> : vector<8xf32>
    %482 = vector.multi_reduction <add>, %481, %cst_222 [1] : vector<8x8xf32> to vector<8xf32>
    %483 = vector.shape_cast %482 : vector<8xf32> to vector<8x1xf32>
    %484 = tpu.reciprocal %483 {approx = true} : vector<8x1xf32> -> vector<8x1xf32>
    %485 = vector.broadcast %484 : vector<8x1xf32> to vector<8x8xf32>
    %486 = arith.mulf %481, %485 : vector<8x8xf32>
    %cst_223 = arith.constant dense<0.000000e+00> : vector<8x8xf32>
    %487 = tpu.matmul %486, %471, %cst_223 {dimension_numbers = #tpu.dot_dimension_numbers<[1], [0], [0], [1], [0, 0, 1, 1], [], []>} : vector<8x8xf32>, vector<8x8xf32>, vector<8x8xf32> -> vector<8x8xf32>
    %c8_224 = arith.constant 8 : index
    %c24_225 = arith.constant 24 : index
    %488 = vector.load %arg24[%c8_224, %c24_225] : memref<16x32xf32, #tpu.memory_space<vmem>>, vector<8x8xf32>
    tpu.vector_store %arg24[%c8_224, %c24_225], %487 {strides = array<i32>} : memref<16x32xf32, #tpu.memory_space<vmem>>, vector<8x8xf32>,
    %c0_226 = arith.constant 0 : index
    %c0_227 = arith.constant 0 : index
    %489 = vector.load %arg24[%c0_226, %c0_227] : memref<16x32xf32, #tpu.memory_space<vmem>>, vector<16x32xf32>
    %c1_228 = arith.constant 1 : index
    %c0_229 = arith.constant 0 : index
    %c0_230 = arith.constant 0 : index
    %490 = vector.load %arg15[%c1_228, %c0_229, %c0_230] : memref<2x32x32xbf16, #tpu.memory_space<vmem>>, vector<1x32x32xbf16>
    %491 = vector.shape_cast %490 : vector<1x32x32xbf16> to vector<32x32xbf16>
    %c1_231 = arith.constant 1 : index
    %c0_232 = arith.constant 0 : index
    %c0_233 = arith.constant 0 : index
    %492 = vector.load %arg16[%c1_231, %c0_232, %c0_233] : memref<2x1x32xf32, #tpu.memory_space<vmem>>, vector<1x1x32xf32>
    %493 = vector.shape_cast %492 : vector<1x1x32xf32> to vector<1x32xf32>
    %494 = arith.truncf %489 : vector<16x32xf32> to vector<16x32xbf16>
    %cst_234 = arith.constant dense<0.000000e+00> : vector<16x32xf32>
    %495 = tpu.matmul %494, %491, %cst_234 {dimension_numbers = #tpu.dot_dimension_numbers<[1], [0], [0], [1], [0, 0, 1, 1], [], []>} : vector<16x32xbf16>, vector<32x32xbf16>, vector<16x32xf32> -> vector<16x32xf32>
    %496 = vector.broadcast %493 : vector<1x32xf32> to vector<16x32xf32>
    %497 = arith.addf %495, %496 : vector<16x32xf32>
    %498 = arith.addf %275, %497 : vector<16x32xf32>
    %c1_235 = arith.constant 1 : index
    %c0_236 = arith.constant 0 : index
    %c0_237 = arith.constant 0 : index
    %499 = vector.load %arg7[%c1_235, %c0_236, %c0_237] : memref<2x1x32xf32, #tpu.memory_space<vmem>>, vector<1x1x32xf32>
    %500 = vector.shape_cast %499 : vector<1x1x32xf32> to vector<1x32xf32>
    %c1_238 = arith.constant 1 : index
    %c0_239 = arith.constant 0 : index
    %c0_240 = arith.constant 0 : index
    %501 = vector.load %arg8[%c1_238, %c0_239, %c0_240] : memref<2x1x32xf32, #tpu.memory_space<vmem>>, vector<1x1x32xf32>
    %502 = vector.shape_cast %501 : vector<1x1x32xf32> to vector<1x32xf32>
    %cst_241 = arith.constant dense<0.000000e+00> : vector<16xf32>
    %503 = vector.multi_reduction <add>, %498, %cst_241 [1] : vector<16x32xf32> to vector<16xf32>
    %504 = vector.shape_cast %503 : vector<16xf32> to vector<16x1xf32>
    %cst_242 = arith.constant 3.200000e+01 : f32
    %505 = vector.broadcast %cst_242 : f32 to vector<16x1xf32>
    %506 = arith.divf %504, %505 : vector<16x1xf32>
    %507 = vector.broadcast %506 : vector<16x1xf32> to vector<16x32xf32>
    %508 = arith.subf %498, %507 : vector<16x32xf32>
    %509 = arith.mulf %508, %508 : vector<16x32xf32>
    %cst_243 = arith.constant dense<0.000000e+00> : vector<16xf32>
    %510 = vector.multi_reduction <add>, %509, %cst_243 [1] : vector<16x32xf32> to vector<16xf32>
    %511 = vector.shape_cast %510 : vector<16xf32> to vector<16x1xf32>
    %cst_244 = arith.constant 3.100000e+01 : f32
    %512 = vector.broadcast %cst_244 : f32 to vector<16x1xf32>
    %513 = arith.divf %511, %512 : vector<16x1xf32>
    %514 = math.sqrt %513 : vector<16x1xf32>
    %cst_245 = arith.constant 9.99999997E-7 : f32
    %515 = vector.broadcast %cst_245 : f32 to vector<16x1xf32>
    %516 = arith.addf %514, %515 : vector<16x1xf32>
    %517 = tpu.reciprocal %516 {approx = true} : vector<16x1xf32> -> vector<16x1xf32>
    %518 = vector.broadcast %500 : vector<1x32xf32> to vector<16x32xf32>
    %519 = arith.mulf %518, %508 : vector<16x32xf32>
    %520 = vector.broadcast %517 : vector<16x1xf32> to vector<16x32xf32>
    %521 = arith.mulf %519, %520 : vector<16x32xf32>
    %522 = vector.broadcast %502 : vector<1x32xf32> to vector<16x32xf32>
    %523 = arith.addf %521, %522 : vector<16x32xf32>
    %c1_246 = arith.constant 1 : index
    %c0_247 = arith.constant 0 : index
    %c0_248 = arith.constant 0 : index
    %524 = vector.load %arg17[%c1_246, %c0_247, %c0_248] : memref<2x32x2048xbf16, #tpu.memory_space<vmem>>, vector<1x32x2048xbf16>
    %525 = vector.shape_cast %524 : vector<1x32x2048xbf16> to vector<32x2048xbf16>
    %c1_249 = arith.constant 1 : index
    %c0_250 = arith.constant 0 : index
    %c0_251 = arith.constant 0 : index
    %526 = vector.load %arg18[%c1_249, %c0_250, %c0_251] : memref<2x1x2048xf32, #tpu.memory_space<vmem>>, vector<1x1x2048xf32>
    %527 = vector.shape_cast %526 : vector<1x1x2048xf32> to vector<1x2048xf32>
    %528 = arith.truncf %523 : vector<16x32xf32> to vector<16x32xbf16>
    %cst_252 = arith.constant dense<0.000000e+00> : vector<16x2048xf32>
    %529 = tpu.matmul %528, %525, %cst_252 {dimension_numbers = #tpu.dot_dimension_numbers<[1], [0], [0], [1], [0, 0, 1, 1], [], []>} : vector<16x32xbf16>, vector<32x2048xbf16>, vector<16x2048xf32> -> vector<16x2048xf32>
    %530 = vector.broadcast %527 : vector<1x2048xf32> to vector<16x2048xf32>
    %531 = arith.addf %529, %530 : vector<16x2048xf32>
    %cst_253 = arith.constant 0.000000e+00 : f32
    %532 = vector.broadcast %cst_253 : f32 to vector<16x2048xf32>
    %533 = arith.maximumf %531, %532 : vector<16x2048xf32>
    %c1_254 = arith.constant 1 : index
    %c0_255 = arith.constant 0 : index
    %c0_256 = arith.constant 0 : index
    %534 = vector.load %arg19[%c1_254, %c0_255, %c0_256] : memref<2x2048x32xbf16, #tpu.memory_space<vmem>>, vector<1x2048x32xbf16>
    %535 = vector.shape_cast %534 : vector<1x2048x32xbf16> to vector<2048x32xbf16>
    %c1_257 = arith.constant 1 : index
    %c0_258 = arith.constant 0 : index
    %c0_259 = arith.constant 0 : index
    %536 = vector.load %arg20[%c1_257, %c0_258, %c0_259] : memref<2x1x32xf32, #tpu.memory_space<vmem>>, vector<1x1x32xf32>
    %537 = vector.shape_cast %536 : vector<1x1x32xf32> to vector<1x32xf32>
    %538 = arith.truncf %533 : vector<16x2048xf32> to vector<16x2048xbf16>
    %cst_260 = arith.constant dense<0.000000e+00> : vector<16x32xf32>
    %539 = tpu.matmul %538, %535, %cst_260 {dimension_numbers = #tpu.dot_dimension_numbers<[1], [0], [0], [1], [0, 0, 1, 1], [], []>} : vector<16x2048xbf16>, vector<2048x32xbf16>, vector<16x32xf32> -> vector<16x32xf32>
    %540 = vector.broadcast %537 : vector<1x32xf32> to vector<16x32xf32>
    %541 = arith.addf %539, %540 : vector<16x32xf32>
    %542 = arith.addf %498, %541 : vector<16x32xf32>
    %c0_261 = arith.constant 0 : index
    %c0_262 = arith.constant 0 : index
    %543 = vector.load %arg21[%c0_261, %c0_262] : memref<1x32xf32, #tpu.memory_space<vmem>>, vector<1x32xf32>
    %c0_263 = arith.constant 0 : index
    %c0_264 = arith.constant 0 : index
    %544 = vector.load %arg22[%c0_263, %c0_264] : memref<1x32xf32, #tpu.memory_space<vmem>>, vector<1x32xf32>
    %cst_265 = arith.constant dense<0.000000e+00> : vector<16xf32>
    %545 = vector.multi_reduction <add>, %542, %cst_265 [1] : vector<16x32xf32> to vector<16xf32>
    %546 = vector.shape_cast %545 : vector<16xf32> to vector<16x1xf32>
    %cst_266 = arith.constant 3.200000e+01 : f32
    %547 = vector.broadcast %cst_266 : f32 to vector<16x1xf32>
    %548 = arith.divf %546, %547 : vector<16x1xf32>
    %549 = vector.broadcast %548 : vector<16x1xf32> to vector<16x32xf32>
    %550 = arith.subf %542, %549 : vector<16x32xf32>
    %551 = arith.mulf %550, %550 : vector<16x32xf32>
    %cst_267 = arith.constant dense<0.000000e+00> : vector<16xf32>
    %552 = vector.multi_reduction <add>, %551, %cst_267 [1] : vector<16x32xf32> to vector<16xf32>
    %553 = vector.shape_cast %552 : vector<16xf32> to vector<16x1xf32>
    %cst_268 = arith.constant 3.100000e+01 : f32
    %554 = vector.broadcast %cst_268 : f32 to vector<16x1xf32>
    %555 = arith.divf %553, %554 : vector<16x1xf32>
    %556 = math.sqrt %555 : vector<16x1xf32>
    %cst_269 = arith.constant 9.99999997E-7 : f32
    %557 = vector.broadcast %cst_269 : f32 to vector<16x1xf32>
    %558 = arith.addf %556, %557 : vector<16x1xf32>
    %559 = tpu.reciprocal %558 {approx = true} : vector<16x1xf32> -> vector<16x1xf32>
    %560 = vector.broadcast %543 : vector<1x32xf32> to vector<16x32xf32>
    %561 = arith.mulf %560, %550 : vector<16x32xf32>
    %562 = vector.broadcast %559 : vector<16x1xf32> to vector<16x32xf32>
    %563 = arith.mulf %561, %562 : vector<16x32xf32>
    %564 = vector.broadcast %544 : vector<1x32xf32> to vector<16x32xf32>
    %565 = arith.addf %563, %564 : vector<16x32xf32>
    %c0_270 = arith.constant 0 : index
    %c0_271 = arith.constant 0 : index
    %566 = vector.load %arg23[%c0_270, %c0_271] : memref<16x32xf32, #tpu.memory_space<vmem>>, vector<16x32xf32>
    tpu.vector_store %arg23[%c0_270, %c0_271], %565 {strides = array<i32>} : memref<16x32xf32, #tpu.memory_space<vmem>>, vector<16x32xf32>,
    return
  }
}

</mosaic_0001>

<llo_original>
// kernel: encoder_forward.1
$region0: #{encoder_forward.1}
  #allocation0 [shape = 'u32[]', space=smem, size = 0x4, offset = 0x4, fixed_abs, tag = 'smem constant byte address 0x4 - core index']
  #allocation1 [shape = 'u32[144,128]{1,0:T(1,128)}', space=vmem, size = 0x12000, scoped, tag = 'internal scratch']
  #allocation2 [shape = 'f32[16,32]{1,0:T(8,128)}', space=vmem, size = 0x2000, scoped, tag = 'scratch operand']
  %s0 = inlined_call_operand.vmem [shape: f32[16,16], index: 0, kind: input, shape index: {}]
  %s1 = inlined_call_operand.vmem [shape: f32[16,32], index: 1, kind: input, shape index: {}]
  %s2 = inlined_call_operand.vmem [shape: f32[2,1,8], index: 2, kind: input, shape index: {}]
  %s3 = inlined_call_operand.vmem [shape: bf16[16,32], index: 3, kind: input, shape index: {}]
  %s4 = inlined_call_operand.vmem [shape: f32[1,32], index: 4, kind: input, shape index: {}]
  %s5 = inlined_call_operand.vmem [shape: f32[2,1,32], index: 5, kind: input, shape index: {}]
  %s6 = inlined_call_operand.vmem [shape: f32[2,1,32], index: 6, kind: input, shape index: {}]
  %s7 = inlined_call_operand.vmem [shape: f32[2,1,32], index: 7, kind: input, shape index: {}]
  %s8 = inlined_call_operand.vmem [shape: f32[2,1,32], index: 8, kind: input, shape index: {}]
  %s9 = inlined_call_operand.vmem [shape: bf16[2,32,32], index: 9, kind: input, shape index: {}]
  %s10 = inlined_call_operand.vmem [shape: f32[2,1,32], index: 10, kind: input, shape index: {}]
  %s11 = inlined_call_operand.vmem [shape: bf16[2,32,32], index: 11, kind: input, shape index: {}]
  %s12 = inlined_call_operand.vmem [shape: f32[2,1,32], index: 12, kind: input, shape index: {}]
  %s13 = inlined_call_operand.vmem [shape: bf16[2,32,32], index: 13, kind: input, shape index: {}]
  %s14 = inlined_call_operand.vmem [shape: f32[2,1,32], index: 14, kind: input, shape index: {}]
  %s15 = inlined_call_operand.vmem [shape: bf16[2,32,32], index: 15, kind: input, shape index: {}]
  %s16 = inlined_call_operand.vmem [shape: f32[2,1,32], index: 16, kind: input, shape index: {}]
  %s17 = inlined_call_operand.vmem [shape: bf16[2,32,2048], index: 17, kind: input, shape index: {}]
  %s18 = inlined_call_operand.vmem [shape: f32[2,1,2048], index: 18, kind: input, shape index: {}]
  %s19 = inlined_call_operand.vmem [shape: bf16[2,2048,32], index: 19, kind: input, shape index: {}]
  %s20 = inlined_call_operand.vmem [shape: f32[2,1,32], index: 20, kind: input, shape index: {}]
  %s21 = inlined_call_operand.vmem [shape: f32[1,32], index: 21, kind: input, shape index: {}]
  %s22 = inlined_call_operand.vmem [shape: f32[1,32], index: 22, kind: input, shape index: {}]
  %s23 = inlined_call_operand.hbm [shape: f32[16,32], index: 23, kind: output, shape index: {}]
  %s24 = sld [smem:[#allocation0]]
  $region102: #{encoder_forward.1} parent=0
    _
  %s26 = ssub.s32 1, %s24
  %s27 = scalar_select 0, %s26, %s24
  $region1: #{encoder_forward.1} parent=0
    #allocation3 [shape = 'u8[8192]{0}', space=vmem, size = 0x2000, scoped, tag = 'output window, operand 0, single buffered']
    #allocation4 [shape = 's32[1]{0}', space=sflag, size = 0x4, scoped, tag = 'scoped memory for encoder_forward.1']
    %28 = vsyncpa [#allocation4], 0
    // Predicated region
    $region2: #{encoder_forward.1} parent=1 // pred_check
      _
    $region3: #{encoder_forward.1} parent=1 // pred_check_branch
      %30 = sbr.rel (0) target = $region5
    $region4: #{encoder_forward.1} parent=1 // pred_region
      _
    $region5: #{encoder_forward.1} parent=1 // pred_fallthru
      _
    // Predicated region
    $region6: #{encoder_forward.1} parent=1 // pred_check
      _
    $region7: #{encoder_forward.1} parent=1 // pred_check_branch
      %32 = sbr.rel (0) target = $region9
    $region8: #{encoder_forward.1} parent=1 // pred_region
      _
    $region9: #{encoder_forward.1} parent=1 // pred_fallthru
      _
    // Predicated region
    $region10: #{encoder_forward.1} parent=1 // pred_check
      _
    $region11: #{encoder_forward.1} parent=1 // pred_check_branch
      %34 = sbr.rel (0) target = $region13
    $region12: #{encoder_forward.1} parent=1 // pred_region
      _
    $region13: #{encoder_forward.1} parent=1 // pred_fallthru
      _
    // Predicated region
    $region14: #{encoder_forward.1} parent=1 // pred_check
      _
    $region15: #{encoder_forward.1} parent=1 // pred_check_branch
      %36 = sbr.rel (0) target = $region17
    $region16: #{encoder_forward.1} parent=1 // pred_region
      _
    $region17: #{encoder_forward.1} parent=1 // pred_fallthru
      _
    // Predicated region
    $region18: #{encoder_forward.1} parent=1 // pred_check
      _
    $region19: #{encoder_forward.1} parent=1 // pred_check_branch
      %38 = sbr.rel (0) target = $region21
    $region20: #{encoder_forward.1} parent=1 // pred_region
      _
    $region21: #{encoder_forward.1} parent=1 // pred_fallthru
      _
    // Predicated region
    $region22: #{encoder_forward.1} parent=1 // pred_check
      _
    $region23: #{encoder_forward.1} parent=1 // pred_check_branch
      %40 = sbr.rel (0) target = $region25
    $region24: #{encoder_forward.1} parent=1 // pred_region
      _
    $region25: #{encoder_forward.1} parent=1 // pred_fallthru
      _
    // Predicated region
    $region26: #{encoder_forward.1} parent=1 // pred_check
      _
    $region27: #{encoder_forward.1} parent=1 // pred_check_branch
      %42 = sbr.rel (0) target = $region29
    $region28: #{encoder_forward.1} parent=1 // pred_region
      _
    $region29: #{encoder_forward.1} parent=1 // pred_fallthru
      _
    // Predicated region
    $region30: #{encoder_forward.1} parent=1 // pred_check
      _
    $region31: #{encoder_forward.1} parent=1 // pred_check_branch
      %44 = sbr.rel (0) target = $region33
    $region32: #{encoder_forward.1} parent=1 // pred_region
      _
    $region33: #{encoder_forward.1} parent=1 // pred_fallthru
      _
    // Predicated region
    $region34: #{encoder_forward.1} parent=1 // pred_check
      _
    $region35: #{encoder_forward.1} parent=1 // pred_check_branch
      %46 = sbr.rel (0) target = $region37
    $region36: #{encoder_forward.1} parent=1 // pred_region
      _
    $region37: #{encoder_forward.1} parent=1 // pred_fallthru
      _
    // Predicated region
    $region38: #{encoder_forward.1} parent=1 // pred_check
      _
    $region39: #{encoder_forward.1} parent=1 // pred_check_branch
      %48 = sbr.rel (0) target = $region41
    $region40: #{encoder_forward.1} parent=1 // pred_region
      _
    $region41: #{encoder_forward.1} parent=1 // pred_fallthru
      _
    // Predicated region
    $region42: #{encoder_forward.1} parent=1 // pred_check
      _
    $region43: #{encoder_forward.1} parent=1 // pred_check_branch
      %50 = sbr.rel (0) target = $region45
    $region44: #{encoder_forward.1} parent=1 // pred_region
      _
    $region45: #{encoder_forward.1} parent=1 // pred_fallthru
      _
    // Predicated region
    $region46: #{encoder_forward.1} parent=1 // pred_check
      _
    $region47: #{encoder_forward.1} parent=1 // pred_check_branch
      %52 = sbr.rel (0) target = $region49
    $region48: #{encoder_forward.1} parent=1 // pred_region
      _
    $region49: #{encoder_forward.1} parent=1 // pred_fallthru
      _
    // Predicated region
    $region50: #{encoder_forward.1} parent=1 // pred_check
      _
    $region51: #{encoder_forward.1} parent=1 // pred_check_branch
      %54 = sbr.rel (0) target = $region53
    $region52: #{encoder_forward.1} parent=1 // pred_region
      _
    $region53: #{encoder_forward.1} parent=1 // pred_fallthru
      _
    // Predicated region
    $region54: #{encoder_forward.1} parent=1 // pred_check
      _
    $region55: #{encoder_forward.1} parent=1 // pred_check_branch
      %56 = sbr.rel (0) target = $region57
    $region56: #{encoder_forward.1} parent=1 // pred_region
      _
    $region57: #{encoder_forward.1} parent=1 // pred_fallthru
      _
    // Predicated region
    $region58: #{encoder_forward.1} parent=1 // pred_check
      _
    $region59: #{encoder_forward.1} parent=1 // pred_check_branch
      %58 = sbr.rel (0) target = $region61
    $region60: #{encoder_forward.1} parent=1 // pred_region
      _
    $region61: #{encoder_forward.1} parent=1 // pred_fallthru
      _
    // Predicated region
    $region62: #{encoder_forward.1} parent=1 // pred_check
      _
    $region63: #{encoder_forward.1} parent=1 // pred_check_branch
      %60 = sbr.rel (0) target = $region65
    $region64: #{encoder_forward.1} parent=1 // pred_region
      _
    $region65: #{encoder_forward.1} parent=1 // pred_fallthru
      _
    // Predicated region
    $region66: #{encoder_forward.1} parent=1 // pred_check
      _
    $region67: #{encoder_forward.1} parent=1 // pred_check_branch
      %62 = sbr.rel (0) target = $region69
    $region68: #{encoder_forward.1} parent=1 // pred_region
      _
    $region69: #{encoder_forward.1} parent=1 // pred_fallthru
      _
    // Predicated region
    $region70: #{encoder_forward.1} parent=1 // pred_check
      _
    $region71: #{encoder_forward.1} parent=1 // pred_check_branch
      %64 = sbr.rel (0) target = $region73
    $region72: #{encoder_forward.1} parent=1 // pred_region
      _
    $region73: #{encoder_forward.1} parent=1 // pred_fallthru
      _
    // Predicated region
    $region74: #{encoder_forward.1} parent=1 // pred_check
      _
    $region75: #{encoder_forward.1} parent=1 // pred_check_branch
      %66 = sbr.rel (0) target = $region77
    $region76: #{encoder_forward.1} parent=1 // pred_region
      _
    $region77: #{encoder_forward.1} parent=1 // pred_fallthru
      _
    // Predicated region
    $region78: #{encoder_forward.1} parent=1 // pred_check
      _
    $region79: #{encoder_forward.1} parent=1 // pred_check_branch
      %68 = sbr.rel (0) target = $region81
    $region80: #{encoder_forward.1} parent=1 // pred_region
      _
    $region81: #{encoder_forward.1} parent=1 // pred_fallthru
      _
    // Predicated region
    $region82: #{encoder_forward.1} parent=1 // pred_check
      _
    $region83: #{encoder_forward.1} parent=1 // pred_check_branch
      %70 = sbr.rel (0) target = $region85
    $region84: #{encoder_forward.1} parent=1 // pred_region
      _
    $region85: #{encoder_forward.1} parent=1 // pred_fallthru
      _
    // Predicated region
    $region86: #{encoder_forward.1} parent=1 // pred_check
      _
    $region87: #{encoder_forward.1} parent=1 // pred_check_branch
      %72 = sbr.rel (0) target = $region89
    $region88: #{encoder_forward.1} parent=1 // pred_region
      _
    $region89: #{encoder_forward.1} parent=1 // pred_fallthru
      _
    // Predicated region
    $region90: #{encoder_forward.1} parent=1 // pred_check
      _
    $region91: #{encoder_forward.1} parent=1 // pred_check_branch
      %74 = sbr.rel (0) target = $region93
    $region92: #{encoder_forward.1} parent=1 // pred_region
      _
    $region93: #{encoder_forward.1} parent=1 // pred_fallthru
      _
    %v76 = vld [vmem:[%s0] sm:$0xff]
    %v77 = vld [vmem:[%s0 + $0x8] sm:$0xff]
    %v78 = vld [vmem:[%s3] sm:$0xf]
    %v79 = vld [vmem:[%s3 + $0x4] sm:$0xf]
    %v80 = vld [vmem:[%s4] sm:$0x1]
    %v81 = vpack.c.bf16 %v77, %v76
    %v83 = vlaneseq
    %v84 = vshrl.u32 %v83, 7
    %v85 = vsub.s32 0, %v84
    %v86 = vrot.slane %v80, %v85
    %v90 = vunpack.c.l.b16 %v78
    %v91 = vunpack.c.l.b16 %v79
    %v92 = vpack.c.b16 %v91, %v90
    %vm94 = vcmask 130048
    %v96 = vsel %vm94, %v81, 0
    %98 = vmatprep.subr.bf16.mxu0 0
    %99 = vmatpush1.bf16.msra.mxu0 %v92
    %100 = vmatprep.subr.bf16.mxu0 0
    %101 = vmatpush1.bf16.msra.mxu0 0
    %102 = vmatprep.subr.bf16.mxu0 0
    %103 = vmatpush1.bf16.msra.mxu0 0
    %104 = vmatprep.subr.bf16.mxu0 0
    %105 = vmatpush1.bf16.msra.mxu0 0
    %106 = vmatprep.subr.bf16.mxu0 0
    %107 = vmatpush1.bf16.msra.mxu0 0
    %108 = vmatprep.subr.bf16.mxu0 0
    %109 = vmatpush1.bf16.msra.mxu0 0
    %110 = vmatprep.subr.bf16.mxu0 0
    %111 = vmatpush1.bf16.msra.mxu0 0
    %112 = vmatprep.subr.bf16.mxu0 0
    %113 = vmatpush1.bf16.msra.mxu0 0
    %114 = vmatprep.subr.bf16.mxu0 0
    %115 = vmatpush1.bf16.msra.mxu0 0
    %116 = vmatprep.subr.bf16.mxu0 0
    %117 = vmatpush1.bf16.msra.mxu0 0
    %118 = vmatprep.subr.bf16.mxu0 0
    %119 = vmatpush1.bf16.msra.mxu0 0
    %120 = vmatprep.subr.bf16.mxu0 0
    %121 = vmatpush1.bf16.msra.mxu0 0
    %122 = vmatprep.subr.bf16.mxu0 0
    %123 = vmatpush1.bf16.msra.mxu0 0
    %124 = vmatprep.subr.bf16.mxu0 0
    %125 = vmatpush1.bf16.msra.mxu0 0
    %126 = vmatprep.subr.bf16.mxu0 0
    %127 = vmatpush1.bf16.msra.mxu0 0
    %128 = vmatprep.subr.bf16.mxu0 0
    %129 = vmatpush1.bf16.msra.mxu0 0
    %130 = vmatprep.mubr.bf16.mxu0 0
    %131 = vmatmul.mubr.bf16.gmra.mrb[0].mxu0 %v96
    %v132 = vpop.f32.mrb[0].mxu0
    %v133 = vadd.f32 %v86, %v132
    %v134 = vpop.f32.mrb[0].mxu0
    %v135 = vpop.f32.mrb[0].mxu0
    %v136 = vadd.f32 %v86, %v135
    %v137 = vpop.f32.mrb[0].mxu0
    %138 = vdwg.mxu0
    %v139 = vld [vmem:[%s1] sm:$0xff]
    %v140 = vld [vmem:[%s1 + $0x8] sm:$0xff]
    %v141 = vadd.f32 %v133, %v139
    %v142 = vadd.f32 %v136, %v140
    %v143 = vld [vmem:[%s5] sm:$0x1]
    %v144 = vld [vmem:[%s6] sm:$0x1]
    %vm145 = vcmask 261120
    %v146 = vsel %vm145, %v141, 0.0
    %147 = vadd.xlane.f32.xlu0 %v146
    %v148 = vpop.xlane.xlu0 %147
    %v149 = vsel %vm145, %v142, 0.0
    %150 = vadd.xlane.f32.xlu0 %v149
    %v151 = vpop.xlane.xlu0 %150
    %v152 = vrcp.pop 32.0
    %v153 = vmul.f32 %v148, %v152
    %v154 = vmul.f32 %v151, %v152
    %v155 = vsub.f32 %v141, %v153
    %v156 = vsub.f32 %v142, %v154
    %v157 = vmul.f32 %v155, %v155
    %v158 = vmul.f32 %v156, %v156
    %v159 = vsel %vm145, %v157, 0.0
    %160 = vadd.xlane.f32.xlu0 %v159
    %v161 = vpop.xlane.xlu0 %160
    %v162 = vsel %vm145, %v158, 0.0
    %163 = vadd.xlane.f32.xlu0 %v162
    %v164 = vpop.xlane.xlu0 %163
    %v165 = vrcp.pop 31.0
    %v166 = vmul.f32 %v161, %v165
    %v167 = vmul.f32 %v164, %v165
    %v168 = vrsqrt.pop %v166
    %v169 = vmul.f32 %v166, %v168
    %vm170 = vcmp.eq.f32.partialorder %v166, inf
    %v171 = vsel %vm170, %v166, %v169
    %vm172 = vcmp.eq.f32.partialorder %v166, 0.0
    %v173 = vand.u32 %v166, 2147483648
    %v174 = vsel %vm172, %v173, %v171
    %v175 = vrsqrt.pop %v167
    %v176 = vmul.f32 %v167, %v175
    %vm177 = vcmp.eq.f32.partialorder %v167, inf
    %v178 = vsel %vm177, %v167, %v176
    %vm179 = vcmp.eq.f32.partialorder %v167, 0.0
    %v180 = vand.u32 %v167, 2147483648
    %v181 = vsel %vm179, %v180, %v178
    %v182 = vadd.f32 %v174, 1e-06
    %v183 = vadd.f32 %v181, 1e-06
    %v184 = vrcp.pop %v182
    %v185 = vrcp.pop %v183
    %v187 = vlaneseq
    %v188 = vshrl.u32 %v187, 7
    %v189 = vsub.s32 0, %v188
    %v190 = vrot.slane %v143, %v189
    %v192 = vmul.f32 %v190, %v155
    %v193 = vmul.f32 %v190, %v156
    %v194 = vmul.f32 %v192, %v184
    %v195 = vmul.f32 %v193, %v185
    %v197 = vlaneseq
    %v198 = vshrl.u32 %v197, 7
    %v199 = vsub.s32 0, %v198
    %v200 = vrot.slane %v144, %v199
    %v202 = vadd.f32 %v194, %v200
    %v203 = vadd.f32 %v195, %v200
    %v204 = vld [vmem:[%s9] sm:$0xf]
    %v205 = vld [vmem:[%s9 + $0x4] sm:$0xf]
    %v206 = vld [vmem:[%s9 + $0x8] sm:$0xf]
    %v207 = vld [vmem:[%s9 + $0xc] sm:$0xf]
    %v208 = vld [vmem:[%s10] sm:$0x1]
    %v209 = vpack.c.bf16 %v203, %v202
    %v211 = vlaneseq
    %v212 = vshrl.u32 %v211, 7
    %v213 = vsub.s32 0, %v212
    %v214 = vrot.slane %v208, %v213
    %v220 = vunpack.c.l.b16 %v204
    %v221 = vunpack.c.l.b16 %v205
    %v222 = vunpack.c.l.b16 %v206
    %v223 = vunpack.c.l.b16 %v207
    %v224 = vpack.c.b16 %v221, %v220
    %v225 = vpack.c.b16 %v223, %v222
    %v229 = vsel %vm145, %v209, 0
    %231 = vmatprep.subr.bf16.mxu0 0
    %232 = vmatpush1.bf16.msra.mxu0 %v224
    %233 = vmatprep.subr.bf16.mxu0 0
    %234 = vmatpush1.bf16.msra.mxu0 %v225
    %235 = vmatprep.subr.bf16.mxu0 0
    %236 = vmatpush1.bf16.msra.mxu0 0
    %237 = vmatprep.subr.bf16.mxu0 0
    %238 = vmatpush1.bf16.msra.mxu0 0
    %239 = vmatprep.subr.bf16.mxu0 0
    %240 = vmatpush1.bf16.msra.mxu0 0
    %241 = vmatprep.subr.bf16.mxu0 0
    %242 = vmatpush1.bf16.msra.mxu0 0
    %243 = vmatprep.subr.bf16.mxu0 0
    %244 = vmatpush1.bf16.msra.mxu0 0
    %245 = vmatprep.subr.bf16.mxu0 0
    %246 = vmatpush1.bf16.msra.mxu0 0
    %247 = vmatprep.subr.bf16.mxu0 0
    %248 = vmatpush1.bf16.msra.mxu0 0
    %249 = vmatprep.subr.bf16.mxu0 0
    %250 = vmatpush1.bf16.msra.mxu0 0
    %251 = vmatprep.subr.bf16.mxu0 0
    %252 = vmatpush1.bf16.msra.mxu0 0
    %253 = vmatprep.subr.bf16.mxu0 0
    %254 = vmatpush1.bf16.msra.mxu0 0
    %255 = vmatprep.subr.bf16.mxu0 0
    %256 = vmatpush1.bf16.msra.mxu0 0
    %257 = vmatprep.subr.bf16.mxu0 0
    %258 = vmatpush1.bf16.msra.mxu0 0
    %259 = vmatprep.subr.bf16.mxu0 0
    %260 = vmatpush1.bf16.msra.mxu0 0
    %261 = vmatprep.subr.bf16.mxu0 0
    %262 = vmatpush1.bf16.msra.mxu0 0
    %263 = vmatprep.mubr.bf16.mxu0 0
    %264 = vmatmul.mubr.bf16.gmra.mrb[0].mxu0 %v229
    %v265 = vpop.f32.mrb[0].mxu0
    %v266 = vadd.f32 %v214, %v265
    %v267 = vpop.f32.mrb[0].mxu0
    %v268 = vpop.f32.mrb[0].mxu0
    %v269 = vadd.f32 %v214, %v268
    %v270 = vpop.f32.mrb[0].mxu0
    %271 = vdwg.mxu0
    %v272 = vld [vmem:[%s11] sm:$0xf]
    %v273 = vld [vmem:[%s11 + $0x4] sm:$0xf]
    %v274 = vld [vmem:[%s11 + $0x8] sm:$0xf]
    %v275 = vld [vmem:[%s11 + $0xc] sm:$0xf]
    %v276 = vld [vmem:[%s12] sm:$0x1]
    %v278 = vlaneseq
    %v279 = vshrl.u32 %v278, 7
    %v280 = vsub.s32 0, %v279
    %v281 = vrot.slane %v276, %v280
    %v287 = vunpack.c.l.b16 %v272
    %v288 = vunpack.c.l.b16 %v273
    %v289 = vunpack.c.l.b16 %v274
    %v290 = vunpack.c.l.b16 %v275
    %v291 = vpack.c.b16 %v288, %v287
    %v292 = vpack.c.b16 %v290, %v289
    %295 = vmatprep.subr.bf16.mxu0 0
    %296 = vmatpush1.bf16.msra.mxu0 %v291
    %297 = vmatprep.subr.bf16.mxu0 0
    %298 = vmatpush1.bf16.msra.mxu0 %v292
    %299 = vmatprep.subr.bf16.mxu0 0
    %300 = vmatpush1.bf16.msra.mxu0 0
    %301 = vmatprep.subr.bf16.mxu0 0
    %302 = vmatpush1.bf16.msra.mxu0 0
    %303 = vmatprep.subr.bf16.mxu0 0
    %304 = vmatpush1.bf16.msra.mxu0 0
    %305 = vmatprep.subr.bf16.mxu0 0
    %306 = vmatpush1.bf16.msra.mxu0 0
    %307 = vmatprep.subr.bf16.mxu0 0
    %308 = vmatpush1.bf16.msra.mxu0 0
    %309 = vmatprep.subr.bf16.mxu0 0
    %310 = vmatpush1.bf16.msra.mxu0 0
    %311 = vmatprep.subr.bf16.mxu0 0
    %312 = vmatpush1.bf16.msra.mxu0 0
    %313 = vmatprep.subr.bf16.mxu0 0
    %314 = vmatpush1.bf16.msra.mxu0 0
    %315 = vmatprep.subr.bf16.mxu0 0
    %316 = vmatpush1.bf16.msra.mxu0 0
    %317 = vmatprep.subr.bf16.mxu0 0
    %318 = vmatpush1.bf16.msra.mxu0 0
    %319 = vmatprep.subr.bf16.mxu0 0
    %320 = vmatpush1.bf16.msra.mxu0 0
    %321 = vmatprep.subr.bf16.mxu0 0
    %322 = vmatpush1.bf16.msra.mxu0 0
    %323 = vmatprep.subr.bf16.mxu0 0
    %324 = vmatpush1.bf16.msra.mxu0 0
    %325 = vmatprep.subr.bf16.mxu0 0
    %326 = vmatpush1.bf16.msra.mxu0 0
    %327 = vmatprep.mubr.bf16.mxu0 0
    %328 = vmatmul.mubr.bf16.gmra.mrb[0].mxu0 %v229
    %v329 = vpop.f32.mrb[0].mxu0
    %v330 = vadd.f32 %v281, %v329
    %v331 = vpop.f32.mrb[0].mxu0
    %v332 = vpop.f32.mrb[0].mxu0
    %v333 = vadd.f32 %v281, %v332
    %v334 = vpop.f32.mrb[0].mxu0
    %335 = vdwg.mxu0
    %v336 = vld [vmem:[%s13] sm:$0xf]
    %v337 = vld [vmem:[%s13 + $0x4] sm:$0xf]
    %v338 = vld [vmem:[%s13 + $0x8] sm:$0xf]
    %v339 = vld [vmem:[%s13 + $0xc] sm:$0xf]
    %v340 = vld [vmem:[%s14] sm:$0x1]
    %v342 = vlaneseq
    %v343 = vshrl.u32 %v342, 7
    %v344 = vsub.s32 0, %v343
    %v345 = vrot.slane %v340, %v344
    %v351 = vunpack.c.l.b16 %v336
    %v352 = vunpack.c.l.b16 %v337
    %v353 = vunpack.c.l.b16 %v338
    %v354 = vunpack.c.l.b16 %v339
    %v355 = vpack.c.b16 %v352, %v351
    %v356 = vpack.c.b16 %v354, %v353
    %359 = vmatprep.subr.bf16.mxu0 0
    %360 = vmatpush1.bf16.msra.mxu0 %v355
    %361 = vmatprep.subr.bf16.mxu0 0
    %362 = vmatpush1.bf16.msra.mxu0 %v356
    %363 = vmatprep.subr.bf16.mxu0 0
    %364 = vmatpush1.bf16.msra.mxu0 0
    %365 = vmatprep.subr.bf16.mxu0 0
    %366 = vmatpush1.bf16.msra.mxu0 0
    %367 = vmatprep.subr.bf16.mxu0 0
    %368 = vmatpush1.bf16.msra.mxu0 0
    %369 = vmatprep.subr.bf16.mxu0 0
    %370 = vmatpush1.bf16.msra.mxu0 0
    %371 = vmatprep.subr.bf16.mxu0 0
    %372 = vmatpush1.bf16.msra.mxu0 0
    %373 = vmatprep.subr.bf16.mxu0 0
    %374 = vmatpush1.bf16.msra.mxu0 0
    %375 = vmatprep.subr.bf16.mxu0 0
    %376 = vmatpush1.bf16.msra.mxu0 0
    %377 = vmatprep.subr.bf16.mxu0 0
    %378 = vmatpush1.bf16.msra.mxu0 0
    %379 = vmatprep.subr.bf16.mxu0 0
    %380 = vmatpush1.bf16.msra.mxu0 0
    %381 = vmatprep.subr.bf16.mxu0 0
    %382 = vmatpush1.bf16.msra.mxu0 0
    %383 = vmatprep.subr.bf16.mxu0 0
    %384 = vmatpush1.bf16.msra.mxu0 0
    %385 = vmatprep.subr.bf16.mxu0 0
    %386 = vmatpush1.bf16.msra.mxu0 0
    %387 = vmatprep.subr.bf16.mxu0 0
    %388 = vmatpush1.bf16.msra.mxu0 0
    %389 = vmatprep.subr.bf16.mxu0 0
    %390 = vmatpush1.bf16.msra.mxu0 0
    %391 = vmatprep.mubr.bf16.mxu0 0
    %392 = vmatmul.mubr.bf16.gmra.mrb[0].mxu0 %v229
    %v393 = vpop.f32.mrb[0].mxu0
    %v394 = vadd.f32 %v345, %v393
    %v395 = vpop.f32.mrb[0].mxu0
    %v396 = vpop.f32.mrb[0].mxu0
    %v397 = vadd.f32 %v345, %v396
    %v398 = vpop.f32.mrb[0].mxu0
    %399 = vdwg.mxu0
    %v400 = vld [vmem:[%s2] sm:$0x1]
    %vm401 = vcmask 64512
    %v403 = vsel %vm401, %v266, 0
    %v406 = vsel %vm401, %v330, 0
    %408 = vmatprep.subr.mxu0 0.0
    %409 = vmatpush1.xpose.msra.mxu0 %v406
    %410 = vmatprep.subr.mxu0 0.0
    %411 = vmatpush1.xpose.msra.mxu0 0.0
    %412 = vmatprep.subr.mxu0 0.0
    %413 = vmatpush1.xpose.msra.mxu0 0.0
    %414 = vmatprep.subr.mxu0 0.0
    %415 = vmatpush1.xpose.msra.mxu0 0.0
    %416 = vmatprep.subr.mxu0 0.0
    %417 = vmatpush1.xpose.msra.mxu0 0.0
    %418 = vmatprep.subr.mxu0 0.0
    %419 = vmatpush1.xpose.msra.mxu0 0.0
    %420 = vmatprep.subr.mxu0 0.0
    %421 = vmatpush1.xpose.msra.mxu0 0.0
    %422 = vmatprep.subr.mxu0 0.0
    %423 = vmatpush1.xpose.msra.mxu0 0.0
    %424 = vmatprep.subr.mxu0 0.0
    %425 = vmatpush1.xpose.msra.mxu0 0.0
    %426 = vmatprep.subr.mxu0 0.0
    %427 = vmatpush1.xpose.msra.mxu0 0.0
    %428 = vmatprep.subr.mxu0 0.0
    %429 = vmatpush1.xpose.msra.mxu0 0.0
    %430 = vmatprep.subr.mxu0 0.0
    %431 = vmatpush1.xpose.msra.mxu0 0.0
    %432 = vmatprep.subr.mxu0 0.0
    %433 = vmatpush1.xpose.msra.mxu0 0.0
    %434 = vmatprep.subr.mxu0 0.0
    %435 = vmatpush1.xpose.msra.mxu0 0.0
    %436 = vmatprep.subr.mxu0 0.0
    %437 = vmatpush1.xpose.msra.mxu0 0.0
    %438 = vmatprep.subr.mxu0 0.0
    %439 = vmatpush1.xpose.msra.mxu0 0.0
    %440 = vmatprep.subr.mxu0 0.0
    %441 = vmatpush1.xpose.msra.mxu0 0.0
    %442 = vmatprep.subr.mxu0 0.0
    %443 = vmatpush1.xpose.msra.mxu0 0.0
    %444 = vmatprep.subr.mxu0 0.0
    %445 = vmatpush1.xpose.msra.mxu0 0.0
    %446 = vmatprep.subr.mxu0 0.0
    %447 = vmatpush1.xpose.msra.mxu0 0.0
    %448 = vmatprep.subr.mxu0 0.0
    %449 = vmatpush1.xpose.msra.mxu0 0.0
    %450 = vmatprep.subr.mxu0 0.0
    %451 = vmatpush1.xpose.msra.mxu0 0.0
    %452 = vmatprep.subr.mxu0 0.0
    %453 = vmatpush1.xpose.msra.mxu0 0.0
    %454 = vmatprep.subr.mxu0 0.0
    %455 = vmatpush1.xpose.msra.mxu0 0.0
    %456 = vmatprep.subr.mxu0 0.0
    %457 = vmatpush1.xpose.msra.mxu0 0.0
    %458 = vmatprep.subr.mxu0 0.0
    %459 = vmatpush1.xpose.msra.mxu0 0.0
    %460 = vmatprep.subr.mxu0 0.0
    %461 = vmatpush1.xpose.msra.mxu0 0.0
    %462 = vmatprep.subr.mxu0 0.0
    %463 = vmatpush1.xpose.msra.mxu0 0.0
    %464 = vmatprep.subr.mxu0 0.0
    %465 = vmatpush1.xpose.msra.mxu0 0.0
    %466 = vmatprep.subr.mxu0 0.0
    %467 = vmatpush1.xpose.msra.mxu0 0.0
    %468 = vmatprep.subr.mxu0 0.0
    %469 = vmatpush1.xpose.msra.mxu0 0.0
    %470 = vmatprep.subr.mxu0 0.0
    %471 = vmatpush1.xpose.msra.mxu0 0.0
    %472 = vmatprep.mubr.f32.mxu0 0.0
    %473 = vmatmul.mubr.f32.gmra.mrb[0].mxu0 %v403
    %v474 = vpop.f32.mrb[0].mxu0
    %v475 = vadd.f32 0.0, %v474
    %v476 = vpop.f32.mrb[0].mxu0
    %477 = vdwg.mxu0
    %v478 = vmul.f32 %v475, 0.35355338
    %v480 = vlaneseq
    %v481 = vshrl.u32 %v480, 7
    %v482 = vsub.s32 0, %v481
    %v483 = vrot.slane %v400, %v482
    %v485 = vadd.f32 %v478, %v483
    %v486 = vsel %vm401, %v485, -inf
    %487 = vmax.xlane.f32.xlu0 %v486
    %v488 = vpop.xlane.xlu0 %487
    %v489 = vsub.f32 %v485, %v488
    %v490 = vmul.f32 %v489, 1.442695
    %v491 = vpow.pop %v490
    %v492 = vsel %vm401, %v491, 0.0
    %493 = vadd.xlane.f32.xlu0 %v492
    %v494 = vpop.xlane.xlu0 %493
    %v495 = vrcp.pop %v494
    %v496 = vmul.f32 %v491, %v495
    %v498 = vsel %vm401, %v496, 0
    %500 = vmatprep.subr.mxu0 0.0
    %501 = vmatpush1.msra.mxu0 %v394
    %502 = vmatprep.subr.mxu0 0.0
    %503 = vmatpush1.msra.mxu0 0.0
    %504 = vmatprep.subr.mxu0 0.0
    %505 = vmatpush1.msra.mxu0 0.0
    %506 = vmatprep.subr.mxu0 0.0
    %507 = vmatpush1.msra.mxu0 0.0
    %508 = vmatprep.subr.mxu0 0.0
    %509 = vmatpush1.msra.mxu0 0.0
    %510 = vmatprep.subr.mxu0 0.0
    %511 = vmatpush1.msra.mxu0 0.0
    %512 = vmatprep.subr.mxu0 0.0
    %513 = vmatpush1.msra.mxu0 0.0
    %514 = vmatprep.subr.mxu0 0.0
    %515 = vmatpush1.msra.mxu0 0.0
    %516 = vmatprep.subr.mxu0 0.0
    %517 = vmatpush1.msra.mxu0 0.0
    %518 = vmatprep.subr.mxu0 0.0
    %519 = vmatpush1.msra.mxu0 0.0
    %520 = vmatprep.subr.mxu0 0.0
    %521 = vmatpush1.msra.mxu0 0.0
    %522 = vmatprep.subr.mxu0 0.0
    %523 = vmatpush1.msra.mxu0 0.0
    %524 = vmatprep.subr.mxu0 0.0
    %525 = vmatpush1.msra.mxu0 0.0
    %526 = vmatprep.subr.mxu0 0.0
    %527 = vmatpush1.msra.mxu0 0.0
    %528 = vmatprep.subr.mxu0 0.0
    %529 = vmatpush1.msra.mxu0 0.0
    %530 = vmatprep.subr.mxu0 0.0
    %531 = vmatpush1.msra.mxu0 0.0
    %532 = vmatprep.subr.mxu0 0.0
    %533 = vmatpush1.msra.mxu0 0.0
    %534 = vmatprep.subr.mxu0 0.0
    %535 = vmatpush1.msra.mxu0 0.0
    %536 = vmatprep.subr.mxu0 0.0
    %537 = vmatpush1.msra.mxu0 0.0
    %538 = vmatprep.subr.mxu0 0.0
    %539 = vmatpush1.msra.mxu0 0.0
    %540 = vmatprep.subr.mxu0 0.0
    %541 = vmatpush1.msra.mxu0 0.0
    %542 = vmatprep.subr.mxu0 0.0
    %543 = vmatpush1.msra.mxu0 0.0
    %544 = vmatprep.subr.mxu0 0.0
    %545 = vmatpush1.msra.mxu0 0.0
    %546 = vmatprep.subr.mxu0 0.0
    %547 = vmatpush1.msra.mxu0 0.0
    %548 = vmatprep.subr.mxu0 0.0
    %549 = vmatpush1.msra.mxu0 0.0
    %550 = vmatprep.subr.mxu0 0.0
    %551 = vmatpush1.msra.mxu0 0.0
    %552 = vmatprep.subr.mxu0 0.0
    %553 = vmatpush1.msra.mxu0 0.0
    %554 = vmatprep.subr.mxu0 0.0
    %555 = vmatpush1.msra.mxu0 0.0
    %556 = vmatprep.subr.mxu0 0.0
    %557 = vmatpush1.msra.mxu0 0.0
    %558 = vmatprep.subr.mxu0 0.0
    %559 = vmatpush1.msra.mxu0 0.0
    %560 = vmatprep.subr.mxu0 0.0
    %561 = vmatpush1.msra.mxu0 0.0
    %562 = vmatprep.subr.mxu0 0.0
    %563 = vmatpush1.msra.mxu0 0.0
    %564 = vmatprep.mubr.f32.mxu0 0.0
    %565 = vmatmul.mubr.f32.gmra.mrb[0].mxu0 %v498
    %v566 = vpop.f32.mrb[0].mxu0
    %v567 = vadd.f32 0.0, %v566
    %v568 = vpop.f32.mrb[0].mxu0
    %569 = vdwg.mxu0
    %570 = vst.msk [vmem:[#allocation2] sm:$0xff] %vm401, %v567
    %571 = vrot.lane.b32.xlu0 %v266, 120
    %v572 = vpop.permute.xlu0 %571
    %573 = vrot.lane.b32.xlu0 %v330, 120
    %v574 = vpop.permute.xlu0 %573
    %v575 = vsel %vm401, %v572, 0
    %v577 = vsel %vm401, %v574, 0
    %579 = vmatprep.subr.mxu0 0.0
    %580 = vmatpush1.xpose.msra.mxu0 %v577
    %581 = vmatprep.subr.mxu0 0.0
    %582 = vmatpush1.xpose.msra.mxu0 0.0
    %583 = vmatprep.subr.mxu0 0.0
    %584 = vmatpush1.xpose.msra.mxu0 0.0
    %585 = vmatprep.subr.mxu0 0.0
    %586 = vmatpush1.xpose.msra.mxu0 0.0
    %587 = vmatprep.subr.mxu0 0.0
    %588 = vmatpush1.xpose.msra.mxu0 0.0
    %589 = vmatprep.subr.mxu0 0.0
    %590 = vmatpush1.xpose.msra.mxu0 0.0
    %591 = vmatprep.subr.mxu0 0.0
    %592 = vmatpush1.xpose.msra.mxu0 0.0
    %593 = vmatprep.subr.mxu0 0.0
    %594 = vmatpush1.xpose.msra.mxu0 0.0
    %595 = vmatprep.subr.mxu0 0.0
    %596 = vmatpush1.xpose.msra.mxu0 0.0
    %597 = vmatprep.subr.mxu0 0.0
    %598 = vmatpush1.xpose.msra.mxu0 0.0
    %599 = vmatprep.subr.mxu0 0.0
    %600 = vmatpush1.xpose.msra.mxu0 0.0
    %601 = vmatprep.subr.mxu0 0.0
    %602 = vmatpush1.xpose.msra.mxu0 0.0
    %603 = vmatprep.subr.mxu0 0.0
    %604 = vmatpush1.xpose.msra.mxu0 0.0
    %605 = vmatprep.subr.mxu0 0.0
    %606 = vmatpush1.xpose.msra.mxu0 0.0
    %607 = vmatprep.subr.mxu0 0.0
    %608 = vmatpush1.xpose.msra.mxu0 0.0
    %609 = vmatprep.subr.mxu0 0.0
    %610 = vmatpush1.xpose.msra.mxu0 0.0
    %611 = vmatprep.subr.mxu0 0.0
    %612 = vmatpush1.xpose.msra.mxu0 0.0
    %613 = vmatprep.subr.mxu0 0.0
    %614 = vmatpush1.xpose.msra.mxu0 0.0
    %615 = vmatprep.subr.mxu0 0.0
    %616 = vmatpush1.xpose.msra.mxu0 0.0
    %617 = vmatprep.subr.mxu0 0.0
    %618 = vmatpush1.xpose.msra.mxu0 0.0
    %619 = vmatprep.subr.mxu0 0.0
    %620 = vmatpush1.xpose.msra.mxu0 0.0
    %621 = vmatprep.subr.mxu0 0.0
    %622 = vmatpush1.xpose.msra.mxu0 0.0
    %623 = vmatprep.subr.mxu0 0.0
    %624 = vmatpush1.xpose.msra.mxu0 0.0
    %625 = vmatprep.subr.mxu0 0.0
    %626 = vmatpush1.xpose.msra.mxu0 0.0
    %627 = vmatprep.subr.mxu0 0.0
    %628 = vmatpush1.xpose.msra.mxu0 0.0
    %629 = vmatprep.subr.mxu0 0.0
    %630 = vmatpush1.xpose.msra.mxu0 0.0
    %631 = vmatprep.subr.mxu0 0.0
    %632 = vmatpush1.xpose.msra.mxu0 0.0
    %633 = vmatprep.subr.mxu0 0.0
    %634 = vmatpush1.xpose.msra.mxu0 0.0
    %635 = vmatprep.subr.mxu0 0.0
    %636 = vmatpush1.xpose.msra.mxu0 0.0
    %637 = vmatprep.subr.mxu0 0.0
    %638 = vmatpush1.xpose.msra.mxu0 0.0
    %639 = vmatprep.subr.mxu0 0.0
    %640 = vmatpush1.xpose.msra.mxu0 0.0
    %641 = vmatprep.subr.mxu0 0.0
    %642 = vmatpush1.xpose.msra.mxu0 0.0
    %643 = vmatprep.mubr.f32.mxu0 0.0
    %644 = vmatmul.mubr.f32.gmra.mrb[0].mxu0 %v575
    %v645 = vpop.f32.mrb[0].mxu0
    %v646 = vadd.f32 0.0, %v645
    %v647 = vpop.f32.mrb[0].mxu0
    %648 = vdwg.mxu0
    %v649 = vmul.f32 %v646, 0.35355338
    %v650 = vadd.f32 %v649, %v483
    %v651 = vsel %vm401, %v650, -inf
    %652 = vmax.xlane.f32.xlu0 %v651
    %v653 = vpop.xlane.xlu0 %652
    %v654 = vsub.f32 %v650, %v653
    %v655 = vmul.f32 %v654, 1.442695
    %v656 = vpow.pop %v655
    %v657 = vsel %vm401, %v656, 0.0
    %658 = vadd.xlane.f32.xlu0 %v657
    %v659 = vpop.xlane.xlu0 %658
    %v660 = vrcp.pop %v659
    %v661 = vmul.f32 %v656, %v660
    %663 = vrot.lane.b32.xlu0 %v394, 120
    %v664 = vpop.permute.xlu0 %663
    %v667 = vsel %vm401, %v661, 0
    %669 = vmatprep.subr.mxu0 0.0
    %670 = vmatpush1.msra.mxu0 %v664
    %671 = vmatprep.subr.mxu0 0.0
    %672 = vmatpush1.msra.mxu0 0.0
    %673 = vmatprep.subr.mxu0 0.0
    %674 = vmatpush1.msra.mxu0 0.0
    %675 = vmatprep.subr.mxu0 0.0
    %676 = vmatpush1.msra.mxu0 0.0
    %677 = vmatprep.subr.mxu0 0.0
    %678 = vmatpush1.msra.mxu0 0.0
    %679 = vmatprep.subr.mxu0 0.0
    %680 = vmatpush1.msra.mxu0 0.0
    %681 = vmatprep.subr.mxu0 0.0
    %682 = vmatpush1.msra.mxu0 0.0
    %683 = vmatprep.subr.mxu0 0.0
    %684 = vmatpush1.msra.mxu0 0.0
    %685 = vmatprep.subr.mxu0 0.0
    %686 = vmatpush1.msra.mxu0 0.0
    %687 = vmatprep.subr.mxu0 0.0
    %688 = vmatpush1.msra.mxu0 0.0
    %689 = vmatprep.subr.mxu0 0.0
    %690 = vmatpush1.msra.mxu0 0.0
    %691 = vmatprep.subr.mxu0 0.0
    %692 = vmatpush1.msra.mxu0 0.0
    %693 = vmatprep.subr.mxu0 0.0
    %694 = vmatpush1.msra.mxu0 0.0
    %695 = vmatprep.subr.mxu0 0.0
    %696 = vmatpush1.msra.mxu0 0.0
    %697 = vmatprep.subr.mxu0 0.0
    %698 = vmatpush1.msra.mxu0 0.0
    %699 = vmatprep.subr.mxu0 0.0
    %700 = vmatpush1.msra.mxu0 0.0
    %701 = vmatprep.subr.mxu0 0.0
    %702 = vmatpush1.msra.mxu0 0.0
    %703 = vmatprep.subr.mxu0 0.0
    %704 = vmatpush1.msra.mxu0 0.0
    %705 = vmatprep.subr.mxu0 0.0
    %706 = vmatpush1.msra.mxu0 0.0
    %707 = vmatprep.subr.mxu0 0.0
    %708 = vmatpush1.msra.mxu0 0.0
    %709 = vmatprep.subr.mxu0 0.0
    %710 = vmatpush1.msra.mxu0 0.0
    %711 = vmatprep.subr.mxu0 0.0
    %712 = vmatpush1.msra.mxu0 0.0
    %713 = vmatprep.subr.mxu0 0.0
    %714 = vmatpush1.msra.mxu0 0.0
    %715 = vmatprep.subr.mxu0 0.0
    %716 = vmatpush1.msra.mxu0 0.0
    %717 = vmatprep.subr.mxu0 0.0
    %718 = vmatpush1.msra.mxu0 0.0
    %719 = vmatprep.subr.mxu0 0.0
    %720 = vmatpush1.msra.mxu0 0.0
    %721 = vmatprep.subr.mxu0 0.0
    %722 = vmatpush1.msra.mxu0 0.0
    %723 = vmatprep.subr.mxu0 0.0
    %724 = vmatpush1.msra.mxu0 0.0
    %725 = vmatprep.subr.mxu0 0.0
    %726 = vmatpush1.msra.mxu0 0.0
    %727 = vmatprep.subr.mxu0 0.0
    %728 = vmatpush1.msra.mxu0 0.0
    %729 = vmatprep.subr.mxu0 0.0
    %730 = vmatpush1.msra.mxu0 0.0
    %731 = vmatprep.subr.mxu0 0.0
    %732 = vmatpush1.msra.mxu0 0.0
    %733 = vmatprep.mubr.f32.mxu0 0.0
    %734 = vmatmul.mubr.f32.gmra.mrb[0].mxu0 %v667
    %v735 = vpop.f32.mrb[0].mxu0
    %v736 = vadd.f32 0.0, %v735
    %v737 = vpop.f32.mrb[0].mxu0
    %738 = vdwg.mxu0
    %740 = vrot.lane.b32.xlu0 %v736, 8
    %v741 = vpop.permute.xlu0 %740
    %vm743 = vcmask 130112
    %744 = vst.msk [vmem:[#allocation2] sm:$0xff] %vm743, %v741
    %745 = vrot.lane.b32.xlu0 %v266, 112
    %v746 = vpop.permute.xlu0 %745
    %747 = vrot.lane.b32.xlu0 %v330, 112
    %v748 = vpop.permute.xlu0 %747
    %v749 = vsel %vm401, %v746, 0
    %v751 = vsel %vm401, %v748, 0
    %753 = vmatprep.subr.mxu0 0.0
    %754 = vmatpush1.xpose.msra.mxu0 %v751
    %755 = vmatprep.subr.mxu0 0.0
    %756 = vmatpush1.xpose.msra.mxu0 0.0
    %757 = vmatprep.subr.mxu0 0.0
    %758 = vmatpush1.xpose.msra.mxu0 0.0
    %759 = vmatprep.subr.mxu0 0.0
    %760 = vmatpush1.xpose.msra.mxu0 0.0
    %761 = vmatprep.subr.mxu0 0.0
    %762 = vmatpush1.xpose.msra.mxu0 0.0
    %763 = vmatprep.subr.mxu0 0.0
    %764 = vmatpush1.xpose.msra.mxu0 0.0
    %765 = vmatprep.subr.mxu0 0.0
    %766 = vmatpush1.xpose.msra.mxu0 0.0
    %767 = vmatprep.subr.mxu0 0.0
    %768 = vmatpush1.xpose.msra.mxu0 0.0
    %769 = vmatprep.subr.mxu0 0.0
    %770 = vmatpush1.xpose.msra.mxu0 0.0
    %771 = vmatprep.subr.mxu0 0.0
    %772 = vmatpush1.xpose.msra.mxu0 0.0
    %773 = vmatprep.subr.mxu0 0.0
    %774 = vmatpush1.xpose.msra.mxu0 0.0
    %775 = vmatprep.subr.mxu0 0.0
    %776 = vmatpush1.xpose.msra.mxu0 0.0
    %777 = vmatprep.subr.mxu0 0.0
    %778 = vmatpush1.xpose.msra.mxu0 0.0
    %779 = vmatprep.subr.mxu0 0.0
    %780 = vmatpush1.xpose.msra.mxu0 0.0
    %781 = vmatprep.subr.mxu0 0.0
    %782 = vmatpush1.xpose.msra.mxu0 0.0
    %783 = vmatprep.subr.mxu0 0.0
    %784 = vmatpush1.xpose.msra.mxu0 0.0
    %785 = vmatprep.subr.mxu0 0.0
    %786 = vmatpush1.xpose.msra.mxu0 0.0
    %787 = vmatprep.subr.mxu0 0.0
    %788 = vmatpush1.xpose.msra.mxu0 0.0
    %789 = vmatprep.subr.mxu0 0.0
    %790 = vmatpush1.xpose.msra.mxu0 0.0
    %791 = vmatprep.subr.mxu0 0.0
    %792 = vmatpush1.xpose.msra.mxu0 0.0
    %793 = vmatprep.subr.mxu0 0.0
    %794 = vmatpush1.xpose.msra.mxu0 0.0
    %795 = vmatprep.subr.mxu0 0.0
    %796 = vmatpush1.xpose.msra.mxu0 0.0
    %797 = vmatprep.subr.mxu0 0.0
    %798 = vmatpush1.xpose.msra.mxu0 0.0
    %799 = vmatprep.subr.mxu0 0.0
    %800 = vmatpush1.xpose.msra.mxu0 0.0
    %801 = vmatprep.subr.mxu0 0.0
    %802 = vmatpush1.xpose.msra.mxu0 0.0
    %803 = vmatprep.subr.mxu0 0.0
    %804 = vmatpush1.xpose.msra.mxu0 0.0
    %805 = vmatprep.subr.mxu0 0.0
    %806 = vmatpush1.xpose.msra.mxu0 0.0
    %807 = vmatprep.subr.mxu0 0.0
    %808 = vmatpush1.xpose.msra.mxu0 0.0
    %809 = vmatprep.subr.mxu0 0.0
    %810 = vmatpush1.xpose.msra.mxu0 0.0
    %811 = vmatprep.subr.mxu0 0.0
    %812 = vmatpush1.xpose.msra.mxu0 0.0
    %813 = vmatprep.subr.mxu0 0.0
    %814 = vmatpush1.xpose.msra.mxu0 0.0
    %815 = vmatprep.subr.mxu0 0.0
    %816 = vmatpush1.xpose.msra.mxu0 0.0
    %817 = vmatprep.mubr.f32.mxu0 0.0
    %818 = vmatmul.mubr.f32.gmra.mrb[0].mxu0 %v749
    %v819 = vpop.f32.mrb[0].mxu0
    %v820 = vadd.f32 0.0, %v819
    %v821 = vpop.f32.mrb[0].mxu0
    %822 = vdwg.mxu0
    %v823 = vmul.f32 %v820, 0.35355338
    %v824 = vadd.f32 %v823, %v483
    %v825 = vsel %vm401, %v824, -inf
    %826 = vmax.xlane.f32.xlu0 %v825
    %v827 = vpop.xlane.xlu0 %826
    %v828 = vsub.f32 %v824, %v827
    %v829 = vmul.f32 %v828, 1.442695
    %v830 = vpow.pop %v829
    %v831 = vsel %vm401, %v830, 0.0
    %832 = vadd.xlane.f32.xlu0 %v831
    %v833 = vpop.xlane.xlu0 %832
    %v834 = vrcp.pop %v833
    %v835 = vmul.f32 %v830, %v834
    %836 = vrot.lane.b32.xlu0 %v394, 112
    %v837 = vpop.permute.xlu0 %836
    %v840 = vsel %vm401, %v835, 0
    %842 = vmatprep.subr.mxu0 0.0
    %843 = vmatpush1.msra.mxu0 %v837
    %844 = vmatprep.subr.mxu0 0.0
    %845 = vmatpush1.msra.mxu0 0.0
    %846 = vmatprep.subr.mxu0 0.0
    %847 = vmatpush1.msra.mxu0 0.0
    %848 = vmatprep.subr.mxu0 0.0
    %849 = vmatpush1.msra.mxu0 0.0
    %850 = vmatprep.subr.mxu0 0.0
    %851 = vmatpush1.msra.mxu0 0.0
    %852 = vmatprep.subr.mxu0 0.0
    %853 = vmatpush1.msra.mxu0 0.0
    %854 = vmatprep.subr.mxu0 0.0
    %855 = vmatpush1.msra.mxu0 0.0
    %856 = vmatprep.subr.mxu0 0.0
    %857 = vmatpush1.msra.mxu0 0.0
    %858 = vmatprep.subr.mxu0 0.0
    %859 = vmatpush1.msra.mxu0 0.0
    %860 = vmatprep.subr.mxu0 0.0
    %861 = vmatpush1.msra.mxu0 0.0
    %862 = vmatprep.subr.mxu0 0.0
    %863 = vmatpush1.msra.mxu0 0.0
    %864 = vmatprep.subr.mxu0 0.0
    %865 = vmatpush1.msra.mxu0 0.0
    %866 = vmatprep.subr.mxu0 0.0
    %867 = vmatpush1.msra.mxu0 0.0
    %868 = vmatprep.subr.mxu0 0.0
    %869 = vmatpush1.msra.mxu0 0.0
    %870 = vmatprep.subr.mxu0 0.0
    %871 = vmatpush1.msra.mxu0 0.0
    %872 = vmatprep.subr.mxu0 0.0
    %873 = vmatpush1.msra.mxu0 0.0
    %874 = vmatprep.subr.mxu0 0.0
    %875 = vmatpush1.msra.mxu0 0.0
    %876 = vmatprep.subr.mxu0 0.0
    %877 = vmatpush1.msra.mxu0 0.0
    %878 = vmatprep.subr.mxu0 0.0
    %879 = vmatpush1.msra.mxu0 0.0
    %880 = vmatprep.subr.mxu0 0.0
    %881 = vmatpush1.msra.mxu0 0.0
    %882 = vmatprep.subr.mxu0 0.0
    %883 = vmatpush1.msra.mxu0 0.0
    %884 = vmatprep.subr.mxu0 0.0
    %885 = vmatpush1.msra.mxu0 0.0
    %886 = vmatprep.subr.mxu0 0.0
    %887 = vmatpush1.msra.mxu0 0.0
    %888 = vmatprep.subr.mxu0 0.0
    %889 = vmatpush1.msra.mxu0 0.0
    %890 = vmatprep.subr.mxu0 0.0
    %891 = vmatpush1.msra.mxu0 0.0
    %892 = vmatprep.subr.mxu0 0.0
    %893 = vmatpush1.msra.mxu0 0.0
    %894 = vmatprep.subr.mxu0 0.0
    %895 = vmatpush1.msra.mxu0 0.0
    %896 = vmatprep.subr.mxu0 0.0
    %897 = vmatpush1.msra.mxu0 0.0
    %898 = vmatprep.subr.mxu0 0.0
    %899 = vmatpush1.msra.mxu0 0.0
    %900 = vmatprep.subr.mxu0 0.0
    %901 = vmatpush1.msra.mxu0 0.0
    %902 = vmatprep.subr.mxu0 0.0
    %903 = vmatpush1.msra.mxu0 0.0
    %904 = vmatprep.subr.mxu0 0.0
    %905 = vmatpush1.msra.mxu0 0.0
    %906 = vmatprep.mubr.f32.mxu0 0.0
    %907 = vmatmul.mubr.f32.gmra.mrb[0].mxu0 %v840
    %v908 = vpop.f32.mrb[0].mxu0
    %v909 = vadd.f32 0.0, %v908
    %v910 = vpop.f32.mrb[0].mxu0
    %911 = vdwg.mxu0
    %913 = vrot.lane.b32.xlu0 %v909, 16
    %v914 = vpop.permute.xlu0 %913
    %vm916 = vcmask 195712
    %917 = vst.msk [vmem:[#allocation2] sm:$0xff] %vm916, %v914
    %918 = vrot.lane.b32.xlu0 %v266, 104
    %v919 = vpop.permute.xlu0 %918
    %920 = vrot.lane.b32.xlu0 %v330, 104
    %v921 = vpop.permute.xlu0 %920
    %v922 = vsel %vm401, %v919, 0
    %v924 = vsel %vm401, %v921, 0
    %926 = vmatprep.subr.mxu0 0.0
    %927 = vmatpush1.xpose.msra.mxu0 %v924
    %928 = vmatprep.subr.mxu0 0.0
    %929 = vmatpush1.xpose.msra.mxu0 0.0
    %930 = vmatprep.subr.mxu0 0.0
    %931 = vmatpush1.xpose.msra.mxu0 0.0
    %932 = vmatprep.subr.mxu0 0.0
    %933 = vmatpush1.xpose.msra.mxu0 0.0
    %934 = vmatprep.subr.mxu0 0.0
    %935 = vmatpush1.xpose.msra.mxu0 0.0
    %936 = vmatprep.subr.mxu0 0.0
    %937 = vmatpush1.xpose.msra.mxu0 0.0
    %938 = vmatprep.subr.mxu0 0.0
    %939 = vmatpush1.xpose.msra.mxu0 0.0
    %940 = vmatprep.subr.mxu0 0.0
    %941 = vmatpush1.xpose.msra.mxu0 0.0
    %942 = vmatprep.subr.mxu0 0.0
    %943 = vmatpush1.xpose.msra.mxu0 0.0
    %944 = vmatprep.subr.mxu0 0.0
    %945 = vmatpush1.xpose.msra.mxu0 0.0
    %946 = vmatprep.subr.mxu0 0.0
    %947 = vmatpush1.xpose.msra.mxu0 0.0
    %948 = vmatprep.subr.mxu0 0.0
    %949 = vmatpush1.xpose.msra.mxu0 0.0
    %950 = vmatprep.subr.mxu0 0.0
    %951 = vmatpush1.xpose.msra.mxu0 0.0
    %952 = vmatprep.subr.mxu0 0.0
    %953 = vmatpush1.xpose.msra.mxu0 0.0
    %954 = vmatprep.subr.mxu0 0.0
    %955 = vmatpush1.xpose.msra.mxu0 0.0
    %956 = vmatprep.subr.mxu0 0.0
    %957 = vmatpush1.xpose.msra.mxu0 0.0
    %958 = vmatprep.subr.mxu0 0.0
    %959 = vmatpush1.xpose.msra.mxu0 0.0
    %960 = vmatprep.subr.mxu0 0.0
    %961 = vmatpush1.xpose.msra.mxu0 0.0
    %962 = vmatprep.subr.mxu0 0.0
    %963 = vmatpush1.xpose.msra.mxu0 0.0
    %964 = vmatprep.subr.mxu0 0.0
    %965 = vmatpush1.xpose.msra.mxu0 0.0
    %966 = vmatprep.subr.mxu0 0.0
    %967 = vmatpush1.xpose.msra.mxu0 0.0
    %968 = vmatprep.subr.mxu0 0.0
    %969 = vmatpush1.xpose.msra.mxu0 0.0
    %970 = vmatprep.subr.mxu0 0.0
    %971 = vmatpush1.xpose.msra.mxu0 0.0
    %972 = vmatprep.subr.mxu0 0.0
    %973 = vmatpush1.xpose.msra.mxu0 0.0
    %974 = vmatprep.subr.mxu0 0.0
    %975 = vmatpush1.xpose.msra.mxu0 0.0
    %976 = vmatprep.subr.mxu0 0.0
    %977 = vmatpush1.xpose.msra.mxu0 0.0
    %978 = vmatprep.subr.mxu0 0.0
    %979 = vmatpush1.xpose.msra.mxu0 0.0
    %980 = vmatprep.subr.mxu0 0.0
    %981 = vmatpush1.xpose.msra.mxu0 0.0
    %982 = vmatprep.subr.mxu0 0.0
    %983 = vmatpush1.xpose.msra.mxu0 0.0
    %984 = vmatprep.subr.mxu0 0.0
    %985 = vmatpush1.xpose.msra.mxu0 0.0
    %986 = vmatprep.subr.mxu0 0.0
    %987 = vmatpush1.xpose.msra.mxu0 0.0
    %988 = vmatprep.subr.mxu0 0.0
    %989 = vmatpush1.xpose.msra.mxu0 0.0
    %990 = vmatprep.mubr.f32.mxu0 0.0
    %991 = vmatmul.mubr.f32.gmra.mrb[0].mxu0 %v922
    %v992 = vpop.f32.mrb[0].mxu0
    %v993 = vadd.f32 0.0, %v992
    %v994 = vpop.f32.mrb[0].mxu0
    %995 = vdwg.mxu0
    %v996 = vmul.f32 %v993, 0.35355338
    %v997 = vadd.f32 %v996, %v483
    %v998 = vsel %vm401, %v997, -inf
    %999 = vmax.xlane.f32.xlu0 %v998
    %v1000 = vpop.xlane.xlu0 %999
    %v1001 = vsub.f32 %v997, %v1000
    %v1002 = vmul.f32 %v1001, 1.442695
    %v1003 = vpow.pop %v1002
    %v1004 = vsel %vm401, %v1003, 0.0
    %1005 = vadd.xlane.f32.xlu0 %v1004
    %v1006 = vpop.xlane.xlu0 %1005
    %v1007 = vrcp.pop %v1006
    %v1008 = vmul.f32 %v1003, %v1007
    %1009 = vrot.lane.b32.xlu0 %v394, 104
    %v1010 = vpop.permute.xlu0 %1009
    %v1013 = vsel %vm401, %v1008, 0
    %1015 = vmatprep.subr.mxu0 0.0
    %1016 = vmatpush1.msra.mxu0 %v1010
    %1017 = vmatprep.subr.mxu0 0.0
    %1018 = vmatpush1.msra.mxu0 0.0
    %1019 = vmatprep.subr.mxu0 0.0
    %1020 = vmatpush1.msra.mxu0 0.0
    %1021 = vmatprep.subr.mxu0 0.0
    %1022 = vmatpush1.msra.mxu0 0.0
    %1023 = vmatprep.subr.mxu0 0.0
    %1024 = vmatpush1.msra.mxu0 0.0
    %1025 = vmatprep.subr.mxu0 0.0
    %1026 = vmatpush1.msra.mxu0 0.0
    %1027 = vmatprep.subr.mxu0 0.0
    %1028 = vmatpush1.msra.mxu0 0.0
    %1029 = vmatprep.subr.mxu0 0.0
    %1030 = vmatpush1.msra.mxu0 0.0
    %1031 = vmatprep.subr.mxu0 0.0
    %1032 = vmatpush1.msra.mxu0 0.0
    %1033 = vmatprep.subr.mxu0 0.0
    %1034 = vmatpush1.msra.mxu0 0.0
    %1035 = vmatprep.subr.mxu0 0.0
    %1036 = vmatpush1.msra.mxu0 0.0
    %1037 = vmatprep.subr.mxu0 0.0
    %1038 = vmatpush1.msra.mxu0 0.0
    %1039 = vmatprep.subr.mxu0 0.0
    %1040 = vmatpush1.msra.mxu0 0.0
    %1041 = vmatprep.subr.mxu0 0.0
    %1042 = vmatpush1.msra.mxu0 0.0
    %1043 = vmatprep.subr.mxu0 0.0
    %1044 = vmatpush1.msra.mxu0 0.0
    %1045 = vmatprep.subr.mxu0 0.0
    %1046 = vmatpush1.msra.mxu0 0.0
    %1047 = vmatprep.subr.mxu0 0.0
    %1048 = vmatpush1.msra.mxu0 0.0
    %1049 = vmatprep.subr.mxu0 0.0
    %1050 = vmatpush1.msra.mxu0 0.0
    %1051 = vmatprep.subr.mxu0 0.0
    %1052 = vmatpush1.msra.mxu0 0.0
    %1053 = vmatprep.subr.mxu0 0.0
    %1054 = vmatpush1.msra.mxu0 0.0
    %1055 = vmatprep.subr.mxu0 0.0
    %1056 = vmatpush1.msra.mxu0 0.0
    %1057 = vmatprep.subr.mxu0 0.0
    %1058 = vmatpush1.msra.mxu0 0.0
    %1059 = vmatprep.subr.mxu0 0.0
    %1060 = vmatpush1.msra.mxu0 0.0
    %1061 = vmatprep.subr.mxu0 0.0
    %1062 = vmatpush1.msra.mxu0 0.0
    %1063 = vmatprep.subr.mxu0 0.0
    %1064 = vmatpush1.msra.mxu0 0.0
    %1065 = vmatprep.subr.mxu0 0.0
    %1066 = vmatpush1.msra.mxu0 0.0
    %1067 = vmatprep.subr.mxu0 0.0
    %1068 = vmatpush1.msra.mxu0 0.0
    %1069 = vmatprep.subr.mxu0 0.0
    %1070 = vmatpush1.msra.mxu0 0.0
    %1071 = vmatprep.subr.mxu0 0.0
    %1072 = vmatpush1.msra.mxu0 0.0
    %1073 = vmatprep.subr.mxu0 0.0
    %1074 = vmatpush1.msra.mxu0 0.0
    %1075 = vmatprep.subr.mxu0 0.0
    %1076 = vmatpush1.msra.mxu0 0.0
    %1077 = vmatprep.subr.mxu0 0.0
    %1078 = vmatpush1.msra.mxu0 0.0
    %1079 = vmatprep.mubr.f32.mxu0 0.0
    %1080 = vmatmul.mubr.f32.gmra.mrb[0].mxu0 %v1013
    %v1081 = vpop.f32.mrb[0].mxu0
    %v1082 = vadd.f32 0.0, %v1081
    %v1083 = vpop.f32.mrb[0].mxu0
    %1084 = vdwg.mxu0
    %1086 = vrot.lane.b32.xlu0 %v1082, 24
    %v1087 = vpop.permute.xlu0 %1086
    %vm1089 = vcmask 261312
    %1090 = vst.msk [vmem:[#allocation2] sm:$0xff] %vm1089, %v1087
    %s1091 = scalar_lea.vmem %s2, 1
    %v1092 = vld [vmem:[%s1091] sm:$0x1]
    %v1094 = vsel %vm401, %v269, 0
    %v1097 = vsel %vm401, %v333, 0
    %1099 = vmatprep.subr.mxu0 0.0
    %1100 = vmatpush1.xpose.msra.mxu0 %v1097
    %1101 = vmatprep.subr.mxu0 0.0
    %1102 = vmatpush1.xpose.msra.mxu0 0.0
    %1103 = vmatprep.subr.mxu0 0.0
    %1104 = vmatpush1.xpose.msra.mxu0 0.0
    %1105 = vmatprep.subr.mxu0 0.0
    %1106 = vmatpush1.xpose.msra.mxu0 0.0
    %1107 = vmatprep.subr.mxu0 0.0
    %1108 = vmatpush1.xpose.msra.mxu0 0.0
    %1109 = vmatprep.subr.mxu0 0.0
    %1110 = vmatpush1.xpose.msra.mxu0 0.0
    %1111 = vmatprep.subr.mxu0 0.0
    %1112 = vmatpush1.xpose.msra.mxu0 0.0
    %1113 = vmatprep.subr.mxu0 0.0
    %1114 = vmatpush1.xpose.msra.mxu0 0.0
    %1115 = vmatprep.subr.mxu0 0.0
    %1116 = vmatpush1.xpose.msra.mxu0 0.0
    %1117 = vmatprep.subr.mxu0 0.0
    %1118 = vmatpush1.xpose.msra.mxu0 0.0
    %1119 = vmatprep.subr.mxu0 0.0
    %1120 = vmatpush1.xpose.msra.mxu0 0.0
    %1121 = vmatprep.subr.mxu0 0.0
    %1122 = vmatpush1.xpose.msra.mxu0 0.0
    %1123 = vmatprep.subr.mxu0 0.0
    %1124 = vmatpush1.xpose.msra.mxu0 0.0
    %1125 = vmatprep.subr.mxu0 0.0
    %1126 = vmatpush1.xpose.msra.mxu0 0.0
    %1127 = vmatprep.subr.mxu0 0.0
    %1128 = vmatpush1.xpose.msra.mxu0 0.0
    %1129 = vmatprep.subr.mxu0 0.0
    %1130 = vmatpush1.xpose.msra.mxu0 0.0
    %1131 = vmatprep.subr.mxu0 0.0
    %1132 = vmatpush1.xpose.msra.mxu0 0.0
    %1133 = vmatprep.subr.mxu0 0.0
    %1134 = vmatpush1.xpose.msra.mxu0 0.0
    %1135 = vmatprep.subr.mxu0 0.0
    %1136 = vmatpush1.xpose.msra.mxu0 0.0
    %1137 = vmatprep.subr.mxu0 0.0
    %1138 = vmatpush1.xpose.msra.mxu0 0.0
    %1139 = vmatprep.subr.mxu0 0.0
    %1140 = vmatpush1.xpose.msra.mxu0 0.0
    %1141 = vmatprep.subr.mxu0 0.0
    %1142 = vmatpush1.xpose.msra.mxu0 0.0
    %1143 = vmatprep.subr.mxu0 0.0
    %1144 = vmatpush1.xpose.msra.mxu0 0.0
    %1145 = vmatprep.subr.mxu0 0.0
    %1146 = vmatpush1.xpose.msra.mxu0 0.0
    %1147 = vmatprep.subr.mxu0 0.0
    %1148 = vmatpush1.xpose.msra.mxu0 0.0
    %1149 = vmatprep.subr.mxu0 0.0
    %1150 = vmatpush1.xpose.msra.mxu0 0.0
    %1151 = vmatprep.subr.mxu0 0.0
    %1152 = vmatpush1.xpose.msra.mxu0 0.0
    %1153 = vmatprep.subr.mxu0 0.0
    %1154 = vmatpush1.xpose.msra.mxu0 0.0
    %1155 = vmatprep.subr.mxu0 0.0
    %1156 = vmatpush1.xpose.msra.mxu0 0.0
    %1157 = vmatprep.subr.mxu0 0.0
    %1158 = vmatpush1.xpose.msra.mxu0 0.0
    %1159 = vmatprep.subr.mxu0 0.0
    %1160 = vmatpush1.xpose.msra.mxu0 0.0
    %1161 = vmatprep.subr.mxu0 0.0
    %1162 = vmatpush1.xpose.msra.mxu0 0.0
    %1163 = vmatprep.mubr.f32.mxu0 0.0
    %1164 = vmatmul.mubr.f32.gmra.mrb[0].mxu0 %v1094
    %v1165 = vpop.f32.mrb[0].mxu0
    %v1166 = vadd.f32 0.0, %v1165
    %v1167 = vpop.f32.mrb[0].mxu0
    %1168 = vdwg.mxu0
    %v1169 = vmul.f32 %v1166, 0.35355338
    %v1171 = vlaneseq
    %v1172 = vshrl.u32 %v1171, 7
    %v1173 = vsub.s32 0, %v1172
    %v1174 = vrot.slane %v1092, %v1173
    %v1176 = vadd.f32 %v1169, %v1174
    %v1177 = vsel %vm401, %v1176, -inf
    %1178 = vmax.xlane.f32.xlu0 %v1177
    %v1179 = vpop.xlane.xlu0 %1178
    %v1180 = vsub.f32 %v1176, %v1179
    %v1181 = vmul.f32 %v1180, 1.442695
    %v1182 = vpow.pop %v1181
    %v1183 = vsel %vm401, %v1182, 0.0
    %1184 = vadd.xlane.f32.xlu0 %v1183
    %v1185 = vpop.xlane.xlu0 %1184
    %v1186 = vrcp.pop %v1185
    %v1187 = vmul.f32 %v1182, %v1186
    %v1189 = vsel %vm401, %v1187, 0
    %1191 = vmatprep.subr.mxu0 0.0
    %1192 = vmatpush1.msra.mxu0 %v397
    %1193 = vmatprep.subr.mxu0 0.0
    %1194 = vmatpush1.msra.mxu0 0.0
    %1195 = vmatprep.subr.mxu0 0.0
    %1196 = vmatpush1.msra.mxu0 0.0
    %1197 = vmatprep.subr.mxu0 0.0
    %1198 = vmatpush1.msra.mxu0 0.0
    %1199 = vmatprep.subr.mxu0 0.0
    %1200 = vmatpush1.msra.mxu0 0.0
    %1201 = vmatprep.subr.mxu0 0.0
    %1202 = vmatpush1.msra.mxu0 0.0
    %1203 = vmatprep.subr.mxu0 0.0
    %1204 = vmatpush1.msra.mxu0 0.0
    %1205 = vmatprep.subr.mxu0 0.0
    %1206 = vmatpush1.msra.mxu0 0.0
    %1207 = vmatprep.subr.mxu0 0.0
    %1208 = vmatpush1.msra.mxu0 0.0
    %1209 = vmatprep.subr.mxu0 0.0
    %1210 = vmatpush1.msra.mxu0 0.0
    %1211 = vmatprep.subr.mxu0 0.0
    %1212 = vmatpush1.msra.mxu0 0.0
    %1213 = vmatprep.subr.mxu0 0.0
    %1214 = vmatpush1.msra.mxu0 0.0
    %1215 = vmatprep.subr.mxu0 0.0
    %1216 = vmatpush1.msra.mxu0 0.0
    %1217 = vmatprep.subr.mxu0 0.0
    %1218 = vmatpush1.msra.mxu0 0.0
    %1219 = vmatprep.subr.mxu0 0.0
    %1220 = vmatpush1.msra.mxu0 0.0
    %1221 = vmatprep.subr.mxu0 0.0
    %1222 = vmatpush1.msra.mxu0 0.0
    %1223 = vmatprep.subr.mxu0 0.0
    %1224 = vmatpush1.msra.mxu0 0.0
    %1225 = vmatprep.subr.mxu0 0.0
    %1226 = vmatpush1.msra.mxu0 0.0
    %1227 = vmatprep.subr.mxu0 0.0
    %1228 = vmatpush1.msra.mxu0 0.0
    %1229 = vmatprep.subr.mxu0 0.0
    %1230 = vmatpush1.msra.mxu0 0.0
    %1231 = vmatprep.subr.mxu0 0.0
    %1232 = vmatpush1.msra.mxu0 0.0
    %1233 = vmatprep.subr.mxu0 0.0
    %1234 = vmatpush1.msra.mxu0 0.0
    %1235 = vmatprep.subr.mxu0 0.0
    %1236 = vmatpush1.msra.mxu0 0.0
    %1237 = vmatprep.subr.mxu0 0.0
    %1238 = vmatpush1.msra.mxu0 0.0
    %1239 = vmatprep.subr.mxu0 0.0
    %1240 = vmatpush1.msra.mxu0 0.0
    %1241 = vmatprep.subr.mxu0 0.0
    %1242 = vmatpush1.msra.mxu0 0.0
    %1243 = vmatprep.subr.mxu0 0.0
    %1244 = vmatpush1.msra.mxu0 0.0
    %1245 = vmatprep.subr.mxu0 0.0
    %1246 = vmatpush1.msra.mxu0 0.0
    %1247 = vmatprep.subr.mxu0 0.0
    %1248 = vmatpush1.msra.mxu0 0.0
    %1249 = vmatprep.subr.mxu0 0.0
    %1250 = vmatpush1.msra.mxu0 0.0
    %1251 = vmatprep.subr.mxu0 0.0
    %1252 = vmatpush1.msra.mxu0 0.0
    %1253 = vmatprep.subr.mxu0 0.0
    %1254 = vmatpush1.msra.mxu0 0.0
    %1255 = vmatprep.mubr.f32.mxu0 0.0
    %1256 = vmatmul.mubr.f32.gmra.mrb[0].mxu0 %v1189
    %v1257 = vpop.f32.mrb[0].mxu0
    %v1258 = vadd.f32 0.0, %v1257
    %v1259 = vpop.f32.mrb[0].mxu0
    %1260 = vdwg.mxu0
    %1261 = vst.msk [vmem:[#allocation2 + $0x8] sm:$0xff] %vm401, %v1258
    %1262 = vrot.lane.b32.xlu0 %v269, 120
    %v1263 = vpop.permute.xlu0 %1262
    %1264 = vrot.lane.b32.xlu0 %v333, 120
    %v1265 = vpop.permute.xlu0 %1264
    %v1266 = vsel %vm401, %v1263, 0
    %v1268 = vsel %vm401, %v1265, 0
    %1270 = vmatprep.subr.mxu0 0.0
    %1271 = vmatpush1.xpose.msra.mxu0 %v1268
    %1272 = vmatprep.subr.mxu0 0.0
    %1273 = vmatpush1.xpose.msra.mxu0 0.0
    %1274 = vmatprep.subr.mxu0 0.0
    %1275 = vmatpush1.xpose.msra.mxu0 0.0
    %1276 = vmatprep.subr.mxu0 0.0
    %1277 = vmatpush1.xpose.msra.mxu0 0.0
    %1278 = vmatprep.subr.mxu0 0.0
    %1279 = vmatpush1.xpose.msra.mxu0 0.0
    %1280 = vmatprep.subr.mxu0 0.0
    %1281 = vmatpush1.xpose.msra.mxu0 0.0
    %1282 = vmatprep.subr.mxu0 0.0
    %1283 = vmatpush1.xpose.msra.mxu0 0.0
    %1284 = vmatprep.subr.mxu0 0.0
    %1285 = vmatpush1.xpose.msra.mxu0 0.0
    %1286 = vmatprep.subr.mxu0 0.0
    %1287 = vmatpush1.xpose.msra.mxu0 0.0
    %1288 = vmatprep.subr.mxu0 0.0
    %1289 = vmatpush1.xpose.msra.mxu0 0.0
    %1290 = vmatprep.subr.mxu0 0.0
    %1291 = vmatpush1.xpose.msra.mxu0 0.0
    %1292 = vmatprep.subr.mxu0 0.0
    %1293 = vmatpush1.xpose.msra.mxu0 0.0
    %1294 = vmatprep.subr.mxu0 0.0
    %1295 = vmatpush1.xpose.msra.mxu0 0.0
    %1296 = vmatprep.subr.mxu0 0.0
    %1297 = vmatpush1.xpose.msra.mxu0 0.0
    %1298 = vmatprep.subr.mxu0 0.0
    %1299 = vmatpush1.xpose.msra.mxu0 0.0
    %1300 = vmatprep.subr.mxu0 0.0
    %1301 = vmatpush1.xpose.msra.mxu0 0.0
    %1302 = vmatprep.subr.mxu0 0.0
    %1303 = vmatpush1.xpose.msra.mxu0 0.0
    %1304 = vmatprep.subr.mxu0 0.0
    %1305 = vmatpush1.xpose.msra.mxu0 0.0
    %1306 = vmatprep.subr.mxu0 0.0
    %1307 = vmatpush1.xpose.msra.mxu0 0.0
    %1308 = vmatprep.subr.mxu0 0.0
    %1309 = vmatpush1.xpose.msra.mxu0 0.0
    %1310 = vmatprep.subr.mxu0 0.0
    %1311 = vmatpush1.xpose.msra.mxu0 0.0
    %1312 = vmatprep.subr.mxu0 0.0
    %1313 = vmatpush1.xpose.msra.mxu0 0.0
    %1314 = vmatprep.subr.mxu0 0.0
    %1315 = vmatpush1.xpose.msra.mxu0 0.0
    %1316 = vmatprep.subr.mxu0 0.0
    %1317 = vmatpush1.xpose.msra.mxu0 0.0
    %1318 = vmatprep.subr.mxu0 0.0
    %1319 = vmatpush1.xpose.msra.mxu0 0.0
    %1320 = vmatprep.subr.mxu0 0.0
    %1321 = vmatpush1.xpose.msra.mxu0 0.0
    %1322 = vmatprep.subr.mxu0 0.0
    %1323 = vmatpush1.xpose.msra.mxu0 0.0
    %1324 = vmatprep.subr.mxu0 0.0
    %1325 = vmatpush1.xpose.msra.mxu0 0.0
    %1326 = vmatprep.subr.mxu0 0.0
    %1327 = vmatpush1.xpose.msra.mxu0 0.0
    %1328 = vmatprep.subr.mxu0 0.0
    %1329 = vmatpush1.xpose.msra.mxu0 0.0
    %1330 = vmatprep.subr.mxu0 0.0
    %1331 = vmatpush1.xpose.msra.mxu0 0.0
    %1332 = vmatprep.subr.mxu0 0.0
    %1333 = vmatpush1.xpose.msra.mxu0 0.0
    %1334 = vmatprep.mubr.f32.mxu0 0.0
    %1335 = vmatmul.mubr.f32.gmra.mrb[0].mxu0 %v1266
    %v1336 = vpop.f32.mrb[0].mxu0
    %v1337 = vadd.f32 0.0, %v1336
    %v1338 = vpop.f32.mrb[0].mxu0
    %1339 = vdwg.mxu0
    %v1340 = vmul.f32 %v1337, 0.35355338
    %v1341 = vadd.f32 %v1340, %v1174
    %v1342 = vsel %vm401, %v1341, -inf
    %1343 = vmax.xlane.f32.xlu0 %v1342
    %v1344 = vpop.xlane.xlu0 %1343
    %v1345 = vsub.f32 %v1341, %v1344
    %v1346 = vmul.f32 %v1345, 1.442695
    %v1347 = vpow.pop %v1346
    %v1348 = vsel %vm401, %v1347, 0.0
    %1349 = vadd.xlane.f32.xlu0 %v1348
    %v1350 = vpop.xlane.xlu0 %1349
    %v1351 = vrcp.pop %v1350
    %v1352 = vmul.f32 %v1347, %v1351
    %1354 = vrot.lane.b32.xlu0 %v397, 120
    %v1355 = vpop.permute.xlu0 %1354
    %v1358 = vsel %vm401, %v1352, 0
    %1360 = vmatprep.subr.mxu0 0.0
    %1361 = vmatpush1.msra.mxu0 %v1355
    %1362 = vmatprep.subr.mxu0 0.0
    %1363 = vmatpush1.msra.mxu0 0.0
    %1364 = vmatprep.subr.mxu0 0.0
    %1365 = vmatpush1.msra.mxu0 0.0
    %1366 = vmatprep.subr.mxu0 0.0
    %1367 = vmatpush1.msra.mxu0 0.0
    %1368 = vmatprep.subr.mxu0 0.0
    %1369 = vmatpush1.msra.mxu0 0.0
    %1370 = vmatprep.subr.mxu0 0.0
    %1371 = vmatpush1.msra.mxu0 0.0
    %1372 = vmatprep.subr.mxu0 0.0
    %1373 = vmatpush1.msra.mxu0 0.0
    %1374 = vmatprep.subr.mxu0 0.0
    %1375 = vmatpush1.msra.mxu0 0.0
    %1376 = vmatprep.subr.mxu0 0.0
    %1377 = vmatpush1.msra.mxu0 0.0
    %1378 = vmatprep.subr.mxu0 0.0
    %1379 = vmatpush1.msra.mxu0 0.0
    %1380 = vmatprep.subr.mxu0 0.0
    %1381 = vmatpush1.msra.mxu0 0.0
    %1382 = vmatprep.subr.mxu0 0.0
    %1383 = vmatpush1.msra.mxu0 0.0
    %1384 = vmatprep.subr.mxu0 0.0
    %1385 = vmatpush1.msra.mxu0 0.0
    %1386 = vmatprep.subr.mxu0 0.0
    %1387 = vmatpush1.msra.mxu0 0.0
    %1388 = vmatprep.subr.mxu0 0.0
    %1389 = vmatpush1.msra.mxu0 0.0
    %1390 = vmatprep.subr.mxu0 0.0
    %1391 = vmatpush1.msra.mxu0 0.0
    %1392 = vmatprep.subr.mxu0 0.0
    %1393 = vmatpush1.msra.mxu0 0.0
    %1394 = vmatprep.subr.mxu0 0.0
    %1395 = vmatpush1.msra.mxu0 0.0
    %1396 = vmatprep.subr.mxu0 0.0
    %1397 = vmatpush1.msra.mxu0 0.0
    %1398 = vmatprep.subr.mxu0 0.0
    %1399 = vmatpush1.msra.mxu0 0.0
    %1400 = vmatprep.subr.mxu0 0.0
    %1401 = vmatpush1.msra.mxu0 0.0
    %1402 = vmatprep.subr.mxu0 0.0
    %1403 = vmatpush1.msra.mxu0 0.0
    %1404 = vmatprep.subr.mxu0 0.0
    %1405 = vmatpush1.msra.mxu0 0.0
    %1406 = vmatprep.subr.mxu0 0.0
    %1407 = vmatpush1.msra.mxu0 0.0
    %1408 = vmatprep.subr.mxu0 0.0
    %1409 = vmatpush1.msra.mxu0 0.0
    %1410 = vmatprep.subr.mxu0 0.0
    %1411 = vmatpush1.msra.mxu0 0.0
    %1412 = vmatprep.subr.mxu0 0.0
    %1413 = vmatpush1.msra.mxu0 0.0
    %1414 = vmatprep.subr.mxu0 0.0
    %1415 = vmatpush1.msra.mxu0 0.0
    %1416 = vmatprep.subr.mxu0 0.0
    %1417 = vmatpush1.msra.mxu0 0.0
    %1418 = vmatprep.subr.mxu0 0.0
    %1419 = vmatpush1.msra.mxu0 0.0
    %1420 = vmatprep.subr.mxu0 0.0
    %1421 = vmatpush1.msra.mxu0 0.0
    %1422 = vmatprep.subr.mxu0 0.0
    %1423 = vmatpush1.msra.mxu0 0.0
    %1424 = vmatprep.mubr.f32.mxu0 0.0
    %1425 = vmatmul.mubr.f32.gmra.mrb[0].mxu0 %v1358
    %v1426 = vpop.f32.mrb[0].mxu0
    %v1427 = vadd.f32 0.0, %v1426
    %v1428 = vpop.f32.mrb[0].mxu0
    %1429 = vdwg.mxu0
    %1431 = vrot.lane.b32.xlu0 %v1427, 8
    %v1432 = vpop.permute.xlu0 %1431
    %1434 = vst.msk [vmem:[#allocation2 + $0x8] sm:$0xff] %vm743, %v1432
    %1435 = vrot.lane.b32.xlu0 %v269, 112
    %v1436 = vpop.permute.xlu0 %1435
    %1437 = vrot.lane.b32.xlu0 %v333, 112
    %v1438 = vpop.permute.xlu0 %1437
    %v1439 = vsel %vm401, %v1436, 0
    %v1441 = vsel %vm401, %v1438, 0
    %1443 = vmatprep.subr.mxu0 0.0
    %1444 = vmatpush1.xpose.msra.mxu0 %v1441
    %1445 = vmatprep.subr.mxu0 0.0
    %1446 = vmatpush1.xpose.msra.mxu0 0.0
    %1447 = vmatprep.subr.mxu0 0.0
    %1448 = vmatpush1.xpose.msra.mxu0 0.0
    %1449 = vmatprep.subr.mxu0 0.0
    %1450 = vmatpush1.xpose.msra.mxu0 0.0
    %1451 = vmatprep.subr.mxu0 0.0
    %1452 = vmatpush1.xpose.msra.mxu0 0.0
    %1453 = vmatprep.subr.mxu0 0.0
    %1454 = vmatpush1.xpose.msra.mxu0 0.0
    %1455 = vmatprep.subr.mxu0 0.0
    %1456 = vmatpush1.xpose.msra.mxu0 0.0
    %1457 = vmatprep.subr.mxu0 0.0
    %1458 = vmatpush1.xpose.msra.mxu0 0.0
    %1459 = vmatprep.subr.mxu0 0.0
    %1460 = vmatpush1.xpose.msra.mxu0 0.0
    %1461 = vmatprep.subr.mxu0 0.0
    %1462 = vmatpush1.xpose.msra.mxu0 0.0
    %1463 = vmatprep.subr.mxu0 0.0
    %1464 = vmatpush1.xpose.msra.mxu0 0.0
    %1465 = vmatprep.subr.mxu0 0.0
    %1466 = vmatpush1.xpose.msra.mxu0 0.0
    %1467 = vmatprep.subr.mxu0 0.0
    %1468 = vmatpush1.xpose.msra.mxu0 0.0
    %1469 = vmatprep.subr.mxu0 0.0
    %1470 = vmatpush1.xpose.msra.mxu0 0.0
    %1471 = vmatprep.subr.mxu0 0.0
    %1472 = vmatpush1.xpose.msra.mxu0 0.0
    %1473 = vmatprep.subr.mxu0 0.0
    %1474 = vmatpush1.xpose.msra.mxu0 0.0
    %1475 = vmatprep.subr.mxu0 0.0
    %1476 = vmatpush1.xpose.msra.mxu0 0.0
    %1477 = vmatprep.subr.mxu0 0.0
    %1478 = vmatpush1.xpose.msra.mxu0 0.0
    %1479 = vmatprep.subr.mxu0 0.0
    %1480 = vmatpush1.xpose.msra.mxu0 0.0
    %1481 = vmatprep.subr.mxu0 0.0
    %1482 = vmatpush1.xpose.msra.mxu0 0.0
    %1483 = vmatprep.subr.mxu0 0.0
    %1484 = vmatpush1.xpose.msra.mxu0 0.0
    %1485 = vmatprep.subr.mxu0 0.0
    %1486 = vmatpush1.xpose.msra.mxu0 0.0
    %1487 = vmatprep.subr.mxu0 0.0
    %1488 = vmatpush1.xpose.msra.mxu0 0.0
    %1489 = vmatprep.subr.mxu0 0.0
    %1490 = vmatpush1.xpose.msra.mxu0 0.0
    %1491 = vmatprep.subr.mxu0 0.0
    %1492 = vmatpush1.xpose.msra.mxu0 0.0
    %1493 = vmatprep.subr.mxu0 0.0
    %1494 = vmatpush1.xpose.msra.mxu0 0.0
    %1495 = vmatprep.subr.mxu0 0.0
    %1496 = vmatpush1.xpose.msra.mxu0 0.0
    %1497 = vmatprep.subr.mxu0 0.0
    %1498 = vmatpush1.xpose.msra.mxu0 0.0
    %1499 = vmatprep.subr.mxu0 0.0
    %1500 = vmatpush1.xpose.msra.mxu0 0.0
    %1501 = vmatprep.subr.mxu0 0.0
    %1502 = vmatpush1.xpose.msra.mxu0 0.0
    %1503 = vmatprep.subr.mxu0 0.0
    %1504 = vmatpush1.xpose.msra.mxu0 0.0
    %1505 = vmatprep.subr.mxu0 0.0
    %1506 = vmatpush1.xpose.msra.mxu0 0.0
    %1507 = vmatprep.mubr.f32.mxu0 0.0
    %1508 = vmatmul.mubr.f32.gmra.mrb[0].mxu0 %v1439
    %v1509 = vpop.f32.mrb[0].mxu0
    %v1510 = vadd.f32 0.0, %v1509
    %v1511 = vpop.f32.mrb[0].mxu0
    %1512 = vdwg.mxu0
    %v1513 = vmul.f32 %v1510, 0.35355338
    %v1514 = vadd.f32 %v1513, %v1174
    %v1515 = vsel %vm401, %v1514, -inf
    %1516 = vmax.xlane.f32.xlu0 %v1515
    %v1517 = vpop.xlane.xlu0 %1516
    %v1518 = vsub.f32 %v1514, %v1517
    %v1519 = vmul.f32 %v1518, 1.442695
    %v1520 = vpow.pop %v1519
    %v1521 = vsel %vm401, %v1520, 0.0
    %1522 = vadd.xlane.f32.xlu0 %v1521
    %v1523 = vpop.xlane.xlu0 %1522
    %v1524 = vrcp.pop %v1523
    %v1525 = vmul.f32 %v1520, %v1524
    %1526 = vrot.lane.b32.xlu0 %v397, 112
    %v1527 = vpop.permute.xlu0 %1526
    %v1530 = vsel %vm401, %v1525, 0
    %1532 = vmatprep.subr.mxu0 0.0
    %1533 = vmatpush1.msra.mxu0 %v1527
    %1534 = vmatprep.subr.mxu0 0.0
    %1535 = vmatpush1.msra.mxu0 0.0
    %1536 = vmatprep.subr.mxu0 0.0
    %1537 = vmatpush1.msra.mxu0 0.0
    %1538 = vmatprep.subr.mxu0 0.0
    %1539 = vmatpush1.msra.mxu0 0.0
    %1540 = vmatprep.subr.mxu0 0.0
    %1541 = vmatpush1.msra.mxu0 0.0
    %1542 = vmatprep.subr.mxu0 0.0
    %1543 = vmatpush1.msra.mxu0 0.0
    %1544 = vmatprep.subr.mxu0 0.0
    %1545 = vmatpush1.msra.mxu0 0.0
    %1546 = vmatprep.subr.mxu0 0.0
    %1547 = vmatpush1.msra.mxu0 0.0
    %1548 = vmatprep.subr.mxu0 0.0
    %1549 = vmatpush1.msra.mxu0 0.0
    %1550 = vmatprep.subr.mxu0 0.0
    %1551 = vmatpush1.msra.mxu0 0.0
    %1552 = vmatprep.subr.mxu0 0.0
    %1553 = vmatpush1.msra.mxu0 0.0
    %1554 = vmatprep.subr.mxu0 0.0
    %1555 = vmatpush1.msra.mxu0 0.0
    %1556 = vmatprep.subr.mxu0 0.0
    %1557 = vmatpush1.msra.mxu0 0.0
    %1558 = vmatprep.subr.mxu0 0.0
    %1559 = vmatpush1.msra.mxu0 0.0
    %1560 = vmatprep.subr.mxu0 0.0
    %1561 = vmatpush1.msra.mxu0 0.0
    %1562 = vmatprep.subr.mxu0 0.0
    %1563 = vmatpush1.msra.mxu0 0.0
    %1564 = vmatprep.subr.mxu0 0.0
    %1565 = vmatpush1.msra.mxu0 0.0
    %1566 = vmatprep.subr.mxu0 0.0
    %1567 = vmatpush1.msra.mxu0 0.0
    %1568 = vmatprep.subr.mxu0 0.0
    %1569 = vmatpush1.msra.mxu0 0.0
    %1570 = vmatprep.subr.mxu0 0.0
    %1571 = vmatpush1.msra.mxu0 0.0
    %1572 = vmatprep.subr.mxu0 0.0
    %1573 = vmatpush1.msra.mxu0 0.0
    %1574 = vmatprep.subr.mxu0 0.0
    %1575 = vmatpush1.msra.mxu0 0.0
    %1576 = vmatprep.subr.mxu0 0.0
    %1577 = vmatpush1.msra.mxu0 0.0
    %1578 = vmatprep.subr.mxu0 0.0
    %1579 = vmatpush1.msra.mxu0 0.0
    %1580 = vmatprep.subr.mxu0 0.0
    %1581 = vmatpush1.msra.mxu0 0.0
    %1582 = vmatprep.subr.mxu0 0.0
    %1583 = vmatpush1.msra.mxu0 0.0
    %1584 = vmatprep.subr.mxu0 0.0
    %1585 = vmatpush1.msra.mxu0 0.0
    %1586 = vmatprep.subr.mxu0 0.0
    %1587 = vmatpush1.msra.mxu0 0.0
    %1588 = vmatprep.subr.mxu0 0.0
    %1589 = vmatpush1.msra.mxu0 0.0
    %1590 = vmatprep.subr.mxu0 0.0
    %1591 = vmatpush1.msra.mxu0 0.0
    %1592 = vmatprep.subr.mxu0 0.0
    %1593 = vmatpush1.msra.mxu0 0.0
    %1594 = vmatprep.subr.mxu0 0.0
    %1595 = vmatpush1.msra.mxu0 0.0
    %1596 = vmatprep.mubr.f32.mxu0 0.0
    %1597 = vmatmul.mubr.f32.gmra.mrb[0].mxu0 %v1530
    %v1598 = vpop.f32.mrb[0].mxu0
    %v1599 = vadd.f32 0.0, %v1598
    %v1600 = vpop.f32.mrb[0].mxu0
    %1601 = vdwg.mxu0
    %1603 = vrot.lane.b32.xlu0 %v1599, 16
    %v1604 = vpop.permute.xlu0 %1603
    %1606 = vst.msk [vmem:[#allocation2 + $0x8] sm:$0xff] %vm916, %v1604
    %1607 = vrot.lane.b32.xlu0 %v269, 104
    %v1608 = vpop.permute.xlu0 %1607
    %1609 = vrot.lane.b32.xlu0 %v333, 104
    %v1610 = vpop.permute.xlu0 %1609
    %v1611 = vsel %vm401, %v1608, 0
    %v1613 = vsel %vm401, %v1610, 0
    %1615 = vmatprep.subr.mxu0 0.0
    %1616 = vmatpush1.xpose.msra.mxu0 %v1613
    %1617 = vmatprep.subr.mxu0 0.0
    %1618 = vmatpush1.xpose.msra.mxu0 0.0
    %1619 = vmatprep.subr.mxu0 0.0
    %1620 = vmatpush1.xpose.msra.mxu0 0.0
    %1621 = vmatprep.subr.mxu0 0.0
    %1622 = vmatpush1.xpose.msra.mxu0 0.0
    %1623 = vmatprep.subr.mxu0 0.0
    %1624 = vmatpush1.xpose.msra.mxu0 0.0
    %1625 = vmatprep.subr.mxu0 0.0
    %1626 = vmatpush1.xpose.msra.mxu0 0.0
    %1627 = vmatprep.subr.mxu0 0.0
    %1628 = vmatpush1.xpose.msra.mxu0 0.0
    %1629 = vmatprep.subr.mxu0 0.0
    %1630 = vmatpush1.xpose.msra.mxu0 0.0
    %1631 = vmatprep.subr.mxu0 0.0
    %1632 = vmatpush1.xpose.msra.mxu0 0.0
    %1633 = vmatprep.subr.mxu0 0.0
    %1634 = vmatpush1.xpose.msra.mxu0 0.0
    %1635 = vmatprep.subr.mxu0 0.0
    %1636 = vmatpush1.xpose.msra.mxu0 0.0
    %1637 = vmatprep.subr.mxu0 0.0
    %1638 = vmatpush1.xpose.msra.mxu0 0.0
    %1639 = vmatprep.subr.mxu0 0.0
    %1640 = vmatpush1.xpose.msra.mxu0 0.0
    %1641 = vmatprep.subr.mxu0 0.0
    %1642 = vmatpush1.xpose.msra.mxu0 0.0
    %1643 = vmatprep.subr.mxu0 0.0
    %1644 = vmatpush1.xpose.msra.mxu0 0.0
    %1645 = vmatprep.subr.mxu0 0.0
    %1646 = vmatpush1.xpose.msra.mxu0 0.0
    %1647 = vmatprep.subr.mxu0 0.0
    %1648 = vmatpush1.xpose.msra.mxu0 0.0
    %1649 = vmatprep.subr.mxu0 0.0
    %1650 = vmatpush1.xpose.msra.mxu0 0.0
    %1651 = vmatprep.subr.mxu0 0.0
    %1652 = vmatpush1.xpose.msra.mxu0 0.0
    %1653 = vmatprep.subr.mxu0 0.0
    %1654 = vmatpush1.xpose.msra.mxu0 0.0
    %1655 = vmatprep.subr.mxu0 0.0
    %1656 = vmatpush1.xpose.msra.mxu0 0.0
    %1657 = vmatprep.subr.mxu0 0.0
    %1658 = vmatpush1.xpose.msra.mxu0 0.0
    %1659 = vmatprep.subr.mxu0 0.0
    %1660 = vmatpush1.xpose.msra.mxu0 0.0
    %1661 = vmatprep.subr.mxu0 0.0
    %1662 = vmatpush1.xpose.msra.mxu0 0.0
    %1663 = vmatprep.subr.mxu0 0.0
    %1664 = vmatpush1.xpose.msra.mxu0 0.0
    %1665 = vmatprep.subr.mxu0 0.0
    %1666 = vmatpush1.xpose.msra.mxu0 0.0
    %1667 = vmatprep.subr.mxu0 0.0
    %1668 = vmatpush1.xpose.msra.mxu0 0.0
    %1669 = vmatprep.subr.mxu0 0.0
    %1670 = vmatpush1.xpose.msra.mxu0 0.0
    %1671 = vmatprep.subr.mxu0 0.0
    %1672 = vmatpush1.xpose.msra.mxu0 0.0
    %1673 = vmatprep.subr.mxu0 0.0
    %1674 = vmatpush1.xpose.msra.mxu0 0.0
    %1675 = vmatprep.subr.mxu0 0.0
    %1676 = vmatpush1.xpose.msra.mxu0 0.0
    %1677 = vmatprep.subr.mxu0 0.0
    %1678 = vmatpush1.xpose.msra.mxu0 0.0
    %1679 = vmatprep.mubr.f32.mxu0 0.0
    %1680 = vmatmul.mubr.f32.gmra.mrb[0].mxu0 %v1611
    %v1681 = vpop.f32.mrb[0].mxu0
    %v1682 = vadd.f32 0.0, %v1681
    %v1683 = vpop.f32.mrb[0].mxu0
    %1684 = vdwg.mxu0
    %v1685 = vmul.f32 %v1682, 0.35355338
    %v1686 = vadd.f32 %v1685, %v1174
    %v1687 = vsel %vm401, %v1686, -inf
    %1688 = vmax.xlane.f32.xlu0 %v1687
    %v1689 = vpop.xlane.xlu0 %1688
    %v1690 = vsub.f32 %v1686, %v1689
    %v1691 = vmul.f32 %v1690, 1.442695
    %v1692 = vpow.pop %v1691
    %v1693 = vsel %vm401, %v1692, 0.0
    %1694 = vadd.xlane.f32.xlu0 %v1693
    %v1695 = vpop.xlane.xlu0 %1694
    %v1696 = vrcp.pop %v1695
    %v1697 = vmul.f32 %v1692, %v1696
    %1698 = vrot.lane.b32.xlu0 %v397, 104
    %v1699 = vpop.permute.xlu0 %1698
    %v1702 = vsel %vm401, %v1697, 0
    %1704 = vmatprep.subr.mxu0 0.0
    %1705 = vmatpush1.msra.mxu0 %v1699
    %1706 = vmatprep.subr.mxu0 0.0
    %1707 = vmatpush1.msra.mxu0 0.0
    %1708 = vmatprep.subr.mxu0 0.0
    %1709 = vmatpush1.msra.mxu0 0.0
    %1710 = vmatprep.subr.mxu0 0.0
    %1711 = vmatpush1.msra.mxu0 0.0
    %1712 = vmatprep.subr.mxu0 0.0
    %1713 = vmatpush1.msra.mxu0 0.0
    %1714 = vmatprep.subr.mxu0 0.0
    %1715 = vmatpush1.msra.mxu0 0.0
    %1716 = vmatprep.subr.mxu0 0.0
    %1717 = vmatpush1.msra.mxu0 0.0
    %1718 = vmatprep.subr.mxu0 0.0
    %1719 = vmatpush1.msra.mxu0 0.0
    %1720 = vmatprep.subr.mxu0 0.0
    %1721 = vmatpush1.msra.mxu0 0.0
    %1722 = vmatprep.subr.mxu0 0.0
    %1723 = vmatpush1.msra.mxu0 0.0
    %1724 = vmatprep.subr.mxu0 0.0
    %1725 = vmatpush1.msra.mxu0 0.0
    %1726 = vmatprep.subr.mxu0 0.0
    %1727 = vmatpush1.msra.mxu0 0.0
    %1728 = vmatprep.subr.mxu0 0.0
    %1729 = vmatpush1.msra.mxu0 0.0
    %1730 = vmatprep.subr.mxu0 0.0
    %1731 = vmatpush1.msra.mxu0 0.0
    %1732 = vmatprep.subr.mxu0 0.0
    %1733 = vmatpush1.msra.mxu0 0.0
    %1734 = vmatprep.subr.mxu0 0.0
    %1735 = vmatpush1.msra.mxu0 0.0
    %1736 = vmatprep.subr.mxu0 0.0
    %1737 = vmatpush1.msra.mxu0 0.0
    %1738 = vmatprep.subr.mxu0 0.0
    %1739 = vmatpush1.msra.mxu0 0.0
    %1740 = vmatprep.subr.mxu0 0.0
    %1741 = vmatpush1.msra.mxu0 0.0
    %1742 = vmatprep.subr.mxu0 0.0
    %1743 = vmatpush1.msra.mxu0 0.0
    %1744 = vmatprep.subr.mxu0 0.0
    %1745 = vmatpush1.msra.mxu0 0.0
    %1746 = vmatprep.subr.mxu0 0.0
    %1747 = vmatpush1.msra.mxu0 0.0
    %1748 = vmatprep.subr.mxu0 0.0
    %1749 = vmatpush1.msra.mxu0 0.0
    %1750 = vmatprep.subr.mxu0 0.0
    %1751 = vmatpush1.msra.mxu0 0.0
    %1752 = vmatprep.subr.mxu0 0.0
    %1753 = vmatpush1.msra.mxu0 0.0
    %1754 = vmatprep.subr.mxu0 0.0
    %1755 = vmatpush1.msra.mxu0 0.0
    %1756 = vmatprep.subr.mxu0 0.0
    %1757 = vmatpush1.msra.mxu0 0.0
    %1758 = vmatprep.subr.mxu0 0.0
    %1759 = vmatpush1.msra.mxu0 0.0
    %1760 = vmatprep.subr.mxu0 0.0
    %1761 = vmatpush1.msra.mxu0 0.0
    %1762 = vmatprep.subr.mxu0 0.0
    %1763 = vmatpush1.msra.mxu0 0.0
    %1764 = vmatprep.subr.mxu0 0.0
    %1765 = vmatpush1.msra.mxu0 0.0
    %1766 = vmatprep.subr.mxu0 0.0
    %1767 = vmatpush1.msra.mxu0 0.0
    %1768 = vmatprep.mubr.f32.mxu0 0.0
    %1769 = vmatmul.mubr.f32.gmra.mrb[0].mxu0 %v1702
    %v1770 = vpop.f32.mrb[0].mxu0
    %v1771 = vadd.f32 0.0, %v1770
    %v1772 = vpop.f32.mrb[0].mxu0
    %1773 = vdwg.mxu0
    %1775 = vrot.lane.b32.xlu0 %v1771, 24
    %v1776 = vpop.permute.xlu0 %1775
    %1778 = vst.msk [vmem:[#allocation2 + $0x8] sm:$0xff] %vm1089, %v1776
    %v1779 = vld [vmem:[#allocation2] sm:$0xff]
    %v1780 = vld [vmem:[#allocation2 + $0x8] sm:$0xff]
    %v1781 = vld [vmem:[%s15] sm:$0xf]
    %v1782 = vld [vmem:[%s15 + $0x4] sm:$0xf]
    %v1783 = vld [vmem:[%s15 + $0x8] sm:$0xf]
    %v1784 = vld [vmem:[%s15 + $0xc] sm:$0xf]
    %v1785 = vld [vmem:[%s16] sm:$0x1]
    %v1786 = vpack.c.bf16 %v1780, %v1779
    %v1788 = vlaneseq
    %v1789 = vshrl.u32 %v1788, 7
    %v1790 = vsub.s32 0, %v1789
    %v1791 = vrot.slane %v1785, %v1790
    %v1797 = vunpack.c.l.b16 %v1781
    %v1798 = vunpack.c.l.b16 %v1782
    %v1799 = vunpack.c.l.b16 %v1783
    %v1800 = vunpack.c.l.b16 %v1784
    %v1801 = vpack.c.b16 %v1798, %v1797
    %v1802 = vpack.c.b16 %v1800, %v1799
    %v1806 = vsel %vm145, %v1786, 0
    %1808 = vmatprep.subr.bf16.mxu0 0
    %1809 = vmatpush1.bf16.msra.mxu0 %v1801
    %1810 = vmatprep.subr.bf16.mxu0 0
    %1811 = vmatpush1.bf16.msra.mxu0 %v1802
    %1812 = vmatprep.subr.bf16.mxu0 0
    %1813 = vmatpush1.bf16.msra.mxu0 0
    %1814 = vmatprep.subr.bf16.mxu0 0
    %1815 = vmatpush1.bf16.msra.mxu0 0
    %1816 = vmatprep.subr.bf16.mxu0 0
    %1817 = vmatpush1.bf16.msra.mxu0 0
    %1818 = vmatprep.subr.bf16.mxu0 0
    %1819 = vmatpush1.bf16.msra.mxu0 0
    %1820 = vmatprep.subr.bf16.mxu0 0
    %1821 = vmatpush1.bf16.msra.mxu0 0
    %1822 = vmatprep.subr.bf16.mxu0 0
    %1823 = vmatpush1.bf16.msra.mxu0 0
    %1824 = vmatprep.subr.bf16.mxu0 0
    %1825 = vmatpush1.bf16.msra.mxu0 0
    %1826 = vmatprep.subr.bf16.mxu0 0
    %1827 = vmatpush1.bf16.msra.mxu0 0
    %1828 = vmatprep.subr.bf16.mxu0 0
    %1829 = vmatpush1.bf16.msra.mxu0 0
    %1830 = vmatprep.subr.bf16.mxu0 0
    %1831 = vmatpush1.bf16.msra.mxu0 0
    %1832 = vmatprep.subr.bf16.mxu0 0
    %1833 = vmatpush1.bf16.msra.mxu0 0
    %1834 = vmatprep.subr.bf16.mxu0 0
    %1835 = vmatpush1.bf16.msra.mxu0 0
    %1836 = vmatprep.subr.bf16.mxu0 0
    %1837 = vmatpush1.bf16.msra.mxu0 0
    %1838 = vmatprep.subr.bf16.mxu0 0
    %1839 = vmatpush1.bf16.msra.mxu0 0
    %1840 = vmatprep.mubr.bf16.mxu0 0
    %1841 = vmatmul.mubr.bf16.gmra.mrb[0].mxu0 %v1806
    %v1842 = vpop.f32.mrb[0].mxu0
    %v1843 = vadd.f32 %v1791, %v1842
    %v1844 = vpop.f32.mrb[0].mxu0
    %v1845 = vpop.f32.mrb[0].mxu0
    %v1846 = vadd.f32 %v1791, %v1845
    %v1847 = vpop.f32.mrb[0].mxu0
    %1848 = vdwg.mxu0
    %v1849 = vadd.f32 %v141, %v1843
    %v1850 = vadd.f32 %v142, %v1846
    %v1851 = vld [vmem:[%s7] sm:$0x1]
    %v1852 = vld [vmem:[%s8] sm:$0x1]
    %v1853 = vsel %vm145, %v1849, 0.0
    %1854 = vadd.xlane.f32.xlu0 %v1853
    %v1855 = vpop.xlane.xlu0 %1854
    %v1856 = vsel %vm145, %v1850, 0.0
    %1857 = vadd.xlane.f32.xlu0 %v1856
    %v1858 = vpop.xlane.xlu0 %1857
    %v1859 = vmul.f32 %v1855, %v152
    %v1860 = vmul.f32 %v1858, %v152
    %v1861 = vsub.f32 %v1849, %v1859
    %v1862 = vsub.f32 %v1850, %v1860
    %v1863 = vmul.f32 %v1861, %v1861
    %v1864 = vmul.f32 %v1862, %v1862
    %v1865 = vsel %vm145, %v1863, 0.0
    %1866 = vadd.xlane.f32.xlu0 %v1865
    %v1867 = vpop.xlane.xlu0 %1866
    %v1868 = vsel %vm145, %v1864, 0.0
    %1869 = vadd.xlane.f32.xlu0 %v1868
    %v1870 = vpop.xlane.xlu0 %1869
    %v1871 = vmul.f32 %v1867, %v165
    %v1872 = vmul.f32 %v1870, %v165
    %v1873 = vrsqrt.pop %v1871
    %v1874 = vmul.f32 %v1871, %v1873
    %vm1875 = vcmp.eq.f32.partialorder %v1871, inf
    %v1876 = vsel %vm1875, %v1871, %v1874
    %vm1877 = vcmp.eq.f32.partialorder %v1871, 0.0
    %v1878 = vand.u32 %v1871, 2147483648
    %v1879 = vsel %vm1877, %v1878, %v1876
    %v1880 = vrsqrt.pop %v1872
    %v1881 = vmul.f32 %v1872, %v1880
    %vm1882 = vcmp.eq.f32.partialorder %v1872, inf
    %v1883 = vsel %vm1882, %v1872, %v1881
    %vm1884 = vcmp.eq.f32.partialorder %v1872, 0.0
    %v1885 = vand.u32 %v1872, 2147483648
    %v1886 = vsel %vm1884, %v1885, %v1883
    %v1887 = vadd.f32 %v1879, 1e-06
    %v1888 = vadd.f32 %v1886, 1e-06
    %v1889 = vrcp.pop %v1887
    %v1890 = vrcp.pop %v1888
    %v1892 = vlaneseq
    %v1893 = vshrl.u32 %v1892, 7
    %v1894 = vsub.s32 0, %v1893
    %v1895 = vrot.slane %v1851, %v1894
    %v1897 = vmul.f32 %v1895, %v1861
    %v1898 = vmul.f32 %v1895, %v1862
    %v1899 = vmul.f32 %v1897, %v1889
    %v1900 = vmul.f32 %v1898, %v1890
    %v1902 = vlaneseq
    %v1903 = vshrl.u32 %v1902, 7
    %v1904 = vsub.s32 0, %v1903
    %v1905 = vrot.slane %v1852, %v1904
    %v1907 = vadd.f32 %v1899, %v1905
    %v1908 = vadd.f32 %v1900, %v1905
    %v1909 = vld [vmem:[%s17] sm:$0xff]
    %v1910 = vld [vmem:[%s17 + $0x8] sm:$0xff]
    %v1911 = vld [vmem:[%s17 + $0x10] sm:$0xff]
    %v1912 = vld [vmem:[%s17 + $0x18] sm:$0xff]
    %v1913 = vld [vmem:[%s17 + $0x20] sm:$0xff]
    %v1914 = vld [vmem:[%s17 + $0x28] sm:$0xff]
    %v1915 = vld [vmem:[%s17 + $0x30] sm:$0xff]
    %v1916 = vld [vmem:[%s17 + $0x38] sm:$0xff]
    %v1917 = vld [vmem:[%s17 + $0x40] sm:$0xff]
    %v1918 = vld [vmem:[%s17 + $0x48] sm:$0xff]
    %v1919 = vld [vmem:[%s17 + $0x50] sm:$0xff]
    %v1920 = vld [vmem:[%s17 + $0x58] sm:$0xff]
    %v1921 = vld [vmem:[%s17 + $0x60] sm:$0xff]
    %v1922 = vld [vmem:[%s17 + $0x68] sm:$0xff]
    %v1923 = vld [vmem:[%s17 + $0x70] sm:$0xff]
    %v1924 = vld [vmem:[%s17 + $0x78] sm:$0xff]
    %v1925 = vld [vmem:[%s17 + $0x80] sm:$0xff]
    %v1926 = vld [vmem:[%s17 + $0x88] sm:$0xff]
    %v1927 = vld [vmem:[%s17 + $0x90] sm:$0xff]
    %v1928 = vld [vmem:[%s17 + $0x98] sm:$0xff]
    %v1929 = vld [vmem:[%s17 + $0xa0] sm:$0xff]
    %v1930 = vld [vmem:[%s17 + $0xa8] sm:$0xff]
    %v1931 = vld [vmem:[%s17 + $0xb0] sm:$0xff]
    %v1932 = vld [vmem:[%s17 + $0xb8] sm:$0xff]
    %v1933 = vld [vmem:[%s17 + $0xc0] sm:$0xff]
    %v1934 = vld [vmem:[%s17 + $0xc8] sm:$0xff]
    %v1935 = vld [vmem:[%s17 + $0xd0] sm:$0xff]
    %v1936 = vld [vmem:[%s17 + $0xd8] sm:$0xff]
    %v1937 = vld [vmem:[%s17 + $0xe0] sm:$0xff]
    %v1938 = vld [vmem:[%s17 + $0xe8] sm:$0xff]
    %v1939 = vld [vmem:[%s17 + $0xf0] sm:$0xff]
    %v1940 = vld [vmem:[%s17 + $0xf8] sm:$0xff]
    %v1941 = vld [vmem:[%s18] sm:$0xff]
    %v1942 = vld [vmem:[%s18 + $0x8] sm:$0xff]
    %v1943 = vpack.c.bf16 %v1908, %v1907
    %v1946 = vlaneseq
    %v1947 = vshrl.u32 %v1946, 7
    %v1948 = vsub.s32 0, %v1947
    %v1949 = vrot.slane %v1941, %v1948
    %v1950 = vlaneseq
    %v1951 = vshrl.u32 %v1950, 7
    %v1952 = vsub.s32 1, %v1951
    %v1953 = vrot.slane %v1941, %v1952
    %v1954 = vlaneseq
    %v1955 = vshrl.u32 %v1954, 7
    %v1956 = vsub.s32 2, %v1955
    %v1957 = vrot.slane %v1941, %v1956
    %v1958 = vlaneseq
    %v1959 = vshrl.u32 %v1958, 7
    %v1960 = vsub.s32 3, %v1959
    %v1961 = vrot.slane %v1941, %v1960
    %v1962 = vlaneseq
    %v1963 = vshrl.u32 %v1962, 7
    %v1964 = vsub.s32 4, %v1963
    %v1965 = vrot.slane %v1941, %v1964
    %v1966 = vlaneseq
    %v1967 = vshrl.u32 %v1966, 7
    %v1968 = vsub.s32 5, %v1967
    %v1969 = vrot.slane %v1941, %v1968
    %v1970 = vlaneseq
    %v1971 = vshrl.u32 %v1970, 7
    %v1972 = vsub.s32 6, %v1971
    %v1973 = vrot.slane %v1941, %v1972
    %v1974 = vlaneseq
    %v1975 = vshrl.u32 %v1974, 7
    %v1976 = vsub.s32 7, %v1975
    %v1977 = vrot.slane %v1941, %v1976
    %v1978 = vlaneseq
    %v1979 = vshrl.u32 %v1978, 7
    %v1980 = vsub.s32 0, %v1979
    %v1981 = vrot.slane %v1942, %v1980
    %v1982 = vlaneseq
    %v1983 = vshrl.u32 %v1982, 7
    %v1984 = vsub.s32 1, %v1983
    %v1985 = vrot.slane %v1942, %v1984
    %v1986 = vlaneseq
    %v1987 = vshrl.u32 %v1986, 7
    %v1988 = vsub.s32 2, %v1987
    %v1989 = vrot.slane %v1942, %v1988
    %v1990 = vlaneseq
    %v1991 = vshrl.u32 %v1990, 7
    %v1992 = vsub.s32 3, %v1991
    %v1993 = vrot.slane %v1942, %v1992
    %v1994 = vlaneseq
    %v1995 = vshrl.u32 %v1994, 7
    %v1996 = vsub.s32 4, %v1995
    %v1997 = vrot.slane %v1942, %v1996
    %v1998 = vlaneseq
    %v1999 = vshrl.u32 %v1998, 7
    %v2000 = vsub.s32 5, %v1999
    %v2001 = vrot.slane %v1942, %v2000
    %v2002 = vlaneseq
    %v2003 = vshrl.u32 %v2002, 7
    %v2004 = vsub.s32 6, %v2003
    %v2005 = vrot.slane %v1942, %v2004
    %v2006 = vlaneseq
    %v2007 = vshrl.u32 %v2006, 7
    %v2008 = vsub.s32 7, %v2007
    %v2009 = vrot.slane %v1942, %v2008
    %v2058 = vunpack.c.l.b16 %v1909
    %v2059 = vunpack.c.h.b16 %v1909
    %v2060 = vunpack.c.l.b16 %v1910
    %v2061 = vunpack.c.h.b16 %v1910
    %v2062 = vunpack.c.l.b16 %v1911
    %v2063 = vunpack.c.h.b16 %v1911
    %v2064 = vunpack.c.l.b16 %v1912
    %v2065 = vunpack.c.h.b16 %v1912
    %v2066 = vunpack.c.l.b16 %v1913
    %v2067 = vunpack.c.h.b16 %v1913
    %v2068 = vunpack.c.l.b16 %v1914
    %v2069 = vunpack.c.h.b16 %v1914
    %v2070 = vunpack.c.l.b16 %v1915
    %v2071 = vunpack.c.h.b16 %v1915
    %v2072 = vunpack.c.l.b16 %v1916
    %v2073 = vunpack.c.h.b16 %v1916
    %v2074 = vunpack.c.l.b16 %v1917
    %v2075 = vunpack.c.h.b16 %v1917
    %v2076 = vunpack.c.l.b16 %v1918
    %v2077 = vunpack.c.h.b16 %v1918
    %v2078 = vunpack.c.l.b16 %v1919
    %v2079 = vunpack.c.h.b16 %v1919
    %v2080 = vunpack.c.l.b16 %v1920
    %v2081 = vunpack.c.h.b16 %v1920
    %v2082 = vunpack.c.l.b16 %v1921
    %v2083 = vunpack.c.h.b16 %v1921
    %v2084 = vunpack.c.l.b16 %v1922
    %v2085 = vunpack.c.h.b16 %v1922
    %v2086 = vunpack.c.l.b16 %v1923
    %v2087 = vunpack.c.h.b16 %v1923
    %v2088 = vunpack.c.l.b16 %v1924
    %v2089 = vunpack.c.h.b16 %v1924
    %v2090 = vunpack.c.l.b16 %v1925
    %v2091 = vunpack.c.h.b16 %v1925
    %v2092 = vunpack.c.l.b16 %v1926
    %v2093 = vunpack.c.h.b16 %v1926
    %v2094 = vunpack.c.l.b16 %v1927
    %v2095 = vunpack.c.h.b16 %v1927
    %v2096 = vunpack.c.l.b16 %v1928
    %v2097 = vunpack.c.h.b16 %v1928
    %v2098 = vunpack.c.l.b16 %v1929
    %v2099 = vunpack.c.h.b16 %v1929
    %v2100 = vunpack.c.l.b16 %v1930
    %v2101 = vunpack.c.h.b16 %v1930
    %v2102 = vunpack.c.l.b16 %v1931
    %v2103 = vunpack.c.h.b16 %v1931
    %v2104 = vunpack.c.l.b16 %v1932
    %v2105 = vunpack.c.h.b16 %v1932
    %v2106 = vunpack.c.l.b16 %v1933
    %v2107 = vunpack.c.h.b16 %v1933
    %v2108 = vunpack.c.l.b16 %v1934
    %v2109 = vunpack.c.h.b16 %v1934
    %v2110 = vunpack.c.l.b16 %v1935
    %v2111 = vunpack.c.h.b16 %v1935
    %v2112 = vunpack.c.l.b16 %v1936
    %v2113 = vunpack.c.h.b16 %v1936
    %v2114 = vunpack.c.l.b16 %v1937
    %v2115 = vunpack.c.h.b16 %v1937
    %v2116 = vunpack.c.l.b16 %v1938
    %v2117 = vunpack.c.h.b16 %v1938
    %v2118 = vunpack.c.l.b16 %v1939
    %v2119 = vunpack.c.h.b16 %v1939
    %v2120 = vunpack.c.l.b16 %v1940
    %v2121 = vunpack.c.h.b16 %v1940
    %v2122 = vpack.c.b16 %v2074, %v2058
    %v2123 = vpack.c.b16 %v2075, %v2059
    %v2124 = vpack.c.b16 %v2076, %v2060
    %v2125 = vpack.c.b16 %v2077, %v2061
    %v2126 = vpack.c.b16 %v2078, %v2062
    %v2127 = vpack.c.b16 %v2079, %v2063
    %v2128 = vpack.c.b16 %v2080, %v2064
    %v2129 = vpack.c.b16 %v2081, %v2065
    %v2130 = vpack.c.b16 %v2082, %v2066
    %v2131 = vpack.c.b16 %v2083, %v2067
    %v2132 = vpack.c.b16 %v2084, %v2068
    %v2133 = vpack.c.b16 %v2085, %v2069
    %v2134 = vpack.c.b16 %v2086, %v2070
    %v2135 = vpack.c.b16 %v2087, %v2071
    %v2136 = vpack.c.b16 %v2088, %v2072
    %v2137 = vpack.c.b16 %v2089, %v2073
    %v2138 = vpack.c.b16 %v2106, %v2090
    %v2139 = vpack.c.b16 %v2107, %v2091
    %v2140 = vpack.c.b16 %v2108, %v2092
    %v2141 = vpack.c.b16 %v2109, %v2093
    %v2142 = vpack.c.b16 %v2110, %v2094
    %v2143 = vpack.c.b16 %v2111, %v2095
    %v2144 = vpack.c.b16 %v2112, %v2096
    %v2145 = vpack.c.b16 %v2113, %v2097
    %v2146 = vpack.c.b16 %v2114, %v2098
    %v2147 = vpack.c.b16 %v2115, %v2099
    %v2148 = vpack.c.b16 %v2116, %v2100
    %v2149 = vpack.c.b16 %v2117, %v2101
    %v2150 = vpack.c.b16 %v2118, %v2102
    %v2151 = vpack.c.b16 %v2119, %v2103
    %v2152 = vpack.c.b16 %v2120, %v2104
    %v2153 = vpack.c.b16 %v2121, %v2105
    %v2187 = vsel %vm145, %v1943, 0
    %2189 = vmatprep.subr.bf16.mxu0 %v2123
    %2190 = vmatpush1.bf16.msra.mxu0 %v2122
    %2191 = vmatprep.subr.bf16.mxu0 %v2139
    %2192 = vmatpush1.bf16.msra.mxu0 %v2138
    %2193 = vmatprep.subr.bf16.mxu0 0
    %2194 = vmatpush1.bf16.msra.mxu0 0
    %2195 = vmatprep.subr.bf16.mxu0 0
    %2196 = vmatpush1.bf16.msra.mxu0 0
    %2197 = vmatprep.subr.bf16.mxu0 0
    %2198 = vmatpush1.bf16.msra.mxu0 0
    %2199 = vmatprep.subr.bf16.mxu0 0
    %2200 = vmatpush1.bf16.msra.mxu0 0
    %2201 = vmatprep.subr.bf16.mxu0 0
    %2202 = vmatpush1.bf16.msra.mxu0 0
    %2203 = vmatprep.subr.bf16.mxu0 0
    %2204 = vmatpush1.bf16.msra.mxu0 0
    %2205 = vmatprep.subr.bf16.mxu0 0
    %2206 = vmatpush1.bf16.msra.mxu0 0
    %2207 = vmatprep.subr.bf16.mxu0 0
    %2208 = vmatpush1.bf16.msra.mxu0 0
    %2209 = vmatprep.subr.bf16.mxu0 0
    %2210 = vmatpush1.bf16.msra.mxu0 0
    %2211 = vmatprep.subr.bf16.mxu0 0
    %2212 = vmatpush1.bf16.msra.mxu0 0
    %2213 = vmatprep.subr.bf16.mxu0 0
    %2214 = vmatpush1.bf16.msra.mxu0 0
    %2215 = vmatprep.subr.bf16.mxu0 0
    %2216 = vmatpush1.bf16.msra.mxu0 0
    %2217 = vmatprep.subr.bf16.mxu0 0
    %2218 = vmatpush1.bf16.msra.mxu0 0
    %2219 = vmatprep.subr.bf16.mxu0 0
    %2220 = vmatpush1.bf16.msra.mxu0 0
    %2221 = vmatprep.mubr.bf16.mxu0 0
    %2222 = vmatmul.mubr.bf16.gmra.mrb[0].mxu0 %v2187
    %v2223 = vpop.f32.mrb[0].mxu0
    %v2224 = vadd.f32 %v1949, %v2223
    %v2225 = vpop.f32.mrb[0].mxu0
    %v2226 = vadd.f32 %v1953, %v2225
    %v2227 = vpop.f32.mrb[0].mxu0
    %v2228 = vadd.f32 %v1949, %v2227
    %v2229 = vpop.f32.mrb[0].mxu0
    %v2230 = vadd.f32 %v1953, %v2229
    %2231 = vdwg.mxu0
    %2232 = vmatprep.subr.bf16.mxu0 %v2125
    %2233 = vmatpush1.bf16.msra.mxu0 %v2124
    %2234 = vmatprep.subr.bf16.mxu0 %v2141
    %2235 = vmatpush1.bf16.msra.mxu0 %v2140
    %2236 = vmatprep.subr.bf16.mxu0 0
    %2237 = vmatpush1.bf16.msra.mxu0 0
    %2238 = vmatprep.subr.bf16.mxu0 0
    %2239 = vmatpush1.bf16.msra.mxu0 0
    %2240 = vmatprep.subr.bf16.mxu0 0
    %2241 = vmatpush1.bf16.msra.mxu0 0
    %2242 = vmatprep.subr.bf16.mxu0 0
    %2243 = vmatpush1.bf16.msra.mxu0 0
    %2244 = vmatprep.subr.bf16.mxu0 0
    %2245 = vmatpush1.bf16.msra.mxu0 0
    %2246 = vmatprep.subr.bf16.mxu0 0
    %2247 = vmatpush1.bf16.msra.mxu0 0
    %2248 = vmatprep.subr.bf16.mxu0 0
    %2249 = vmatpush1.bf16.msra.mxu0 0
    %2250 = vmatprep.subr.bf16.mxu0 0
    %2251 = vmatpush1.bf16.msra.mxu0 0
    %2252 = vmatprep.subr.bf16.mxu0 0
    %2253 = vmatpush1.bf16.msra.mxu0 0
    %2254 = vmatprep.subr.bf16.mxu0 0
    %2255 = vmatpush1.bf16.msra.mxu0 0
    %2256 = vmatprep.subr.bf16.mxu0 0
    %2257 = vmatpush1.bf16.msra.mxu0 0
    %2258 = vmatprep.subr.bf16.mxu0 0
    %2259 = vmatpush1.bf16.msra.mxu0 0
    %2260 = vmatprep.subr.bf16.mxu0 0
    %2261 = vmatpush1.bf16.msra.mxu0 0
    %2262 = vmatprep.subr.bf16.mxu0 0
    %2263 = vmatpush1.bf16.msra.mxu0 0
    %2264 = vmatprep.mubr.bf16.mxu0 0
    %2265 = vmatmul.mubr.bf16.gmra.mrb[0].mxu0 %v2187
    %v2266 = vpop.f32.mrb[0].mxu0
    %v2267 = vadd.f32 %v1957, %v2266
    %v2268 = vpop.f32.mrb[0].mxu0
    %v2269 = vadd.f32 %v1961, %v2268
    %v2270 = vpop.f32.mrb[0].mxu0
    %v2271 = vadd.f32 %v1957, %v2270
    %v2272 = vpop.f32.mrb[0].mxu0
    %v2273 = vadd.f32 %v1961, %v2272
    %2274 = vdwg.mxu0
    %2275 = vmatprep.subr.bf16.mxu0 %v2127
    %2276 = vmatpush1.bf16.msra.mxu0 %v2126
    %2277 = vmatprep.subr.bf16.mxu0 %v2143
    %2278 = vmatpush1.bf16.msra.mxu0 %v2142
    %2279 = vmatprep.subr.bf16.mxu0 0
    %2280 = vmatpush1.bf16.msra.mxu0 0
    %2281 = vmatprep.subr.bf16.mxu0 0
    %2282 = vmatpush1.bf16.msra.mxu0 0
    %2283 = vmatprep.subr.bf16.mxu0 0
    %2284 = vmatpush1.bf16.msra.mxu0 0
    %2285 = vmatprep.subr.bf16.mxu0 0
    %2286 = vmatpush1.bf16.msra.mxu0 0
    %2287 = vmatprep.subr.bf16.mxu0 0
    %2288 = vmatpush1.bf16.msra.mxu0 0
    %2289 = vmatprep.subr.bf16.mxu0 0
    %2290 = vmatpush1.bf16.msra.mxu0 0
    %2291 = vmatprep.subr.bf16.mxu0 0
    %2292 = vmatpush1.bf16.msra.mxu0 0
    %2293 = vmatprep.subr.bf16.mxu0 0
    %2294 = vmatpush1.bf16.msra.mxu0 0
    %2295 = vmatprep.subr.bf16.mxu0 0
    %2296 = vmatpush1.bf16.msra.mxu0 0
    %2297 = vmatprep.subr.bf16.mxu0 0
    %2298 = vmatpush1.bf16.msra.mxu0 0
    %2299 = vmatprep.subr.bf16.mxu0 0
    %2300 = vmatpush1.bf16.msra.mxu0 0
    %2301 = vmatprep.subr.bf16.mxu0 0
    %2302 = vmatpush1.bf16.msra.mxu0 0
    %2303 = vmatprep.subr.bf16.mxu0 0
    %2304 = vmatpush1.bf16.msra.mxu0 0
    %2305 = vmatprep.subr.bf16.mxu0 0
    %2306 = vmatpush1.bf16.msra.mxu0 0
    %2307 = vmatprep.mubr.bf16.mxu0 0
    %2308 = vmatmul.mubr.bf16.gmra.mrb[0].mxu0 %v2187
    %v2309 = vpop.f32.mrb[0].mxu0
    %v2310 = vadd.f32 %v1965, %v2309
    %v2311 = vpop.f32.mrb[0].mxu0
    %v2312 = vadd.f32 %v1969, %v2311
    %v2313 = vpop.f32.mrb[0].mxu0
    %v2314 = vadd.f32 %v1965, %v2313
    %v2315 = vpop.f32.mrb[0].mxu0
    %v2316 = vadd.f32 %v1969, %v2315
    %2317 = vdwg.mxu0
    %2318 = vmatprep.subr.bf16.mxu0 %v2129
    %2319 = vmatpush1.bf16.msra.mxu0 %v2128
    %2320 = vmatprep.subr.bf16.mxu0 %v2145
    %2321 = vmatpush1.bf16.msra.mxu0 %v2144
    %2322 = vmatprep.subr.bf16.mxu0 0
    %2323 = vmatpush1.bf16.msra.mxu0 0
    %2324 = vmatprep.subr.bf16.mxu0 0
    %2325 = vmatpush1.bf16.msra.mxu0 0
    %2326 = vmatprep.subr.bf16.mxu0 0
    %2327 = vmatpush1.bf16.msra.mxu0 0
    %2328 = vmatprep.subr.bf16.mxu0 0
    %2329 = vmatpush1.bf16.msra.mxu0 0
    %2330 = vmatprep.subr.bf16.mxu0 0
    %2331 = vmatpush1.bf16.msra.mxu0 0
    %2332 = vmatprep.subr.bf16.mxu0 0
    %2333 = vmatpush1.bf16.msra.mxu0 0
    %2334 = vmatprep.subr.bf16.mxu0 0
    %2335 = vmatpush1.bf16.msra.mxu0 0
    %2336 = vmatprep.subr.bf16.mxu0 0
    %2337 = vmatpush1.bf16.msra.mxu0 0
    %2338 = vmatprep.subr.bf16.mxu0 0
    %2339 = vmatpush1.bf16.msra.mxu0 0
    %2340 = vmatprep.subr.bf16.mxu0 0
    %2341 = vmatpush1.bf16.msra.mxu0 0
    %2342 = vmatprep.subr.bf16.mxu0 0
    %2343 = vmatpush1.bf16.msra.mxu0 0
    %2344 = vmatprep.subr.bf16.mxu0 0
    %2345 = vmatpush1.bf16.msra.mxu0 0
    %2346 = vmatprep.subr.bf16.mxu0 0
    %2347 = vmatpush1.bf16.msra.mxu0 0
    %2348 = vmatprep.subr.bf16.mxu0 0
    %2349 = vmatpush1.bf16.msra.mxu0 0
    %2350 = vmatprep.mubr.bf16.mxu0 0
    %2351 = vmatmul.mubr.bf16.gmra.mrb[0].mxu0 %v2187
    %v2352 = vpop.f32.mrb[0].mxu0
    %v2353 = vadd.f32 %v1973, %v2352
    %v2354 = vpop.f32.mrb[0].mxu0
    %v2355 = vadd.f32 %v1977, %v2354
    %v2356 = vpop.f32.mrb[0].mxu0
    %v2357 = vadd.f32 %v1973, %v2356
    %v2358 = vpop.f32.mrb[0].mxu0
    %v2359 = vadd.f32 %v1977, %v2358
    %2360 = vdwg.mxu0
    %2361 = vmatprep.subr.bf16.mxu0 %v2131
    %2362 = vmatpush1.bf16.msra.mxu0 %v2130
    %2363 = vmatprep.subr.bf16.mxu0 %v2147
    %2364 = vmatpush1.bf16.msra.mxu0 %v2146
    %2365 = vmatprep.subr.bf16.mxu0 0
    %2366 = vmatpush1.bf16.msra.mxu0 0
    %2367 = vmatprep.subr.bf16.mxu0 0
    %2368 = vmatpush1.bf16.msra.mxu0 0
    %2369 = vmatprep.subr.bf16.mxu0 0
    %2370 = vmatpush1.bf16.msra.mxu0 0
    %2371 = vmatprep.subr.bf16.mxu0 0
    %2372 = vmatpush1.bf16.msra.mxu0 0
    %2373 = vmatprep.subr.bf16.mxu0 0
    %2374 = vmatpush1.bf16.msra.mxu0 0
    %2375 = vmatprep.subr.bf16.mxu0 0
    %2376 = vmatpush1.bf16.msra.mxu0 0
    %2377 = vmatprep.subr.bf16.mxu0 0
    %2378 = vmatpush1.bf16.msra.mxu0 0
    %2379 = vmatprep.subr.bf16.mxu0 0
    %2380 = vmatpush1.bf16.msra.mxu0 0
    %2381 = vmatprep.subr.bf16.mxu0 0
    %2382 = vmatpush1.bf16.msra.mxu0 0
    %2383 = vmatprep.subr.bf16.mxu0 0
    %2384 = vmatpush1.bf16.msra.mxu0 0
    %2385 = vmatprep.subr.bf16.mxu0 0
    %2386 = vmatpush1.bf16.msra.mxu0 0
    %2387 = vmatprep.subr.bf16.mxu0 0
    %2388 = vmatpush1.bf16.msra.mxu0 0
    %2389 = vmatprep.subr.bf16.mxu0 0
    %2390 = vmatpush1.bf16.msra.mxu0 0
    %2391 = vmatprep.subr.bf16.mxu0 0
    %2392 = vmatpush1.bf16.msra.mxu0 0
    %2393 = vmatprep.mubr.bf16.mxu0 0
    %2394 = vmatmul.mubr.bf16.gmra.mrb[0].mxu0 %v2187
    %v2395 = vpop.f32.mrb[0].mxu0
    %v2396 = vadd.f32 %v1981, %v2395
    %v2397 = vpop.f32.mrb[0].mxu0
    %v2398 = vadd.f32 %v1985, %v2397
    %v2399 = vpop.f32.mrb[0].mxu0
    %v2400 = vadd.f32 %v1981, %v2399
    %v2401 = vpop.f32.mrb[0].mxu0
    %v2402 = vadd.f32 %v1985, %v2401
    %2403 = vdwg.mxu0
    %2404 = vmatprep.subr.bf16.mxu0 %v2133
    %2405 = vmatpush1.bf16.msra.mxu0 %v2132
    %2406 = vmatprep.subr.bf16.mxu0 %v2149
    %2407 = vmatpush1.bf16.msra.mxu0 %v2148
    %2408 = vmatprep.subr.bf16.mxu0 0
    %2409 = vmatpush1.bf16.msra.mxu0 0
    %2410 = vmatprep.subr.bf16.mxu0 0
    %2411 = vmatpush1.bf16.msra.mxu0 0
    %2412 = vmatprep.subr.bf16.mxu0 0
    %2413 = vmatpush1.bf16.msra.mxu0 0
    %2414 = vmatprep.subr.bf16.mxu0 0
    %2415 = vmatpush1.bf16.msra.mxu0 0
    %2416 = vmatprep.subr.bf16.mxu0 0
    %2417 = vmatpush1.bf16.msra.mxu0 0
    %2418 = vmatprep.subr.bf16.mxu0 0
    %2419 = vmatpush1.bf16.msra.mxu0 0
    %2420 = vmatprep.subr.bf16.mxu0 0
    %2421 = vmatpush1.bf16.msra.mxu0 0
    %2422 = vmatprep.subr.bf16.mxu0 0
    %2423 = vmatpush1.bf16.msra.mxu0 0
    %2424 = vmatprep.subr.bf16.mxu0 0
    %2425 = vmatpush1.bf16.msra.mxu0 0
    %2426 = vmatprep.subr.bf16.mxu0 0
    %2427 = vmatpush1.bf16.msra.mxu0 0
    %2428 = vmatprep.subr.bf16.mxu0 0
    %2429 = vmatpush1.bf16.msra.mxu0 0
    %2430 = vmatprep.subr.bf16.mxu0 0
    %2431 = vmatpush1.bf16.msra.mxu0 0
    %2432 = vmatprep.subr.bf16.mxu0 0
    %2433 = vmatpush1.bf16.msra.mxu0 0
    %2434 = vmatprep.subr.bf16.mxu0 0
    %2435 = vmatpush1.bf16.msra.mxu0 0
    %2436 = vmatprep.mubr.bf16.mxu0 0
    %2437 = vmatmul.mubr.bf16.gmra.mrb[0].mxu0 %v2187
    %v2438 = vpop.f32.mrb[0].mxu0
    %v2439 = vadd.f32 %v1989, %v2438
    %v2440 = vpop.f32.mrb[0].mxu0
    %v2441 = vadd.f32 %v1993, %v2440
    %v2442 = vpop.f32.mrb[0].mxu0
    %v2443 = vadd.f32 %v1989, %v2442
    %v2444 = vpop.f32.mrb[0].mxu0
    %v2445 = vadd.f32 %v1993, %v2444
    %2446 = vdwg.mxu0
    %2447 = vmatprep.subr.bf16.mxu0 %v2135
    %2448 = vmatpush1.bf16.msra.mxu0 %v2134
    %2449 = vmatprep.subr.bf16.mxu0 %v2151
    %2450 = vmatpush1.bf16.msra.mxu0 %v2150
    %2451 = vmatprep.subr.bf16.mxu0 0
    %2452 = vmatpush1.bf16.msra.mxu0 0
    %2453 = vmatprep.subr.bf16.mxu0 0
    %2454 = vmatpush1.bf16.msra.mxu0 0
    %2455 = vmatprep.subr.bf16.mxu0 0
    %2456 = vmatpush1.bf16.msra.mxu0 0
    %2457 = vmatprep.subr.bf16.mxu0 0
    %2458 = vmatpush1.bf16.msra.mxu0 0
    %2459 = vmatprep.subr.bf16.mxu0 0
    %2460 = vmatpush1.bf16.msra.mxu0 0
    %2461 = vmatprep.subr.bf16.mxu0 0
    %2462 = vmatpush1.bf16.msra.mxu0 0
    %2463 = vmatprep.subr.bf16.mxu0 0
    %2464 = vmatpush1.bf16.msra.mxu0 0
    %2465 = vmatprep.subr.bf16.mxu0 0
    %2466 = vmatpush1.bf16.msra.mxu0 0
    %2467 = vmatprep.subr.bf16.mxu0 0
    %2468 = vmatpush1.bf16.msra.mxu0 0
    %2469 = vmatprep.subr.bf16.mxu0 0
    %2470 = vmatpush1.bf16.msra.mxu0 0
    %2471 = vmatprep.subr.bf16.mxu0 0
    %2472 = vmatpush1.bf16.msra.mxu0 0
    %2473 = vmatprep.subr.bf16.mxu0 0
    %2474 = vmatpush1.bf16.msra.mxu0 0
    %2475 = vmatprep.subr.bf16.mxu0 0
    %2476 = vmatpush1.bf16.msra.mxu0 0
    %2477 = vmatprep.subr.bf16.mxu0 0
    %2478 = vmatpush1.bf16.msra.mxu0 0
    %2479 = vmatprep.mubr.bf16.mxu0 0
    %2480 = vmatmul.mubr.bf16.gmra.mrb[0].mxu0 %v2187
    %v2481 = vpop.f32.mrb[0].mxu0
    %v2482 = vadd.f32 %v1997, %v2481
    %v2483 = vpop.f32.mrb[0].mxu0
    %v2484 = vadd.f32 %v2001, %v2483
    %v2485 = vpop.f32.mrb[0].mxu0
    %v2486 = vadd.f32 %v1997, %v2485
    %v2487 = vpop.f32.mrb[0].mxu0
    %v2488 = vadd.f32 %v2001, %v2487
    %2489 = vdwg.mxu0
    %2490 = vmatprep.subr.bf16.mxu0 %v2137
    %2491 = vmatpush1.bf16.msra.mxu0 %v2136
    %2492 = vmatprep.subr.bf16.mxu0 %v2153
    %2493 = vmatpush1.bf16.msra.mxu0 %v2152
    %2494 = vmatprep.subr.bf16.mxu0 0
    %2495 = vmatpush1.bf16.msra.mxu0 0
    %2496 = vmatprep.subr.bf16.mxu0 0
    %2497 = vmatpush1.bf16.msra.mxu0 0
    %2498 = vmatprep.subr.bf16.mxu0 0
    %2499 = vmatpush1.bf16.msra.mxu0 0
    %2500 = vmatprep.subr.bf16.mxu0 0
    %2501 = vmatpush1.bf16.msra.mxu0 0
    %2502 = vmatprep.subr.bf16.mxu0 0
    %2503 = vmatpush1.bf16.msra.mxu0 0
    %2504 = vmatprep.subr.bf16.mxu0 0
    %2505 = vmatpush1.bf16.msra.mxu0 0
    %2506 = vmatprep.subr.bf16.mxu0 0
    %2507 = vmatpush1.bf16.msra.mxu0 0
    %2508 = vmatprep.subr.bf16.mxu0 0
    %2509 = vmatpush1.bf16.msra.mxu0 0
    %2510 = vmatprep.subr.bf16.mxu0 0
    %2511 = vmatpush1.bf16.msra.mxu0 0
    %2512 = vmatprep.subr.bf16.mxu0 0
    %2513 = vmatpush1.bf16.msra.mxu0 0
    %2514 = vmatprep.subr.bf16.mxu0 0
    %2515 = vmatpush1.bf16.msra.mxu0 0
    %2516 = vmatprep.subr.bf16.mxu0 0
    %2517 = vmatpush1.bf16.msra.mxu0 0
    %2518 = vmatprep.subr.bf16.mxu0 0
    %2519 = vmatpush1.bf16.msra.mxu0 0
    %2520 = vmatprep.subr.bf16.mxu0 0
    %2521 = vmatpush1.bf16.msra.mxu0 0
    %2522 = vmatprep.mubr.bf16.mxu0 0
    %2523 = vmatmul.mubr.bf16.gmra.mrb[0].mxu0 %v2187
    %v2524 = vpop.f32.mrb[0].mxu0
    %v2525 = vadd.f32 %v2005, %v2524
    %v2526 = vpop.f32.mrb[0].mxu0
    %v2527 = vadd.f32 %v2009, %v2526
    %v2528 = vpop.f32.mrb[0].mxu0
    %v2529 = vadd.f32 %v2005, %v2528
    %v2530 = vpop.f32.mrb[0].mxu0
    %v2531 = vadd.f32 %v2009, %v2530
    %2532 = vdwg.mxu0
    %v2533 = vmax.f32 %v2224, 0.0
    %v2534 = vmax.f32 %v2226, 0.0
    %v2535 = vmax.f32 %v2267, 0.0
    %v2536 = vmax.f32 %v2269, 0.0
    %v2537 = vmax.f32 %v2310, 0.0
    %v2538 = vmax.f32 %v2312, 0.0
    %v2539 = vmax.f32 %v2353, 0.0
    %v2540 = vmax.f32 %v2355, 0.0
    %v2541 = vmax.f32 %v2396, 0.0
    %v2542 = vmax.f32 %v2398, 0.0
    %v2543 = vmax.f32 %v2439, 0.0
    %v2544 = vmax.f32 %v2441, 0.0
    %v2545 = vmax.f32 %v2482, 0.0
    %v2546 = vmax.f32 %v2484, 0.0
    %v2547 = vmax.f32 %v2525, 0.0
    %v2548 = vmax.f32 %v2527, 0.0
    %v2549 = vmax.f32 %v2228, 0.0
    %v2550 = vmax.f32 %v2230, 0.0
    %v2551 = vmax.f32 %v2271, 0.0
    %v2552 = vmax.f32 %v2273, 0.0
    %v2553 = vmax.f32 %v2314, 0.0
    %v2554 = vmax.f32 %v2316, 0.0
    %v2555 = vmax.f32 %v2357, 0.0
    %v2556 = vmax.f32 %v2359, 0.0
    %v2557 = vmax.f32 %v2400, 0.0
    %v2558 = vmax.f32 %v2402, 0.0
    %v2559 = vmax.f32 %v2443, 0.0
    %v2560 = vmax.f32 %v2445, 0.0
    %v2561 = vmax.f32 %v2486, 0.0
    %v2562 = vmax.f32 %v2488, 0.0
    %v2563 = vmax.f32 %v2529, 0.0
    %v2564 = vmax.f32 %v2531, 0.0
    %v2565 = vld [vmem:[%s19] sm:$0xf]
    %v2566 = vld [vmem:[%s19 + $0x4] sm:$0xf]
    %v2567 = vld [vmem:[%s19 + $0x8] sm:$0xf]
    %v2568 = vld [vmem:[%s19 + $0xc] sm:$0xf]
    %v2569 = vld [vmem:[%s19 + $0x10] sm:$0xf]
    %v2570 = vld [vmem:[%s19 + $0x14] sm:$0xf]
    %v2571 = vld [vmem:[%s19 + $0x18] sm:$0xf]
    %v2572 = vld [vmem:[%s19 + $0x1c] sm:$0xf]
    %v2573 = vld [vmem:[%s19 + $0x20] sm:$0xf]
    %v2574 = vld [vmem:[%s19 + $0x24] sm:$0xf]
    %v2575 = vld [vmem:[%s19 + $0x28] sm:$0xf]
    %v2576 = vld [vmem:[%s19 + $0x2c] sm:$0xf]
    %v2577 = vld [vmem:[%s19 + $0x30] sm:$0xf]
    %v2578 = vld [vmem:[%s19 + $0x34] sm:$0xf]
    %v2579 = vld [vmem:[%s19 + $0x38] sm:$0xf]
    %v2580 = vld [vmem:[%s19 + $0x3c] sm:$0xf]
    %v2581 = vld [vmem:[%s19 + $0x40] sm:$0xf]
    %v2582 = vld [vmem:[%s19 + $0x44] sm:$0xf]
    %v2583 = vld [vmem:[%s19 + $0x48] sm:$0xf]
    %v2584 = vld [vmem:[%s19 + $0x4c] sm:$0xf]
    %v2585 = vld [vmem:[%s19 + $0x50] sm:$0xf]
    %v2586 = vld [vmem:[%s19 + $0x54] sm:$0xf]
    %v2587 = vld [vmem:[%s19 + $0x58] sm:$0xf]
    %v2588 = vld [vmem:[%s19 + $0x5c] sm:$0xf]
    %v2589 = vld [vmem:[%s19 + $0x60] sm:$0xf]
    %v2590 = vld [vmem:[%s19 + $0x64] sm:$0xf]
    %v2591 = vld [vmem:[%s19 + $0x68] sm:$0xf]
    %v2592 = vld [vmem:[%s19 + $0x6c] sm:$0xf]
    %v2593 = vld [vmem:[%s19 + $0x70] sm:$0xf]
    %v2594 = vld [vmem:[%s19 + $0x74] sm:$0xf]
    %v2595 = vld [vmem:[%s19 + $0x78] sm:$0xf]
    %v2596 = vld [vmem:[%s19 + $0x7c] sm:$0xf]
    %v2597 = vld [vmem:[%s19 + $0x80] sm:$0xf]
    %v2598 = vld [vmem:[%s19 + $0x84] sm:$0xf]
    %v2599 = vld [vmem:[%s19 + $0x88] sm:$0xf]
    %v2600 = vld [vmem:[%s19 + $0x8c] sm:$0xf]
    %v2601 = vld [vmem:[%s19 + $0x90] sm:$0xf]
    %v2602 = vld [vmem:[%s19 + $0x94] sm:$0xf]
    %v2603 = vld [vmem:[%s19 + $0x98] sm:$0xf]
    %v2604 = vld [vmem:[%s19 + $0x9c] sm:$0xf]
    %v2605 = vld [vmem:[%s19 + $0xa0] sm:$0xf]
    %v2606 = vld [vmem:[%s19 + $0xa4] sm:$0xf]
    %v2607 = vld [vmem:[%s19 + $0xa8] sm:$0xf]
    %v2608 = vld [vmem:[%s19 + $0xac] sm:$0xf]
    %v2609 = vld [vmem:[%s19 + $0xb0] sm:$0xf]
    %v2610 = vld [vmem:[%s19 + $0xb4] sm:$0xf]
    %v2611 = vld [vmem:[%s19 + $0xb8] sm:$0xf]
    %v2612 = vld [vmem:[%s19 + $0xbc] sm:$0xf]
    %v2613 = vld [vmem:[%s19 + $0xc0] sm:$0xf]
    %v2614 = vld [vmem:[%s19 + $0xc4] sm:$0xf]
    %v2615 = vld [vmem:[%s19 + $0xc8] sm:$0xf]
    %v2616 = vld [vmem:[%s19 + $0xcc] sm:$0xf]
    %v2617 = vld [vmem:[%s19 + $0xd0] sm:$0xf]
    %v2618 = vld [vmem:[%s19 + $0xd4] sm:$0xf]
    %v2619 = vld [vmem:[%s19 + $0xd8] sm:$0xf]
    %v2620 = vld [vmem:[%s19 + $0xdc] sm:$0xf]
    %v2621 = vld [vmem:[%s19 + $0xe0] sm:$0xf]
    %v2622 = vld [vmem:[%s19 + $0xe4] sm:$0xf]
    %v2623 = vld [vmem:[%s19 + $0xe8] sm:$0xf]
    %v2624 = vld [vmem:[%s19 + $0xec] sm:$0xf]
    %v2625 = vld [vmem:[%s19 + $0xf0] sm:$0xf]
    %v2626 = vld [vmem:[%s19 + $0xf4] sm:$0xf]
    %v2627 = vld [vmem:[%s19 + $0xf8] sm:$0xf]
    %v2628 = vld [vmem:[%s19 + $0xfc] sm:$0xf]
    %v2629 = vld [vmem:[%s19 + $0x100] sm:$0xf]
    %v2630 = vld [vmem:[%s19 + $0x104] sm:$0xf]
    %v2631 = vld [vmem:[%s19 + $0x108] sm:$0xf]
    %v2632 = vld [vmem:[%s19 + $0x10c] sm:$0xf]
    %v2633 = vld [vmem:[%s19 + $0x110] sm:$0xf]
    %v2634 = vld [vmem:[%s19 + $0x114] sm:$0xf]
    %v2635 = vld [vmem:[%s19 + $0x118] sm:$0xf]
    %v2636 = vld [vmem:[%s19 + $0x11c] sm:$0xf]
    %v2637 = vld [vmem:[%s19 + $0x120] sm:$0xf]
    %v2638 = vld [vmem:[%s19 + $0x124] sm:$0xf]
    %v2639 = vld [vmem:[%s19 + $0x128] sm:$0xf]
    %v2640 = vld [vmem:[%s19 + $0x12c] sm:$0xf]
    %v2641 = vld [vmem:[%s19 + $0x130] sm:$0xf]
    %v2642 = vld [vmem:[%s19 + $0x134] sm:$0xf]
    %v2643 = vld [vmem:[%s19 + $0x138] sm:$0xf]
    %v2644 = vld [vmem:[%s19 + $0x13c] sm:$0xf]
    %v2645 = vld [vmem:[%s19 + $0x140] sm:$0xf]
    %v2646 = vld [vmem:[%s19 + $0x144] sm:$0xf]
    %v2647 = vld [vmem:[%s19 + $0x148] sm:$0xf]
    %v2648 = vld [vmem:[%s19 + $0x14c] sm:$0xf]
    %v2649 = vld [vmem:[%s19 + $0x150] sm:$0xf]
    %v2650 = vld [vmem:[%s19 + $0x154] sm:$0xf]
    %v2651 = vld [vmem:[%s19 + $0x158] sm:$0xf]
    %v2652 = vld [vmem:[%s19 + $0x15c] sm:$0xf]
    %v2653 = vld [vmem:[%s19 + $0x160] sm:$0xf]
    %v2654 = vld [vmem:[%s19 + $0x164] sm:$0xf]
    %v2655 = vld [vmem:[%s19 + $0x168] sm:$0xf]
    %v2656 = vld [vmem:[%s19 + $0x16c] sm:$0xf]
    %v2657 = vld [vmem:[%s19 + $0x170] sm:$0xf]
    %v2658 = vld [vmem:[%s19 + $0x174] sm:$0xf]
    %v2659 = vld [vmem:[%s19 + $0x178] sm:$0xf]
    %v2660 = vld [vmem:[%s19 + $0x17c] sm:$0xf]
    %v2661 = vld [vmem:[%s19 + $0x180] sm:$0xf]
    %v2662 = vld [vmem:[%s19 + $0x184] sm:$0xf]
    %v2663 = vld [vmem:[%s19 + $0x188] sm:$0xf]
    %v2664 = vld [vmem:[%s19 + $0x18c] sm:$0xf]
    %v2665 = vld [vmem:[%s19 + $0x190] sm:$0xf]
    %v2666 = vld [vmem:[%s19 + $0x194] sm:$0xf]
    %v2667 = vld [vmem:[%s19 + $0x198] sm:$0xf]
    %v2668 = vld [vmem:[%s19 + $0x19c] sm:$0xf]
    %v2669 = vld [vmem:[%s19 + $0x1a0] sm:$0xf]
    %v2670 = vld [vmem:[%s19 + $0x1a4] sm:$0xf]
    %v2671 = vld [vmem:[%s19 + $0x1a8] sm:$0xf]
    %v2672 = vld [vmem:[%s19 + $0x1ac] sm:$0xf]
    %v2673 = vld [vmem:[%s19 + $0x1b0] sm:$0xf]
    %v2674 = vld [vmem:[%s19 + $0x1b4] sm:$0xf]
    %v2675 = vld [vmem:[%s19 + $0x1b8] sm:$0xf]
    %v2676 = vld [vmem:[%s19 + $0x1bc] sm:$0xf]
    %v2677 = vld [vmem:[%s19 + $0x1c0] sm:$0xf]
    %v2678 = vld [vmem:[%s19 + $0x1c4] sm:$0xf]
    %v2679 = vld [vmem:[%s19 + $0x1c8] sm:$0xf]
    %v2680 = vld [vmem:[%s19 + $0x1cc] sm:$0xf]
    %v2681 = vld [vmem:[%s19 + $0x1d0] sm:$0xf]
    %v2682 = vld [vmem:[%s19 + $0x1d4] sm:$0xf]
    %v2683 = vld [vmem:[%s19 + $0x1d8] sm:$0xf]
    %v2684 = vld [vmem:[%s19 + $0x1dc] sm:$0xf]
    %v2685 = vld [vmem:[%s19 + $0x1e0] sm:$0xf]
    %v2686 = vld [vmem:[%s19 + $0x1e4] sm:$0xf]
    %v2687 = vld [vmem:[%s19 + $0x1e8] sm:$0xf]
    %v2688 = vld [vmem:[%s19 + $0x1ec] sm:$0xf]
    %v2689 = vld [vmem:[%s19 + $0x1f0] sm:$0xf]
    %v2690 = vld [vmem:[%s19 + $0x1f4] sm:$0xf]
    %v2691 = vld [vmem:[%s19 + $0x1f8] sm:$0xf]
    %v2692 = vld [vmem:[%s19 + $0x1fc] sm:$0xf]
    %v2693 = vld [vmem:[%s19 + $0x200] sm:$0xf]
    %v2694 = vld [vmem:[%s19 + $0x204] sm:$0xf]
    %v2695 = vld [vmem:[%s19 + $0x208] sm:$0xf]
    %v2696 = vld [vmem:[%s19 + $0x20c] sm:$0xf]
    %v2697 = vld [vmem:[%s19 + $0x210] sm:$0xf]
    %v2698 = vld [vmem:[%s19 + $0x214] sm:$0xf]
    %v2699 = vld [vmem:[%s19 + $0x218] sm:$0xf]
    %v2700 = vld [vmem:[%s19 + $0x21c] sm:$0xf]
    %v2701 = vld [vmem:[%s19 + $0x220] sm:$0xf]
    %v2702 = vld [vmem:[%s19 + $0x224] sm:$0xf]
    %v2703 = vld [vmem:[%s19 + $0x228] sm:$0xf]
    %v2704 = vld [vmem:[%s19 + $0x22c] sm:$0xf]
    %v2705 = vld [vmem:[%s19 + $0x230] sm:$0xf]
    %v2706 = vld [vmem:[%s19 + $0x234] sm:$0xf]
    %v2707 = vld [vmem:[%s19 + $0x238] sm:$0xf]
    %v2708 = vld [vmem:[%s19 + $0x23c] sm:$0xf]
    %v2709 = vld [vmem:[%s19 + $0x240] sm:$0xf]
    %v2710 = vld [vmem:[%s19 + $0x244] sm:$0xf]
    %v2711 = vld [vmem:[%s19 + $0x248] sm:$0xf]
    %v2712 = vld [vmem:[%s19 + $0x24c] sm:$0xf]
    %v2713 = vld [vmem:[%s19 + $0x250] sm:$0xf]
    %v2714 = vld [vmem:[%s19 + $0x254] sm:$0xf]
    %v2715 = vld [vmem:[%s19 + $0x258] sm:$0xf]
    %v2716 = vld [vmem:[%s19 + $0x25c] sm:$0xf]
    %v2717 = vld [vmem:[%s19 + $0x260] sm:$0xf]
    %v2718 = vld [vmem:[%s19 + $0x264] sm:$0xf]
    %v2719 = vld [vmem:[%s19 + $0x268] sm:$0xf]
    %v2720 = vld [vmem:[%s19 + $0x26c] sm:$0xf]
    %v2721 = vld [vmem:[%s19 + $0x270] sm:$0xf]
    %v2722 = vld [vmem:[%s19 + $0x274] sm:$0xf]
    %v2723 = vld [vmem:[%s19 + $0x278] sm:$0xf]
    %v2724 = vld [vmem:[%s19 + $0x27c] sm:$0xf]
    %v2725 = vld [vmem:[%s19 + $0x280] sm:$0xf]
    %v2726 = vld [vmem:[%s19 + $0x284] sm:$0xf]
    %v2727 = vld [vmem:[%s19 + $0x288] sm:$0xf]
    %v2728 = vld [vmem:[%s19 + $0x28c] sm:$0xf]
    %v2729 = vld [vmem:[%s19 + $0x290] sm:$0xf]
    %v2730 = vld [vmem:[%s19 + $0x294] sm:$0xf]
    %v2731 = vld [vmem:[%s19 + $0x298] sm:$0xf]
    %v2732 = vld [vmem:[%s19 + $0x29c] sm:$0xf]
    %v2733 = vld [vmem:[%s19 + $0x2a0] sm:$0xf]
    %v2734 = vld [vmem:[%s19 + $0x2a4] sm:$0xf]
    %v2735 = vld [vmem:[%s19 + $0x2a8] sm:$0xf]
    %v2736 = vld [vmem:[%s19 + $0x2ac] sm:$0xf]
    %v2737 = vld [vmem:[%s19 + $0x2b0] sm:$0xf]
    %v2738 = vld [vmem:[%s19 + $0x2b4] sm:$0xf]
    %v2739 = vld [vmem:[%s19 + $0x2b8] sm:$0xf]
    %v2740 = vld [vmem:[%s19 + $0x2bc] sm:$0xf]
    %v2741 = vld [vmem:[%s19 + $0x2c0] sm:$0xf]
    %v2742 = vld [vmem:[%s19 + $0x2c4] sm:$0xf]
    %v2743 = vld [vmem:[%s19 + $0x2c8] sm:$0xf]
    %v2744 = vld [vmem:[%s19 + $0x2cc] sm:$0xf]
    %v2745 = vld [vmem:[%s19 + $0x2d0] sm:$0xf]
    %v2746 = vld [vmem:[%s19 + $0x2d4] sm:$0xf]
    %v2747 = vld [vmem:[%s19 + $0x2d8] sm:$0xf]
    %v2748 = vld [vmem:[%s19 + $0x2dc] sm:$0xf]
    %v2749 = vld [vmem:[%s19 + $0x2e0] sm:$0xf]
    %v2750 = vld [vmem:[%s19 + $0x2e4] sm:$0xf]
    %v2751 = vld [vmem:[%s19 + $0x2e8] sm:$0xf]
    %v2752 = vld [vmem:[%s19 + $0x2ec] sm:$0xf]
    %v2753 = vld [vmem:[%s19 + $0x2f0] sm:$0xf]
    %v2754 = vld [vmem:[%s19 + $0x2f4] sm:$0xf]
    %v2755 = vld [vmem:[%s19 + $0x2f8] sm:$0xf]
    %v2756 = vld [vmem:[%s19 + $0x2fc] sm:$0xf]
    %v2757 = vld [vmem:[%s19 + $0x300] sm:$0xf]
    %v2758 = vld [vmem:[%s19 + $0x304] sm:$0xf]
    %v2759 = vld [vmem:[%s19 + $0x308] sm:$0xf]
    %v2760 = vld [vmem:[%s19 + $0x30c] sm:$0xf]
    %v2761 = vld [vmem:[%s19 + $0x310] sm:$0xf]
    %v2762 = vld [vmem:[%s19 + $0x314] sm:$0xf]
    %v2763 = vld [vmem:[%s19 + $0x318] sm:$0xf]
    %v2764 = vld [vmem:[%s19 + $0x31c] sm:$0xf]
    %v2765 = vld [vmem:[%s19 + $0x320] sm:$0xf]
    %v2766 = vld [vmem:[%s19 + $0x324] sm:$0xf]
    %v2767 = vld [vmem:[%s19 + $0x328] sm:$0xf]
    %v2768 = vld [vmem:[%s19 + $0x32c] sm:$0xf]
    %v2769 = vld [vmem:[%s19 + $0x330] sm:$0xf]
    %v2770 = vld [vmem:[%s19 + $0x334] sm:$0xf]
    %v2771 = vld [vmem:[%s19 + $0x338] sm:$0xf]
    %v2772 = vld [vmem:[%s19 + $0x33c] sm:$0xf]
    %v2773 = vld [vmem:[%s19 + $0x340] sm:$0xf]
    %v2774 = vld [vmem:[%s19 + $0x344] sm:$0xf]
    %v2775 = vld [vmem:[%s19 + $0x348] sm:$0xf]
    %v2776 = vld [vmem:[%s19 + $0x34c] sm:$0xf]
    %v2777 = vld [vmem:[%s19 + $0x350] sm:$0xf]
    %v2778 = vld [vmem:[%s19 + $0x354] sm:$0xf]
    %v2779 = vld [vmem:[%s19 + $0x358] sm:$0xf]
    %v2780 = vld [vmem:[%s19 + $0x35c] sm:$0xf]
    %v2781 = vld [vmem:[%s19 + $0x360] sm:$0xf]
    %v2782 = vld [vmem:[%s19 + $0x364] sm:$0xf]
    %v2783 = vld [vmem:[%s19 + $0x368] sm:$0xf]
    %v2784 = vld [vmem:[%s19 + $0x36c] sm:$0xf]
    %v2785 = vld [vmem:[%s19 + $0x370] sm:$0xf]
    %v2786 = vld [vmem:[%s19 + $0x374] sm:$0xf]
    %v2787 = vld [vmem:[%s19 + $0x378] sm:$0xf]
    %v2788 = vld [vmem:[%s19 + $0x37c] sm:$0xf]
    %v2789 = vld [vmem:[%s19 + $0x380] sm:$0xf]
    %v2790 = vld [vmem:[%s19 + $0x384] sm:$0xf]
    %v2791 = vld [vmem:[%s19 + $0x388] sm:$0xf]
    %v2792 = vld [vmem:[%s19 + $0x38c] sm:$0xf]
    %v2793 = vld [vmem:[%s19 + $0x390] sm:$0xf]
    %v2794 = vld [vmem:[%s19 + $0x394] sm:$0xf]
    %v2795 = vld [vmem:[%s19 + $0x398] sm:$0xf]
    %v2796 = vld [vmem:[%s19 + $0x39c] sm:$0xf]
    %v2797 = vld [vmem:[%s19 + $0x3a0] sm:$0xf]
    %v2798 = vld [vmem:[%s19 + $0x3a4] sm:$0xf]
    %v2799 = vld [vmem:[%s19 + $0x3a8] sm:$0xf]
    %v2800 = vld [vmem:[%s19 + $0x3ac] sm:$0xf]
    %v2801 = vld [vmem:[%s19 + $0x3b0] sm:$0xf]
    %v2802 = vld [vmem:[%s19 + $0x3b4] sm:$0xf]
    %v2803 = vld [vmem:[%s19 + $0x3b8] sm:$0xf]
    %v2804 = vld [vmem:[%s19 + $0x3bc] sm:$0xf]
    %v2805 = vld [vmem:[%s19 + $0x3c0] sm:$0xf]
    %v2806 = vld [vmem:[%s19 + $0x3c4] sm:$0xf]
    %v2807 = vld [vmem:[%s19 + $0x3c8] sm:$0xf]
    %v2808 = vld [vmem:[%s19 + $0x3cc] sm:$0xf]
    %v2809 = vld [vmem:[%s19 + $0x3d0] sm:$0xf]
    %v2810 = vld [vmem:[%s19 + $0x3d4] sm:$0xf]
    %v2811 = vld [vmem:[%s19 + $0x3d8] sm:$0xf]
    %v2812 = vld [vmem:[%s19 + $0x3dc] sm:$0xf]
    %v2813 = vld [vmem:[%s19 + $0x3e0] sm:$0xf]
    %v2814 = vld [vmem:[%s19 + $0x3e4] sm:$0xf]
    %v2815 = vld [vmem:[%s19 + $0x3e8] sm:$0xf]
    %v2816 = vld [vmem:[%s19 + $0x3ec] sm:$0xf]
    %v2817 = vld [vmem:[%s19 + $0x3f0] sm:$0xf]
    %v2818 = vld [vmem:[%s19 + $0x3f4] sm:$0xf]
    %v2819 = vld [vmem:[%s19 + $0x3f8] sm:$0xf]
    %v2820 = vld [vmem:[%s19 + $0x3fc] sm:$0xf]
    %v2821 = vld [vmem:[%s20] sm:$0x1]
    %v2822 = vpack.c.bf16 %v2549, %v2533
    %v2823 = vpack.c.bf16 %v2550, %v2534
    %v2824 = vpack.c.bf16 %v2551, %v2535
    %v2825 = vpack.c.bf16 %v2552, %v2536
    %v2826 = vpack.c.bf16 %v2553, %v2537
    %v2827 = vpack.c.bf16 %v2554, %v2538
    %v2828 = vpack.c.bf16 %v2555, %v2539
    %v2829 = vpack.c.bf16 %v2556, %v2540
    %v2830 = vpack.c.bf16 %v2557, %v2541
    %v2831 = vpack.c.bf16 %v2558, %v2542
    %v2832 = vpack.c.bf16 %v2559, %v2543
    %v2833 = vpack.c.bf16 %v2560, %v2544
    %v2834 = vpack.c.bf16 %v2561, %v2545
    %v2835 = vpack.c.bf16 %v2562, %v2546
    %v2836 = vpack.c.bf16 %v2563, %v2547
    %v2837 = vpack.c.bf16 %v2564, %v2548
    %v2839 = vlaneseq
    %v2840 = vshrl.u32 %v2839, 7
    %v2841 = vsub.s32 0, %v2840
    %v2842 = vrot.slane %v2821, %v2841
    %v3100 = vunpack.c.l.b16 %v2565
    %v3101 = vunpack.c.l.b16 %v2566
    %v3102 = vunpack.c.l.b16 %v2567
    %v3103 = vunpack.c.l.b16 %v2568
    %v3104 = vunpack.c.l.b16 %v2569
    %v3105 = vunpack.c.l.b16 %v2570
    %v3106 = vunpack.c.l.b16 %v2571
    %v3107 = vunpack.c.l.b16 %v2572
    %v3108 = vunpack.c.l.b16 %v2573
    %v3109 = vunpack.c.l.b16 %v2574
    %v3110 = vunpack.c.l.b16 %v2575
    %v3111 = vunpack.c.l.b16 %v2576
    %v3112 = vunpack.c.l.b16 %v2577
    %v3113 = vunpack.c.l.b16 %v2578
    %v3114 = vunpack.c.l.b16 %v2579
    %v3115 = vunpack.c.l.b16 %v2580
    %v3116 = vunpack.c.l.b16 %v2581
    %v3117 = vunpack.c.l.b16 %v2582
    %v3118 = vunpack.c.l.b16 %v2583
    %v3119 = vunpack.c.l.b16 %v2584
    %v3120 = vunpack.c.l.b16 %v2585
    %v3121 = vunpack.c.l.b16 %v2586
    %v3122 = vunpack.c.l.b16 %v2587
    %v3123 = vunpack.c.l.b16 %v2588
    %v3124 = vunpack.c.l.b16 %v2589
    %v3125 = vunpack.c.l.b16 %v2590
    %v3126 = vunpack.c.l.b16 %v2591
    %v3127 = vunpack.c.l.b16 %v2592
    %v3128 = vunpack.c.l.b16 %v2593
    %v3129 = vunpack.c.l.b16 %v2594
    %v3130 = vunpack.c.l.b16 %v2595
    %v3131 = vunpack.c.l.b16 %v2596
    %v3132 = vunpack.c.l.b16 %v2597
    %v3133 = vunpack.c.l.b16 %v2598
    %v3134 = vunpack.c.l.b16 %v2599
    %v3135 = vunpack.c.l.b16 %v2600
    %v3136 = vunpack.c.l.b16 %v2601
    %v3137 = vunpack.c.l.b16 %v2602
    %v3138 = vunpack.c.l.b16 %v2603
    %v3139 = vunpack.c.l.b16 %v2604
    %v3140 = vunpack.c.l.b16 %v2605
    %v3141 = vunpack.c.l.b16 %v2606
    %v3142 = vunpack.c.l.b16 %v2607
    %v3143 = vunpack.c.l.b16 %v2608
    %v3144 = vunpack.c.l.b16 %v2609
    %v3145 = vunpack.c.l.b16 %v2610
    %v3146 = vunpack.c.l.b16 %v2611
    %v3147 = vunpack.c.l.b16 %v2612
    %v3148 = vunpack.c.l.b16 %v2613
    %v3149 = vunpack.c.l.b16 %v2614
    %v3150 = vunpack.c.l.b16 %v2615
    %v3151 = vunpack.c.l.b16 %v2616
    %v3152 = vunpack.c.l.b16 %v2617
    %v3153 = vunpack.c.l.b16 %v2618
    %v3154 = vunpack.c.l.b16 %v2619
    %v3155 = vunpack.c.l.b16 %v2620
    %v3156 = vunpack.c.l.b16 %v2621
    %v3157 = vunpack.c.l.b16 %v2622
    %v3158 = vunpack.c.l.b16 %v2623
    %v3159 = vunpack.c.l.b16 %v2624
    %v3160 = vunpack.c.l.b16 %v2625
    %v3161 = vunpack.c.l.b16 %v2626
    %v3162 = vunpack.c.l.b16 %v2627
    %v3163 = vunpack.c.l.b16 %v2628
    %v3164 = vunpack.c.l.b16 %v2629
    %v3165 = vunpack.c.l.b16 %v2630
    %v3166 = vunpack.c.l.b16 %v2631
    %v3167 = vunpack.c.l.b16 %v2632
    %v3168 = vunpack.c.l.b16 %v2633
    %v3169 = vunpack.c.l.b16 %v2634
    %v3170 = vunpack.c.l.b16 %v2635
    %v3171 = vunpack.c.l.b16 %v2636
    %v3172 = vunpack.c.l.b16 %v2637
    %v3173 = vunpack.c.l.b16 %v2638
    %v3174 = vunpack.c.l.b16 %v2639
    %v3175 = vunpack.c.l.b16 %v2640
    %v3176 = vunpack.c.l.b16 %v2641
    %v3177 = vunpack.c.l.b16 %v2642
    %v3178 = vunpack.c.l.b16 %v2643
    %v3179 = vunpack.c.l.b16 %v2644
    %v3180 = vunpack.c.l.b16 %v2645
    %v3181 = vunpack.c.l.b16 %v2646
    %v3182 = vunpack.c.l.b16 %v2647
    %v3183 = vunpack.c.l.b16 %v2648
    %v3184 = vunpack.c.l.b16 %v2649
    %v3185 = vunpack.c.l.b16 %v2650
    %v3186 = vunpack.c.l.b16 %v2651
    %v3187 = vunpack.c.l.b16 %v2652
    %v3188 = vunpack.c.l.b16 %v2653
    %v3189 = vunpack.c.l.b16 %v2654
    %v3190 = vunpack.c.l.b16 %v2655
    %v3191 = vunpack.c.l.b16 %v2656
    %v3192 = vunpack.c.l.b16 %v2657
    %v3193 = vunpack.c.l.b16 %v2658
    %v3194 = vunpack.c.l.b16 %v2659
    %v3195 = vunpack.c.l.b16 %v2660
    %v3196 = vunpack.c.l.b16 %v2661
    %v3197 = vunpack.c.l.b16 %v2662
    %v3198 = vunpack.c.l.b16 %v2663
    %v3199 = vunpack.c.l.b16 %v2664
    %v3200 = vunpack.c.l.b16 %v2665
    %v3201 = vunpack.c.l.b16 %v2666
    %v3202 = vunpack.c.l.b16 %v2667
    %v3203 = vunpack.c.l.b16 %v2668
    %v3204 = vunpack.c.l.b16 %v2669
    %v3205 = vunpack.c.l.b16 %v2670
    %v3206 = vunpack.c.l.b16 %v2671
    %v3207 = vunpack.c.l.b16 %v2672
    %v3208 = vunpack.c.l.b16 %v2673
    %v3209 = vunpack.c.l.b16 %v2674
    %v3210 = vunpack.c.l.b16 %v2675
    %v3211 = vunpack.c.l.b16 %v2676
    %v3212 = vunpack.c.l.b16 %v2677
    %v3213 = vunpack.c.l.b16 %v2678
    %v3214 = vunpack.c.l.b16 %v2679
    %v3215 = vunpack.c.l.b16 %v2680
    %v3216 = vunpack.c.l.b16 %v2681
    %v3217 = vunpack.c.l.b16 %v2682
    %v3218 = vunpack.c.l.b16 %v2683
    %v3219 = vunpack.c.l.b16 %v2684
    %v3220 = vunpack.c.l.b16 %v2685
    %v3221 = vunpack.c.l.b16 %v2686
    %v3222 = vunpack.c.l.b16 %v2687
    %v3223 = vunpack.c.l.b16 %v2688
    %v3224 = vunpack.c.l.b16 %v2689
    %v3225 = vunpack.c.l.b16 %v2690
    %v3226 = vunpack.c.l.b16 %v2691
    %v3227 = vunpack.c.l.b16 %v2692
    %v3228 = vunpack.c.l.b16 %v2693
    %v3229 = vunpack.c.l.b16 %v2694
    %v3230 = vunpack.c.l.b16 %v2695
    %v3231 = vunpack.c.l.b16 %v2696
    %v3232 = vunpack.c.l.b16 %v2697
    %v3233 = vunpack.c.l.b16 %v2698
    %v3234 = vunpack.c.l.b16 %v2699
    %v3235 = vunpack.c.l.b16 %v2700
    %v3236 = vunpack.c.l.b16 %v2701
    %v3237 = vunpack.c.l.b16 %v2702
    %v3238 = vunpack.c.l.b16 %v2703
    %v3239 = vunpack.c.l.b16 %v2704
    %v3240 = vunpack.c.l.b16 %v2705
    %v3241 = vunpack.c.l.b16 %v2706
    %v3242 = vunpack.c.l.b16 %v2707
    %v3243 = vunpack.c.l.b16 %v2708
    %v3244 = vunpack.c.l.b16 %v2709
    %v3245 = vunpack.c.l.b16 %v2710
    %v3246 = vunpack.c.l.b16 %v2711
    %v3247 = vunpack.c.l.b16 %v2712
    %v3248 = vunpack.c.l.b16 %v2713
    %v3249 = vunpack.c.l.b16 %v2714
    %v3250 = vunpack.c.l.b16 %v2715
    %v3251 = vunpack.c.l.b16 %v2716
    %v3252 = vunpack.c.l.b16 %v2717
    %v3253 = vunpack.c.l.b16 %v2718
    %v3254 = vunpack.c.l.b16 %v2719
    %v3255 = vunpack.c.l.b16 %v2720
    %v3256 = vunpack.c.l.b16 %v2721
    %v3257 = vunpack.c.l.b16 %v2722
    %v3258 = vunpack.c.l.b16 %v2723
    %v3259 = vunpack.c.l.b16 %v2724
    %v3260 = vunpack.c.l.b16 %v2725
    %v3261 = vunpack.c.l.b16 %v2726
    %v3262 = vunpack.c.l.b16 %v2727
    %v3263 = vunpack.c.l.b16 %v2728
    %v3264 = vunpack.c.l.b16 %v2729
    %v3265 = vunpack.c.l.b16 %v2730
    %v3266 = vunpack.c.l.b16 %v2731
    %v3267 = vunpack.c.l.b16 %v2732
    %v3268 = vunpack.c.l.b16 %v2733
    %v3269 = vunpack.c.l.b16 %v2734
    %v3270 = vunpack.c.l.b16 %v2735
    %v3271 = vunpack.c.l.b16 %v2736
    %v3272 = vunpack.c.l.b16 %v2737
    %v3273 = vunpack.c.l.b16 %v2738
    %v3274 = vunpack.c.l.b16 %v2739
    %v3275 = vunpack.c.l.b16 %v2740
    %v3276 = vunpack.c.l.b16 %v2741
    %v3277 = vunpack.c.l.b16 %v2742
    %v3278 = vunpack.c.l.b16 %v2743
    %v3279 = vunpack.c.l.b16 %v2744
    %v3280 = vunpack.c.l.b16 %v2745
    %v3281 = vunpack.c.l.b16 %v2746
    %v3282 = vunpack.c.l.b16 %v2747
    %v3283 = vunpack.c.l.b16 %v2748
    %v3284 = vunpack.c.l.b16 %v2749
    %v3285 = vunpack.c.l.b16 %v2750
    %v3286 = vunpack.c.l.b16 %v2751
    %v3287 = vunpack.c.l.b16 %v2752
    %v3288 = vunpack.c.l.b16 %v2753
    %v3289 = vunpack.c.l.b16 %v2754
    %v3290 = vunpack.c.l.b16 %v2755
    %v3291 = vunpack.c.l.b16 %v2756
    %v3292 = vunpack.c.l.b16 %v2757
    %v3293 = vunpack.c.l.b16 %v2758
    %v3294 = vunpack.c.l.b16 %v2759
    %v3295 = vunpack.c.l.b16 %v2760
    %v3296 = vunpack.c.l.b16 %v2761
    %v3297 = vunpack.c.l.b16 %v2762
    %v3298 = vunpack.c.l.b16 %v2763
    %v3299 = vunpack.c.l.b16 %v2764
    %v3300 = vunpack.c.l.b16 %v2765
    %v3301 = vunpack.c.l.b16 %v2766
    %v3302 = vunpack.c.l.b16 %v2767
    %v3303 = vunpack.c.l.b16 %v2768
    %v3304 = vunpack.c.l.b16 %v2769
    %v3305 = vunpack.c.l.b16 %v2770
    %v3306 = vunpack.c.l.b16 %v2771
    %v3307 = vunpack.c.l.b16 %v2772
    %v3308 = vunpack.c.l.b16 %v2773
    %v3309 = vunpack.c.l.b16 %v2774
    %v3310 = vunpack.c.l.b16 %v2775
    %v3311 = vunpack.c.l.b16 %v2776
    %v3312 = vunpack.c.l.b16 %v2777
    %v3313 = vunpack.c.l.b16 %v2778
    %v3314 = vunpack.c.l.b16 %v2779
    %v3315 = vunpack.c.l.b16 %v2780
    %v3316 = vunpack.c.l.b16 %v2781
    %v3317 = vunpack.c.l.b16 %v2782
    %v3318 = vunpack.c.l.b16 %v2783
    %v3319 = vunpack.c.l.b16 %v2784
    %v3320 = vunpack.c.l.b16 %v2785
    %v3321 = vunpack.c.l.b16 %v2786
    %v3322 = vunpack.c.l.b16 %v2787
    %v3323 = vunpack.c.l.b16 %v2788
    %v3324 = vunpack.c.l.b16 %v2789
    %v3325 = vunpack.c.l.b16 %v2790
    %v3326 = vunpack.c.l.b16 %v2791
    %v3327 = vunpack.c.l.b16 %v2792
    %v3328 = vunpack.c.l.b16 %v2793
    %v3329 = vunpack.c.l.b16 %v2794
    %v3330 = vunpack.c.l.b16 %v2795
    %v3331 = vunpack.c.l.b16 %v2796
    %v3332 = vunpack.c.l.b16 %v2797
    %v3333 = vunpack.c.l.b16 %v2798
    %v3334 = vunpack.c.l.b16 %v2799
    %v3335 = vunpack.c.l.b16 %v2800
    %v3336 = vunpack.c.l.b16 %v2801
    %v3337 = vunpack.c.l.b16 %v2802
    %v3338 = vunpack.c.l.b16 %v2803
    %v3339 = vunpack.c.l.b16 %v2804
    %v3340 = vunpack.c.l.b16 %v2805
    %v3341 = vunpack.c.l.b16 %v2806
    %v3342 = vunpack.c.l.b16 %v2807
    %v3343 = vunpack.c.l.b16 %v2808
    %v3344 = vunpack.c.l.b16 %v2809
    %v3345 = vunpack.c.l.b16 %v2810
    %v3346 = vunpack.c.l.b16 %v2811
    %v3347 = vunpack.c.l.b16 %v2812
    %v3348 = vunpack.c.l.b16 %v2813
    %v3349 = vunpack.c.l.b16 %v2814
    %v3350 = vunpack.c.l.b16 %v2815
    %v3351 = vunpack.c.l.b16 %v2816
    %v3352 = vunpack.c.l.b16 %v2817
    %v3353 = vunpack.c.l.b16 %v2818
    %v3354 = vunpack.c.l.b16 %v2819
    %v3355 = vunpack.c.l.b16 %v2820
    %v3356 = vpack.c.b16 %v3101, %v3100
    %v3357 = vpack.c.b16 %v3103, %v3102
    %v3358 = vpack.c.b16 %v3105, %v3104
    %v3359 = vpack.c.b16 %v3107, %v3106
    %v3360 = vpack.c.b16 %v3109, %v3108
    %v3361 = vpack.c.b16 %v3111, %v3110
    %v3362 = vpack.c.b16 %v3113, %v3112
    %v3363 = vpack.c.b16 %v3115, %v3114
    %v3364 = vpack.c.b16 %v3117, %v3116
    %v3365 = vpack.c.b16 %v3119, %v3118
    %v3366 = vpack.c.b16 %v3121, %v3120
    %v3367 = vpack.c.b16 %v3123, %v3122
    %v3368 = vpack.c.b16 %v3125, %v3124
    %v3369 = vpack.c.b16 %v3127, %v3126
    %v3370 = vpack.c.b16 %v3129, %v3128
    %v3371 = vpack.c.b16 %v3131, %v3130
    %v3372 = vpack.c.b16 %v3133, %v3132
    %v3373 = vpack.c.b16 %v3135, %v3134
    %v3374 = vpack.c.b16 %v3137, %v3136
    %v3375 = vpack.c.b16 %v3139, %v3138
    %v3376 = vpack.c.b16 %v3141, %v3140
    %v3377 = vpack.c.b16 %v3143, %v3142
    %v3378 = vpack.c.b16 %v3145, %v3144
    %v3379 = vpack.c.b16 %v3147, %v3146
    %v3380 = vpack.c.b16 %v3149, %v3148
    %v3381 = vpack.c.b16 %v3151, %v3150
    %v3382 = vpack.c.b16 %v3153, %v3152
    %v3383 = vpack.c.b16 %v3155, %v3154
    %v3384 = vpack.c.b16 %v3157, %v3156
    %v3385 = vpack.c.b16 %v3159, %v3158
    %v3386 = vpack.c.b16 %v3161, %v3160
    %v3387 = vpack.c.b16 %v3163, %v3162
    %v3388 = vpack.c.b16 %v3165, %v3164
    %v3389 = vpack.c.b16 %v3167, %v3166
    %v3390 = vpack.c.b16 %v3169, %v3168
    %v3391 = vpack.c.b16 %v3171, %v3170
    %v3392 = vpack.c.b16 %v3173, %v3172
    %v3393 = vpack.c.b16 %v3175, %v3174
    %v3394 = vpack.c.b16 %v3177, %v3176
    %v3395 = vpack.c.b16 %v3179, %v3178
    %v3396 = vpack.c.b16 %v3181, %v3180
    %v3397 = vpack.c.b16 %v3183, %v3182
    %v3398 = vpack.c.b16 %v3185, %v3184
    %v3399 = vpack.c.b16 %v3187, %v3186
    %v3400 = vpack.c.b16 %v3189, %v3188
    %v3401 = vpack.c.b16 %v3191, %v3190
    %v3402 = vpack.c.b16 %v3193, %v3192
    %v3403 = vpack.c.b16 %v3195, %v3194
    %v3404 = vpack.c.b16 %v3197, %v3196
    %v3405 = vpack.c.b16 %v3199, %v3198
    %v3406 = vpack.c.b16 %v3201, %v3200
    %v3407 = vpack.c.b16 %v3203, %v3202
    %v3408 = vpack.c.b16 %v3205, %v3204
    %v3409 = vpack.c.b16 %v3207, %v3206
    %v3410 = vpack.c.b16 %v3209, %v3208
    %v3411 = vpack.c.b16 %v3211, %v3210
    %v3412 = vpack.c.b16 %v3213, %v3212
    %v3413 = vpack.c.b16 %v3215, %v3214
    %v3414 = vpack.c.b16 %v3217, %v3216
    %v3415 = vpack.c.b16 %v3219, %v3218
    %v3416 = vpack.c.b16 %v3221, %v3220
    %v3417 = vpack.c.b16 %v3223, %v3222
    %v3418 = vpack.c.b16 %v3225, %v3224
    %v3419 = vpack.c.b16 %v3227, %v3226
    %v3420 = vpack.c.b16 %v3229, %v3228
    %v3421 = vpack.c.b16 %v3231, %v3230
    %v3422 = vpack.c.b16 %v3233, %v3232
    %v3423 = vpack.c.b16 %v3235, %v3234
    %v3424 = vpack.c.b16 %v3237, %v3236
    %v3425 = vpack.c.b16 %v3239, %v3238
    %v3426 = vpack.c.b16 %v3241, %v3240
    %v3427 = vpack.c.b16 %v3243, %v3242
    %v3428 = vpack.c.b16 %v3245, %v3244
    %v3429 = vpack.c.b16 %v3247, %v3246
    %v3430 = vpack.c.b16 %v3249, %v3248
    %v3431 = vpack.c.b16 %v3251, %v3250
    %v3432 = vpack.c.b16 %v3253, %v3252
    %v3433 = vpack.c.b16 %v3255, %v3254
    %v3434 = vpack.c.b16 %v3257, %v3256
    %v3435 = vpack.c.b16 %v3259, %v3258
    %v3436 = vpack.c.b16 %v3261, %v3260
    %v3437 = vpack.c.b16 %v3263, %v3262
    %v3438 = vpack.c.b16 %v3265, %v3264
    %v3439 = vpack.c.b16 %v3267, %v3266
    %v3440 = vpack.c.b16 %v3269, %v3268
    %v3441 = vpack.c.b16 %v3271, %v3270
    %v3442 = vpack.c.b16 %v3273, %v3272
    %v3443 = vpack.c.b16 %v3275, %v3274
    %v3444 = vpack.c.b16 %v3277, %v3276
    %v3445 = vpack.c.b16 %v3279, %v3278
    %v3446 = vpack.c.b16 %v3281, %v3280
    %v3447 = vpack.c.b16 %v3283, %v3282
    %v3448 = vpack.c.b16 %v3285, %v3284
    %v3449 = vpack.c.b16 %v3287, %v3286
    %v3450 = vpack.c.b16 %v3289, %v3288
    %v3451 = vpack.c.b16 %v3291, %v3290
    %v3452 = vpack.c.b16 %v3293, %v3292
    %v3453 = vpack.c.b16 %v3295, %v3294
    %v3454 = vpack.c.b16 %v3297, %v3296
    %v3455 = vpack.c.b16 %v3299, %v3298
    %v3456 = vpack.c.b16 %v3301, %v3300
    %v3457 = vpack.c.b16 %v3303, %v3302
    %v3458 = vpack.c.b16 %v3305, %v3304
    %v3459 = vpack.c.b16 %v3307, %v3306
    %v3460 = vpack.c.b16 %v3309, %v3308
    %v3461 = vpack.c.b16 %v3311, %v3310
    %v3462 = vpack.c.b16 %v3313, %v3312
    %v3463 = vpack.c.b16 %v3315, %v3314
    %v3464 = vpack.c.b16 %v3317, %v3316
    %v3465 = vpack.c.b16 %v3319, %v3318
    %v3466 = vpack.c.b16 %v3321, %v3320
    %v3467 = vpack.c.b16 %v3323, %v3322
    %v3468 = vpack.c.b16 %v3325, %v3324
    %v3469 = vpack.c.b16 %v3327, %v3326
    %v3470 = vpack.c.b16 %v3329, %v3328
    %v3471 = vpack.c.b16 %v3331, %v3330
    %v3472 = vpack.c.b16 %v3333, %v3332
    %v3473 = vpack.c.b16 %v3335, %v3334
    %v3474 = vpack.c.b16 %v3337, %v3336
    %v3475 = vpack.c.b16 %v3339, %v3338
    %v3476 = vpack.c.b16 %v3341, %v3340
    %v3477 = vpack.c.b16 %v3343, %v3342
    %v3478 = vpack.c.b16 %v3345, %v3344
    %v3479 = vpack.c.b16 %v3347, %v3346
    %v3480 = vpack.c.b16 %v3349, %v3348
    %v3481 = vpack.c.b16 %v3351, %v3350
    %v3482 = vpack.c.b16 %v3353, %v3352
    %v3483 = vpack.c.b16 %v3355, %v3354
    %3612 = vmatprep.subr.bf16.mxu0 0
    %3613 = vmatpush1.bf16.msra.mxu0 %v3356
    %3614 = vmatprep.subr.bf16.mxu0 0
    %3615 = vmatpush1.bf16.msra.mxu0 %v3357
    %3616 = vmatprep.subr.bf16.mxu0 0
    %3617 = vmatpush1.bf16.msra.mxu0 %v3358
    %3618 = vmatprep.subr.bf16.mxu0 0
    %3619 = vmatpush1.bf16.msra.mxu0 %v3359
    %3620 = vmatprep.subr.bf16.mxu0 0
    %3621 = vmatpush1.bf16.msra.mxu0 %v3360
    %3622 = vmatprep.subr.bf16.mxu0 0
    %3623 = vmatpush1.bf16.msra.mxu0 %v3361
    %3624 = vmatprep.subr.bf16.mxu0 0
    %3625 = vmatpush1.bf16.msra.mxu0 %v3362
    %3626 = vmatprep.subr.bf16.mxu0 0
    %3627 = vmatpush1.bf16.msra.mxu0 %v3363
    %3628 = vmatprep.subr.bf16.mxu0 0
    %3629 = vmatpush1.bf16.msra.mxu0 %v3364
    %3630 = vmatprep.subr.bf16.mxu0 0
    %3631 = vmatpush1.bf16.msra.mxu0 %v3365
    %3632 = vmatprep.subr.bf16.mxu0 0
    %3633 = vmatpush1.bf16.msra.mxu0 %v3366
    %3634 = vmatprep.subr.bf16.mxu0 0
    %3635 = vmatpush1.bf16.msra.mxu0 %v3367
    %3636 = vmatprep.subr.bf16.mxu0 0
    %3637 = vmatpush1.bf16.msra.mxu0 %v3368
    %3638 = vmatprep.subr.bf16.mxu0 0
    %3639 = vmatpush1.bf16.msra.mxu0 %v3369
    %3640 = vmatprep.subr.bf16.mxu0 0
    %3641 = vmatpush1.bf16.msra.mxu0 %v3370
    %3642 = vmatprep.subr.bf16.mxu0 0
    %3643 = vmatpush1.bf16.msra.mxu0 %v3371
    %3644 = vmatprep.mubr.bf16.mxu0 %v2823
    %3645 = vmatmul.mubr.bf16.gmra.mrb[0].mxu0 %v2822
    %v3646 = vpop.f32.mrb[0].mxu0
    %v3647 = vadd.f32 %v2842, %v3646
    %v3648 = vpop.f32.mrb[0].mxu0
    %v3649 = vpop.f32.mrb[0].mxu0
    %v3650 = vadd.f32 %v2842, %v3649
    %v3651 = vpop.f32.mrb[0].mxu0
    %3652 = vdwg.mxu0
    %3653 = vmatprep.subr.bf16.mxu0 0
    %3654 = vmatpush1.bf16.msra.mxu0 %v3372
    %3655 = vmatprep.subr.bf16.mxu0 0
    %3656 = vmatpush1.bf16.msra.mxu0 %v3373
    %3657 = vmatprep.subr.bf16.mxu0 0
    %3658 = vmatpush1.bf16.msra.mxu0 %v3374
    %3659 = vmatprep.subr.bf16.mxu0 0
    %3660 = vmatpush1.bf16.msra.mxu0 %v3375
    %3661 = vmatprep.subr.bf16.mxu0 0
    %3662 = vmatpush1.bf16.msra.mxu0 %v3376
    %3663 = vmatprep.subr.bf16.mxu0 0
    %3664 = vmatpush1.bf16.msra.mxu0 %v3377
    %3665 = vmatprep.subr.bf16.mxu0 0
    %3666 = vmatpush1.bf16.msra.mxu0 %v3378
    %3667 = vmatprep.subr.bf16.mxu0 0
    %3668 = vmatpush1.bf16.msra.mxu0 %v3379
    %3669 = vmatprep.subr.bf16.mxu0 0
    %3670 = vmatpush1.bf16.msra.mxu0 %v3380
    %3671 = vmatprep.subr.bf16.mxu0 0
    %3672 = vmatpush1.bf16.msra.mxu0 %v3381
    %3673 = vmatprep.subr.bf16.mxu0 0
    %3674 = vmatpush1.bf16.msra.mxu0 %v3382
    %3675 = vmatprep.subr.bf16.mxu0 0
    %3676 = vmatpush1.bf16.msra.mxu0 %v3383
    %3677 = vmatprep.subr.bf16.mxu0 0
    %3678 = vmatpush1.bf16.msra.mxu0 %v3384
    %3679 = vmatprep.subr.bf16.mxu0 0
    %3680 = vmatpush1.bf16.msra.mxu0 %v3385
    %3681 = vmatprep.subr.bf16.mxu0 0
    %3682 = vmatpush1.bf16.msra.mxu0 %v3386
    %3683 = vmatprep.subr.bf16.mxu0 0
    %3684 = vmatpush1.bf16.msra.mxu0 %v3387
    %3685 = vmatprep.mubr.bf16.mxu0 %v2825
    %3686 = vmatmul.mubr.bf16.gmra.mrb[0].mxu0 %v2824
    %v3687 = vpop.f32.mrb[0].mxu0
    %v3688 = vadd.f32 %v3647, %v3687
    %v3689 = vpop.f32.mrb[0].mxu0
    %v3690 = vpop.f32.mrb[0].mxu0
    %v3691 = vadd.f32 %v3650, %v3690
    %v3692 = vpop.f32.mrb[0].mxu0
    %3693 = vdwg.mxu0
    %3694 = vmatprep.subr.bf16.mxu0 0
    %3695 = vmatpush1.bf16.msra.mxu0 %v3388
    %3696 = vmatprep.subr.bf16.mxu0 0
    %3697 = vmatpush1.bf16.msra.mxu0 %v3389
    %3698 = vmatprep.subr.bf16.mxu0 0
    %3699 = vmatpush1.bf16.msra.mxu0 %v3390
    %3700 = vmatprep.subr.bf16.mxu0 0
    %3701 = vmatpush1.bf16.msra.mxu0 %v3391
    %3702 = vmatprep.subr.bf16.mxu0 0
    %3703 = vmatpush1.bf16.msra.mxu0 %v3392
    %3704 = vmatprep.subr.bf16.mxu0 0
    %3705 = vmatpush1.bf16.msra.mxu0 %v3393
    %3706 = vmatprep.subr.bf16.mxu0 0
    %3707 = vmatpush1.bf16.msra.mxu0 %v3394
    %3708 = vmatprep.subr.bf16.mxu0 0
    %3709 = vmatpush1.bf16.msra.mxu0 %v3395
    %3710 = vmatprep.subr.bf16.mxu0 0
    %3711 = vmatpush1.bf16.msra.mxu0 %v3396
    %3712 = vmatprep.subr.bf16.mxu0 0
    %3713 = vmatpush1.bf16.msra.mxu0 %v3397
    %3714 = vmatprep.subr.bf16.mxu0 0
    %3715 = vmatpush1.bf16.msra.mxu0 %v3398
    %3716 = vmatprep.subr.bf16.mxu0 0
    %3717 = vmatpush1.bf16.msra.mxu0 %v3399
    %3718 = vmatprep.subr.bf16.mxu0 0
    %3719 = vmatpush1.bf16.msra.mxu0 %v3400
    %3720 = vmatprep.subr.bf16.mxu0 0
    %3721 = vmatpush1.bf16.msra.mxu0 %v3401
    %3722 = vmatprep.subr.bf16.mxu0 0
    %3723 = vmatpush1.bf16.msra.mxu0 %v3402
    %3724 = vmatprep.subr.bf16.mxu0 0
    %3725 = vmatpush1.bf16.msra.mxu0 %v3403
    %3726 = vmatprep.mubr.bf16.mxu0 %v2827
    %3727 = vmatmul.mubr.bf16.gmra.mrb[0].mxu0 %v2826
    %v3728 = vpop.f32.mrb[0].mxu0
    %v3729 = vadd.f32 %v3688, %v3728
    %v3730 = vpop.f32.mrb[0].mxu0
    %v3731 = vpop.f32.mrb[0].mxu0
    %v3732 = vadd.f32 %v3691, %v3731
    %v3733 = vpop.f32.mrb[0].mxu0
    %3734 = vdwg.mxu0
    %3735 = vmatprep.subr.bf16.mxu0 0
    %3736 = vmatpush1.bf16.msra.mxu0 %v3404
    %3737 = vmatprep.subr.bf16.mxu0 0
    %3738 = vmatpush1.bf16.msra.mxu0 %v3405
    %3739 = vmatprep.subr.bf16.mxu0 0
    %3740 = vmatpush1.bf16.msra.mxu0 %v3406
    %3741 = vmatprep.subr.bf16.mxu0 0
    %3742 = vmatpush1.bf16.msra.mxu0 %v3407
    %3743 = vmatprep.subr.bf16.mxu0 0
    %3744 = vmatpush1.bf16.msra.mxu0 %v3408
    %3745 = vmatprep.subr.bf16.mxu0 0
    %3746 = vmatpush1.bf16.msra.mxu0 %v3409
    %3747 = vmatprep.subr.bf16.mxu0 0
    %3748 = vmatpush1.bf16.msra.mxu0 %v3410
    %3749 = vmatprep.subr.bf16.mxu0 0
    %3750 = vmatpush1.bf16.msra.mxu0 %v3411
    %3751 = vmatprep.subr.bf16.mxu0 0
    %3752 = vmatpush1.bf16.msra.mxu0 %v3412
    %3753 = vmatprep.subr.bf16.mxu0 0
    %3754 = vmatpush1.bf16.msra.mxu0 %v3413
    %3755 = vmatprep.subr.bf16.mxu0 0
    %3756 = vmatpush1.bf16.msra.mxu0 %v3414
    %3757 = vmatprep.subr.bf16.mxu0 0
    %3758 = vmatpush1.bf16.msra.mxu0 %v3415
    %3759 = vmatprep.subr.bf16.mxu0 0
    %3760 = vmatpush1.bf16.msra.mxu0 %v3416
    %3761 = vmatprep.subr.bf16.mxu0 0
    %3762 = vmatpush1.bf16.msra.mxu0 %v3417
    %3763 = vmatprep.subr.bf16.mxu0 0
    %3764 = vmatpush1.bf16.msra.mxu0 %v3418
    %3765 = vmatprep.subr.bf16.mxu0 0
    %3766 = vmatpush1.bf16.msra.mxu0 %v3419
    %3767 = vmatprep.mubr.bf16.mxu0 %v2829
    %3768 = vmatmul.mubr.bf16.gmra.mrb[0].mxu0 %v2828
    %v3769 = vpop.f32.mrb[0].mxu0
    %v3770 = vadd.f32 %v3729, %v3769
    %v3771 = vpop.f32.mrb[0].mxu0
    %v3772 = vpop.f32.mrb[0].mxu0
    %v3773 = vadd.f32 %v3732, %v3772
    %v3774 = vpop.f32.mrb[0].mxu0
    %3775 = vdwg.mxu0
    %3776 = vmatprep.subr.bf16.mxu0 0
    %3777 = vmatpush1.bf16.msra.mxu0 %v3420
    %3778 = vmatprep.subr.bf16.mxu0 0
    %3779 = vmatpush1.bf16.msra.mxu0 %v3421
    %3780 = vmatprep.subr.bf16.mxu0 0
    %3781 = vmatpush1.bf16.msra.mxu0 %v3422
    %3782 = vmatprep.subr.bf16.mxu0 0
    %3783 = vmatpush1.bf16.msra.mxu0 %v3423
    %3784 = vmatprep.subr.bf16.mxu0 0
    %3785 = vmatpush1.bf16.msra.mxu0 %v3424
    %3786 = vmatprep.subr.bf16.mxu0 0
    %3787 = vmatpush1.bf16.msra.mxu0 %v3425
    %3788 = vmatprep.subr.bf16.mxu0 0
    %3789 = vmatpush1.bf16.msra.mxu0 %v3426
    %3790 = vmatprep.subr.bf16.mxu0 0
    %3791 = vmatpush1.bf16.msra.mxu0 %v3427
    %3792 = vmatprep.subr.bf16.mxu0 0
    %3793 = vmatpush1.bf16.msra.mxu0 %v3428
    %3794 = vmatprep.subr.bf16.mxu0 0
    %3795 = vmatpush1.bf16.msra.mxu0 %v3429
    %3796 = vmatprep.subr.bf16.mxu0 0
    %3797 = vmatpush1.bf16.msra.mxu0 %v3430
    %3798 = vmatprep.subr.bf16.mxu0 0
    %3799 = vmatpush1.bf16.msra.mxu0 %v3431
    %3800 = vmatprep.subr.bf16.mxu0 0
    %3801 = vmatpush1.bf16.msra.mxu0 %v3432
    %3802 = vmatprep.subr.bf16.mxu0 0
    %3803 = vmatpush1.bf16.msra.mxu0 %v3433
    %3804 = vmatprep.subr.bf16.mxu0 0
    %3805 = vmatpush1.bf16.msra.mxu0 %v3434
    %3806 = vmatprep.subr.bf16.mxu0 0
    %3807 = vmatpush1.bf16.msra.mxu0 %v3435
    %3808 = vmatprep.mubr.bf16.mxu0 %v2831
    %3809 = vmatmul.mubr.bf16.gmra.mrb[0].mxu0 %v2830
    %v3810 = vpop.f32.mrb[0].mxu0
    %v3811 = vadd.f32 %v3770, %v3810
    %v3812 = vpop.f32.mrb[0].mxu0
    %v3813 = vpop.f32.mrb[0].mxu0
    %v3814 = vadd.f32 %v3773, %v3813
    %v3815 = vpop.f32.mrb[0].mxu0
    %3816 = vdwg.mxu0
    %3817 = vmatprep.subr.bf16.mxu0 0
    %3818 = vmatpush1.bf16.msra.mxu0 %v3436
    %3819 = vmatprep.subr.bf16.mxu0 0
    %3820 = vmatpush1.bf16.msra.mxu0 %v3437
    %3821 = vmatprep.subr.bf16.mxu0 0
    %3822 = vmatpush1.bf16.msra.mxu0 %v3438
    %3823 = vmatprep.subr.bf16.mxu0 0
    %3824 = vmatpush1.bf16.msra.mxu0 %v3439
    %3825 = vmatprep.subr.bf16.mxu0 0
    %3826 = vmatpush1.bf16.msra.mxu0 %v3440
    %3827 = vmatprep.subr.bf16.mxu0 0
    %3828 = vmatpush1.bf16.msra.mxu0 %v3441
    %3829 = vmatprep.subr.bf16.mxu0 0
    %3830 = vmatpush1.bf16.msra.mxu0 %v3442
    %3831 = vmatprep.subr.bf16.mxu0 0
    %3832 = vmatpush1.bf16.msra.mxu0 %v3443
    %3833 = vmatprep.subr.bf16.mxu0 0
    %3834 = vmatpush1.bf16.msra.mxu0 %v3444
    %3835 = vmatprep.subr.bf16.mxu0 0
    %3836 = vmatpush1.bf16.msra.mxu0 %v3445
    %3837 = vmatprep.subr.bf16.mxu0 0
    %3838 = vmatpush1.bf16.msra.mxu0 %v3446
    %3839 = vmatprep.subr.bf16.mxu0 0
    %3840 = vmatpush1.bf16.msra.mxu0 %v3447
    %3841 = vmatprep.subr.bf16.mxu0 0
    %3842 = vmatpush1.bf16.msra.mxu0 %v3448
    %3843 = vmatprep.subr.bf16.mxu0 0
    %3844 = vmatpush1.bf16.msra.mxu0 %v3449
    %3845 = vmatprep.subr.bf16.mxu0 0
    %3846 = vmatpush1.bf16.msra.mxu0 %v3450
    %3847 = vmatprep.subr.bf16.mxu0 0
    %3848 = vmatpush1.bf16.msra.mxu0 %v3451
    %3849 = vmatprep.mubr.bf16.mxu0 %v2833
    %3850 = vmatmul.mubr.bf16.gmra.mrb[0].mxu0 %v2832
    %v3851 = vpop.f32.mrb[0].mxu0
    %v3852 = vadd.f32 %v3811, %v3851
    %v3853 = vpop.f32.mrb[0].mxu0
    %v3854 = vpop.f32.mrb[0].mxu0
    %v3855 = vadd.f32 %v3814, %v3854
    %v3856 = vpop.f32.mrb[0].mxu0
    %3857 = vdwg.mxu0
    %3858 = vmatprep.subr.bf16.mxu0 0
    %3859 = vmatpush1.bf16.msra.mxu0 %v3452
    %3860 = vmatprep.subr.bf16.mxu0 0
    %3861 = vmatpush1.bf16.msra.mxu0 %v3453
    %3862 = vmatprep.subr.bf16.mxu0 0
    %3863 = vmatpush1.bf16.msra.mxu0 %v3454
    %3864 = vmatprep.subr.bf16.mxu0 0
    %3865 = vmatpush1.bf16.msra.mxu0 %v3455
    %3866 = vmatprep.subr.bf16.mxu0 0
    %3867 = vmatpush1.bf16.msra.mxu0 %v3456
    %3868 = vmatprep.subr.bf16.mxu0 0
    %3869 = vmatpush1.bf16.msra.mxu0 %v3457
    %3870 = vmatprep.subr.bf16.mxu0 0
    %3871 = vmatpush1.bf16.msra.mxu0 %v3458
    %3872 = vmatprep.subr.bf16.mxu0 0
    %3873 = vmatpush1.bf16.msra.mxu0 %v3459
    %3874 = vmatprep.subr.bf16.mxu0 0
    %3875 = vmatpush1.bf16.msra.mxu0 %v3460
    %3876 = vmatprep.subr.bf16.mxu0 0
    %3877 = vmatpush1.bf16.msra.mxu0 %v3461
    %3878 = vmatprep.subr.bf16.mxu0 0
    %3879 = vmatpush1.bf16.msra.mxu0 %v3462
    %3880 = vmatprep.subr.bf16.mxu0 0
    %3881 = vmatpush1.bf16.msra.mxu0 %v3463
    %3882 = vmatprep.subr.bf16.mxu0 0
    %3883 = vmatpush1.bf16.msra.mxu0 %v3464
    %3884 = vmatprep.subr.bf16.mxu0 0
    %3885 = vmatpush1.bf16.msra.mxu0 %v3465
    %3886 = vmatprep.subr.bf16.mxu0 0
    %3887 = vmatpush1.bf16.msra.mxu0 %v3466
    %3888 = vmatprep.subr.bf16.mxu0 0
    %3889 = vmatpush1.bf16.msra.mxu0 %v3467
    %3890 = vmatprep.mubr.bf16.mxu0 %v2835
    %3891 = vmatmul.mubr.bf16.gmra.mrb[0].mxu0 %v2834
    %v3892 = vpop.f32.mrb[0].mxu0
    %v3893 = vadd.f32 %v3852, %v3892
    %v3894 = vpop.f32.mrb[0].mxu0
    %v3895 = vpop.f32.mrb[0].mxu0
    %v3896 = vadd.f32 %v3855, %v3895
    %v3897 = vpop.f32.mrb[0].mxu0
    %3898 = vdwg.mxu0
    %3899 = vmatprep.subr.bf16.mxu0 0
    %3900 = vmatpush1.bf16.msra.mxu0 %v3468
    %3901 = vmatprep.subr.bf16.mxu0 0
    %3902 = vmatpush1.bf16.msra.mxu0 %v3469
    %3903 = vmatprep.subr.bf16.mxu0 0
    %3904 = vmatpush1.bf16.msra.mxu0 %v3470
    %3905 = vmatprep.subr.bf16.mxu0 0
    %3906 = vmatpush1.bf16.msra.mxu0 %v3471
    %3907 = vmatprep.subr.bf16.mxu0 0
    %3908 = vmatpush1.bf16.msra.mxu0 %v3472
    %3909 = vmatprep.subr.bf16.mxu0 0
    %3910 = vmatpush1.bf16.msra.mxu0 %v3473
    %3911 = vmatprep.subr.bf16.mxu0 0
    %3912 = vmatpush1.bf16.msra.mxu0 %v3474
    %3913 = vmatprep.subr.bf16.mxu0 0
    %3914 = vmatpush1.bf16.msra.mxu0 %v3475
    %3915 = vmatprep.subr.bf16.mxu0 0
    %3916 = vmatpush1.bf16.msra.mxu0 %v3476
    %3917 = vmatprep.subr.bf16.mxu0 0
    %3918 = vmatpush1.bf16.msra.mxu0 %v3477
    %3919 = vmatprep.subr.bf16.mxu0 0
    %3920 = vmatpush1.bf16.msra.mxu0 %v3478
    %3921 = vmatprep.subr.bf16.mxu0 0
    %3922 = vmatpush1.bf16.msra.mxu0 %v3479
    %3923 = vmatprep.subr.bf16.mxu0 0
    %3924 = vmatpush1.bf16.msra.mxu0 %v3480
    %3925 = vmatprep.subr.bf16.mxu0 0
    %3926 = vmatpush1.bf16.msra.mxu0 %v3481
    %3927 = vmatprep.subr.bf16.mxu0 0
    %3928 = vmatpush1.bf16.msra.mxu0 %v3482
    %3929 = vmatprep.subr.bf16.mxu0 0
    %3930 = vmatpush1.bf16.msra.mxu0 %v3483
    %3931 = vmatprep.mubr.bf16.mxu0 %v2837
    %3932 = vmatmul.mubr.bf16.gmra.mrb[0].mxu0 %v2836
    %v3933 = vpop.f32.mrb[0].mxu0
    %v3934 = vadd.f32 %v3893, %v3933
    %v3935 = vpop.f32.mrb[0].mxu0
    %v3936 = vpop.f32.mrb[0].mxu0
    %v3937 = vadd.f32 %v3896, %v3936
    %v3938 = vpop.f32.mrb[0].mxu0
    %3939 = vdwg.mxu0
    %v3940 = vadd.f32 %v1849, %v3934
    %v3941 = vadd.f32 %v1850, %v3937
    %s3942 = scalar_lea.vmem %s5, 1
    %v3943 = vld [vmem:[%s3942] sm:$0x1]
    %s3944 = scalar_lea.vmem %s6, 1
    %v3945 = vld [vmem:[%s3944] sm:$0x1]
    %v3946 = vsel %vm145, %v3940, 0.0
    %3947 = vadd.xlane.f32.xlu0 %v3946
    %v3948 = vpop.xlane.xlu0 %3947
    %v3949 = vsel %vm145, %v3941, 0.0
    %3950 = vadd.xlane.f32.xlu0 %v3949
    %v3951 = vpop.xlane.xlu0 %3950
    %v3952 = vmul.f32 %v3948, %v152
    %v3953 = vmul.f32 %v3951, %v152
    %v3954 = vsub.f32 %v3940, %v3952
    %v3955 = vsub.f32 %v3941, %v3953
    %v3956 = vmul.f32 %v3954, %v3954
    %v3957 = vmul.f32 %v3955, %v3955
    %v3958 = vsel %vm145, %v3956, 0.0
    %3959 = vadd.xlane.f32.xlu0 %v3958
    %v3960 = vpop.xlane.xlu0 %3959
    %v3961 = vsel %vm145, %v3957, 0.0
    %3962 = vadd.xlane.f32.xlu0 %v3961
    %v3963 = vpop.xlane.xlu0 %3962
    %v3964 = vmul.f32 %v3960, %v165
    %v3965 = vmul.f32 %v3963, %v165
    %v3966 = vrsqrt.pop %v3964
    %v3967 = vmul.f32 %v3964, %v3966
    %vm3968 = vcmp.eq.f32.partialorder %v3964, inf
    %v3969 = vsel %vm3968, %v3964, %v3967
    %vm3970 = vcmp.eq.f32.partialorder %v3964, 0.0
    %v3971 = vand.u32 %v3964, 2147483648
    %v3972 = vsel %vm3970, %v3971, %v3969
    %v3973 = vrsqrt.pop %v3965
    %v3974 = vmul.f32 %v3965, %v3973
    %vm3975 = vcmp.eq.f32.partialorder %v3965, inf
    %v3976 = vsel %vm3975, %v3965, %v3974
    %vm3977 = vcmp.eq.f32.partialorder %v3965, 0.0
    %v3978 = vand.u32 %v3965, 2147483648
    %v3979 = vsel %vm3977, %v3978, %v3976
    %v3980 = vadd.f32 %v3972, 1e-06
    %v3981 = vadd.f32 %v3979, 1e-06
    %v3982 = vrcp.pop %v3980
    %v3983 = vrcp.pop %v3981
    %v3985 = vlaneseq
    %v3986 = vshrl.u32 %v3985, 7
    %v3987 = vsub.s32 0, %v3986
    %v3988 = vrot.slane %v3943, %v3987
    %v3990 = vmul.f32 %v3988, %v3954
    %v3991 = vmul.f32 %v3988, %v3955
    %v3992 = vmul.f32 %v3990, %v3982
    %v3993 = vmul.f32 %v3991, %v3983
    %v3995 = vlaneseq
    %v3996 = vshrl.u32 %v3995, 7
    %v3997 = vsub.s32 0, %v3996
    %v3998 = vrot.slane %v3945, %v3997
    %v4000 = vadd.f32 %v3992, %v3998
    %v4001 = vadd.f32 %v3993, %v3998
    %s4002 = scalar_lea.vmem %s9, 16
    %v4003 = vld [vmem:[%s4002] sm:$0xf]
    %v4004 = vld [vmem:[%s4002 + $0x4] sm:$0xf]
    %v4005 = vld [vmem:[%s4002 + $0x8] sm:$0xf]
    %v4006 = vld [vmem:[%s4002 + $0xc] sm:$0xf]
    %s4007 = scalar_lea.vmem %s10, 1
    %v4008 = vld [vmem:[%s4007] sm:$0x1]
    %v4009 = vpack.c.bf16 %v4001, %v4000
    %v4011 = vlaneseq
    %v4012 = vshrl.u32 %v4011, 7
    %v4013 = vsub.s32 0, %v4012
    %v4014 = vrot.slane %v4008, %v4013
    %v4020 = vunpack.c.l.b16 %v4003
    %v4021 = vunpack.c.l.b16 %v4004
    %v4022 = vunpack.c.l.b16 %v4005
    %v4023 = vunpack.c.l.b16 %v4006
    %v4024 = vpack.c.b16 %v4021, %v4020
    %v4025 = vpack.c.b16 %v4023, %v4022
    %v4029 = vsel %vm145, %v4009, 0
    %4031 = vmatprep.subr.bf16.mxu0 0
    %4032 = vmatpush1.bf16.msra.mxu0 %v4024
    %4033 = vmatprep.subr.bf16.mxu0 0
    %4034 = vmatpush1.bf16.msra.mxu0 %v4025
    %4035 = vmatprep.subr.bf16.mxu0 0
    %4036 = vmatpush1.bf16.msra.mxu0 0
    %4037 = vmatprep.subr.bf16.mxu0 0
    %4038 = vmatpush1.bf16.msra.mxu0 0
    %4039 = vmatprep.subr.bf16.mxu0 0
    %4040 = vmatpush1.bf16.msra.mxu0 0
    %4041 = vmatprep.subr.bf16.mxu0 0
    %4042 = vmatpush1.bf16.msra.mxu0 0
    %4043 = vmatprep.subr.bf16.mxu0 0
    %4044 = vmatpush1.bf16.msra.mxu0 0
    %4045 = vmatprep.subr.bf16.mxu0 0
    %4046 = vmatpush1.bf16.msra.mxu0 0
    %4047 = vmatprep.subr.bf16.mxu0 0
    %4048 = vmatpush1.bf16.msra.mxu0 0
    %4049 = vmatprep.subr.bf16.mxu0 0
    %4050 = vmatpush1.bf16.msra.mxu0 0
    %4051 = vmatprep.subr.bf16.mxu0 0
    %4052 = vmatpush1.bf16.msra.mxu0 0
    %4053 = vmatprep.subr.bf16.mxu0 0
    %4054 = vmatpush1.bf16.msra.mxu0 0
    %4055 = vmatprep.subr.bf16.mxu0 0
    %4056 = vmatpush1.bf16.msra.mxu0 0
    %4057 = vmatprep.subr.bf16.mxu0 0
    %4058 = vmatpush1.bf16.msra.mxu0 0
    %4059 = vmatprep.subr.bf16.mxu0 0
    %4060 = vmatpush1.bf16.msra.mxu0 0
    %4061 = vmatprep.subr.bf16.mxu0 0
    %4062 = vmatpush1.bf16.msra.mxu0 0
    %4063 = vmatprep.mubr.bf16.mxu0 0
    %4064 = vmatmul.mubr.bf16.gmra.mrb[0].mxu0 %v4029
    %v4065 = vpop.f32.mrb[0].mxu0
    %v4066 = vadd.f32 %v4014, %v4065
    %v4067 = vpop.f32.mrb[0].mxu0
    %v4068 = vpop.f32.mrb[0].mxu0
    %v4069 = vadd.f32 %v4014, %v4068
    %v4070 = vpop.f32.mrb[0].mxu0
    %4071 = vdwg.mxu0
    %s4072 = scalar_lea.vmem %s11, 16
    %v4073 = vld [vmem:[%s4072] sm:$0xf]
    %v4074 = vld [vmem:[%s4072 + $0x4] sm:$0xf]
    %v4075 = vld [vmem:[%s4072 + $0x8] sm:$0xf]
    %v4076 = vld [vmem:[%s4072 + $0xc] sm:$0xf]
    %s4077 = scalar_lea.vmem %s12, 1
    %v4078 = vld [vmem:[%s4077] sm:$0x1]
    %v4080 = vlaneseq
    %v4081 = vshrl.u32 %v4080, 7
    %v4082 = vsub.s32 0, %v4081
    %v4083 = vrot.slane %v4078, %v4082
    %v4089 = vunpack.c.l.b16 %v4073
    %v4090 = vunpack.c.l.b16 %v4074
    %v4091 = vunpack.c.l.b16 %v4075
    %v4092 = vunpack.c.l.b16 %v4076
    %v4093 = vpack.c.b16 %v4090, %v4089
    %v4094 = vpack.c.b16 %v4092, %v4091
    %4097 = vmatprep.subr.bf16.mxu0 0
    %4098 = vmatpush1.bf16.msra.mxu0 %v4093
    %4099 = vmatprep.subr.bf16.mxu0 0
    %4100 = vmatpush1.bf16.msra.mxu0 %v4094
    %4101 = vmatprep.subr.bf16.mxu0 0
    %4102 = vmatpush1.bf16.msra.mxu0 0
    %4103 = vmatprep.subr.bf16.mxu0 0
    %4104 = vmatpush1.bf16.msra.mxu0 0
    %4105 = vmatprep.subr.bf16.mxu0 0
    %4106 = vmatpush1.bf16.msra.mxu0 0
    %4107 = vmatprep.subr.bf16.mxu0 0
    %4108 = vmatpush1.bf16.msra.mxu0 0
    %4109 = vmatprep.subr.bf16.mxu0 0
    %4110 = vmatpush1.bf16.msra.mxu0 0
    %4111 = vmatprep.subr.bf16.mxu0 0
    %4112 = vmatpush1.bf16.msra.mxu0 0
    %4113 = vmatprep.subr.bf16.mxu0 0
    %4114 = vmatpush1.bf16.msra.mxu0 0
    %4115 = vmatprep.subr.bf16.mxu0 0
    %4116 = vmatpush1.bf16.msra.mxu0 0
    %4117 = vmatprep.subr.bf16.mxu0 0
    %4118 = vmatpush1.bf16.msra.mxu0 0
    %4119 = vmatprep.subr.bf16.mxu0 0
    %4120 = vmatpush1.bf16.msra.mxu0 0
    %4121 = vmatprep.subr.bf16.mxu0 0
    %4122 = vmatpush1.bf16.msra.mxu0 0
    %4123 = vmatprep.subr.bf16.mxu0 0
    %4124 = vmatpush1.bf16.msra.mxu0 0
    %4125 = vmatprep.subr.bf16.mxu0 0
    %4126 = vmatpush1.bf16.msra.mxu0 0
    %4127 = vmatprep.subr.bf16.mxu0 0
    %4128 = vmatpush1.bf16.msra.mxu0 0
    %4129 = vmatprep.mubr.bf16.mxu0 0
    %4130 = vmatmul.mubr.bf16.gmra.mrb[0].mxu0 %v4029
    %v4131 = vpop.f32.mrb[0].mxu0
    %v4132 = vadd.f32 %v4083, %v4131
    %v4133 = vpop.f32.mrb[0].mxu0
    %v4134 = vpop.f32.mrb[0].mxu0
    %v4135 = vadd.f32 %v4083, %v4134
    %v4136 = vpop.f32.mrb[0].mxu0
    %4137 = vdwg.mxu0
    %s4138 = scalar_lea.vmem %s13, 16
    %v4139 = vld [vmem:[%s4138] sm:$0xf]
    %v4140 = vld [vmem:[%s4138 + $0x4] sm:$0xf]
    %v4141 = vld [vmem:[%s4138 + $0x8] sm:$0xf]
    %v4142 = vld [vmem:[%s4138 + $0xc] sm:$0xf]
    %s4143 = scalar_lea.vmem %s14, 1
    %v4144 = vld [vmem:[%s4143] sm:$0x1]
    %v4146 = vlaneseq
    %v4147 = vshrl.u32 %v4146, 7
    %v4148 = vsub.s32 0, %v4147
    %v4149 = vrot.slane %v4144, %v4148
    %v4155 = vunpack.c.l.b16 %v4139
    %v4156 = vunpack.c.l.b16 %v4140
    %v4157 = vunpack.c.l.b16 %v4141
    %v4158 = vunpack.c.l.b16 %v4142
    %v4159 = vpack.c.b16 %v4156, %v4155
    %v4160 = vpack.c.b16 %v4158, %v4157
    %4163 = vmatprep.subr.bf16.mxu0 0
    %4164 = vmatpush1.bf16.msra.mxu0 %v4159
    %4165 = vmatprep.subr.bf16.mxu0 0
    %4166 = vmatpush1.bf16.msra.mxu0 %v4160
    %4167 = vmatprep.subr.bf16.mxu0 0
    %4168 = vmatpush1.bf16.msra.mxu0 0
    %4169 = vmatprep.subr.bf16.mxu0 0
    %4170 = vmatpush1.bf16.msra.mxu0 0
    %4171 = vmatprep.subr.bf16.mxu0 0
    %4172 = vmatpush1.bf16.msra.mxu0 0
    %4173 = vmatprep.subr.bf16.mxu0 0
    %4174 = vmatpush1.bf16.msra.mxu0 0
    %4175 = vmatprep.subr.bf16.mxu0 0
    %4176 = vmatpush1.bf16.msra.mxu0 0
    %4177 = vmatprep.subr.bf16.mxu0 0
    %4178 = vmatpush1.bf16.msra.mxu0 0
    %4179 = vmatprep.subr.bf16.mxu0 0
    %4180 = vmatpush1.bf16.msra.mxu0 0
    %4181 = vmatprep.subr.bf16.mxu0 0
    %4182 = vmatpush1.bf16.msra.mxu0 0
    %4183 = vmatprep.subr.bf16.mxu0 0
    %4184 = vmatpush1.bf16.msra.mxu0 0
    %4185 = vmatprep.subr.bf16.mxu0 0
    %4186 = vmatpush1.bf16.msra.mxu0 0
    %4187 = vmatprep.subr.bf16.mxu0 0
    %4188 = vmatpush1.bf16.msra.mxu0 0
    %4189 = vmatprep.subr.bf16.mxu0 0
    %4190 = vmatpush1.bf16.msra.mxu0 0
    %4191 = vmatprep.subr.bf16.mxu0 0
    %4192 = vmatpush1.bf16.msra.mxu0 0
    %4193 = vmatprep.subr.bf16.mxu0 0
    %4194 = vmatpush1.bf16.msra.mxu0 0
    %4195 = vmatprep.mubr.bf16.mxu0 0
    %4196 = vmatmul.mubr.bf16.gmra.mrb[0].mxu0 %v4029
    %v4197 = vpop.f32.mrb[0].mxu0
    %v4198 = vadd.f32 %v4149, %v4197
    %v4199 = vpop.f32.mrb[0].mxu0
    %v4200 = vpop.f32.mrb[0].mxu0
    %v4201 = vadd.f32 %v4149, %v4200
    %v4202 = vpop.f32.mrb[0].mxu0
    %4203 = vdwg.mxu0
    %v4204 = vld [vmem:[%s2] sm:$0x1]
    %v4206 = vsel %vm401, %v4066, 0
    %v4209 = vsel %vm401, %v4132, 0
    %4211 = vmatprep.subr.mxu0 0.0
    %4212 = vmatpush1.xpose.msra.mxu0 %v4209
    %4213 = vmatprep.subr.mxu0 0.0
    %4214 = vmatpush1.xpose.msra.mxu0 0.0
    %4215 = vmatprep.subr.mxu0 0.0
    %4216 = vmatpush1.xpose.msra.mxu0 0.0
    %4217 = vmatprep.subr.mxu0 0.0
    %4218 = vmatpush1.xpose.msra.mxu0 0.0
    %4219 = vmatprep.subr.mxu0 0.0
    %4220 = vmatpush1.xpose.msra.mxu0 0.0
    %4221 = vmatprep.subr.mxu0 0.0
    %4222 = vmatpush1.xpose.msra.mxu0 0.0
    %4223 = vmatprep.subr.mxu0 0.0
    %4224 = vmatpush1.xpose.msra.mxu0 0.0
    %4225 = vmatprep.subr.mxu0 0.0
    %4226 = vmatpush1.xpose.msra.mxu0 0.0
    %4227 = vmatprep.subr.mxu0 0.0
    %4228 = vmatpush1.xpose.msra.mxu0 0.0
    %4229 = vmatprep.subr.mxu0 0.0
    %4230 = vmatpush1.xpose.msra.mxu0 0.0
    %4231 = vmatprep.subr.mxu0 0.0
    %4232 = vmatpush1.xpose.msra.mxu0 0.0
    %4233 = vmatprep.subr.mxu0 0.0
    %4234 = vmatpush1.xpose.msra.mxu0 0.0
    %4235 = vmatprep.subr.mxu0 0.0
    %4236 = vmatpush1.xpose.msra.mxu0 0.0
    %4237 = vmatprep.subr.mxu0 0.0
    %4238 = vmatpush1.xpose.msra.mxu0 0.0
    %4239 = vmatprep.subr.mxu0 0.0
    %4240 = vmatpush1.xpose.msra.mxu0 0.0
    %4241 = vmatprep.subr.mxu0 0.0
    %4242 = vmatpush1.xpose.msra.mxu0 0.0
    %4243 = vmatprep.subr.mxu0 0.0
    %4244 = vmatpush1.xpose.msra.mxu0 0.0
    %4245 = vmatprep.subr.mxu0 0.0
    %4246 = vmatpush1.xpose.msra.mxu0 0.0
    %4247 = vmatprep.subr.mxu0 0.0
    %4248 = vmatpush1.xpose.msra.mxu0 0.0
    %4249 = vmatprep.subr.mxu0 0.0
    %4250 = vmatpush1.xpose.msra.mxu0 0.0
    %4251 = vmatprep.subr.mxu0 0.0
    %4252 = vmatpush1.xpose.msra.mxu0 0.0
    %4253 = vmatprep.subr.mxu0 0.0
    %4254 = vmatpush1.xpose.msra.mxu0 0.0
    %4255 = vmatprep.subr.mxu0 0.0
    %4256 = vmatpush1.xpose.msra.mxu0 0.0
    %4257 = vmatprep.subr.mxu0 0.0
    %4258 = vmatpush1.xpose.msra.mxu0 0.0
    %4259 = vmatprep.subr.mxu0 0.0
    %4260 = vmatpush1.xpose.msra.mxu0 0.0
    %4261 = vmatprep.subr.mxu0 0.0
    %4262 = vmatpush1.xpose.msra.mxu0 0.0
    %4263 = vmatprep.subr.mxu0 0.0
    %4264 = vmatpush1.xpose.msra.mxu0 0.0
    %4265 = vmatprep.subr.mxu0 0.0
    %4266 = vmatpush1.xpose.msra.mxu0 0.0
    %4267 = vmatprep.subr.mxu0 0.0
    %4268 = vmatpush1.xpose.msra.mxu0 0.0
    %4269 = vmatprep.subr.mxu0 0.0
    %4270 = vmatpush1.xpose.msra.mxu0 0.0
    %4271 = vmatprep.subr.mxu0 0.0
    %4272 = vmatpush1.xpose.msra.mxu0 0.0
    %4273 = vmatprep.subr.mxu0 0.0
    %4274 = vmatpush1.xpose.msra.mxu0 0.0
    %4275 = vmatprep.mubr.f32.mxu0 0.0
    %4276 = vmatmul.mubr.f32.gmra.mrb[0].mxu0 %v4206
    %v4277 = vpop.f32.mrb[0].mxu0
    %v4278 = vadd.f32 0.0, %v4277
    %v4279 = vpop.f32.mrb[0].mxu0
    %4280 = vdwg.mxu0
    %v4281 = vmul.f32 %v4278, 0.35355338
    %v4283 = vlaneseq
    %v4284 = vshrl.u32 %v4283, 7
    %v4285 = vsub.s32 0, %v4284
    %v4286 = vrot.slane %v4204, %v4285
    %v4288 = vadd.f32 %v4281, %v4286
    %v4289 = vsel %vm401, %v4288, -inf
    %4290 = vmax.xlane.f32.xlu0 %v4289
    %v4291 = vpop.xlane.xlu0 %4290
    %v4292 = vsub.f32 %v4288, %v4291
    %v4293 = vmul.f32 %v4292, 1.442695
    %v4294 = vpow.pop %v4293
    %v4295 = vsel %vm401, %v4294, 0.0
    %4296 = vadd.xlane.f32.xlu0 %v4295
    %v4297 = vpop.xlane.xlu0 %4296
    %v4298 = vrcp.pop %v4297
    %v4299 = vmul.f32 %v4294, %v4298
    %v4301 = vsel %vm401, %v4299, 0
    %4303 = vmatprep.subr.mxu0 0.0
    %4304 = vmatpush1.msra.mxu0 %v4198
    %4305 = vmatprep.subr.mxu0 0.0
    %4306 = vmatpush1.msra.mxu0 0.0
    %4307 = vmatprep.subr.mxu0 0.0
    %4308 = vmatpush1.msra.mxu0 0.0
    %4309 = vmatprep.subr.mxu0 0.0
    %4310 = vmatpush1.msra.mxu0 0.0
    %4311 = vmatprep.subr.mxu0 0.0
    %4312 = vmatpush1.msra.mxu0 0.0
    %4313 = vmatprep.subr.mxu0 0.0
    %4314 = vmatpush1.msra.mxu0 0.0
    %4315 = vmatprep.subr.mxu0 0.0
    %4316 = vmatpush1.msra.mxu0 0.0
    %4317 = vmatprep.subr.mxu0 0.0
    %4318 = vmatpush1.msra.mxu0 0.0
    %4319 = vmatprep.subr.mxu0 0.0
    %4320 = vmatpush1.msra.mxu0 0.0
    %4321 = vmatprep.subr.mxu0 0.0
    %4322 = vmatpush1.msra.mxu0 0.0
    %4323 = vmatprep.subr.mxu0 0.0
    %4324 = vmatpush1.msra.mxu0 0.0
    %4325 = vmatprep.subr.mxu0 0.0
    %4326 = vmatpush1.msra.mxu0 0.0
    %4327 = vmatprep.subr.mxu0 0.0
    %4328 = vmatpush1.msra.mxu0 0.0
    %4329 = vmatprep.subr.mxu0 0.0
    %4330 = vmatpush1.msra.mxu0 0.0
    %4331 = vmatprep.subr.mxu0 0.0
    %4332 = vmatpush1.msra.mxu0 0.0
    %4333 = vmatprep.subr.mxu0 0.0
    %4334 = vmatpush1.msra.mxu0 0.0
    %4335 = vmatprep.subr.mxu0 0.0
    %4336 = vmatpush1.msra.mxu0 0.0
    %4337 = vmatprep.subr.mxu0 0.0
    %4338 = vmatpush1.msra.mxu0 0.0
    %4339 = vmatprep.subr.mxu0 0.0
    %4340 = vmatpush1.msra.mxu0 0.0
    %4341 = vmatprep.subr.mxu0 0.0
    %4342 = vmatpush1.msra.mxu0 0.0
    %4343 = vmatprep.subr.mxu0 0.0
    %4344 = vmatpush1.msra.mxu0 0.0
    %4345 = vmatprep.subr.mxu0 0.0
    %4346 = vmatpush1.msra.mxu0 0.0
    %4347 = vmatprep.subr.mxu0 0.0
    %4348 = vmatpush1.msra.mxu0 0.0
    %4349 = vmatprep.subr.mxu0 0.0
    %4350 = vmatpush1.msra.mxu0 0.0
    %4351 = vmatprep.subr.mxu0 0.0
    %4352 = vmatpush1.msra.mxu0 0.0
    %4353 = vmatprep.subr.mxu0 0.0
    %4354 = vmatpush1.msra.mxu0 0.0
    %4355 = vmatprep.subr.mxu0 0.0
    %4356 = vmatpush1.msra.mxu0 0.0
    %4357 = vmatprep.subr.mxu0 0.0
    %4358 = vmatpush1.msra.mxu0 0.0
    %4359 = vmatprep.subr.mxu0 0.0
    %4360 = vmatpush1.msra.mxu0 0.0
    %4361 = vmatprep.subr.mxu0 0.0
    %4362 = vmatpush1.msra.mxu0 0.0
    %4363 = vmatprep.subr.mxu0 0.0
    %4364 = vmatpush1.msra.mxu0 0.0
    %4365 = vmatprep.subr.mxu0 0.0
    %4366 = vmatpush1.msra.mxu0 0.0
    %4367 = vmatprep.mubr.f32.mxu0 0.0
    %4368 = vmatmul.mubr.f32.gmra.mrb[0].mxu0 %v4301
    %v4369 = vpop.f32.mrb[0].mxu0
    %v4370 = vadd.f32 0.0, %v4369
    %v4371 = vpop.f32.mrb[0].mxu0
    %4372 = vdwg.mxu0
    %4373 = vst.msk [vmem:[#allocation2] sm:$0xff] %vm401, %v4370
    %4374 = vrot.lane.b32.xlu0 %v4066, 120
    %v4375 = vpop.permute.xlu0 %4374
    %4376 = vrot.lane.b32.xlu0 %v4132, 120
    %v4377 = vpop.permute.xlu0 %4376
    %v4378 = vsel %vm401, %v4375, 0
    %v4380 = vsel %vm401, %v4377, 0
    %4382 = vmatprep.subr.mxu0 0.0
    %4383 = vmatpush1.xpose.msra.mxu0 %v4380
    %4384 = vmatprep.subr.mxu0 0.0
    %4385 = vmatpush1.xpose.msra.mxu0 0.0
    %4386 = vmatprep.subr.mxu0 0.0
    %4387 = vmatpush1.xpose.msra.mxu0 0.0
    %4388 = vmatprep.subr.mxu0 0.0
    %4389 = vmatpush1.xpose.msra.mxu0 0.0
    %4390 = vmatprep.subr.mxu0 0.0
    %4391 = vmatpush1.xpose.msra.mxu0 0.0
    %4392 = vmatprep.subr.mxu0 0.0
    %4393 = vmatpush1.xpose.msra.mxu0 0.0
    %4394 = vmatprep.subr.mxu0 0.0
    %4395 = vmatpush1.xpose.msra.mxu0 0.0
    %4396 = vmatprep.subr.mxu0 0.0
    %4397 = vmatpush1.xpose.msra.mxu0 0.0
    %4398 = vmatprep.subr.mxu0 0.0
    %4399 = vmatpush1.xpose.msra.mxu0 0.0
    %4400 = vmatprep.subr.mxu0 0.0
    %4401 = vmatpush1.xpose.msra.mxu0 0.0
    %4402 = vmatprep.subr.mxu0 0.0
    %4403 = vmatpush1.xpose.msra.mxu0 0.0
    %4404 = vmatprep.subr.mxu0 0.0
    %4405 = vmatpush1.xpose.msra.mxu0 0.0
    %4406 = vmatprep.subr.mxu0 0.0
    %4407 = vmatpush1.xpose.msra.mxu0 0.0
    %4408 = vmatprep.subr.mxu0 0.0
    %4409 = vmatpush1.xpose.msra.mxu0 0.0
    %4410 = vmatprep.subr.mxu0 0.0
    %4411 = vmatpush1.xpose.msra.mxu0 0.0
    %4412 = vmatprep.subr.mxu0 0.0
    %4413 = vmatpush1.xpose.msra.mxu0 0.0
    %4414 = vmatprep.subr.mxu0 0.0
    %4415 = vmatpush1.xpose.msra.mxu0 0.0
    %4416 = vmatprep.subr.mxu0 0.0
    %4417 = vmatpush1.xpose.msra.mxu0 0.0
    %4418 = vmatprep.subr.mxu0 0.0
    %4419 = vmatpush1.xpose.msra.mxu0 0.0
    %4420 = vmatprep.subr.mxu0 0.0
    %4421 = vmatpush1.xpose.msra.mxu0 0.0
    %4422 = vmatprep.subr.mxu0 0.0
    %4423 = vmatpush1.xpose.msra.mxu0 0.0
    %4424 = vmatprep.subr.mxu0 0.0
    %4425 = vmatpush1.xpose.msra.mxu0 0.0
    %4426 = vmatprep.subr.mxu0 0.0
    %4427 = vmatpush1.xpose.msra.mxu0 0.0
    %4428 = vmatprep.subr.mxu0 0.0
    %4429 = vmatpush1.xpose.msra.mxu0 0.0
    %4430 = vmatprep.subr.mxu0 0.0
    %4431 = vmatpush1.xpose.msra.mxu0 0.0
    %4432 = vmatprep.subr.mxu0 0.0
    %4433 = vmatpush1.xpose.msra.mxu0 0.0
    %4434 = vmatprep.subr.mxu0 0.0
    %4435 = vmatpush1.xpose.msra.mxu0 0.0
    %4436 = vmatprep.subr.mxu0 0.0
    %4437 = vmatpush1.xpose.msra.mxu0 0.0
    %4438 = vmatprep.subr.mxu0 0.0
    %4439 = vmatpush1.xpose.msra.mxu0 0.0
    %4440 = vmatprep.subr.mxu0 0.0
    %4441 = vmatpush1.xpose.msra.mxu0 0.0
    %4442 = vmatprep.subr.mxu0 0.0
    %4443 = vmatpush1.xpose.msra.mxu0 0.0
    %4444 = vmatprep.subr.mxu0 0.0
    %4445 = vmatpush1.xpose.msra.mxu0 0.0
    %4446 = vmatprep.mubr.f32.mxu0 0.0
    %4447 = vmatmul.mubr.f32.gmra.mrb[0].mxu0 %v4378
    %v4448 = vpop.f32.mrb[0].mxu0
    %v4449 = vadd.f32 0.0, %v4448
    %v4450 = vpop.f32.mrb[0].mxu0
    %4451 = vdwg.mxu0
    %v4452 = vmul.f32 %v4449, 0.35355338
    %v4453 = vadd.f32 %v4452, %v4286
    %v4454 = vsel %vm401, %v4453, -inf
    %4455 = vmax.xlane.f32.xlu0 %v4454
    %v4456 = vpop.xlane.xlu0 %4455
    %v4457 = vsub.f32 %v4453, %v4456
    %v4458 = vmul.f32 %v4457, 1.442695
    %v4459 = vpow.pop %v4458
    %v4460 = vsel %vm401, %v4459, 0.0
    %4461 = vadd.xlane.f32.xlu0 %v4460
    %v4462 = vpop.xlane.xlu0 %4461
    %v4463 = vrcp.pop %v4462
    %v4464 = vmul.f32 %v4459, %v4463
    %4466 = vrot.lane.b32.xlu0 %v4198, 120
    %v4467 = vpop.permute.xlu0 %4466
    %v4470 = vsel %vm401, %v4464, 0
    %4472 = vmatprep.subr.mxu0 0.0
    %4473 = vmatpush1.msra.mxu0 %v4467
    %4474 = vmatprep.subr.mxu0 0.0
    %4475 = vmatpush1.msra.mxu0 0.0
    %4476 = vmatprep.subr.mxu0 0.0
    %4477 = vmatpush1.msra.mxu0 0.0
    %4478 = vmatprep.subr.mxu0 0.0
    %4479 = vmatpush1.msra.mxu0 0.0
    %4480 = vmatprep.subr.mxu0 0.0
    %4481 = vmatpush1.msra.mxu0 0.0
    %4482 = vmatprep.subr.mxu0 0.0
    %4483 = vmatpush1.msra.mxu0 0.0
    %4484 = vmatprep.subr.mxu0 0.0
    %4485 = vmatpush1.msra.mxu0 0.0
    %4486 = vmatprep.subr.mxu0 0.0
    %4487 = vmatpush1.msra.mxu0 0.0
    %4488 = vmatprep.subr.mxu0 0.0
    %4489 = vmatpush1.msra.mxu0 0.0
    %4490 = vmatprep.subr.mxu0 0.0
    %4491 = vmatpush1.msra.mxu0 0.0
    %4492 = vmatprep.subr.mxu0 0.0
    %4493 = vmatpush1.msra.mxu0 0.0
    %4494 = vmatprep.subr.mxu0 0.0
    %4495 = vmatpush1.msra.mxu0 0.0
    %4496 = vmatprep.subr.mxu0 0.0
    %4497 = vmatpush1.msra.mxu0 0.0
    %4498 = vmatprep.subr.mxu0 0.0
    %4499 = vmatpush1.msra.mxu0 0.0
    %4500 = vmatprep.subr.mxu0 0.0
    %4501 = vmatpush1.msra.mxu0 0.0
    %4502 = vmatprep.subr.mxu0 0.0
    %4503 = vmatpush1.msra.mxu0 0.0
    %4504 = vmatprep.subr.mxu0 0.0
    %4505 = vmatpush1.msra.mxu0 0.0
    %4506 = vmatprep.subr.mxu0 0.0
    %4507 = vmatpush1.msra.mxu0 0.0
    %4508 = vmatprep.subr.mxu0 0.0
    %4509 = vmatpush1.msra.mxu0 0.0
    %4510 = vmatprep.subr.mxu0 0.0
    %4511 = vmatpush1.msra.mxu0 0.0
    %4512 = vmatprep.subr.mxu0 0.0
    %4513 = vmatpush1.msra.mxu0 0.0
    %4514 = vmatprep.subr.mxu0 0.0
    %4515 = vmatpush1.msra.mxu0 0.0
    %4516 = vmatprep.subr.mxu0 0.0
    %4517 = vmatpush1.msra.mxu0 0.0
    %4518 = vmatprep.subr.mxu0 0.0
    %4519 = vmatpush1.msra.mxu0 0.0
    %4520 = vmatprep.subr.mxu0 0.0
    %4521 = vmatpush1.msra.mxu0 0.0
    %4522 = vmatprep.subr.mxu0 0.0
    %4523 = vmatpush1.msra.mxu0 0.0
    %4524 = vmatprep.subr.mxu0 0.0
    %4525 = vmatpush1.msra.mxu0 0.0
    %4526 = vmatprep.subr.mxu0 0.0
    %4527 = vmatpush1.msra.mxu0 0.0
    %4528 = vmatprep.subr.mxu0 0.0
    %4529 = vmatpush1.msra.mxu0 0.0
    %4530 = vmatprep.subr.mxu0 0.0
    %4531 = vmatpush1.msra.mxu0 0.0
    %4532 = vmatprep.subr.mxu0 0.0
    %4533 = vmatpush1.msra.mxu0 0.0
    %4534 = vmatprep.subr.mxu0 0.0
    %4535 = vmatpush1.msra.mxu0 0.0
    %4536 = vmatprep.mubr.f32.mxu0 0.0
    %4537 = vmatmul.mubr.f32.gmra.mrb[0].mxu0 %v4470
    %v4538 = vpop.f32.mrb[0].mxu0
    %v4539 = vadd.f32 0.0, %v4538
    %v4540 = vpop.f32.mrb[0].mxu0
    %4541 = vdwg.mxu0
    %4543 = vrot.lane.b32.xlu0 %v4539, 8
    %v4544 = vpop.permute.xlu0 %4543
    %4546 = vst.msk [vmem:[#allocation2] sm:$0xff] %vm743, %v4544
    %4547 = vrot.lane.b32.xlu0 %v4066, 112
    %v4548 = vpop.permute.xlu0 %4547
    %4549 = vrot.lane.b32.xlu0 %v4132, 112
    %v4550 = vpop.permute.xlu0 %4549
    %v4551 = vsel %vm401, %v4548, 0
    %v4553 = vsel %vm401, %v4550, 0
    %4555 = vmatprep.subr.mxu0 0.0
    %4556 = vmatpush1.xpose.msra.mxu0 %v4553
    %4557 = vmatprep.subr.mxu0 0.0
    %4558 = vmatpush1.xpose.msra.mxu0 0.0
    %4559 = vmatprep.subr.mxu0 0.0
    %4560 = vmatpush1.xpose.msra.mxu0 0.0
    %4561 = vmatprep.subr.mxu0 0.0
    %4562 = vmatpush1.xpose.msra.mxu0 0.0
    %4563 = vmatprep.subr.mxu0 0.0
    %4564 = vmatpush1.xpose.msra.mxu0 0.0
    %4565 = vmatprep.subr.mxu0 0.0
    %4566 = vmatpush1.xpose.msra.mxu0 0.0
    %4567 = vmatprep.subr.mxu0 0.0
    %4568 = vmatpush1.xpose.msra.mxu0 0.0
    %4569 = vmatprep.subr.mxu0 0.0
    %4570 = vmatpush1.xpose.msra.mxu0 0.0
    %4571 = vmatprep.subr.mxu0 0.0
    %4572 = vmatpush1.xpose.msra.mxu0 0.0
    %4573 = vmatprep.subr.mxu0 0.0
    %4574 = vmatpush1.xpose.msra.mxu0 0.0
    %4575 = vmatprep.subr.mxu0 0.0
    %4576 = vmatpush1.xpose.msra.mxu0 0.0
    %4577 = vmatprep.subr.mxu0 0.0
    %4578 = vmatpush1.xpose.msra.mxu0 0.0
    %4579 = vmatprep.subr.mxu0 0.0
    %4580 = vmatpush1.xpose.msra.mxu0 0.0
    %4581 = vmatprep.subr.mxu0 0.0
    %4582 = vmatpush1.xpose.msra.mxu0 0.0
    %4583 = vmatprep.subr.mxu0 0.0
    %4584 = vmatpush1.xpose.msra.mxu0 0.0
    %4585 = vmatprep.subr.mxu0 0.0
    %4586 = vmatpush1.xpose.msra.mxu0 0.0
    %4587 = vmatprep.subr.mxu0 0.0
    %4588 = vmatpush1.xpose.msra.mxu0 0.0
    %4589 = vmatprep.subr.mxu0 0.0
    %4590 = vmatpush1.xpose.msra.mxu0 0.0
    %4591 = vmatprep.subr.mxu0 0.0
    %4592 = vmatpush1.xpose.msra.mxu0 0.0
    %4593 = vmatprep.subr.mxu0 0.0
    %4594 = vmatpush1.xpose.msra.mxu0 0.0
    %4595 = vmatprep.subr.mxu0 0.0
    %4596 = vmatpush1.xpose.msra.mxu0 0.0
    %4597 = vmatprep.subr.mxu0 0.0
    %4598 = vmatpush1.xpose.msra.mxu0 0.0
    %4599 = vmatprep.subr.mxu0 0.0
    %4600 = vmatpush1.xpose.msra.mxu0 0.0
    %4601 = vmatprep.subr.mxu0 0.0
    %4602 = vmatpush1.xpose.msra.mxu0 0.0
    %4603 = vmatprep.subr.mxu0 0.0
    %4604 = vmatpush1.xpose.msra.mxu0 0.0
    %4605 = vmatprep.subr.mxu0 0.0
    %4606 = vmatpush1.xpose.msra.mxu0 0.0
    %4607 = vmatprep.subr.mxu0 0.0
    %4608 = vmatpush1.xpose.msra.mxu0 0.0
    %4609 = vmatprep.subr.mxu0 0.0
    %4610 = vmatpush1.xpose.msra.mxu0 0.0
    %4611 = vmatprep.subr.mxu0 0.0
    %4612 = vmatpush1.xpose.msra.mxu0 0.0
    %4613 = vmatprep.subr.mxu0 0.0
    %4614 = vmatpush1.xpose.msra.mxu0 0.0
    %4615 = vmatprep.subr.mxu0 0.0
    %4616 = vmatpush1.xpose.msra.mxu0 0.0
    %4617 = vmatprep.subr.mxu0 0.0
    %4618 = vmatpush1.xpose.msra.mxu0 0.0
    %4619 = vmatprep.mubr.f32.mxu0 0.0
    %4620 = vmatmul.mubr.f32.gmra.mrb[0].mxu0 %v4551
    %v4621 = vpop.f32.mrb[0].mxu0
    %v4622 = vadd.f32 0.0, %v4621
    %v4623 = vpop.f32.mrb[0].mxu0
    %4624 = vdwg.mxu0
    %v4625 = vmul.f32 %v4622, 0.35355338
    %v4626 = vadd.f32 %v4625, %v4286
    %v4627 = vsel %vm401, %v4626, -inf
    %4628 = vmax.xlane.f32.xlu0 %v4627
    %v4629 = vpop.xlane.xlu0 %4628
    %v4630 = vsub.f32 %v4626, %v4629
    %v4631 = vmul.f32 %v4630, 1.442695
    %v4632 = vpow.pop %v4631
    %v4633 = vsel %vm401, %v4632, 0.0
    %4634 = vadd.xlane.f32.xlu0 %v4633
    %v4635 = vpop.xlane.xlu0 %4634
    %v4636 = vrcp.pop %v4635
    %v4637 = vmul.f32 %v4632, %v4636
    %4638 = vrot.lane.b32.xlu0 %v4198, 112
    %v4639 = vpop.permute.xlu0 %4638
    %v4642 = vsel %vm401, %v4637, 0
    %4644 = vmatprep.subr.mxu0 0.0
    %4645 = vmatpush1.msra.mxu0 %v4639
    %4646 = vmatprep.subr.mxu0 0.0
    %4647 = vmatpush1.msra.mxu0 0.0
    %4648 = vmatprep.subr.mxu0 0.0
    %4649 = vmatpush1.msra.mxu0 0.0
    %4650 = vmatprep.subr.mxu0 0.0
    %4651 = vmatpush1.msra.mxu0 0.0
    %4652 = vmatprep.subr.mxu0 0.0
    %4653 = vmatpush1.msra.mxu0 0.0
    %4654 = vmatprep.subr.mxu0 0.0
    %4655 = vmatpush1.msra.mxu0 0.0
    %4656 = vmatprep.subr.mxu0 0.0
    %4657 = vmatpush1.msra.mxu0 0.0
    %4658 = vmatprep.subr.mxu0 0.0
    %4659 = vmatpush1.msra.mxu0 0.0
    %4660 = vmatprep.subr.mxu0 0.0
    %4661 = vmatpush1.msra.mxu0 0.0
    %4662 = vmatprep.subr.mxu0 0.0
    %4663 = vmatpush1.msra.mxu0 0.0
    %4664 = vmatprep.subr.mxu0 0.0
    %4665 = vmatpush1.msra.mxu0 0.0
    %4666 = vmatprep.subr.mxu0 0.0
    %4667 = vmatpush1.msra.mxu0 0.0
    %4668 = vmatprep.subr.mxu0 0.0
    %4669 = vmatpush1.msra.mxu0 0.0
    %4670 = vmatprep.subr.mxu0 0.0
    %4671 = vmatpush1.msra.mxu0 0.0
    %4672 = vmatprep.subr.mxu0 0.0
    %4673 = vmatpush1.msra.mxu0 0.0
    %4674 = vmatprep.subr.mxu0 0.0
    %4675 = vmatpush1.msra.mxu0 0.0
    %4676 = vmatprep.subr.mxu0 0.0
    %4677 = vmatpush1.msra.mxu0 0.0
    %4678 = vmatprep.subr.mxu0 0.0
    %4679 = vmatpush1.msra.mxu0 0.0
    %4680 = vmatprep.subr.mxu0 0.0
    %4681 = vmatpush1.msra.mxu0 0.0
    %4682 = vmatprep.subr.mxu0 0.0
    %4683 = vmatpush1.msra.mxu0 0.0
    %4684 = vmatprep.subr.mxu0 0.0
    %4685 = vmatpush1.msra.mxu0 0.0
    %4686 = vmatprep.subr.mxu0 0.0
    %4687 = vmatpush1.msra.mxu0 0.0
    %4688 = vmatprep.subr.mxu0 0.0
    %4689 = vmatpush1.msra.mxu0 0.0
    %4690 = vmatprep.subr.mxu0 0.0
    %4691 = vmatpush1.msra.mxu0 0.0
    %4692 = vmatprep.subr.mxu0 0.0
    %4693 = vmatpush1.msra.mxu0 0.0
    %4694 = vmatprep.subr.mxu0 0.0
    %4695 = vmatpush1.msra.mxu0 0.0
    %4696 = vmatprep.subr.mxu0 0.0
    %4697 = vmatpush1.msra.mxu0 0.0
    %4698 = vmatprep.subr.mxu0 0.0
    %4699 = vmatpush1.msra.mxu0 0.0
    %4700 = vmatprep.subr.mxu0 0.0
    %4701 = vmatpush1.msra.mxu0 0.0
    %4702 = vmatprep.subr.mxu0 0.0
    %4703 = vmatpush1.msra.mxu0 0.0
    %4704 = vmatprep.subr.mxu0 0.0
    %4705 = vmatpush1.msra.mxu0 0.0
    %4706 = vmatprep.subr.mxu0 0.0
    %4707 = vmatpush1.msra.mxu0 0.0
    %4708 = vmatprep.mubr.f32.mxu0 0.0
    %4709 = vmatmul.mubr.f32.gmra.mrb[0].mxu0 %v4642
    %v4710 = vpop.f32.mrb[0].mxu0
    %v4711 = vadd.f32 0.0, %v4710
    %v4712 = vpop.f32.mrb[0].mxu0
    %4713 = vdwg.mxu0
    %4715 = vrot.lane.b32.xlu0 %v4711, 16
    %v4716 = vpop.permute.xlu0 %4715
    %4718 = vst.msk [vmem:[#allocation2] sm:$0xff] %vm916, %v4716
    %4719 = vrot.lane.b32.xlu0 %v4066, 104
    %v4720 = vpop.permute.xlu0 %4719
    %4721 = vrot.lane.b32.xlu0 %v4132, 104
    %v4722 = vpop.permute.xlu0 %4721
    %v4723 = vsel %vm401, %v4720, 0
    %v4725 = vsel %vm401, %v4722, 0
    %4727 = vmatprep.subr.mxu0 0.0
    %4728 = vmatpush1.xpose.msra.mxu0 %v4725
    %4729 = vmatprep.subr.mxu0 0.0
    %4730 = vmatpush1.xpose.msra.mxu0 0.0
    %4731 = vmatprep.subr.mxu0 0.0
    %4732 = vmatpush1.xpose.msra.mxu0 0.0
    %4733 = vmatprep.subr.mxu0 0.0
    %4734 = vmatpush1.xpose.msra.mxu0 0.0
    %4735 = vmatprep.subr.mxu0 0.0
    %4736 = vmatpush1.xpose.msra.mxu0 0.0
    %4737 = vmatprep.subr.mxu0 0.0
    %4738 = vmatpush1.xpose.msra.mxu0 0.0
    %4739 = vmatprep.subr.mxu0 0.0
    %4740 = vmatpush1.xpose.msra.mxu0 0.0
    %4741 = vmatprep.subr.mxu0 0.0
    %4742 = vmatpush1.xpose.msra.mxu0 0.0
    %4743 = vmatprep.subr.mxu0 0.0
    %4744 = vmatpush1.xpose.msra.mxu0 0.0
    %4745 = vmatprep.subr.mxu0 0.0
    %4746 = vmatpush1.xpose.msra.mxu0 0.0
    %4747 = vmatprep.subr.mxu0 0.0
    %4748 = vmatpush1.xpose.msra.mxu0 0.0
    %4749 = vmatprep.subr.mxu0 0.0
    %4750 = vmatpush1.xpose.msra.mxu0 0.0
    %4751 = vmatprep.subr.mxu0 0.0
    %4752 = vmatpush1.xpose.msra.mxu0 0.0
    %4753 = vmatprep.subr.mxu0 0.0
    %4754 = vmatpush1.xpose.msra.mxu0 0.0
    %4755 = vmatprep.subr.mxu0 0.0
    %4756 = vmatpush1.xpose.msra.mxu0 0.0
    %4757 = vmatprep.subr.mxu0 0.0
    %4758 = vmatpush1.xpose.msra.mxu0 0.0
    %4759 = vmatprep.subr.mxu0 0.0
    %4760 = vmatpush1.xpose.msra.mxu0 0.0
    %4761 = vmatprep.subr.mxu0 0.0
    %4762 = vmatpush1.xpose.msra.mxu0 0.0
    %4763 = vmatprep.subr.mxu0 0.0
    %4764 = vmatpush1.xpose.msra.mxu0 0.0
    %4765 = vmatprep.subr.mxu0 0.0
    %4766 = vmatpush1.xpose.msra.mxu0 0.0
    %4767 = vmatprep.subr.mxu0 0.0
    %4768 = vmatpush1.xpose.msra.mxu0 0.0
    %4769 = vmatprep.subr.mxu0 0.0
    %4770 = vmatpush1.xpose.msra.mxu0 0.0
    %4771 = vmatprep.subr.mxu0 0.0
    %4772 = vmatpush1.xpose.msra.mxu0 0.0
    %4773 = vmatprep.subr.mxu0 0.0
    %4774 = vmatpush1.xpose.msra.mxu0 0.0
    %4775 = vmatprep.subr.mxu0 0.0
    %4776 = vmatpush1.xpose.msra.mxu0 0.0
    %4777 = vmatprep.subr.mxu0 0.0
    %4778 = vmatpush1.xpose.msra.mxu0 0.0
    %4779 = vmatprep.subr.mxu0 0.0
    %4780 = vmatpush1.xpose.msra.mxu0 0.0
    %4781 = vmatprep.subr.mxu0 0.0
    %4782 = vmatpush1.xpose.msra.mxu0 0.0
    %4783 = vmatprep.subr.mxu0 0.0
    %4784 = vmatpush1.xpose.msra.mxu0 0.0
    %4785 = vmatprep.subr.mxu0 0.0
    %4786 = vmatpush1.xpose.msra.mxu0 0.0
    %4787 = vmatprep.subr.mxu0 0.0
    %4788 = vmatpush1.xpose.msra.mxu0 0.0
    %4789 = vmatprep.subr.mxu0 0.0
    %4790 = vmatpush1.xpose.msra.mxu0 0.0
    %4791 = vmatprep.mubr.f32.mxu0 0.0
    %4792 = vmatmul.mubr.f32.gmra.mrb[0].mxu0 %v4723
    %v4793 = vpop.f32.mrb[0].mxu0
    %v4794 = vadd.f32 0.0, %v4793
    %v4795 = vpop.f32.mrb[0].mxu0
    %4796 = vdwg.mxu0
    %v4797 = vmul.f32 %v4794, 0.35355338
    %v4798 = vadd.f32 %v4797, %v4286
    %v4799 = vsel %vm401, %v4798, -inf
    %4800 = vmax.xlane.f32.xlu0 %v4799
    %v4801 = vpop.xlane.xlu0 %4800
    %v4802 = vsub.f32 %v4798, %v4801
    %v4803 = vmul.f32 %v4802, 1.442695
    %v4804 = vpow.pop %v4803
    %v4805 = vsel %vm401, %v4804, 0.0
    %4806 = vadd.xlane.f32.xlu0 %v4805
    %v4807 = vpop.xlane.xlu0 %4806
    %v4808 = vrcp.pop %v4807
    %v4809 = vmul.f32 %v4804, %v4808
    %4810 = vrot.lane.b32.xlu0 %v4198, 104
    %v4811 = vpop.permute.xlu0 %4810
    %v4814 = vsel %vm401, %v4809, 0
    %4816 = vmatprep.subr.mxu0 0.0
    %4817 = vmatpush1.msra.mxu0 %v4811
    %4818 = vmatprep.subr.mxu0 0.0
    %4819 = vmatpush1.msra.mxu0 0.0
    %4820 = vmatprep.subr.mxu0 0.0
    %4821 = vmatpush1.msra.mxu0 0.0
    %4822 = vmatprep.subr.mxu0 0.0
    %4823 = vmatpush1.msra.mxu0 0.0
    %4824 = vmatprep.subr.mxu0 0.0
    %4825 = vmatpush1.msra.mxu0 0.0
    %4826 = vmatprep.subr.mxu0 0.0
    %4827 = vmatpush1.msra.mxu0 0.0
    %4828 = vmatprep.subr.mxu0 0.0
    %4829 = vmatpush1.msra.mxu0 0.0
    %4830 = vmatprep.subr.mxu0 0.0
    %4831 = vmatpush1.msra.mxu0 0.0
    %4832 = vmatprep.subr.mxu0 0.0
    %4833 = vmatpush1.msra.mxu0 0.0
    %4834 = vmatprep.subr.mxu0 0.0
    %4835 = vmatpush1.msra.mxu0 0.0
    %4836 = vmatprep.subr.mxu0 0.0
    %4837 = vmatpush1.msra.mxu0 0.0
    %4838 = vmatprep.subr.mxu0 0.0
    %4839 = vmatpush1.msra.mxu0 0.0
    %4840 = vmatprep.subr.mxu0 0.0
    %4841 = vmatpush1.msra.mxu0 0.0
    %4842 = vmatprep.subr.mxu0 0.0
    %4843 = vmatpush1.msra.mxu0 0.0
    %4844 = vmatprep.subr.mxu0 0.0
    %4845 = vmatpush1.msra.mxu0 0.0
    %4846 = vmatprep.subr.mxu0 0.0
    %4847 = vmatpush1.msra.mxu0 0.0
    %4848 = vmatprep.subr.mxu0 0.0
    %4849 = vmatpush1.msra.mxu0 0.0
    %4850 = vmatprep.subr.mxu0 0.0
    %4851 = vmatpush1.msra.mxu0 0.0
    %4852 = vmatprep.subr.mxu0 0.0
    %4853 = vmatpush1.msra.mxu0 0.0
    %4854 = vmatprep.subr.mxu0 0.0
    %4855 = vmatpush1.msra.mxu0 0.0
    %4856 = vmatprep.subr.mxu0 0.0
    %4857 = vmatpush1.msra.mxu0 0.0
    %4858 = vmatprep.subr.mxu0 0.0
    %4859 = vmatpush1.msra.mxu0 0.0
    %4860 = vmatprep.subr.mxu0 0.0
    %4861 = vmatpush1.msra.mxu0 0.0
    %4862 = vmatprep.subr.mxu0 0.0
    %4863 = vmatpush1.msra.mxu0 0.0
    %4864 = vmatprep.subr.mxu0 0.0
    %4865 = vmatpush1.msra.mxu0 0.0
    %4866 = vmatprep.subr.mxu0 0.0
    %4867 = vmatpush1.msra.mxu0 0.0
    %4868 = vmatprep.subr.mxu0 0.0
    %4869 = vmatpush1.msra.mxu0 0.0
    %4870 = vmatprep.subr.mxu0 0.0
    %4871 = vmatpush1.msra.mxu0 0.0
    %4872 = vmatprep.subr.mxu0 0.0
    %4873 = vmatpush1.msra.mxu0 0.0
    %4874 = vmatprep.subr.mxu0 0.0
    %4875 = vmatpush1.msra.mxu0 0.0
    %4876 = vmatprep.subr.mxu0 0.0
    %4877 = vmatpush1.msra.mxu0 0.0
    %4878 = vmatprep.subr.mxu0 0.0
    %4879 = vmatpush1.msra.mxu0 0.0
    %4880 = vmatprep.mubr.f32.mxu0 0.0
    %4881 = vmatmul.mubr.f32.gmra.mrb[0].mxu0 %v4814
    %v4882 = vpop.f32.mrb[0].mxu0
    %v4883 = vadd.f32 0.0, %v4882
    %v4884 = vpop.f32.mrb[0].mxu0
    %4885 = vdwg.mxu0
    %4887 = vrot.lane.b32.xlu0 %v4883, 24
    %v4888 = vpop.permute.xlu0 %4887
    %4890 = vst.msk [vmem:[#allocation2] sm:$0xff] %vm1089, %v4888
    %v4891 = vld [vmem:[%s1091] sm:$0x1]
    %v4893 = vsel %vm401, %v4069, 0
    %v4896 = vsel %vm401, %v4135, 0
    %4898 = vmatprep.subr.mxu0 0.0
    %4899 = vmatpush1.xpose.msra.mxu0 %v4896
    %4900 = vmatprep.subr.mxu0 0.0
    %4901 = vmatpush1.xpose.msra.mxu0 0.0
    %4902 = vmatprep.subr.mxu0 0.0
    %4903 = vmatpush1.xpose.msra.mxu0 0.0
    %4904 = vmatprep.subr.mxu0 0.0
    %4905 = vmatpush1.xpose.msra.mxu0 0.0
    %4906 = vmatprep.subr.mxu0 0.0
    %4907 = vmatpush1.xpose.msra.mxu0 0.0
    %4908 = vmatprep.subr.mxu0 0.0
    %4909 = vmatpush1.xpose.msra.mxu0 0.0
    %4910 = vmatprep.subr.mxu0 0.0
    %4911 = vmatpush1.xpose.msra.mxu0 0.0
    %4912 = vmatprep.subr.mxu0 0.0
    %4913 = vmatpush1.xpose.msra.mxu0 0.0
    %4914 = vmatprep.subr.mxu0 0.0
    %4915 = vmatpush1.xpose.msra.mxu0 0.0
    %4916 = vmatprep.subr.mxu0 0.0
    %4917 = vmatpush1.xpose.msra.mxu0 0.0
    %4918 = vmatprep.subr.mxu0 0.0
    %4919 = vmatpush1.xpose.msra.mxu0 0.0
    %4920 = vmatprep.subr.mxu0 0.0
    %4921 = vmatpush1.xpose.msra.mxu0 0.0
    %4922 = vmatprep.subr.mxu0 0.0
    %4923 = vmatpush1.xpose.msra.mxu0 0.0
    %4924 = vmatprep.subr.mxu0 0.0
    %4925 = vmatpush1.xpose.msra.mxu0 0.0
    %4926 = vmatprep.subr.mxu0 0.0
    %4927 = vmatpush1.xpose.msra.mxu0 0.0
    %4928 = vmatprep.subr.mxu0 0.0
    %4929 = vmatpush1.xpose.msra.mxu0 0.0
    %4930 = vmatprep.subr.mxu0 0.0
    %4931 = vmatpush1.xpose.msra.mxu0 0.0
    %4932 = vmatprep.subr.mxu0 0.0
    %4933 = vmatpush1.xpose.msra.mxu0 0.0
    %4934 = vmatprep.subr.mxu0 0.0
    %4935 = vmatpush1.xpose.msra.mxu0 0.0
    %4936 = vmatprep.subr.mxu0 0.0
    %4937 = vmatpush1.xpose.msra.mxu0 0.0
    %4938 = vmatprep.subr.mxu0 0.0
    %4939 = vmatpush1.xpose.msra.mxu0 0.0
    %4940 = vmatprep.subr.mxu0 0.0
    %4941 = vmatpush1.xpose.msra.mxu0 0.0
    %4942 = vmatprep.subr.mxu0 0.0
    %4943 = vmatpush1.xpose.msra.mxu0 0.0
    %4944 = vmatprep.subr.mxu0 0.0
    %4945 = vmatpush1.xpose.msra.mxu0 0.0
    %4946 = vmatprep.subr.mxu0 0.0
    %4947 = vmatpush1.xpose.msra.mxu0 0.0
    %4948 = vmatprep.subr.mxu0 0.0
    %4949 = vmatpush1.xpose.msra.mxu0 0.0
    %4950 = vmatprep.subr.mxu0 0.0
    %4951 = vmatpush1.xpose.msra.mxu0 0.0
    %4952 = vmatprep.subr.mxu0 0.0
    %4953 = vmatpush1.xpose.msra.mxu0 0.0
    %4954 = vmatprep.subr.mxu0 0.0
    %4955 = vmatpush1.xpose.msra.mxu0 0.0
    %4956 = vmatprep.subr.mxu0 0.0
    %4957 = vmatpush1.xpose.msra.mxu0 0.0
    %4958 = vmatprep.subr.mxu0 0.0
    %4959 = vmatpush1.xpose.msra.mxu0 0.0
    %4960 = vmatprep.subr.mxu0 0.0
    %4961 = vmatpush1.xpose.msra.mxu0 0.0
    %4962 = vmatprep.mubr.f32.mxu0 0.0
    %4963 = vmatmul.mubr.f32.gmra.mrb[0].mxu0 %v4893
    %v4964 = vpop.f32.mrb[0].mxu0
    %v4965 = vadd.f32 0.0, %v4964
    %v4966 = vpop.f32.mrb[0].mxu0
    %4967 = vdwg.mxu0
    %v4968 = vmul.f32 %v4965, 0.35355338
    %v4970 = vlaneseq
    %v4971 = vshrl.u32 %v4970, 7
    %v4972 = vsub.s32 0, %v4971
    %v4973 = vrot.slane %v4891, %v4972
    %v4975 = vadd.f32 %v4968, %v4973
    %v4976 = vsel %vm401, %v4975, -inf
    %4977 = vmax.xlane.f32.xlu0 %v4976
    %v4978 = vpop.xlane.xlu0 %4977
    %v4979 = vsub.f32 %v4975, %v4978
    %v4980 = vmul.f32 %v4979, 1.442695
    %v4981 = vpow.pop %v4980
    %v4982 = vsel %vm401, %v4981, 0.0
    %4983 = vadd.xlane.f32.xlu0 %v4982
    %v4984 = vpop.xlane.xlu0 %4983
    %v4985 = vrcp.pop %v4984
    %v4986 = vmul.f32 %v4981, %v4985
    %v4988 = vsel %vm401, %v4986, 0
    %4990 = vmatprep.subr.mxu0 0.0
    %4991 = vmatpush1.msra.mxu0 %v4201
    %4992 = vmatprep.subr.mxu0 0.0
    %4993 = vmatpush1.msra.mxu0 0.0
    %4994 = vmatprep.subr.mxu0 0.0
    %4995 = vmatpush1.msra.mxu0 0.0
    %4996 = vmatprep.subr.mxu0 0.0
    %4997 = vmatpush1.msra.mxu0 0.0
    %4998 = vmatprep.subr.mxu0 0.0
    %4999 = vmatpush1.msra.mxu0 0.0
    %5000 = vmatprep.subr.mxu0 0.0
    %5001 = vmatpush1.msra.mxu0 0.0
    %5002 = vmatprep.subr.mxu0 0.0
    %5003 = vmatpush1.msra.mxu0 0.0
    %5004 = vmatprep.subr.mxu0 0.0
    %5005 = vmatpush1.msra.mxu0 0.0
    %5006 = vmatprep.subr.mxu0 0.0
    %5007 = vmatpush1.msra.mxu0 0.0
    %5008 = vmatprep.subr.mxu0 0.0
    %5009 = vmatpush1.msra.mxu0 0.0
    %5010 = vmatprep.subr.mxu0 0.0
    %5011 = vmatpush1.msra.mxu0 0.0
    %5012 = vmatprep.subr.mxu0 0.0
    %5013 = vmatpush1.msra.mxu0 0.0
    %5014 = vmatprep.subr.mxu0 0.0
    %5015 = vmatpush1.msra.mxu0 0.0
    %5016 = vmatprep.subr.mxu0 0.0
    %5017 = vmatpush1.msra.mxu0 0.0
    %5018 = vmatprep.subr.mxu0 0.0
    %5019 = vmatpush1.msra.mxu0 0.0
    %5020 = vmatprep.subr.mxu0 0.0
    %5021 = vmatpush1.msra.mxu0 0.0
    %5022 = vmatprep.subr.mxu0 0.0
    %5023 = vmatpush1.msra.mxu0 0.0
    %5024 = vmatprep.subr.mxu0 0.0
    %5025 = vmatpush1.msra.mxu0 0.0
    %5026 = vmatprep.subr.mxu0 0.0
    %5027 = vmatpush1.msra.mxu0 0.0
    %5028 = vmatprep.subr.mxu0 0.0
    %5029 = vmatpush1.msra.mxu0 0.0
    %5030 = vmatprep.subr.mxu0 0.0
    %5031 = vmatpush1.msra.mxu0 0.0
    %5032 = vmatprep.subr.mxu0 0.0
    %5033 = vmatpush1.msra.mxu0 0.0
    %5034 = vmatprep.subr.mxu0 0.0
    %5035 = vmatpush1.msra.mxu0 0.0
    %5036 = vmatprep.subr.mxu0 0.0
    %5037 = vmatpush1.msra.mxu0 0.0
    %5038 = vmatprep.subr.mxu0 0.0
    %5039 = vmatpush1.msra.mxu0 0.0
    %5040 = vmatprep.subr.mxu0 0.0
    %5041 = vmatpush1.msra.mxu0 0.0
    %5042 = vmatprep.subr.mxu0 0.0
    %5043 = vmatpush1.msra.mxu0 0.0
    %5044 = vmatprep.subr.mxu0 0.0
    %5045 = vmatpush1.msra.mxu0 0.0
    %5046 = vmatprep.subr.mxu0 0.0
    %5047 = vmatpush1.msra.mxu0 0.0
    %5048 = vmatprep.subr.mxu0 0.0
    %5049 = vmatpush1.msra.mxu0 0.0
    %5050 = vmatprep.subr.mxu0 0.0
    %5051 = vmatpush1.msra.mxu0 0.0
    %5052 = vmatprep.subr.mxu0 0.0
    %5053 = vmatpush1.msra.mxu0 0.0
    %5054 = vmatprep.mubr.f32.mxu0 0.0
    %5055 = vmatmul.mubr.f32.gmra.mrb[0].mxu0 %v4988
    %v5056 = vpop.f32.mrb[0].mxu0
    %v5057 = vadd.f32 0.0, %v5056
    %v5058 = vpop.f32.mrb[0].mxu0
    %5059 = vdwg.mxu0
    %5060 = vst.msk [vmem:[#allocation2 + $0x8] sm:$0xff] %vm401, %v5057
    %5061 = vrot.lane.b32.xlu0 %v4069, 120
    %v5062 = vpop.permute.xlu0 %5061
    %5063 = vrot.lane.b32.xlu0 %v4135, 120
    %v5064 = vpop.permute.xlu0 %5063
    %v5065 = vsel %vm401, %v5062, 0
    %v5067 = vsel %vm401, %v5064, 0
    %5069 = vmatprep.subr.mxu0 0.0
    %5070 = vmatpush1.xpose.msra.mxu0 %v5067
    %5071 = vmatprep.subr.mxu0 0.0
    %5072 = vmatpush1.xpose.msra.mxu0 0.0
    %5073 = vmatprep.subr.mxu0 0.0
    %5074 = vmatpush1.xpose.msra.mxu0 0.0
    %5075 = vmatprep.subr.mxu0 0.0
    %5076 = vmatpush1.xpose.msra.mxu0 0.0
    %5077 = vmatprep.subr.mxu0 0.0
    %5078 = vmatpush1.xpose.msra.mxu0 0.0
    %5079 = vmatprep.subr.mxu0 0.0
    %5080 = vmatpush1.xpose.msra.mxu0 0.0
    %5081 = vmatprep.subr.mxu0 0.0
    %5082 = vmatpush1.xpose.msra.mxu0 0.0
    %5083 = vmatprep.subr.mxu0 0.0
    %5084 = vmatpush1.xpose.msra.mxu0 0.0
    %5085 = vmatprep.subr.mxu0 0.0
    %5086 = vmatpush1.xpose.msra.mxu0 0.0
    %5087 = vmatprep.subr.mxu0 0.0
    %5088 = vmatpush1.xpose.msra.mxu0 0.0
    %5089 = vmatprep.subr.mxu0 0.0
    %5090 = vmatpush1.xpose.msra.mxu0 0.0
    %5091 = vmatprep.subr.mxu0 0.0
    %5092 = vmatpush1.xpose.msra.mxu0 0.0
    %5093 = vmatprep.subr.mxu0 0.0
    %5094 = vmatpush1.xpose.msra.mxu0 0.0
    %5095 = vmatprep.subr.mxu0 0.0
    %5096 = vmatpush1.xpose.msra.mxu0 0.0
    %5097 = vmatprep.subr.mxu0 0.0
    %5098 = vmatpush1.xpose.msra.mxu0 0.0
    %5099 = vmatprep.subr.mxu0 0.0
    %5100 = vmatpush1.xpose.msra.mxu0 0.0
    %5101 = vmatprep.subr.mxu0 0.0
    %5102 = vmatpush1.xpose.msra.mxu0 0.0
    %5103 = vmatprep.subr.mxu0 0.0
    %5104 = vmatpush1.xpose.msra.mxu0 0.0
    %5105 = vmatprep.subr.mxu0 0.0
    %5106 = vmatpush1.xpose.msra.mxu0 0.0
    %5107 = vmatprep.subr.mxu0 0.0
    %5108 = vmatpush1.xpose.msra.mxu0 0.0
    %5109 = vmatprep.subr.mxu0 0.0
    %5110 = vmatpush1.xpose.msra.mxu0 0.0
    %5111 = vmatprep.subr.mxu0 0.0
    %5112 = vmatpush1.xpose.msra.mxu0 0.0
    %5113 = vmatprep.subr.mxu0 0.0
    %5114 = vmatpush1.xpose.msra.mxu0 0.0
    %5115 = vmatprep.subr.mxu0 0.0
    %5116 = vmatpush1.xpose.msra.mxu0 0.0
    %5117 = vmatprep.subr.mxu0 0.0
    %5118 = vmatpush1.xpose.msra.mxu0 0.0
    %5119 = vmatprep.subr.mxu0 0.0
    %5120 = vmatpush1.xpose.msra.mxu0 0.0
    %5121 = vmatprep.subr.mxu0 0.0
    %5122 = vmatpush1.xpose.msra.mxu0 0.0
    %5123 = vmatprep.subr.mxu0 0.0
    %5124 = vmatpush1.xpose.msra.mxu0 0.0
    %5125 = vmatprep.subr.mxu0 0.0
    %5126 = vmatpush1.xpose.msra.mxu0 0.0
    %5127 = vmatprep.subr.mxu0 0.0
    %5128 = vmatpush1.xpose.msra.mxu0 0.0
    %5129 = vmatprep.subr.mxu0 0.0
    %5130 = vmatpush1.xpose.msra.mxu0 0.0
    %5131 = vmatprep.subr.mxu0 0.0
    %5132 = vmatpush1.xpose.msra.mxu0 0.0
    %5133 = vmatprep.mubr.f32.mxu0 0.0
    %5134 = vmatmul.mubr.f32.gmra.mrb[0].mxu0 %v5065
    %v5135 = vpop.f32.mrb[0].mxu0
    %v5136 = vadd.f32 0.0, %v5135
    %v5137 = vpop.f32.mrb[0].mxu0
    %5138 = vdwg.mxu0
    %v5139 = vmul.f32 %v5136, 0.35355338
    %v5140 = vadd.f32 %v5139, %v4973
    %v5141 = vsel %vm401, %v5140, -inf
    %5142 = vmax.xlane.f32.xlu0 %v5141
    %v5143 = vpop.xlane.xlu0 %5142
    %v5144 = vsub.f32 %v5140, %v5143
    %v5145 = vmul.f32 %v5144, 1.442695
    %v5146 = vpow.pop %v5145
    %v5147 = vsel %vm401, %v5146, 0.0
    %5148 = vadd.xlane.f32.xlu0 %v5147
    %v5149 = vpop.xlane.xlu0 %5148
    %v5150 = vrcp.pop %v5149
    %v5151 = vmul.f32 %v5146, %v5150
    %5153 = vrot.lane.b32.xlu0 %v4201, 120
    %v5154 = vpop.permute.xlu0 %5153
    %v5157 = vsel %vm401, %v5151, 0
    %5159 = vmatprep.subr.mxu0 0.0
    %5160 = vmatpush1.msra.mxu0 %v5154
    %5161 = vmatprep.subr.mxu0 0.0
    %5162 = vmatpush1.msra.mxu0 0.0
    %5163 = vmatprep.subr.mxu0 0.0
    %5164 = vmatpush1.msra.mxu0 0.0
    %5165 = vmatprep.subr.mxu0 0.0
    %5166 = vmatpush1.msra.mxu0 0.0
    %5167 = vmatprep.subr.mxu0 0.0
    %5168 = vmatpush1.msra.mxu0 0.0
    %5169 = vmatprep.subr.mxu0 0.0
    %5170 = vmatpush1.msra.mxu0 0.0
    %5171 = vmatprep.subr.mxu0 0.0
    %5172 = vmatpush1.msra.mxu0 0.0
    %5173 = vmatprep.subr.mxu0 0.0
    %5174 = vmatpush1.msra.mxu0 0.0
    %5175 = vmatprep.subr.mxu0 0.0
    %5176 = vmatpush1.msra.mxu0 0.0
    %5177 = vmatprep.subr.mxu0 0.0
    %5178 = vmatpush1.msra.mxu0 0.0
    %5179 = vmatprep.subr.mxu0 0.0
    %5180 = vmatpush1.msra.mxu0 0.0
    %5181 = vmatprep.subr.mxu0 0.0
    %5182 = vmatpush1.msra.mxu0 0.0
    %5183 = vmatprep.subr.mxu0 0.0
    %5184 = vmatpush1.msra.mxu0 0.0
    %5185 = vmatprep.subr.mxu0 0.0
    %5186 = vmatpush1.msra.mxu0 0.0
    %5187 = vmatprep.subr.mxu0 0.0
    %5188 = vmatpush1.msra.mxu0 0.0
    %5189 = vmatprep.subr.mxu0 0.0
    %5190 = vmatpush1.msra.mxu0 0.0
    %5191 = vmatprep.subr.mxu0 0.0
    %5192 = vmatpush1.msra.mxu0 0.0
    %5193 = vmatprep.subr.mxu0 0.0
    %5194 = vmatpush1.msra.mxu0 0.0
    %5195 = vmatprep.subr.mxu0 0.0
    %5196 = vmatpush1.msra.mxu0 0.0
    %5197 = vmatprep.subr.mxu0 0.0
    %5198 = vmatpush1.msra.mxu0 0.0
    %5199 = vmatprep.subr.mxu0 0.0
    %5200 = vmatpush1.msra.mxu0 0.0
    %5201 = vmatprep.subr.mxu0 0.0
    %5202 = vmatpush1.msra.mxu0 0.0
    %5203 = vmatprep.subr.mxu0 0.0
    %5204 = vmatpush1.msra.mxu0 0.0
    %5205 = vmatprep.subr.mxu0 0.0
    %5206 = vmatpush1.msra.mxu0 0.0
    %5207 = vmatprep.subr.mxu0 0.0
    %5208 = vmatpush1.msra.mxu0 0.0
    %5209 = vmatprep.subr.mxu0 0.0
    %5210 = vmatpush1.msra.mxu0 0.0
    %5211 = vmatprep.subr.mxu0 0.0
    %5212 = vmatpush1.msra.mxu0 0.0
    %5213 = vmatprep.subr.mxu0 0.0
    %5214 = vmatpush1.msra.mxu0 0.0
    %5215 = vmatprep.subr.mxu0 0.0
    %5216 = vmatpush1.msra.mxu0 0.0
    %5217 = vmatprep.subr.mxu0 0.0
    %5218 = vmatpush1.msra.mxu0 0.0
    %5219 = vmatprep.subr.mxu0 0.0
    %5220 = vmatpush1.msra.mxu0 0.0
    %5221 = vmatprep.subr.mxu0 0.0
    %5222 = vmatpush1.msra.mxu0 0.0
    %5223 = vmatprep.mubr.f32.mxu0 0.0
    %5224 = vmatmul.mubr.f32.gmra.mrb[0].mxu0 %v5157
    %v5225 = vpop.f32.mrb[0].mxu0
    %v5226 = vadd.f32 0.0, %v5225
    %v5227 = vpop.f32.mrb[0].mxu0
    %5228 = vdwg.mxu0
    %5230 = vrot.lane.b32.xlu0 %v5226, 8
    %v5231 = vpop.permute.xlu0 %5230
    %5233 = vst.msk [vmem:[#allocation2 + $0x8] sm:$0xff] %vm743, %v5231
    %5234 = vrot.lane.b32.xlu0 %v4069, 112
    %v5235 = vpop.permute.xlu0 %5234
    %5236 = vrot.lane.b32.xlu0 %v4135, 112
    %v5237 = vpop.permute.xlu0 %5236
    %v5238 = vsel %vm401, %v5235, 0
    %v5240 = vsel %vm401, %v5237, 0
    %5242 = vmatprep.subr.mxu0 0.0
    %5243 = vmatpush1.xpose.msra.mxu0 %v5240
    %5244 = vmatprep.subr.mxu0 0.0
    %5245 = vmatpush1.xpose.msra.mxu0 0.0
    %5246 = vmatprep.subr.mxu0 0.0
    %5247 = vmatpush1.xpose.msra.mxu0 0.0
    %5248 = vmatprep.subr.mxu0 0.0
    %5249 = vmatpush1.xpose.msra.mxu0 0.0
    %5250 = vmatprep.subr.mxu0 0.0
    %5251 = vmatpush1.xpose.msra.mxu0 0.0
    %5252 = vmatprep.subr.mxu0 0.0
    %5253 = vmatpush1.xpose.msra.mxu0 0.0
    %5254 = vmatprep.subr.mxu0 0.0
    %5255 = vmatpush1.xpose.msra.mxu0 0.0
    %5256 = vmatprep.subr.mxu0 0.0
    %5257 = vmatpush1.xpose.msra.mxu0 0.0
    %5258 = vmatprep.subr.mxu0 0.0
    %5259 = vmatpush1.xpose.msra.mxu0 0.0
    %5260 = vmatprep.subr.mxu0 0.0
    %5261 = vmatpush1.xpose.msra.mxu0 0.0
    %5262 = vmatprep.subr.mxu0 0.0
    %5263 = vmatpush1.xpose.msra.mxu0 0.0
    %5264 = vmatprep.subr.mxu0 0.0
    %5265 = vmatpush1.xpose.msra.mxu0 0.0
    %5266 = vmatprep.subr.mxu0 0.0
    %5267 = vmatpush1.xpose.msra.mxu0 0.0
    %5268 = vmatprep.subr.mxu0 0.0
    %5269 = vmatpush1.xpose.msra.mxu0 0.0
    %5270 = vmatprep.subr.mxu0 0.0
    %5271 = vmatpush1.xpose.msra.mxu0 0.0
    %5272 = vmatprep.subr.mxu0 0.0
    %5273 = vmatpush1.xpose.msra.mxu0 0.0
    %5274 = vmatprep.subr.mxu0 0.0
    %5275 = vmatpush1.xpose.msra.mxu0 0.0
    %5276 = vmatprep.subr.mxu0 0.0
    %5277 = vmatpush1.xpose.msra.mxu0 0.0
    %5278 = vmatprep.subr.mxu0 0.0
    %5279 = vmatpush1.xpose.msra.mxu0 0.0
    %5280 = vmatprep.subr.mxu0 0.0
    %5281 = vmatpush1.xpose.msra.mxu0 0.0
    %5282 = vmatprep.subr.mxu0 0.0
    %5283 = vmatpush1.xpose.msra.mxu0 0.0
    %5284 = vmatprep.subr.mxu0 0.0
    %5285 = vmatpush1.xpose.msra.mxu0 0.0
    %5286 = vmatprep.subr.mxu0 0.0
    %5287 = vmatpush1.xpose.msra.mxu0 0.0
    %5288 = vmatprep.subr.mxu0 0.0
    %5289 = vmatpush1.xpose.msra.mxu0 0.0
    %5290 = vmatprep.subr.mxu0 0.0
    %5291 = vmatpush1.xpose.msra.mxu0 0.0
    %5292 = vmatprep.subr.mxu0 0.0
    %5293 = vmatpush1.xpose.msra.mxu0 0.0
    %5294 = vmatprep.subr.mxu0 0.0
    %5295 = vmatpush1.xpose.msra.mxu0 0.0
    %5296 = vmatprep.subr.mxu0 0.0
    %5297 = vmatpush1.xpose.msra.mxu0 0.0
    %5298 = vmatprep.subr.mxu0 0.0
    %5299 = vmatpush1.xpose.msra.mxu0 0.0
    %5300 = vmatprep.subr.mxu0 0.0
    %5301 = vmatpush1.xpose.msra.mxu0 0.0
    %5302 = vmatprep.subr.mxu0 0.0
    %5303 = vmatpush1.xpose.msra.mxu0 0.0
    %5304 = vmatprep.subr.mxu0 0.0
    %5305 = vmatpush1.xpose.msra.mxu0 0.0
    %5306 = vmatprep.mubr.f32.mxu0 0.0
    %5307 = vmatmul.mubr.f32.gmra.mrb[0].mxu0 %v5238
    %v5308 = vpop.f32.mrb[0].mxu0
    %v5309 = vadd.f32 0.0, %v5308
    %v5310 = vpop.f32.mrb[0].mxu0
    %5311 = vdwg.mxu0
    %v5312 = vmul.f32 %v5309, 0.35355338
    %v5313 = vadd.f32 %v5312, %v4973
    %v5314 = vsel %vm401, %v5313, -inf
    %5315 = vmax.xlane.f32.xlu0 %v5314
    %v5316 = vpop.xlane.xlu0 %5315
    %v5317 = vsub.f32 %v5313, %v5316
    %v5318 = vmul.f32 %v5317, 1.442695
    %v5319 = vpow.pop %v5318
    %v5320 = vsel %vm401, %v5319, 0.0
    %5321 = vadd.xlane.f32.xlu0 %v5320
    %v5322 = vpop.xlane.xlu0 %5321
    %v5323 = vrcp.pop %v5322
    %v5324 = vmul.f32 %v5319, %v5323
    %5325 = vrot.lane.b32.xlu0 %v4201, 112
    %v5326 = vpop.permute.xlu0 %5325
    %v5329 = vsel %vm401, %v5324, 0
    %5331 = vmatprep.subr.mxu0 0.0
    %5332 = vmatpush1.msra.mxu0 %v5326
    %5333 = vmatprep.subr.mxu0 0.0
    %5334 = vmatpush1.msra.mxu0 0.0
    %5335 = vmatprep.subr.mxu0 0.0
    %5336 = vmatpush1.msra.mxu0 0.0
    %5337 = vmatprep.subr.mxu0 0.0
    %5338 = vmatpush1.msra.mxu0 0.0
    %5339 = vmatprep.subr.mxu0 0.0
    %5340 = vmatpush1.msra.mxu0 0.0
    %5341 = vmatprep.subr.mxu0 0.0
    %5342 = vmatpush1.msra.mxu0 0.0
    %5343 = vmatprep.subr.mxu0 0.0
    %5344 = vmatpush1.msra.mxu0 0.0
    %5345 = vmatprep.subr.mxu0 0.0
    %5346 = vmatpush1.msra.mxu0 0.0
    %5347 = vmatprep.subr.mxu0 0.0
    %5348 = vmatpush1.msra.mxu0 0.0
    %5349 = vmatprep.subr.mxu0 0.0
    %5350 = vmatpush1.msra.mxu0 0.0
    %5351 = vmatprep.subr.mxu0 0.0
    %5352 = vmatpush1.msra.mxu0 0.0
    %5353 = vmatprep.subr.mxu0 0.0
    %5354 = vmatpush1.msra.mxu0 0.0
    %5355 = vmatprep.subr.mxu0 0.0
    %5356 = vmatpush1.msra.mxu0 0.0
    %5357 = vmatprep.subr.mxu0 0.0
    %5358 = vmatpush1.msra.mxu0 0.0
    %5359 = vmatprep.subr.mxu0 0.0
    %5360 = vmatpush1.msra.mxu0 0.0
    %5361 = vmatprep.subr.mxu0 0.0
    %5362 = vmatpush1.msra.mxu0 0.0
    %5363 = vmatprep.subr.mxu0 0.0
    %5364 = vmatpush1.msra.mxu0 0.0
    %5365 = vmatprep.subr.mxu0 0.0
    %5366 = vmatpush1.msra.mxu0 0.0
    %5367 = vmatprep.subr.mxu0 0.0
    %5368 = vmatpush1.msra.mxu0 0.0
    %5369 = vmatprep.subr.mxu0 0.0
    %5370 = vmatpush1.msra.mxu0 0.0
    %5371 = vmatprep.subr.mxu0 0.0
    %5372 = vmatpush1.msra.mxu0 0.0
    %5373 = vmatprep.subr.mxu0 0.0
    %5374 = vmatpush1.msra.mxu0 0.0
    %5375 = vmatprep.subr.mxu0 0.0
    %5376 = vmatpush1.msra.mxu0 0.0
    %5377 = vmatprep.subr.mxu0 0.0
    %5378 = vmatpush1.msra.mxu0 0.0
    %5379 = vmatprep.subr.mxu0 0.0
    %5380 = vmatpush1.msra.mxu0 0.0
    %5381 = vmatprep.subr.mxu0 0.0
    %5382 = vmatpush1.msra.mxu0 0.0
    %5383 = vmatprep.subr.mxu0 0.0
    %5384 = vmatpush1.msra.mxu0 0.0
    %5385 = vmatprep.subr.mxu0 0.0
    %5386 = vmatpush1.msra.mxu0 0.0
    %5387 = vmatprep.subr.mxu0 0.0
    %5388 = vmatpush1.msra.mxu0 0.0
    %5389 = vmatprep.subr.mxu0 0.0
    %5390 = vmatpush1.msra.mxu0 0.0
    %5391 = vmatprep.subr.mxu0 0.0
    %5392 = vmatpush1.msra.mxu0 0.0
    %5393 = vmatprep.subr.mxu0 0.0
    %5394 = vmatpush1.msra.mxu0 0.0
    %5395 = vmatprep.mubr.f32.mxu0 0.0
    %5396 = vmatmul.mubr.f32.gmra.mrb[0].mxu0 %v5329
    %v5397 = vpop.f32.mrb[0].mxu0
    %v5398 = vadd.f32 0.0, %v5397
    %v5399 = vpop.f32.mrb[0].mxu0
    %5400 = vdwg.mxu0
    %5402 = vrot.lane.b32.xlu0 %v5398, 16
    %v5403 = vpop.permute.xlu0 %5402
    %5405 = vst.msk [vmem:[#allocation2 + $0x8] sm:$0xff] %vm916, %v5403
    %5406 = vrot.lane.b32.xlu0 %v4069, 104
    %v5407 = vpop.permute.xlu0 %5406
    %5408 = vrot.lane.b32.xlu0 %v4135, 104
    %v5409 = vpop.permute.xlu0 %5408
    %v5410 = vsel %vm401, %v5407, 0
    %v5412 = vsel %vm401, %v5409, 0
    %5414 = vmatprep.subr.mxu0 0.0
    %5415 = vmatpush1.xpose.msra.mxu0 %v5412
    %5416 = vmatprep.subr.mxu0 0.0
    %5417 = vmatpush1.xpose.msra.mxu0 0.0
    %5418 = vmatprep.subr.mxu0 0.0
    %5419 = vmatpush1.xpose.msra.mxu0 0.0
    %5420 = vmatprep.subr.mxu0 0.0
    %5421 = vmatpush1.xpose.msra.mxu0 0.0
    %5422 = vmatprep.subr.mxu0 0.0
    %5423 = vmatpush1.xpose.msra.mxu0 0.0
    %5424 = vmatprep.subr.mxu0 0.0
    %5425 = vmatpush1.xpose.msra.mxu0 0.0
    %5426 = vmatprep.subr.mxu0 0.0
    %5427 = vmatpush1.xpose.msra.mxu0 0.0
    %5428 = vmatprep.subr.mxu0 0.0
    %5429 = vmatpush1.xpose.msra.mxu0 0.0
    %5430 = vmatprep.subr.mxu0 0.0
    %5431 = vmatpush1.xpose.msra.mxu0 0.0
    %5432 = vmatprep.subr.mxu0 0.0
    %5433 = vmatpush1.xpose.msra.mxu0 0.0
    %5434 = vmatprep.subr.mxu0 0.0
    %5435 = vmatpush1.xpose.msra.mxu0 0.0
    %5436 = vmatprep.subr.mxu0 0.0
    %5437 = vmatpush1.xpose.msra.mxu0 0.0
    %5438 = vmatprep.subr.mxu0 0.0
    %5439 = vmatpush1.xpose.msra.mxu0 0.0
    %5440 = vmatprep.subr.mxu0 0.0
    %5441 = vmatpush1.xpose.msra.mxu0 0.0
    %5442 = vmatprep.subr.mxu0 0.0
    %5443 = vmatpush1.xpose.msra.mxu0 0.0
    %5444 = vmatprep.subr.mxu0 0.0
    %5445 = vmatpush1.xpose.msra.mxu0 0.0
    %5446 = vmatprep.subr.mxu0 0.0
    %5447 = vmatpush1.xpose.msra.mxu0 0.0
    %5448 = vmatprep.subr.mxu0 0.0
    %5449 = vmatpush1.xpose.msra.mxu0 0.0
    %5450 = vmatprep.subr.mxu0 0.0
    %5451 = vmatpush1.xpose.msra.mxu0 0.0
    %5452 = vmatprep.subr.mxu0 0.0
    %5453 = vmatpush1.xpose.msra.mxu0 0.0
    %5454 = vmatprep.subr.mxu0 0.0
    %5455 = vmatpush1.xpose.msra.mxu0 0.0
    %5456 = vmatprep.subr.mxu0 0.0
    %5457 = vmatpush1.xpose.msra.mxu0 0.0
    %5458 = vmatprep.subr.mxu0 0.0
    %5459 = vmatpush1.xpose.msra.mxu0 0.0
    %5460 = vmatprep.subr.mxu0 0.0
    %5461 = vmatpush1.xpose.msra.mxu0 0.0
    %5462 = vmatprep.subr.mxu0 0.0
    %5463 = vmatpush1.xpose.msra.mxu0 0.0
    %5464 = vmatprep.subr.mxu0 0.0
    %5465 = vmatpush1.xpose.msra.mxu0 0.0
    %5466 = vmatprep.subr.mxu0 0.0
    %5467 = vmatpush1.xpose.msra.mxu0 0.0
    %5468 = vmatprep.subr.mxu0 0.0
    %5469 = vmatpush1.xpose.msra.mxu0 0.0
    %5470 = vmatprep.subr.mxu0 0.0
    %5471 = vmatpush1.xpose.msra.mxu0 0.0
    %5472 = vmatprep.subr.mxu0 0.0
    %5473 = vmatpush1.xpose.msra.mxu0 0.0
    %5474 = vmatprep.subr.mxu0 0.0
    %5475 = vmatpush1.xpose.msra.mxu0 0.0
    %5476 = vmatprep.subr.mxu0 0.0
    %5477 = vmatpush1.xpose.msra.mxu0 0.0
    %5478 = vmatprep.mubr.f32.mxu0 0.0
    %5479 = vmatmul.mubr.f32.gmra.mrb[0].mxu0 %v5410
    %v5480 = vpop.f32.mrb[0].mxu0
    %v5481 = vadd.f32 0.0, %v5480
    %v5482 = vpop.f32.mrb[0].mxu0
    %5483 = vdwg.mxu0
    %v5484 = vmul.f32 %v5481, 0.35355338
    %v5485 = vadd.f32 %v5484, %v4973
    %v5486 = vsel %vm401, %v5485, -inf
    %5487 = vmax.xlane.f32.xlu0 %v5486
    %v5488 = vpop.xlane.xlu0 %5487
    %v5489 = vsub.f32 %v5485, %v5488
    %v5490 = vmul.f32 %v5489, 1.442695
    %v5491 = vpow.pop %v5490
    %v5492 = vsel %vm401, %v5491, 0.0
    %5493 = vadd.xlane.f32.xlu0 %v5492
    %v5494 = vpop.xlane.xlu0 %5493
    %v5495 = vrcp.pop %v5494
    %v5496 = vmul.f32 %v5491, %v5495
    %5497 = vrot.lane.b32.xlu0 %v4201, 104
    %v5498 = vpop.permute.xlu0 %5497
    %v5501 = vsel %vm401, %v5496, 0
    %5503 = vmatprep.subr.mxu0 0.0
    %5504 = vmatpush1.msra.mxu0 %v5498
    %5505 = vmatprep.subr.mxu0 0.0
    %5506 = vmatpush1.msra.mxu0 0.0
    %5507 = vmatprep.subr.mxu0 0.0
    %5508 = vmatpush1.msra.mxu0 0.0
    %5509 = vmatprep.subr.mxu0 0.0
    %5510 = vmatpush1.msra.mxu0 0.0
    %5511 = vmatprep.subr.mxu0 0.0
    %5512 = vmatpush1.msra.mxu0 0.0
    %5513 = vmatprep.subr.mxu0 0.0
    %5514 = vmatpush1.msra.mxu0 0.0
    %5515 = vmatprep.subr.mxu0 0.0
    %5516 = vmatpush1.msra.mxu0 0.0
    %5517 = vmatprep.subr.mxu0 0.0
    %5518 = vmatpush1.msra.mxu0 0.0
    %5519 = vmatprep.subr.mxu0 0.0
    %5520 = vmatpush1.msra.mxu0 0.0
    %5521 = vmatprep.subr.mxu0 0.0
    %5522 = vmatpush1.msra.mxu0 0.0
    %5523 = vmatprep.subr.mxu0 0.0
    %5524 = vmatpush1.msra.mxu0 0.0
    %5525 = vmatprep.subr.mxu0 0.0
    %5526 = vmatpush1.msra.mxu0 0.0
    %5527 = vmatprep.subr.mxu0 0.0
    %5528 = vmatpush1.msra.mxu0 0.0
    %5529 = vmatprep.subr.mxu0 0.0
    %5530 = vmatpush1.msra.mxu0 0.0
    %5531 = vmatprep.subr.mxu0 0.0
    %5532 = vmatpush1.msra.mxu0 0.0
    %5533 = vmatprep.subr.mxu0 0.0
    %5534 = vmatpush1.msra.mxu0 0.0
    %5535 = vmatprep.subr.mxu0 0.0
    %5536 = vmatpush1.msra.mxu0 0.0
    %5537 = vmatprep.subr.mxu0 0.0
    %5538 = vmatpush1.msra.mxu0 0.0
    %5539 = vmatprep.subr.mxu0 0.0
    %5540 = vmatpush1.msra.mxu0 0.0
    %5541 = vmatprep.subr.mxu0 0.0
    %5542 = vmatpush1.msra.mxu0 0.0
    %5543 = vmatprep.subr.mxu0 0.0
    %5544 = vmatpush1.msra.mxu0 0.0
    %5545 = vmatprep.subr.mxu0 0.0
    %5546 = vmatpush1.msra.mxu0 0.0
    %5547 = vmatprep.subr.mxu0 0.0
    %5548 = vmatpush1.msra.mxu0 0.0
    %5549 = vmatprep.subr.mxu0 0.0
    %5550 = vmatpush1.msra.mxu0 0.0
    %5551 = vmatprep.subr.mxu0 0.0
    %5552 = vmatpush1.msra.mxu0 0.0
    %5553 = vmatprep.subr.mxu0 0.0
    %5554 = vmatpush1.msra.mxu0 0.0
    %5555 = vmatprep.subr.mxu0 0.0
    %5556 = vmatpush1.msra.mxu0 0.0
    %5557 = vmatprep.subr.mxu0 0.0
    %5558 = vmatpush1.msra.mxu0 0.0
    %5559 = vmatprep.subr.mxu0 0.0
    %5560 = vmatpush1.msra.mxu0 0.0
    %5561 = vmatprep.subr.mxu0 0.0
    %5562 = vmatpush1.msra.mxu0 0.0
    %5563 = vmatprep.subr.mxu0 0.0
    %5564 = vmatpush1.msra.mxu0 0.0
    %5565 = vmatprep.subr.mxu0 0.0
    %5566 = vmatpush1.msra.mxu0 0.0
    %5567 = vmatprep.mubr.f32.mxu0 0.0
    %5568 = vmatmul.mubr.f32.gmra.mrb[0].mxu0 %v5501
    %v5569 = vpop.f32.mrb[0].mxu0
    %v5570 = vadd.f32 0.0, %v5569
    %v5571 = vpop.f32.mrb[0].mxu0
    %5572 = vdwg.mxu0
    %5574 = vrot.lane.b32.xlu0 %v5570, 24
    %v5575 = vpop.permute.xlu0 %5574
    %5577 = vst.msk [vmem:[#allocation2 + $0x8] sm:$0xff] %vm1089, %v5575
    %v5578 = vld [vmem:[#allocation2] sm:$0xff]
    %v5579 = vld [vmem:[#allocation2 + $0x8] sm:$0xff]
    %s5580 = scalar_lea.vmem %s15, 16
    %v5581 = vld [vmem:[%s5580] sm:$0xf]
    %v5582 = vld [vmem:[%s5580 + $0x4] sm:$0xf]
    %v5583 = vld [vmem:[%s5580 + $0x8] sm:$0xf]
    %v5584 = vld [vmem:[%s5580 + $0xc] sm:$0xf]
    %s5585 = scalar_lea.vmem %s16, 1
    %v5586 = vld [vmem:[%s5585] sm:$0x1]
    %v5587 = vpack.c.bf16 %v5579, %v5578
    %v5589 = vlaneseq
    %v5590 = vshrl.u32 %v5589, 7
    %v5591 = vsub.s32 0, %v5590
    %v5592 = vrot.slane %v5586, %v5591
    %v5598 = vunpack.c.l.b16 %v5581
    %v5599 = vunpack.c.l.b16 %v5582
    %v5600 = vunpack.c.l.b16 %v5583
    %v5601 = vunpack.c.l.b16 %v5584
    %v5602 = vpack.c.b16 %v5599, %v5598
    %v5603 = vpack.c.b16 %v5601, %v5600
    %v5607 = vsel %vm145, %v5587, 0
    %5609 = vmatprep.subr.bf16.mxu0 0
    %5610 = vmatpush1.bf16.msra.mxu0 %v5602
    %5611 = vmatprep.subr.bf16.mxu0 0
    %5612 = vmatpush1.bf16.msra.mxu0 %v5603
    %5613 = vmatprep.subr.bf16.mxu0 0
    %5614 = vmatpush1.bf16.msra.mxu0 0
    %5615 = vmatprep.subr.bf16.mxu0 0
    %5616 = vmatpush1.bf16.msra.mxu0 0
    %5617 = vmatprep.subr.bf16.mxu0 0
    %5618 = vmatpush1.bf16.msra.mxu0 0
    %5619 = vmatprep.subr.bf16.mxu0 0
    %5620 = vmatpush1.bf16.msra.mxu0 0
    %5621 = vmatprep.subr.bf16.mxu0 0
    %5622 = vmatpush1.bf16.msra.mxu0 0
    %5623 = vmatprep.subr.bf16.mxu0 0
    %5624 = vmatpush1.bf16.msra.mxu0 0
    %5625 = vmatprep.subr.bf16.mxu0 0
    %5626 = vmatpush1.bf16.msra.mxu0 0
    %5627 = vmatprep.subr.bf16.mxu0 0
    %5628 = vmatpush1.bf16.msra.mxu0 0
    %5629 = vmatprep.subr.bf16.mxu0 0
    %5630 = vmatpush1.bf16.msra.mxu0 0
    %5631 = vmatprep.subr.bf16.mxu0 0
    %5632 = vmatpush1.bf16.msra.mxu0 0
    %5633 = vmatprep.subr.bf16.mxu0 0
    %5634 = vmatpush1.bf16.msra.mxu0 0
    %5635 = vmatprep.subr.bf16.mxu0 0
    %5636 = vmatpush1.bf16.msra.mxu0 0
    %5637 = vmatprep.subr.bf16.mxu0 0
    %5638 = vmatpush1.bf16.msra.mxu0 0
    %5639 = vmatprep.subr.bf16.mxu0 0
    %5640 = vmatpush1.bf16.msra.mxu0 0
    %5641 = vmatprep.mubr.bf16.mxu0 0
    %5642 = vmatmul.mubr.bf16.gmra.mrb[0].mxu0 %v5607
    %v5643 = vpop.f32.mrb[0].mxu0
    %v5644 = vadd.f32 %v5592, %v5643
    %v5645 = vpop.f32.mrb[0].mxu0
    %v5646 = vpop.f32.mrb[0].mxu0
    %v5647 = vadd.f32 %v5592, %v5646
    %v5648 = vpop.f32.mrb[0].mxu0
    %5649 = vdwg.mxu0
    %v5650 = vadd.f32 %v3940, %v5644
    %v5651 = vadd.f32 %v3941, %v5647
    %s5652 = scalar_lea.vmem %s7, 1
    %v5653 = vld [vmem:[%s5652] sm:$0x1]
    %s5654 = scalar_lea.vmem %s8, 1
    %v5655 = vld [vmem:[%s5654] sm:$0x1]
    %v5656 = vsel %vm145, %v5650, 0.0
    %5657 = vadd.xlane.f32.xlu0 %v5656
    %v5658 = vpop.xlane.xlu0 %5657
    %v5659 = vsel %vm145, %v5651, 0.0
    %5660 = vadd.xlane.f32.xlu0 %v5659
    %v5661 = vpop.xlane.xlu0 %5660
    %v5662 = vmul.f32 %v5658, %v152
    %v5663 = vmul.f32 %v5661, %v152
    %v5664 = vsub.f32 %v5650, %v5662
    %v5665 = vsub.f32 %v5651, %v5663
    %v5666 = vmul.f32 %v5664, %v5664
    %v5667 = vmul.f32 %v5665, %v5665
    %v5668 = vsel %vm145, %v5666, 0.0
    %5669 = vadd.xlane.f32.xlu0 %v5668
    %v5670 = vpop.xlane.xlu0 %5669
    %v5671 = vsel %vm145, %v5667, 0.0
    %5672 = vadd.xlane.f32.xlu0 %v5671
    %v5673 = vpop.xlane.xlu0 %5672
    %v5674 = vmul.f32 %v5670, %v165
    %v5675 = vmul.f32 %v5673, %v165
    %v5676 = vrsqrt.pop %v5674
    %v5677 = vmul.f32 %v5674, %v5676
    %vm5678 = vcmp.eq.f32.partialorder %v5674, inf
    %v5679 = vsel %vm5678, %v5674, %v5677
    %vm5680 = vcmp.eq.f32.partialorder %v5674, 0.0
    %v5681 = vand.u32 %v5674, 2147483648
    %v5682 = vsel %vm5680, %v5681, %v5679
    %v5683 = vrsqrt.pop %v5675
    %v5684 = vmul.f32 %v5675, %v5683
    %vm5685 = vcmp.eq.f32.partialorder %v5675, inf
    %v5686 = vsel %vm5685, %v5675, %v5684
    %vm5687 = vcmp.eq.f32.partialorder %v5675, 0.0
    %v5688 = vand.u32 %v5675, 2147483648
    %v5689 = vsel %vm5687, %v5688, %v5686
    %v5690 = vadd.f32 %v5682, 1e-06
    %v5691 = vadd.f32 %v5689, 1e-06
    %v5692 = vrcp.pop %v5690
    %v5693 = vrcp.pop %v5691
    %v5695 = vlaneseq
    %v5696 = vshrl.u32 %v5695, 7
    %v5697 = vsub.s32 0, %v5696
    %v5698 = vrot.slane %v5653, %v5697
    %v5700 = vmul.f32 %v5698, %v5664
    %v5701 = vmul.f32 %v5698, %v5665
    %v5702 = vmul.f32 %v5700, %v5692
    %v5703 = vmul.f32 %v5701, %v5693
    %v5705 = vlaneseq
    %v5706 = vshrl.u32 %v5705, 7
    %v5707 = vsub.s32 0, %v5706
    %v5708 = vrot.slane %v5655, %v5707
    %v5710 = vadd.f32 %v5702, %v5708
    %v5711 = vadd.f32 %v5703, %v5708
    %s5712 = scalar_lea.vmem %s17, 256
    %v5713 = vld [vmem:[%s5712] sm:$0xff]
    %v5714 = vld [vmem:[%s5712 + $0x8] sm:$0xff]
    %v5715 = vld [vmem:[%s5712 + $0x10] sm:$0xff]
    %v5716 = vld [vmem:[%s5712 + $0x18] sm:$0xff]
    %v5717 = vld [vmem:[%s5712 + $0x20] sm:$0xff]
    %v5718 = vld [vmem:[%s5712 + $0x28] sm:$0xff]
    %v5719 = vld [vmem:[%s5712 + $0x30] sm:$0xff]
    %v5720 = vld [vmem:[%s5712 + $0x38] sm:$0xff]
    %v5721 = vld [vmem:[%s5712 + $0x40] sm:$0xff]
    %v5722 = vld [vmem:[%s5712 + $0x48] sm:$0xff]
    %v5723 = vld [vmem:[%s5712 + $0x50] sm:$0xff]
    %v5724 = vld [vmem:[%s5712 + $0x58] sm:$0xff]
    %v5725 = vld [vmem:[%s5712 + $0x60] sm:$0xff]
    %v5726 = vld [vmem:[%s5712 + $0x68] sm:$0xff]
    %v5727 = vld [vmem:[%s5712 + $0x70] sm:$0xff]
    %v5728 = vld [vmem:[%s5712 + $0x78] sm:$0xff]
    %v5729 = vld [vmem:[%s5712 + $0x80] sm:$0xff]
    %v5730 = vld [vmem:[%s5712 + $0x88] sm:$0xff]
    %v5731 = vld [vmem:[%s5712 + $0x90] sm:$0xff]
    %v5732 = vld [vmem:[%s5712 + $0x98] sm:$0xff]
    %v5733 = vld [vmem:[%s5712 + $0xa0] sm:$0xff]
    %v5734 = vld [vmem:[%s5712 + $0xa8] sm:$0xff]
    %v5735 = vld [vmem:[%s5712 + $0xb0] sm:$0xff]
    %v5736 = vld [vmem:[%s5712 + $0xb8] sm:$0xff]
    %v5737 = vld [vmem:[%s5712 + $0xc0] sm:$0xff]
    %v5738 = vld [vmem:[%s5712 + $0xc8] sm:$0xff]
    %v5739 = vld [vmem:[%s5712 + $0xd0] sm:$0xff]
    %v5740 = vld [vmem:[%s5712 + $0xd8] sm:$0xff]
    %v5741 = vld [vmem:[%s5712 + $0xe0] sm:$0xff]
    %v5742 = vld [vmem:[%s5712 + $0xe8] sm:$0xff]
    %v5743 = vld [vmem:[%s5712 + $0xf0] sm:$0xff]
    %v5744 = vld [vmem:[%s5712 + $0xf8] sm:$0xff]
    %s5745 = scalar_lea.vmem %s18, 16
    %v5746 = vld [vmem:[%s5745] sm:$0xff]
    %v5747 = vld [vmem:[%s5745 + $0x8] sm:$0xff]
    %v5748 = vpack.c.bf16 %v5711, %v5710
    %v5751 = vlaneseq
    %v5752 = vshrl.u32 %v5751, 7
    %v5753 = vsub.s32 0, %v5752
    %v5754 = vrot.slane %v5746, %v5753
    %v5755 = vlaneseq
    %v5756 = vshrl.u32 %v5755, 7
    %v5757 = vsub.s32 1, %v5756
    %v5758 = vrot.slane %v5746, %v5757
    %v5759 = vlaneseq
    %v5760 = vshrl.u32 %v5759, 7
    %v5761 = vsub.s32 2, %v5760
    %v5762 = vrot.slane %v5746, %v5761
    %v5763 = vlaneseq
    %v5764 = vshrl.u32 %v5763, 7
    %v5765 = vsub.s32 3, %v5764
    %v5766 = vrot.slane %v5746, %v5765
    %v5767 = vlaneseq
    %v5768 = vshrl.u32 %v5767, 7
    %v5769 = vsub.s32 4, %v5768
    %v5770 = vrot.slane %v5746, %v5769
    %v5771 = vlaneseq
    %v5772 = vshrl.u32 %v5771, 7
    %v5773 = vsub.s32 5, %v5772
    %v5774 = vrot.slane %v5746, %v5773
    %v5775 = vlaneseq
    %v5776 = vshrl.u32 %v5775, 7
    %v5777 = vsub.s32 6, %v5776
    %v5778 = vrot.slane %v5746, %v5777
    %v5779 = vlaneseq
    %v5780 = vshrl.u32 %v5779, 7
    %v5781 = vsub.s32 7, %v5780
    %v5782 = vrot.slane %v5746, %v5781
    %v5783 = vlaneseq
    %v5784 = vshrl.u32 %v5783, 7
    %v5785 = vsub.s32 0, %v5784
    %v5786 = vrot.slane %v5747, %v5785
    %v5787 = vlaneseq
    %v5788 = vshrl.u32 %v5787, 7
    %v5789 = vsub.s32 1, %v5788
    %v5790 = vrot.slane %v5747, %v5789
    %v5791 = vlaneseq
    %v5792 = vshrl.u32 %v5791, 7
    %v5793 = vsub.s32 2, %v5792
    %v5794 = vrot.slane %v5747, %v5793
    %v5795 = vlaneseq
    %v5796 = vshrl.u32 %v5795, 7
    %v5797 = vsub.s32 3, %v5796
    %v5798 = vrot.slane %v5747, %v5797
    %v5799 = vlaneseq
    %v5800 = vshrl.u32 %v5799, 7
    %v5801 = vsub.s32 4, %v5800
    %v5802 = vrot.slane %v5747, %v5801
    %v5803 = vlaneseq
    %v5804 = vshrl.u32 %v5803, 7
    %v5805 = vsub.s32 5, %v5804
    %v5806 = vrot.slane %v5747, %v5805
    %v5807 = vlaneseq
    %v5808 = vshrl.u32 %v5807, 7
    %v5809 = vsub.s32 6, %v5808
    %v5810 = vrot.slane %v5747, %v5809
    %v5811 = vlaneseq
    %v5812 = vshrl.u32 %v5811, 7
    %v5813 = vsub.s32 7, %v5812
    %v5814 = vrot.slane %v5747, %v5813
    %v5863 = vunpack.c.l.b16 %v5713
    %v5864 = vunpack.c.h.b16 %v5713
    %v5865 = vunpack.c.l.b16 %v5714
    %v5866 = vunpack.c.h.b16 %v5714
    %v5867 = vunpack.c.l.b16 %v5715
    %v5868 = vunpack.c.h.b16 %v5715
    %v5869 = vunpack.c.l.b16 %v5716
    %v5870 = vunpack.c.h.b16 %v5716
    %v5871 = vunpack.c.l.b16 %v5717
    %v5872 = vunpack.c.h.b16 %v5717
    %v5873 = vunpack.c.l.b16 %v5718
    %v5874 = vunpack.c.h.b16 %v5718
    %v5875 = vunpack.c.l.b16 %v5719
    %v5876 = vunpack.c.h.b16 %v5719
    %v5877 = vunpack.c.l.b16 %v5720
    %v5878 = vunpack.c.h.b16 %v5720
    %v5879 = vunpack.c.l.b16 %v5721
    %v5880 = vunpack.c.h.b16 %v5721
    %v5881 = vunpack.c.l.b16 %v5722
    %v5882 = vunpack.c.h.b16 %v5722
    %v5883 = vunpack.c.l.b16 %v5723
    %v5884 = vunpack.c.h.b16 %v5723
    %v5885 = vunpack.c.l.b16 %v5724
    %v5886 = vunpack.c.h.b16 %v5724
    %v5887 = vunpack.c.l.b16 %v5725
    %v5888 = vunpack.c.h.b16 %v5725
    %v5889 = vunpack.c.l.b16 %v5726
    %v5890 = vunpack.c.h.b16 %v5726
    %v5891 = vunpack.c.l.b16 %v5727
    %v5892 = vunpack.c.h.b16 %v5727
    %v5893 = vunpack.c.l.b16 %v5728
    %v5894 = vunpack.c.h.b16 %v5728
    %v5895 = vunpack.c.l.b16 %v5729
    %v5896 = vunpack.c.h.b16 %v5729
    %v5897 = vunpack.c.l.b16 %v5730
    %v5898 = vunpack.c.h.b16 %v5730
    %v5899 = vunpack.c.l.b16 %v5731
    %v5900 = vunpack.c.h.b16 %v5731
    %v5901 = vunpack.c.l.b16 %v5732
    %v5902 = vunpack.c.h.b16 %v5732
    %v5903 = vunpack.c.l.b16 %v5733
    %v5904 = vunpack.c.h.b16 %v5733
    %v5905 = vunpack.c.l.b16 %v5734
    %v5906 = vunpack.c.h.b16 %v5734
    %v5907 = vunpack.c.l.b16 %v5735
    %v5908 = vunpack.c.h.b16 %v5735
    %v5909 = vunpack.c.l.b16 %v5736
    %v5910 = vunpack.c.h.b16 %v5736
    %v5911 = vunpack.c.l.b16 %v5737
    %v5912 = vunpack.c.h.b16 %v5737
    %v5913 = vunpack.c.l.b16 %v5738
    %v5914 = vunpack.c.h.b16 %v5738
    %v5915 = vunpack.c.l.b16 %v5739
    %v5916 = vunpack.c.h.b16 %v5739
    %v5917 = vunpack.c.l.b16 %v5740
    %v5918 = vunpack.c.h.b16 %v5740
    %v5919 = vunpack.c.l.b16 %v5741
    %v5920 = vunpack.c.h.b16 %v5741
    %v5921 = vunpack.c.l.b16 %v5742
    %v5922 = vunpack.c.h.b16 %v5742
    %v5923 = vunpack.c.l.b16 %v5743
    %v5924 = vunpack.c.h.b16 %v5743
    %v5925 = vunpack.c.l.b16 %v5744
    %v5926 = vunpack.c.h.b16 %v5744
    %v5927 = vpack.c.b16 %v5879, %v5863
    %v5928 = vpack.c.b16 %v5880, %v5864
    %v5929 = vpack.c.b16 %v5881, %v5865
    %v5930 = vpack.c.b16 %v5882, %v5866
    %v5931 = vpack.c.b16 %v5883, %v5867
    %v5932 = vpack.c.b16 %v5884, %v5868
    %v5933 = vpack.c.b16 %v5885, %v5869
    %v5934 = vpack.c.b16 %v5886, %v5870
    %v5935 = vpack.c.b16 %v5887, %v5871
    %v5936 = vpack.c.b16 %v5888, %v5872
    %v5937 = vpack.c.b16 %v5889, %v5873
    %v5938 = vpack.c.b16 %v5890, %v5874
    %v5939 = vpack.c.b16 %v5891, %v5875
    %v5940 = vpack.c.b16 %v5892, %v5876
    %v5941 = vpack.c.b16 %v5893, %v5877
    %v5942 = vpack.c.b16 %v5894, %v5878
    %v5943 = vpack.c.b16 %v5911, %v5895
    %v5944 = vpack.c.b16 %v5912, %v5896
    %v5945 = vpack.c.b16 %v5913, %v5897
    %v5946 = vpack.c.b16 %v5914, %v5898
    %v5947 = vpack.c.b16 %v5915, %v5899
    %v5948 = vpack.c.b16 %v5916, %v5900
    %v5949 = vpack.c.b16 %v5917, %v5901
    %v5950 = vpack.c.b16 %v5918, %v5902
    %v5951 = vpack.c.b16 %v5919, %v5903
    %v5952 = vpack.c.b16 %v5920, %v5904
    %v5953 = vpack.c.b16 %v5921, %v5905
    %v5954 = vpack.c.b16 %v5922, %v5906
    %v5955 = vpack.c.b16 %v5923, %v5907
    %v5956 = vpack.c.b16 %v5924, %v5908
    %v5957 = vpack.c.b16 %v5925, %v5909
    %v5958 = vpack.c.b16 %v5926, %v5910
    %v5992 = vsel %vm145, %v5748, 0
    %5994 = vmatprep.subr.bf16.mxu0 %v5928
    %5995 = vmatpush1.bf16.msra.mxu0 %v5927
    %5996 = vmatprep.subr.bf16.mxu0 %v5944
    %5997 = vmatpush1.bf16.msra.mxu0 %v5943
    %5998 = vmatprep.subr.bf16.mxu0 0
    %5999 = vmatpush1.bf16.msra.mxu0 0
    %6000 = vmatprep.subr.bf16.mxu0 0
    %6001 = vmatpush1.bf16.msra.mxu0 0
    %6002 = vmatprep.subr.bf16.mxu0 0
    %6003 = vmatpush1.bf16.msra.mxu0 0
    %6004 = vmatprep.subr.bf16.mxu0 0
    %6005 = vmatpush1.bf16.msra.mxu0 0
    %6006 = vmatprep.subr.bf16.mxu0 0
    %6007 = vmatpush1.bf16.msra.mxu0 0
    %6008 = vmatprep.subr.bf16.mxu0 0
    %6009 = vmatpush1.bf16.msra.mxu0 0
    %6010 = vmatprep.subr.bf16.mxu0 0
    %6011 = vmatpush1.bf16.msra.mxu0 0
    %6012 = vmatprep.subr.bf16.mxu0 0
    %6013 = vmatpush1.bf16.msra.mxu0 0
    %6014 = vmatprep.subr.bf16.mxu0 0
    %6015 = vmatpush1.bf16.msra.mxu0 0
    %6016 = vmatprep.subr.bf16.mxu0 0
    %6017 = vmatpush1.bf16.msra.mxu0 0
    %6018 = vmatprep.subr.bf16.mxu0 0
    %6019 = vmatpush1.bf16.msra.mxu0 0
    %6020 = vmatprep.subr.bf16.mxu0 0
    %6021 = vmatpush1.bf16.msra.mxu0 0
    %6022 = vmatprep.subr.bf16.mxu0 0
    %6023 = vmatpush1.bf16.msra.mxu0 0
    %6024 = vmatprep.subr.bf16.mxu0 0
    %6025 = vmatpush1.bf16.msra.mxu0 0
    %6026 = vmatprep.mubr.bf16.mxu0 0
    %6027 = vmatmul.mubr.bf16.gmra.mrb[0].mxu0 %v5992
    %v6028 = vpop.f32.mrb[0].mxu0
    %v6029 = vadd.f32 %v5754, %v6028
    %v6030 = vpop.f32.mrb[0].mxu0
    %v6031 = vadd.f32 %v5758, %v6030
    %v6032 = vpop.f32.mrb[0].mxu0
    %v6033 = vadd.f32 %v5754, %v6032
    %v6034 = vpop.f32.mrb[0].mxu0
    %v6035 = vadd.f32 %v5758, %v6034
    %6036 = vdwg.mxu0
    %6037 = vmatprep.subr.bf16.mxu0 %v5930
    %6038 = vmatpush1.bf16.msra.mxu0 %v5929
    %6039 = vmatprep.subr.bf16.mxu0 %v5946
    %6040 = vmatpush1.bf16.msra.mxu0 %v5945
    %6041 = vmatprep.subr.bf16.mxu0 0
    %6042 = vmatpush1.bf16.msra.mxu0 0
    %6043 = vmatprep.subr.bf16.mxu0 0
    %6044 = vmatpush1.bf16.msra.mxu0 0
    %6045 = vmatprep.subr.bf16.mxu0 0
    %6046 = vmatpush1.bf16.msra.mxu0 0
    %6047 = vmatprep.subr.bf16.mxu0 0
    %6048 = vmatpush1.bf16.msra.mxu0 0
    %6049 = vmatprep.subr.bf16.mxu0 0
    %6050 = vmatpush1.bf16.msra.mxu0 0
    %6051 = vmatprep.subr.bf16.mxu0 0
    %6052 = vmatpush1.bf16.msra.mxu0 0
    %6053 = vmatprep.subr.bf16.mxu0 0
    %6054 = vmatpush1.bf16.msra.mxu0 0
    %6055 = vmatprep.subr.bf16.mxu0 0
    %6056 = vmatpush1.bf16.msra.mxu0 0
    %6057 = vmatprep.subr.bf16.mxu0 0
    %6058 = vmatpush1.bf16.msra.mxu0 0
    %6059 = vmatprep.subr.bf16.mxu0 0
    %6060 = vmatpush1.bf16.msra.mxu0 0
    %6061 = vmatprep.subr.bf16.mxu0 0
    %6062 = vmatpush1.bf16.msra.mxu0 0
    %6063 = vmatprep.subr.bf16.mxu0 0
    %6064 = vmatpush1.bf16.msra.mxu0 0
    %6065 = vmatprep.subr.bf16.mxu0 0
    %6066 = vmatpush1.bf16.msra.mxu0 0
    %6067 = vmatprep.subr.bf16.mxu0 0
    %6068 = vmatpush1.bf16.msra.mxu0 0
    %6069 = vmatprep.mubr.bf16.mxu0 0
    %6070 = vmatmul.mubr.bf16.gmra.mrb[0].mxu0 %v5992
    %v6071 = vpop.f32.mrb[0].mxu0
    %v6072 = vadd.f32 %v5762, %v6071
    %v6073 = vpop.f32.mrb[0].mxu0
    %v6074 = vadd.f32 %v5766, %v6073
    %v6075 = vpop.f32.mrb[0].mxu0
    %v6076 = vadd.f32 %v5762, %v6075
    %v6077 = vpop.f32.mrb[0].mxu0
    %v6078 = vadd.f32 %v5766, %v6077
    %6079 = vdwg.mxu0
    %6080 = vmatprep.subr.bf16.mxu0 %v5932
    %6081 = vmatpush1.bf16.msra.mxu0 %v5931
    %6082 = vmatprep.subr.bf16.mxu0 %v5948
    %6083 = vmatpush1.bf16.msra.mxu0 %v5947
    %6084 = vmatprep.subr.bf16.mxu0 0
    %6085 = vmatpush1.bf16.msra.mxu0 0
    %6086 = vmatprep.subr.bf16.mxu0 0
    %6087 = vmatpush1.bf16.msra.mxu0 0
    %6088 = vmatprep.subr.bf16.mxu0 0
    %6089 = vmatpush1.bf16.msra.mxu0 0
    %6090 = vmatprep.subr.bf16.mxu0 0
    %6091 = vmatpush1.bf16.msra.mxu0 0
    %6092 = vmatprep.subr.bf16.mxu0 0
    %6093 = vmatpush1.bf16.msra.mxu0 0
    %6094 = vmatprep.subr.bf16.mxu0 0
    %6095 = vmatpush1.bf16.msra.mxu0 0
    %6096 = vmatprep.subr.bf16.mxu0 0
    %6097 = vmatpush1.bf16.msra.mxu0 0
    %6098 = vmatprep.subr.bf16.mxu0 0
    %6099 = vmatpush1.bf16.msra.mxu0 0
    %6100 = vmatprep.subr.bf16.mxu0 0
    %6101 = vmatpush1.bf16.msra.mxu0 0
    %6102 = vmatprep.subr.bf16.mxu0 0
    %6103 = vmatpush1.bf16.msra.mxu0 0
    %6104 = vmatprep.subr.bf16.mxu0 0
    %6105 = vmatpush1.bf16.msra.mxu0 0
    %6106 = vmatprep.subr.bf16.mxu0 0
    %6107 = vmatpush1.bf16.msra.mxu0 0
    %6108 = vmatprep.subr.bf16.mxu0 0
    %6109 = vmatpush1.bf16.msra.mxu0 0
    %6110 = vmatprep.subr.bf16.mxu0 0
    %6111 = vmatpush1.bf16.msra.mxu0 0
    %6112 = vmatprep.mubr.bf16.mxu0 0
    %6113 = vmatmul.mubr.bf16.gmra.mrb[0].mxu0 %v5992
    %v6114 = vpop.f32.mrb[0].mxu0
    %v6115 = vadd.f32 %v5770, %v6114
    %v6116 = vpop.f32.mrb[0].mxu0
    %v6117 = vadd.f32 %v5774, %v6116
    %v6118 = vpop.f32.mrb[0].mxu0
    %v6119 = vadd.f32 %v5770, %v6118
    %v6120 = vpop.f32.mrb[0].mxu0
    %v6121 = vadd.f32 %v5774, %v6120
    %6122 = vdwg.mxu0
    %6123 = vmatprep.subr.bf16.mxu0 %v5934
    %6124 = vmatpush1.bf16.msra.mxu0 %v5933
    %6125 = vmatprep.subr.bf16.mxu0 %v5950
    %6126 = vmatpush1.bf16.msra.mxu0 %v5949
    %6127 = vmatprep.subr.bf16.mxu0 0
    %6128 = vmatpush1.bf16.msra.mxu0 0
    %6129 = vmatprep.subr.bf16.mxu0 0
    %6130 = vmatpush1.bf16.msra.mxu0 0
    %6131 = vmatprep.subr.bf16.mxu0 0
    %6132 = vmatpush1.bf16.msra.mxu0 0
    %6133 = vmatprep.subr.bf16.mxu0 0
    %6134 = vmatpush1.bf16.msra.mxu0 0
    %6135 = vmatprep.subr.bf16.mxu0 0
    %6136 = vmatpush1.bf16.msra.mxu0 0
    %6137 = vmatprep.subr.bf16.mxu0 0
    %6138 = vmatpush1.bf16.msra.mxu0 0
    %6139 = vmatprep.subr.bf16.mxu0 0
    %6140 = vmatpush1.bf16.msra.mxu0 0
    %6141 = vmatprep.subr.bf16.mxu0 0
    %6142 = vmatpush1.bf16.msra.mxu0 0
    %6143 = vmatprep.subr.bf16.mxu0 0
    %6144 = vmatpush1.bf16.msra.mxu0 0
    %6145 = vmatprep.subr.bf16.mxu0 0
    %6146 = vmatpush1.bf16.msra.mxu0 0
    %6147 = vmatprep.subr.bf16.mxu0 0
    %6148 = vmatpush1.bf16.msra.mxu0 0
    %6149 = vmatprep.subr.bf16.mxu0 0
    %6150 = vmatpush1.bf16.msra.mxu0 0
    %6151 = vmatprep.subr.bf16.mxu0 0
    %6152 = vmatpush1.bf16.msra.mxu0 0
    %6153 = vmatprep.subr.bf16.mxu0 0
    %6154 = vmatpush1.bf16.msra.mxu0 0
    %6155 = vmatprep.mubr.bf16.mxu0 0
    %6156 = vmatmul.mubr.bf16.gmra.mrb[0].mxu0 %v5992
    %v6157 = vpop.f32.mrb[0].mxu0
    %v6158 = vadd.f32 %v5778, %v6157
    %v6159 = vpop.f32.mrb[0].mxu0
    %v6160 = vadd.f32 %v5782, %v6159
    %v6161 = vpop.f32.mrb[0].mxu0
    %v6162 = vadd.f32 %v5778, %v6161
    %v6163 = vpop.f32.mrb[0].mxu0
    %v6164 = vadd.f32 %v5782, %v6163
    %6165 = vdwg.mxu0
    %6166 = vmatprep.subr.bf16.mxu0 %v5936
    %6167 = vmatpush1.bf16.msra.mxu0 %v5935
    %6168 = vmatprep.subr.bf16.mxu0 %v5952
    %6169 = vmatpush1.bf16.msra.mxu0 %v5951
    %6170 = vmatprep.subr.bf16.mxu0 0
    %6171 = vmatpush1.bf16.msra.mxu0 0
    %6172 = vmatprep.subr.bf16.mxu0 0
    %6173 = vmatpush1.bf16.msra.mxu0 0
    %6174 = vmatprep.subr.bf16.mxu0 0
    %6175 = vmatpush1.bf16.msra.mxu0 0
    %6176 = vmatprep.subr.bf16.mxu0 0
    %6177 = vmatpush1.bf16.msra.mxu0 0
    %6178 = vmatprep.subr.bf16.mxu0 0
    %6179 = vmatpush1.bf16.msra.mxu0 0
    %6180 = vmatprep.subr.bf16.mxu0 0
    %6181 = vmatpush1.bf16.msra.mxu0 0
    %6182 = vmatprep.subr.bf16.mxu0 0
    %6183 = vmatpush1.bf16.msra.mxu0 0
    %6184 = vmatprep.subr.bf16.mxu0 0
    %6185 = vmatpush1.bf16.msra.mxu0 0
    %6186 = vmatprep.subr.bf16.mxu0 0
    %6187 = vmatpush1.bf16.msra.mxu0 0
    %6188 = vmatprep.subr.bf16.mxu0 0
    %6189 = vmatpush1.bf16.msra.mxu0 0
    %6190 = vmatprep.subr.bf16.mxu0 0
    %6191 = vmatpush1.bf16.msra.mxu0 0
    %6192 = vmatprep.subr.bf16.mxu0 0
    %6193 = vmatpush1.bf16.msra.mxu0 0
    %6194 = vmatprep.subr.bf16.mxu0 0
    %6195 = vmatpush1.bf16.msra.mxu0 0
    %6196 = vmatprep.subr.bf16.mxu0 0
    %6197 = vmatpush1.bf16.msra.mxu0 0
    %6198 = vmatprep.mubr.bf16.mxu0 0
    %6199 = vmatmul.mubr.bf16.gmra.mrb[0].mxu0 %v5992
    %v6200 = vpop.f32.mrb[0].mxu0
    %v6201 = vadd.f32 %v5786, %v6200
    %v6202 = vpop.f32.mrb[0].mxu0
    %v6203 = vadd.f32 %v5790, %v6202
    %v6204 = vpop.f32.mrb[0].mxu0
    %v6205 = vadd.f32 %v5786, %v6204
    %v6206 = vpop.f32.mrb[0].mxu0
    %v6207 = vadd.f32 %v5790, %v6206
    %6208 = vdwg.mxu0
    %6209 = vmatprep.subr.bf16.mxu0 %v5938
    %6210 = vmatpush1.bf16.msra.mxu0 %v5937
    %6211 = vmatprep.subr.bf16.mxu0 %v5954
    %6212 = vmatpush1.bf16.msra.mxu0 %v5953
    %6213 = vmatprep.subr.bf16.mxu0 0
    %6214 = vmatpush1.bf16.msra.mxu0 0
    %6215 = vmatprep.subr.bf16.mxu0 0
    %6216 = vmatpush1.bf16.msra.mxu0 0
    %6217 = vmatprep.subr.bf16.mxu0 0
    %6218 = vmatpush1.bf16.msra.mxu0 0
    %6219 = vmatprep.subr.bf16.mxu0 0
    %6220 = vmatpush1.bf16.msra.mxu0 0
    %6221 = vmatprep.subr.bf16.mxu0 0
    %6222 = vmatpush1.bf16.msra.mxu0 0
    %6223 = vmatprep.subr.bf16.mxu0 0
    %6224 = vmatpush1.bf16.msra.mxu0 0
    %6225 = vmatprep.subr.bf16.mxu0 0
    %6226 = vmatpush1.bf16.msra.mxu0 0
    %6227 = vmatprep.subr.bf16.mxu0 0
    %6228 = vmatpush1.bf16.msra.mxu0 0
    %6229 = vmatprep.subr.bf16.mxu0 0
    %6230 = vmatpush1.bf16.msra.mxu0 0
    %6231 = vmatprep.subr.bf16.mxu0 0
    %6232 = vmatpush1.bf16.msra.mxu0 0
    %6233 = vmatprep.subr.bf16.mxu0 0
    %6234 = vmatpush1.bf16.msra.mxu0 0
    %6235 = vmatprep.subr.bf16.mxu0 0
    %6236 = vmatpush1.bf16.msra.mxu0 0
    %6237 = vmatprep.subr.bf16.mxu0 0
    %6238 = vmatpush1.bf16.msra.mxu0 0
    %6239 = vmatprep.subr.bf16.mxu0 0
    %6240 = vmatpush1.bf16.msra.mxu0 0
    %6241 = vmatprep.mubr.bf16.mxu0 0
    %6242 = vmatmul.mubr.bf16.gmra.mrb[0].mxu0 %v5992
    %v6243 = vpop.f32.mrb[0].mxu0
    %v6244 = vadd.f32 %v5794, %v6243
    %v6245 = vpop.f32.mrb[0].mxu0
    %v6246 = vadd.f32 %v5798, %v6245
    %v6247 = vpop.f32.mrb[0].mxu0
    %v6248 = vadd.f32 %v5794, %v6247
    %v6249 = vpop.f32.mrb[0].mxu0
    %v6250 = vadd.f32 %v5798, %v6249
    %6251 = vdwg.mxu0
    %6252 = vmatprep.subr.bf16.mxu0 %v5940
    %6253 = vmatpush1.bf16.msra.mxu0 %v5939
    %6254 = vmatprep.subr.bf16.mxu0 %v5956
    %6255 = vmatpush1.bf16.msra.mxu0 %v5955
    %6256 = vmatprep.subr.bf16.mxu0 0
    %6257 = vmatpush1.bf16.msra.mxu0 0
    %6258 = vmatprep.subr.bf16.mxu0 0
    %6259 = vmatpush1.bf16.msra.mxu0 0
    %6260 = vmatprep.subr.bf16.mxu0 0
    %6261 = vmatpush1.bf16.msra.mxu0 0
    %6262 = vmatprep.subr.bf16.mxu0 0
    %6263 = vmatpush1.bf16.msra.mxu0 0
    %6264 = vmatprep.subr.bf16.mxu0 0
    %6265 = vmatpush1.bf16.msra.mxu0 0
    %6266 = vmatprep.subr.bf16.mxu0 0
    %6267 = vmatpush1.bf16.msra.mxu0 0
    %6268 = vmatprep.subr.bf16.mxu0 0
    %6269 = vmatpush1.bf16.msra.mxu0 0
    %6270 = vmatprep.subr.bf16.mxu0 0
    %6271 = vmatpush1.bf16.msra.mxu0 0
    %6272 = vmatprep.subr.bf16.mxu0 0
    %6273 = vmatpush1.bf16.msra.mxu0 0
    %6274 = vmatprep.subr.bf16.mxu0 0
    %6275 = vmatpush1.bf16.msra.mxu0 0
    %6276 = vmatprep.subr.bf16.mxu0 0
    %6277 = vmatpush1.bf16.msra.mxu0 0
    %6278 = vmatprep.subr.bf16.mxu0 0
    %6279 = vmatpush1.bf16.msra.mxu0 0
    %6280 = vmatprep.subr.bf16.mxu0 0
    %6281 = vmatpush1.bf16.msra.mxu0 0
    %6282 = vmatprep.subr.bf16.mxu0 0
    %6283 = vmatpush1.bf16.msra.mxu0 0
    %6284 = vmatprep.mubr.bf16.mxu0 0
    %6285 = vmatmul.mubr.bf16.gmra.mrb[0].mxu0 %v5992
    %v6286 = vpop.f32.mrb[0].mxu0
    %v6287 = vadd.f32 %v5802, %v6286
    %v6288 = vpop.f32.mrb[0].mxu0
    %v6289 = vadd.f32 %v5806, %v6288
    %v6290 = vpop.f32.mrb[0].mxu0
    %v6291 = vadd.f32 %v5802, %v6290
    %v6292 = vpop.f32.mrb[0].mxu0
    %v6293 = vadd.f32 %v5806, %v6292
    %6294 = vdwg.mxu0
    %6295 = vmatprep.subr.bf16.mxu0 %v5942
    %6296 = vmatpush1.bf16.msra.mxu0 %v5941
    %6297 = vmatprep.subr.bf16.mxu0 %v5958
    %6298 = vmatpush1.bf16.msra.mxu0 %v5957
    %6299 = vmatprep.subr.bf16.mxu0 0
    %6300 = vmatpush1.bf16.msra.mxu0 0
    %6301 = vmatprep.subr.bf16.mxu0 0
    %6302 = vmatpush1.bf16.msra.mxu0 0
    %6303 = vmatprep.subr.bf16.mxu0 0
    %6304 = vmatpush1.bf16.msra.mxu0 0
    %6305 = vmatprep.subr.bf16.mxu0 0
    %6306 = vmatpush1.bf16.msra.mxu0 0
    %6307 = vmatprep.subr.bf16.mxu0 0
    %6308 = vmatpush1.bf16.msra.mxu0 0
    %6309 = vmatprep.subr.bf16.mxu0 0
    %6310 = vmatpush1.bf16.msra.mxu0 0
    %6311 = vmatprep.subr.bf16.mxu0 0
    %6312 = vmatpush1.bf16.msra.mxu0 0
    %6313 = vmatprep.subr.bf16.mxu0 0
    %6314 = vmatpush1.bf16.msra.mxu0 0
    %6315 = vmatprep.subr.bf16.mxu0 0
    %6316 = vmatpush1.bf16.msra.mxu0 0
    %6317 = vmatprep.subr.bf16.mxu0 0
    %6318 = vmatpush1.bf16.msra.mxu0 0
    %6319 = vmatprep.subr.bf16.mxu0 0
    %6320 = vmatpush1.bf16.msra.mxu0 0
    %6321 = vmatprep.subr.bf16.mxu0 0
    %6322 = vmatpush1.bf16.msra.mxu0 0
    %6323 = vmatprep.subr.bf16.mxu0 0
    %6324 = vmatpush1.bf16.msra.mxu0 0
    %6325 = vmatprep.subr.bf16.mxu0 0
    %6326 = vmatpush1.bf16.msra.mxu0 0
    %6327 = vmatprep.mubr.bf16.mxu0 0
    %6328 = vmatmul.mubr.bf16.gmra.mrb[0].mxu0 %v5992
    %v6329 = vpop.f32.mrb[0].mxu0
    %v6330 = vadd.f32 %v5810, %v6329
    %v6331 = vpop.f32.mrb[0].mxu0
    %v6332 = vadd.f32 %v5814, %v6331
    %v6333 = vpop.f32.mrb[0].mxu0
    %v6334 = vadd.f32 %v5810, %v6333
    %v6335 = vpop.f32.mrb[0].mxu0
    %v6336 = vadd.f32 %v5814, %v6335
    %6337 = vdwg.mxu0
    %v6338 = vmax.f32 %v6029, 0.0
    %v6339 = vmax.f32 %v6031, 0.0
    %v6340 = vmax.f32 %v6072, 0.0
    %v6341 = vmax.f32 %v6074, 0.0
    %v6342 = vmax.f32 %v6115, 0.0
    %v6343 = vmax.f32 %v6117, 0.0
    %v6344 = vmax.f32 %v6158, 0.0
    %v6345 = vmax.f32 %v6160, 0.0
    %v6346 = vmax.f32 %v6201, 0.0
    %v6347 = vmax.f32 %v6203, 0.0
    %v6348 = vmax.f32 %v6244, 0.0
    %v6349 = vmax.f32 %v6246, 0.0
    %v6350 = vmax.f32 %v6287, 0.0
    %v6351 = vmax.f32 %v6289, 0.0
    %v6352 = vmax.f32 %v6330, 0.0
    %v6353 = vmax.f32 %v6332, 0.0
    %v6354 = vmax.f32 %v6033, 0.0
    %v6355 = vmax.f32 %v6035, 0.0
    %v6356 = vmax.f32 %v6076, 0.0
    %v6357 = vmax.f32 %v6078, 0.0
    %v6358 = vmax.f32 %v6119, 0.0
    %v6359 = vmax.f32 %v6121, 0.0
    %v6360 = vmax.f32 %v6162, 0.0
    %v6361 = vmax.f32 %v6164, 0.0
    %v6362 = vmax.f32 %v6205, 0.0
    %v6363 = vmax.f32 %v6207, 0.0
    %v6364 = vmax.f32 %v6248, 0.0
    %v6365 = vmax.f32 %v6250, 0.0
    %v6366 = vmax.f32 %v6291, 0.0
    %v6367 = vmax.f32 %v6293, 0.0
    %v6368 = vmax.f32 %v6334, 0.0
    %v6369 = vmax.f32 %v6336, 0.0
    %s6370 = scalar_lea.vmem %s19, 1024
    %v6371 = vld [vmem:[%s6370] sm:$0xf]
    %v6372 = vld [vmem:[%s6370 + $0x4] sm:$0xf]
    %v6373 = vld [vmem:[%s6370 + $0x8] sm:$0xf]
    %v6374 = vld [vmem:[%s6370 + $0xc] sm:$0xf]
    %v6375 = vld [vmem:[%s6370 + $0x10] sm:$0xf]
    %v6376 = vld [vmem:[%s6370 + $0x14] sm:$0xf]
    %v6377 = vld [vmem:[%s6370 + $0x18] sm:$0xf]
    %v6378 = vld [vmem:[%s6370 + $0x1c] sm:$0xf]
    %v6379 = vld [vmem:[%s6370 + $0x20] sm:$0xf]
    %v6380 = vld [vmem:[%s6370 + $0x24] sm:$0xf]
    %v6381 = vld [vmem:[%s6370 + $0x28] sm:$0xf]
    %v6382 = vld [vmem:[%s6370 + $0x2c] sm:$0xf]
    %v6383 = vld [vmem:[%s6370 + $0x30] sm:$0xf]
    %v6384 = vld [vmem:[%s6370 + $0x34] sm:$0xf]
    %v6385 = vld [vmem:[%s6370 + $0x38] sm:$0xf]
    %v6386 = vld [vmem:[%s6370 + $0x3c] sm:$0xf]
    %v6387 = vld [vmem:[%s6370 + $0x40] sm:$0xf]
    %v6388 = vld [vmem:[%s6370 + $0x44] sm:$0xf]
    %v6389 = vld [vmem:[%s6370 + $0x48] sm:$0xf]
    %v6390 = vld [vmem:[%s6370 + $0x4c] sm:$0xf]
    %v6391 = vld [vmem:[%s6370 + $0x50] sm:$0xf]
    %v6392 = vld [vmem:[%s6370 + $0x54] sm:$0xf]
    %v6393 = vld [vmem:[%s6370 + $0x58] sm:$0xf]
    %v6394 = vld [vmem:[%s6370 + $0x5c] sm:$0xf]
    %v6395 = vld [vmem:[%s6370 + $0x60] sm:$0xf]
    %v6396 = vld [vmem:[%s6370 + $0x64] sm:$0xf]
    %v6397 = vld [vmem:[%s6370 + $0x68] sm:$0xf]
    %v6398 = vld [vmem:[%s6370 + $0x6c] sm:$0xf]
    %v6399 = vld [vmem:[%s6370 + $0x70] sm:$0xf]
    %v6400 = vld [vmem:[%s6370 + $0x74] sm:$0xf]
    %v6401 = vld [vmem:[%s6370 + $0x78] sm:$0xf]
    %v6402 = vld [vmem:[%s6370 + $0x7c] sm:$0xf]
    %v6403 = vld [vmem:[%s6370 + $0x80] sm:$0xf]
    %v6404 = vld [vmem:[%s6370 + $0x84] sm:$0xf]
    %v6405 = vld [vmem:[%s6370 + $0x88] sm:$0xf]
    %v6406 = vld [vmem:[%s6370 + $0x8c] sm:$0xf]
    %v6407 = vld [vmem:[%s6370 + $0x90] sm:$0xf]
    %v6408 = vld [vmem:[%s6370 + $0x94] sm:$0xf]
    %v6409 = vld [vmem:[%s6370 + $0x98] sm:$0xf]
    %v6410 = vld [vmem:[%s6370 + $0x9c] sm:$0xf]
    %v6411 = vld [vmem:[%s6370 + $0xa0] sm:$0xf]
    %v6412 = vld [vmem:[%s6370 + $0xa4] sm:$0xf]
    %v6413 = vld [vmem:[%s6370 + $0xa8] sm:$0xf]
    %v6414 = vld [vmem:[%s6370 + $0xac] sm:$0xf]
    %v6415 = vld [vmem:[%s6370 + $0xb0] sm:$0xf]
    %v6416 = vld [vmem:[%s6370 + $0xb4] sm:$0xf]
    %v6417 = vld [vmem:[%s6370 + $0xb8] sm:$0xf]
    %v6418 = vld [vmem:[%s6370 + $0xbc] sm:$0xf]
    %v6419 = vld [vmem:[%s6370 + $0xc0] sm:$0xf]
    %v6420 = vld [vmem:[%s6370 + $0xc4] sm:$0xf]
    %v6421 = vld [vmem:[%s6370 + $0xc8] sm:$0xf]
    %v6422 = vld [vmem:[%s6370 + $0xcc] sm:$0xf]
    %v6423 = vld [vmem:[%s6370 + $0xd0] sm:$0xf]
    %v6424 = vld [vmem:[%s6370 + $0xd4] sm:$0xf]
    %v6425 = vld [vmem:[%s6370 + $0xd8] sm:$0xf]
    %v6426 = vld [vmem:[%s6370 + $0xdc] sm:$0xf]
    %v6427 = vld [vmem:[%s6370 + $0xe0] sm:$0xf]
    %v6428 = vld [vmem:[%s6370 + $0xe4] sm:$0xf]
    %v6429 = vld [vmem:[%s6370 + $0xe8] sm:$0xf]
    %v6430 = vld [vmem:[%s6370 + $0xec] sm:$0xf]
    %v6431 = vld [vmem:[%s6370 + $0xf0] sm:$0xf]
    %v6432 = vld [vmem:[%s6370 + $0xf4] sm:$0xf]
    %v6433 = vld [vmem:[%s6370 + $0xf8] sm:$0xf]
    %v6434 = vld [vmem:[%s6370 + $0xfc] sm:$0xf]
    %v6435 = vld [vmem:[%s6370 + $0x100] sm:$0xf]
    %v6436 = vld [vmem:[%s6370 + $0x104] sm:$0xf]
    %v6437 = vld [vmem:[%s6370 + $0x108] sm:$0xf]
    %v6438 = vld [vmem:[%s6370 + $0x10c] sm:$0xf]
    %v6439 = vld [vmem:[%s6370 + $0x110] sm:$0xf]
    %v6440 = vld [vmem:[%s6370 + $0x114] sm:$0xf]
    %v6441 = vld [vmem:[%s6370 + $0x118] sm:$0xf]
    %v6442 = vld [vmem:[%s6370 + $0x11c] sm:$0xf]
    %v6443 = vld [vmem:[%s6370 + $0x120] sm:$0xf]
    %v6444 = vld [vmem:[%s6370 + $0x124] sm:$0xf]
    %v6445 = vld [vmem:[%s6370 + $0x128] sm:$0xf]
    %v6446 = vld [vmem:[%s6370 + $0x12c] sm:$0xf]
    %v6447 = vld [vmem:[%s6370 + $0x130] sm:$0xf]
    %v6448 = vld [vmem:[%s6370 + $0x134] sm:$0xf]
    %v6449 = vld [vmem:[%s6370 + $0x138] sm:$0xf]
    %v6450 = vld [vmem:[%s6370 + $0x13c] sm:$0xf]
    %v6451 = vld [vmem:[%s6370 + $0x140] sm:$0xf]
    %v6452 = vld [vmem:[%s6370 + $0x144] sm:$0xf]
    %v6453 = vld [vmem:[%s6370 + $0x148] sm:$0xf]
    %v6454 = vld [vmem:[%s6370 + $0x14c] sm:$0xf]
    %v6455 = vld [vmem:[%s6370 + $0x150] sm:$0xf]
    %v6456 = vld [vmem:[%s6370 + $0x154] sm:$0xf]
    %v6457 = vld [vmem:[%s6370 + $0x158] sm:$0xf]
    %v6458 = vld [vmem:[%s6370 + $0x15c] sm:$0xf]
    %v6459 = vld [vmem:[%s6370 + $0x160] sm:$0xf]
    %v6460 = vld [vmem:[%s6370 + $0x164] sm:$0xf]
    %v6461 = vld [vmem:[%s6370 + $0x168] sm:$0xf]
    %v6462 = vld [vmem:[%s6370 + $0x16c] sm:$0xf]
    %v6463 = vld [vmem:[%s6370 + $0x170] sm:$0xf]
    %v6464 = vld [vmem:[%s6370 + $0x174] sm:$0xf]
    %v6465 = vld [vmem:[%s6370 + $0x178] sm:$0xf]
    %v6466 = vld [vmem:[%s6370 + $0x17c] sm:$0xf]
    %v6467 = vld [vmem:[%s6370 + $0x180] sm:$0xf]
    %v6468 = vld [vmem:[%s6370 + $0x184] sm:$0xf]
    %v6469 = vld [vmem:[%s6370 + $0x188] sm:$0xf]
    %v6470 = vld [vmem:[%s6370 + $0x18c] sm:$0xf]
    %v6471 = vld [vmem:[%s6370 + $0x190] sm:$0xf]
    %v6472 = vld [vmem:[%s6370 + $0x194] sm:$0xf]
    %v6473 = vld [vmem:[%s6370 + $0x198] sm:$0xf]
    %v6474 = vld [vmem:[%s6370 + $0x19c] sm:$0xf]
    %v6475 = vld [vmem:[%s6370 + $0x1a0] sm:$0xf]
    %v6476 = vld [vmem:[%s6370 + $0x1a4] sm:$0xf]
    %v6477 = vld [vmem:[%s6370 + $0x1a8] sm:$0xf]
    %v6478 = vld [vmem:[%s6370 + $0x1ac] sm:$0xf]
    %v6479 = vld [vmem:[%s6370 + $0x1b0] sm:$0xf]
    %v6480 = vld [vmem:[%s6370 + $0x1b4] sm:$0xf]
    %v6481 = vld [vmem:[%s6370 + $0x1b8] sm:$0xf]
    %v6482 = vld [vmem:[%s6370 + $0x1bc] sm:$0xf]
    %v6483 = vld [vmem:[%s6370 + $0x1c0] sm:$0xf]
    %v6484 = vld [vmem:[%s6370 + $0x1c4] sm:$0xf]
    %v6485 = vld [vmem:[%s6370 + $0x1c8] sm:$0xf]
    %v6486 = vld [vmem:[%s6370 + $0x1cc] sm:$0xf]
    %v6487 = vld [vmem:[%s6370 + $0x1d0] sm:$0xf]
    %v6488 = vld [vmem:[%s6370 + $0x1d4] sm:$0xf]
    %v6489 = vld [vmem:[%s6370 + $0x1d8] sm:$0xf]
    %v6490 = vld [vmem:[%s6370 + $0x1dc] sm:$0xf]
    %v6491 = vld [vmem:[%s6370 + $0x1e0] sm:$0xf]
    %v6492 = vld [vmem:[%s6370 + $0x1e4] sm:$0xf]
    %v6493 = vld [vmem:[%s6370 + $0x1e8] sm:$0xf]
    %v6494 = vld [vmem:[%s6370 + $0x1ec] sm:$0xf]
    %v6495 = vld [vmem:[%s6370 + $0x1f0] sm:$0xf]
    %v6496 = vld [vmem:[%s6370 + $0x1f4] sm:$0xf]
    %v6497 = vld [vmem:[%s6370 + $0x1f8] sm:$0xf]
    %v6498 = vld [vmem:[%s6370 + $0x1fc] sm:$0xf]
    %v6499 = vld [vmem:[%s6370 + $0x200] sm:$0xf]
    %v6500 = vld [vmem:[%s6370 + $0x204] sm:$0xf]
    %v6501 = vld [vmem:[%s6370 + $0x208] sm:$0xf]
    %v6502 = vld [vmem:[%s6370 + $0x20c] sm:$0xf]
    %v6503 = vld [vmem:[%s6370 + $0x210] sm:$0xf]
    %v6504 = vld [vmem:[%s6370 + $0x214] sm:$0xf]
    %v6505 = vld [vmem:[%s6370 + $0x218] sm:$0xf]
    %v6506 = vld [vmem:[%s6370 + $0x21c] sm:$0xf]
    %v6507 = vld [vmem:[%s6370 + $0x220] sm:$0xf]
    %v6508 = vld [vmem:[%s6370 + $0x224] sm:$0xf]
    %v6509 = vld [vmem:[%s6370 + $0x228] sm:$0xf]
    %v6510 = vld [vmem:[%s6370 + $0x22c] sm:$0xf]
    %v6511 = vld [vmem:[%s6370 + $0x230] sm:$0xf]
    %v6512 = vld [vmem:[%s6370 + $0x234] sm:$0xf]
    %v6513 = vld [vmem:[%s6370 + $0x238] sm:$0xf]
    %v6514 = vld [vmem:[%s6370 + $0x23c] sm:$0xf]
    %v6515 = vld [vmem:[%s6370 + $0x240] sm:$0xf]
    %v6516 = vld [vmem:[%s6370 + $0x244] sm:$0xf]
    %v6517 = vld [vmem:[%s6370 + $0x248] sm:$0xf]
    %v6518 = vld [vmem:[%s6370 + $0x24c] sm:$0xf]
    %v6519 = vld [vmem:[%s6370 + $0x250] sm:$0xf]
    %v6520 = vld [vmem:[%s6370 + $0x254] sm:$0xf]
    %v6521 = vld [vmem:[%s6370 + $0x258] sm:$0xf]
    %v6522 = vld [vmem:[%s6370 + $0x25c] sm:$0xf]
    %v6523 = vld [vmem:[%s6370 + $0x260] sm:$0xf]
    %v6524 = vld [vmem:[%s6370 + $0x264] sm:$0xf]
    %v6525 = vld [vmem:[%s6370 + $0x268] sm:$0xf]
    %v6526 = vld [vmem:[%s6370 + $0x26c] sm:$0xf]
    %v6527 = vld [vmem:[%s6370 + $0x270] sm:$0xf]
    %v6528 = vld [vmem:[%s6370 + $0x274] sm:$0xf]
    %v6529 = vld [vmem:[%s6370 + $0x278] sm:$0xf]
    %v6530 = vld [vmem:[%s6370 + $0x27c] sm:$0xf]
    %v6531 = vld [vmem:[%s6370 + $0x280] sm:$0xf]
    %v6532 = vld [vmem:[%s6370 + $0x284] sm:$0xf]
    %v6533 = vld [vmem:[%s6370 + $0x288] sm:$0xf]
    %v6534 = vld [vmem:[%s6370 + $0x28c] sm:$0xf]
    %v6535 = vld [vmem:[%s6370 + $0x290] sm:$0xf]
    %v6536 = vld [vmem:[%s6370 + $0x294] sm:$0xf]
    %v6537 = vld [vmem:[%s6370 + $0x298] sm:$0xf]
    %v6538 = vld [vmem:[%s6370 + $0x29c] sm:$0xf]
    %v6539 = vld [vmem:[%s6370 + $0x2a0] sm:$0xf]
    %v6540 = vld [vmem:[%s6370 + $0x2a4] sm:$0xf]
    %v6541 = vld [vmem:[%s6370 + $0x2a8] sm:$0xf]
    %v6542 = vld [vmem:[%s6370 + $0x2ac] sm:$0xf]
    %v6543 = vld [vmem:[%s6370 + $0x2b0] sm:$0xf]
    %v6544 = vld [vmem:[%s6370 + $0x2b4] sm:$0xf]
    %v6545 = vld [vmem:[%s6370 + $0x2b8] sm:$0xf]
    %v6546 = vld [vmem:[%s6370 + $0x2bc] sm:$0xf]
    %v6547 = vld [vmem:[%s6370 + $0x2c0] sm:$0xf]
    %v6548 = vld [vmem:[%s6370 + $0x2c4] sm:$0xf]
    %v6549 = vld [vmem:[%s6370 + $0x2c8] sm:$0xf]
    %v6550 = vld [vmem:[%s6370 + $0x2cc] sm:$0xf]
    %v6551 = vld [vmem:[%s6370 + $0x2d0] sm:$0xf]
    %v6552 = vld [vmem:[%s6370 + $0x2d4] sm:$0xf]
    %v6553 = vld [vmem:[%s6370 + $0x2d8] sm:$0xf]
    %v6554 = vld [vmem:[%s6370 + $0x2dc] sm:$0xf]
    %v6555 = vld [vmem:[%s6370 + $0x2e0] sm:$0xf]
    %v6556 = vld [vmem:[%s6370 + $0x2e4] sm:$0xf]
    %v6557 = vld [vmem:[%s6370 + $0x2e8] sm:$0xf]
    %v6558 = vld [vmem:[%s6370 + $0x2ec] sm:$0xf]
    %v6559 = vld [vmem:[%s6370 + $0x2f0] sm:$0xf]
    %v6560 = vld [vmem:[%s6370 + $0x2f4] sm:$0xf]
    %v6561 = vld [vmem:[%s6370 + $0x2f8] sm:$0xf]
    %v6562 = vld [vmem:[%s6370 + $0x2fc] sm:$0xf]
    %v6563 = vld [vmem:[%s6370 + $0x300] sm:$0xf]
    %v6564 = vld [vmem:[%s6370 + $0x304] sm:$0xf]
    %v6565 = vld [vmem:[%s6370 + $0x308] sm:$0xf]
    %v6566 = vld [vmem:[%s6370 + $0x30c] sm:$0xf]
    %v6567 = vld [vmem:[%s6370 + $0x310] sm:$0xf]
    %v6568 = vld [vmem:[%s6370 + $0x314] sm:$0xf]
    %v6569 = vld [vmem:[%s6370 + $0x318] sm:$0xf]
    %v6570 = vld [vmem:[%s6370 + $0x31c] sm:$0xf]
    %v6571 = vld [vmem:[%s6370 + $0x320] sm:$0xf]
    %v6572 = vld [vmem:[%s6370 + $0x324] sm:$0xf]
    %v6573 = vld [vmem:[%s6370 + $0x328] sm:$0xf]
    %v6574 = vld [vmem:[%s6370 + $0x32c] sm:$0xf]
    %v6575 = vld [vmem:[%s6370 + $0x330] sm:$0xf]
    %v6576 = vld [vmem:[%s6370 + $0x334] sm:$0xf]
    %v6577 = vld [vmem:[%s6370 + $0x338] sm:$0xf]
    %v6578 = vld [vmem:[%s6370 + $0x33c] sm:$0xf]
    %v6579 = vld [vmem:[%s6370 + $0x340] sm:$0xf]
    %v6580 = vld [vmem:[%s6370 + $0x344] sm:$0xf]
    %v6581 = vld [vmem:[%s6370 + $0x348] sm:$0xf]
    %v6582 = vld [vmem:[%s6370 + $0x34c] sm:$0xf]
    %v6583 = vld [vmem:[%s6370 + $0x350] sm:$0xf]
    %v6584 = vld [vmem:[%s6370 + $0x354] sm:$0xf]
    %v6585 = vld [vmem:[%s6370 + $0x358] sm:$0xf]
    %v6586 = vld [vmem:[%s6370 + $0x35c] sm:$0xf]
    %v6587 = vld [vmem:[%s6370 + $0x360] sm:$0xf]
    %v6588 = vld [vmem:[%s6370 + $0x364] sm:$0xf]
    %v6589 = vld [vmem:[%s6370 + $0x368] sm:$0xf]
    %v6590 = vld [vmem:[%s6370 + $0x36c] sm:$0xf]
    %v6591 = vld [vmem:[%s6370 + $0x370] sm:$0xf]
    %v6592 = vld [vmem:[%s6370 + $0x374] sm:$0xf]
    %v6593 = vld [vmem:[%s6370 + $0x378] sm:$0xf]
    %v6594 = vld [vmem:[%s6370 + $0x37c] sm:$0xf]
    %v6595 = vld [vmem:[%s6370 + $0x380] sm:$0xf]
    %v6596 = vld [vmem:[%s6370 + $0x384] sm:$0xf]
    %v6597 = vld [vmem:[%s6370 + $0x388] sm:$0xf]
    %v6598 = vld [vmem:[%s6370 + $0x38c] sm:$0xf]
    %v6599 = vld [vmem:[%s6370 + $0x390] sm:$0xf]
    %v6600 = vld [vmem:[%s6370 + $0x394] sm:$0xf]
    %v6601 = vld [vmem:[%s6370 + $0x398] sm:$0xf]
    %v6602 = vld [vmem:[%s6370 + $0x39c] sm:$0xf]
    %v6603 = vld [vmem:[%s6370 + $0x3a0] sm:$0xf]
    %v6604 = vld [vmem:[%s6370 + $0x3a4] sm:$0xf]
    %v6605 = vld [vmem:[%s6370 + $0x3a8] sm:$0xf]
    %v6606 = vld [vmem:[%s6370 + $0x3ac] sm:$0xf]
    %v6607 = vld [vmem:[%s6370 + $0x3b0] sm:$0xf]
    %v6608 = vld [vmem:[%s6370 + $0x3b4] sm:$0xf]
    %v6609 = vld [vmem:[%s6370 + $0x3b8] sm:$0xf]
    %v6610 = vld [vmem:[%s6370 + $0x3bc] sm:$0xf]
    %v6611 = vld [vmem:[%s6370 + $0x3c0] sm:$0xf]
    %v6612 = vld [vmem:[%s6370 + $0x3c4] sm:$0xf]
    %v6613 = vld [vmem:[%s6370 + $0x3c8] sm:$0xf]
    %v6614 = vld [vmem:[%s6370 + $0x3cc] sm:$0xf]
    %v6615 = vld [vmem:[%s6370 + $0x3d0] sm:$0xf]
    %v6616 = vld [vmem:[%s6370 + $0x3d4] sm:$0xf]
    %v6617 = vld [vmem:[%s6370 + $0x3d8] sm:$0xf]
    %v6618 = vld [vmem:[%s6370 + $0x3dc] sm:$0xf]
    %v6619 = vld [vmem:[%s6370 + $0x3e0] sm:$0xf]
    %v6620 = vld [vmem:[%s6370 + $0x3e4] sm:$0xf]
    %v6621 = vld [vmem:[%s6370 + $0x3e8] sm:$0xf]
    %v6622 = vld [vmem:[%s6370 + $0x3ec] sm:$0xf]
    %v6623 = vld [vmem:[%s6370 + $0x3f0] sm:$0xf]
    %v6624 = vld [vmem:[%s6370 + $0x3f4] sm:$0xf]
    %v6625 = vld [vmem:[%s6370 + $0x3f8] sm:$0xf]
    %v6626 = vld [vmem:[%s6370 + $0x3fc] sm:$0xf]
    %s6627 = scalar_lea.vmem %s20, 1
    %v6628 = vld [vmem:[%s6627] sm:$0x1]
    %v6629 = vpack.c.bf16 %v6354, %v6338
    %v6630 = vpack.c.bf16 %v6355, %v6339
    %v6631 = vpack.c.bf16 %v6356, %v6340
    %v6632 = vpack.c.bf16 %v6357, %v6341
    %v6633 = vpack.c.bf16 %v6358, %v6342
    %v6634 = vpack.c.bf16 %v6359, %v6343
    %v6635 = vpack.c.bf16 %v6360, %v6344
    %v6636 = vpack.c.bf16 %v6361, %v6345
    %v6637 = vpack.c.bf16 %v6362, %v6346
    %v6638 = vpack.c.bf16 %v6363, %v6347
    %v6639 = vpack.c.bf16 %v6364, %v6348
    %v6640 = vpack.c.bf16 %v6365, %v6349
    %v6641 = vpack.c.bf16 %v6366, %v6350
    %v6642 = vpack.c.bf16 %v6367, %v6351
    %v6643 = vpack.c.bf16 %v6368, %v6352
    %v6644 = vpack.c.bf16 %v6369, %v6353
    %v6646 = vlaneseq
    %v6647 = vshrl.u32 %v6646, 7
    %v6648 = vsub.s32 0, %v6647
    %v6649 = vrot.slane %v6628, %v6648
    %v6907 = vunpack.c.l.b16 %v6371
    %v6908 = vunpack.c.l.b16 %v6372
    %v6909 = vunpack.c.l.b16 %v6373
    %v6910 = vunpack.c.l.b16 %v6374
    %v6911 = vunpack.c.l.b16 %v6375
    %v6912 = vunpack.c.l.b16 %v6376
    %v6913 = vunpack.c.l.b16 %v6377
    %v6914 = vunpack.c.l.b16 %v6378
    %v6915 = vunpack.c.l.b16 %v6379
    %v6916 = vunpack.c.l.b16 %v6380
    %v6917 = vunpack.c.l.b16 %v6381
    %v6918 = vunpack.c.l.b16 %v6382
    %v6919 = vunpack.c.l.b16 %v6383
    %v6920 = vunpack.c.l.b16 %v6384
    %v6921 = vunpack.c.l.b16 %v6385
    %v6922 = vunpack.c.l.b16 %v6386
    %v6923 = vunpack.c.l.b16 %v6387
    %v6924 = vunpack.c.l.b16 %v6388
    %v6925 = vunpack.c.l.b16 %v6389
    %v6926 = vunpack.c.l.b16 %v6390
    %v6927 = vunpack.c.l.b16 %v6391
    %v6928 = vunpack.c.l.b16 %v6392
    %v6929 = vunpack.c.l.b16 %v6393
    %v6930 = vunpack.c.l.b16 %v6394
    %v6931 = vunpack.c.l.b16 %v6395
    %v6932 = vunpack.c.l.b16 %v6396
    %v6933 = vunpack.c.l.b16 %v6397
    %v6934 = vunpack.c.l.b16 %v6398
    %v6935 = vunpack.c.l.b16 %v6399
    %v6936 = vunpack.c.l.b16 %v6400
    %v6937 = vunpack.c.l.b16 %v6401
    %v6938 = vunpack.c.l.b16 %v6402
    %v6939 = vunpack.c.l.b16 %v6403
    %v6940 = vunpack.c.l.b16 %v6404
    %v6941 = vunpack.c.l.b16 %v6405
    %v6942 = vunpack.c.l.b16 %v6406
    %v6943 = vunpack.c.l.b16 %v6407
    %v6944 = vunpack.c.l.b16 %v6408
    %v6945 = vunpack.c.l.b16 %v6409
    %v6946 = vunpack.c.l.b16 %v6410
    %v6947 = vunpack.c.l.b16 %v6411
    %v6948 = vunpack.c.l.b16 %v6412
    %v6949 = vunpack.c.l.b16 %v6413
    %v6950 = vunpack.c.l.b16 %v6414
    %v6951 = vunpack.c.l.b16 %v6415
    %v6952 = vunpack.c.l.b16 %v6416
    %v6953 = vunpack.c.l.b16 %v6417
    %v6954 = vunpack.c.l.b16 %v6418
    %v6955 = vunpack.c.l.b16 %v6419
    %v6956 = vunpack.c.l.b16 %v6420
    %v6957 = vunpack.c.l.b16 %v6421
    %v6958 = vunpack.c.l.b16 %v6422
    %v6959 = vunpack.c.l.b16 %v6423
    %v6960 = vunpack.c.l.b16 %v6424
    %v6961 = vunpack.c.l.b16 %v6425
    %v6962 = vunpack.c.l.b16 %v6426
    %v6963 = vunpack.c.l.b16 %v6427
    %v6964 = vunpack.c.l.b16 %v6428
    %v6965 = vunpack.c.l.b16 %v6429
    %v6966 = vunpack.c.l.b16 %v6430
    %v6967 = vunpack.c.l.b16 %v6431
    %v6968 = vunpack.c.l.b16 %v6432
    %v6969 = vunpack.c.l.b16 %v6433
    %v6970 = vunpack.c.l.b16 %v6434
    %v6971 = vunpack.c.l.b16 %v6435
    %v6972 = vunpack.c.l.b16 %v6436
    %v6973 = vunpack.c.l.b16 %v6437
    %v6974 = vunpack.c.l.b16 %v6438
    %v6975 = vunpack.c.l.b16 %v6439
    %v6976 = vunpack.c.l.b16 %v6440
    %v6977 = vunpack.c.l.b16 %v6441
    %v6978 = vunpack.c.l.b16 %v6442
    %v6979 = vunpack.c.l.b16 %v6443
    %v6980 = vunpack.c.l.b16 %v6444
    %v6981 = vunpack.c.l.b16 %v6445
    %v6982 = vunpack.c.l.b16 %v6446
    %v6983 = vunpack.c.l.b16 %v6447
    %v6984 = vunpack.c.l.b16 %v6448
    %v6985 = vunpack.c.l.b16 %v6449
    %v6986 = vunpack.c.l.b16 %v6450
    %v6987 = vunpack.c.l.b16 %v6451
    %v6988 = vunpack.c.l.b16 %v6452
    %v6989 = vunpack.c.l.b16 %v6453
    %v6990 = vunpack.c.l.b16 %v6454
    %v6991 = vunpack.c.l.b16 %v6455
    %v6992 = vunpack.c.l.b16 %v6456
    %v6993 = vunpack.c.l.b16 %v6457
    %v6994 = vunpack.c.l.b16 %v6458
    %v6995 = vunpack.c.l.b16 %v6459
    %v6996 = vunpack.c.l.b16 %v6460
    %v6997 = vunpack.c.l.b16 %v6461
    %v6998 = vunpack.c.l.b16 %v6462
    %v6999 = vunpack.c.l.b16 %v6463
    %v7000 = vunpack.c.l.b16 %v6464
    %v7001 = vunpack.c.l.b16 %v6465
    %v7002 = vunpack.c.l.b16 %v6466
    %v7003 = vunpack.c.l.b16 %v6467
    %v7004 = vunpack.c.l.b16 %v6468
    %v7005 = vunpack.c.l.b16 %v6469
    %v7006 = vunpack.c.l.b16 %v6470
    %v7007 = vunpack.c.l.b16 %v6471
    %v7008 = vunpack.c.l.b16 %v6472
    %v7009 = vunpack.c.l.b16 %v6473
    %v7010 = vunpack.c.l.b16 %v6474
    %v7011 = vunpack.c.l.b16 %v6475
    %v7012 = vunpack.c.l.b16 %v6476
    %v7013 = vunpack.c.l.b16 %v6477
    %v7014 = vunpack.c.l.b16 %v6478
    %v7015 = vunpack.c.l.b16 %v6479
    %v7016 = vunpack.c.l.b16 %v6480
    %v7017 = vunpack.c.l.b16 %v6481
    %v7018 = vunpack.c.l.b16 %v6482
    %v7019 = vunpack.c.l.b16 %v6483
    %v7020 = vunpack.c.l.b16 %v6484
    %v7021 = vunpack.c.l.b16 %v6485
    %v7022 = vunpack.c.l.b16 %v6486
    %v7023 = vunpack.c.l.b16 %v6487
    %v7024 = vunpack.c.l.b16 %v6488
    %v7025 = vunpack.c.l.b16 %v6489
    %v7026 = vunpack.c.l.b16 %v6490
    %v7027 = vunpack.c.l.b16 %v6491
    %v7028 = vunpack.c.l.b16 %v6492
    %v7029 = vunpack.c.l.b16 %v6493
    %v7030 = vunpack.c.l.b16 %v6494
    %v7031 = vunpack.c.l.b16 %v6495
    %v7032 = vunpack.c.l.b16 %v6496
    %v7033 = vunpack.c.l.b16 %v6497
    %v7034 = vunpack.c.l.b16 %v6498
    %v7035 = vunpack.c.l.b16 %v6499
    %v7036 = vunpack.c.l.b16 %v6500
    %v7037 = vunpack.c.l.b16 %v6501
    %v7038 = vunpack.c.l.b16 %v6502
    %v7039 = vunpack.c.l.b16 %v6503
    %v7040 = vunpack.c.l.b16 %v6504
    %v7041 = vunpack.c.l.b16 %v6505
    %v7042 = vunpack.c.l.b16 %v6506
    %v7043 = vunpack.c.l.b16 %v6507
    %v7044 = vunpack.c.l.b16 %v6508
    %v7045 = vunpack.c.l.b16 %v6509
    %v7046 = vunpack.c.l.b16 %v6510
    %v7047 = vunpack.c.l.b16 %v6511
    %v7048 = vunpack.c.l.b16 %v6512
    %v7049 = vunpack.c.l.b16 %v6513
    %v7050 = vunpack.c.l.b16 %v6514
    %v7051 = vunpack.c.l.b16 %v6515
    %v7052 = vunpack.c.l.b16 %v6516
    %v7053 = vunpack.c.l.b16 %v6517
    %v7054 = vunpack.c.l.b16 %v6518
    %v7055 = vunpack.c.l.b16 %v6519
    %v7056 = vunpack.c.l.b16 %v6520
    %v7057 = vunpack.c.l.b16 %v6521
    %v7058 = vunpack.c.l.b16 %v6522
    %v7059 = vunpack.c.l.b16 %v6523
    %v7060 = vunpack.c.l.b16 %v6524
    %v7061 = vunpack.c.l.b16 %v6525
    %v7062 = vunpack.c.l.b16 %v6526
    %v7063 = vunpack.c.l.b16 %v6527
    %v7064 = vunpack.c.l.b16 %v6528
    %v7065 = vunpack.c.l.b16 %v6529
    %v7066 = vunpack.c.l.b16 %v6530
    %v7067 = vunpack.c.l.b16 %v6531
    %v7068 = vunpack.c.l.b16 %v6532
    %v7069 = vunpack.c.l.b16 %v6533
    %v7070 = vunpack.c.l.b16 %v6534
    %v7071 = vunpack.c.l.b16 %v6535
    %v7072 = vunpack.c.l.b16 %v6536
    %v7073 = vunpack.c.l.b16 %v6537
    %v7074 = vunpack.c.l.b16 %v6538
    %v7075 = vunpack.c.l.b16 %v6539
    %v7076 = vunpack.c.l.b16 %v6540
    %v7077 = vunpack.c.l.b16 %v6541
    %v7078 = vunpack.c.l.b16 %v6542
    %v7079 = vunpack.c.l.b16 %v6543
    %v7080 = vunpack.c.l.b16 %v6544
    %v7081 = vunpack.c.l.b16 %v6545
    %v7082 = vunpack.c.l.b16 %v6546
    %v7083 = vunpack.c.l.b16 %v6547
    %v7084 = vunpack.c.l.b16 %v6548
    %v7085 = vunpack.c.l.b16 %v6549
    %v7086 = vunpack.c.l.b16 %v6550
    %v7087 = vunpack.c.l.b16 %v6551
    %v7088 = vunpack.c.l.b16 %v6552
    %v7089 = vunpack.c.l.b16 %v6553
    %v7090 = vunpack.c.l.b16 %v6554
    %v7091 = vunpack.c.l.b16 %v6555
    %v7092 = vunpack.c.l.b16 %v6556
    %v7093 = vunpack.c.l.b16 %v6557
    %v7094 = vunpack.c.l.b16 %v6558
    %v7095 = vunpack.c.l.b16 %v6559
    %v7096 = vunpack.c.l.b16 %v6560
    %v7097 = vunpack.c.l.b16 %v6561
    %v7098 = vunpack.c.l.b16 %v6562
    %v7099 = vunpack.c.l.b16 %v6563
    %v7100 = vunpack.c.l.b16 %v6564
    %v7101 = vunpack.c.l.b16 %v6565
    %v7102 = vunpack.c.l.b16 %v6566
    %v7103 = vunpack.c.l.b16 %v6567
    %v7104 = vunpack.c.l.b16 %v6568
    %v7105 = vunpack.c.l.b16 %v6569
    %v7106 = vunpack.c.l.b16 %v6570
    %v7107 = vunpack.c.l.b16 %v6571
    %v7108 = vunpack.c.l.b16 %v6572
    %v7109 = vunpack.c.l.b16 %v6573
    %v7110 = vunpack.c.l.b16 %v6574
    %v7111 = vunpack.c.l.b16 %v6575
    %v7112 = vunpack.c.l.b16 %v6576
    %v7113 = vunpack.c.l.b16 %v6577
    %v7114 = vunpack.c.l.b16 %v6578
    %v7115 = vunpack.c.l.b16 %v6579
    %v7116 = vunpack.c.l.b16 %v6580
    %v7117 = vunpack.c.l.b16 %v6581
    %v7118 = vunpack.c.l.b16 %v6582
    %v7119 = vunpack.c.l.b16 %v6583
    %v7120 = vunpack.c.l.b16 %v6584
    %v7121 = vunpack.c.l.b16 %v6585
    %v7122 = vunpack.c.l.b16 %v6586
    %v7123 = vunpack.c.l.b16 %v6587
    %v7124 = vunpack.c.l.b16 %v6588
    %v7125 = vunpack.c.l.b16 %v6589
    %v7126 = vunpack.c.l.b16 %v6590
    %v7127 = vunpack.c.l.b16 %v6591
    %v7128 = vunpack.c.l.b16 %v6592
    %v7129 = vunpack.c.l.b16 %v6593
    %v7130 = vunpack.c.l.b16 %v6594
    %v7131 = vunpack.c.l.b16 %v6595
    %v7132 = vunpack.c.l.b16 %v6596
    %v7133 = vunpack.c.l.b16 %v6597
    %v7134 = vunpack.c.l.b16 %v6598
    %v7135 = vunpack.c.l.b16 %v6599
    %v7136 = vunpack.c.l.b16 %v6600
    %v7137 = vunpack.c.l.b16 %v6601
    %v7138 = vunpack.c.l.b16 %v6602
    %v7139 = vunpack.c.l.b16 %v6603
    %v7140 = vunpack.c.l.b16 %v6604
    %v7141 = vunpack.c.l.b16 %v6605
    %v7142 = vunpack.c.l.b16 %v6606
    %v7143 = vunpack.c.l.b16 %v6607
    %v7144 = vunpack.c.l.b16 %v6608
    %v7145 = vunpack.c.l.b16 %v6609
    %v7146 = vunpack.c.l.b16 %v6610
    %v7147 = vunpack.c.l.b16 %v6611
    %v7148 = vunpack.c.l.b16 %v6612
    %v7149 = vunpack.c.l.b16 %v6613
    %v7150 = vunpack.c.l.b16 %v6614
    %v7151 = vunpack.c.l.b16 %v6615
    %v7152 = vunpack.c.l.b16 %v6616
    %v7153 = vunpack.c.l.b16 %v6617
    %v7154 = vunpack.c.l.b16 %v6618
    %v7155 = vunpack.c.l.b16 %v6619
    %v7156 = vunpack.c.l.b16 %v6620
    %v7157 = vunpack.c.l.b16 %v6621
    %v7158 = vunpack.c.l.b16 %v6622
    %v7159 = vunpack.c.l.b16 %v6623
    %v7160 = vunpack.c.l.b16 %v6624
    %v7161 = vunpack.c.l.b16 %v6625
    %v7162 = vunpack.c.l.b16 %v6626
    %v7163 = vpack.c.b16 %v6908, %v6907
    %v7164 = vpack.c.b16 %v6910, %v6909
    %v7165 = vpack.c.b16 %v6912, %v6911
    %v7166 = vpack.c.b16 %v6914, %v6913
    %v7167 = vpack.c.b16 %v6916, %v6915
    %v7168 = vpack.c.b16 %v6918, %v6917
    %v7169 = vpack.c.b16 %v6920, %v6919
    %v7170 = vpack.c.b16 %v6922, %v6921
    %v7171 = vpack.c.b16 %v6924, %v6923
    %v7172 = vpack.c.b16 %v6926, %v6925
    %v7173 = vpack.c.b16 %v6928, %v6927
    %v7174 = vpack.c.b16 %v6930, %v6929
    %v7175 = vpack.c.b16 %v6932, %v6931
    %v7176 = vpack.c.b16 %v6934, %v6933
    %v7177 = vpack.c.b16 %v6936, %v6935
    %v7178 = vpack.c.b16 %v6938, %v6937
    %v7179 = vpack.c.b16 %v6940, %v6939
    %v7180 = vpack.c.b16 %v6942, %v6941
    %v7181 = vpack.c.b16 %v6944, %v6943
    %v7182 = vpack.c.b16 %v6946, %v6945
    %v7183 = vpack.c.b16 %v6948, %v6947
    %v7184 = vpack.c.b16 %v6950, %v6949
    %v7185 = vpack.c.b16 %v6952, %v6951
    %v7186 = vpack.c.b16 %v6954, %v6953
    %v7187 = vpack.c.b16 %v6956, %v6955
    %v7188 = vpack.c.b16 %v6958, %v6957
    %v7189 = vpack.c.b16 %v6960, %v6959
    %v7190 = vpack.c.b16 %v6962, %v6961
    %v7191 = vpack.c.b16 %v6964, %v6963
    %v7192 = vpack.c.b16 %v6966, %v6965
    %v7193 = vpack.c.b16 %v6968, %v6967
    %v7194 = vpack.c.b16 %v6970, %v6969
    %v7195 = vpack.c.b16 %v6972, %v6971
    %v7196 = vpack.c.b16 %v6974, %v6973
    %v7197 = vpack.c.b16 %v6976, %v6975
    %v7198 = vpack.c.b16 %v6978, %v6977
    %v7199 = vpack.c.b16 %v6980, %v6979
    %v7200 = vpack.c.b16 %v6982, %v6981
    %v7201 = vpack.c.b16 %v6984, %v6983
    %v7202 = vpack.c.b16 %v6986, %v6985
    %v7203 = vpack.c.b16 %v6988, %v6987
    %v7204 = vpack.c.b16 %v6990, %v6989
    %v7205 = vpack.c.b16 %v6992, %v6991
    %v7206 = vpack.c.b16 %v6994, %v6993
    %v7207 = vpack.c.b16 %v6996, %v6995
    %v7208 = vpack.c.b16 %v6998, %v6997
    %v7209 = vpack.c.b16 %v7000, %v6999
    %v7210 = vpack.c.b16 %v7002, %v7001
    %v7211 = vpack.c.b16 %v7004, %v7003
    %v7212 = vpack.c.b16 %v7006, %v7005
    %v7213 = vpack.c.b16 %v7008, %v7007
    %v7214 = vpack.c.b16 %v7010, %v7009
    %v7215 = vpack.c.b16 %v7012, %v7011
    %v7216 = vpack.c.b16 %v7014, %v7013
    %v7217 = vpack.c.b16 %v7016, %v7015
    %v7218 = vpack.c.b16 %v7018, %v7017
    %v7219 = vpack.c.b16 %v7020, %v7019
    %v7220 = vpack.c.b16 %v7022, %v7021
    %v7221 = vpack.c.b16 %v7024, %v7023
    %v7222 = vpack.c.b16 %v7026, %v7025
    %v7223 = vpack.c.b16 %v7028, %v7027
    %v7224 = vpack.c.b16 %v7030, %v7029
    %v7225 = vpack.c.b16 %v7032, %v7031
    %v7226 = vpack.c.b16 %v7034, %v7033
    %v7227 = vpack.c.b16 %v7036, %v7035
    %v7228 = vpack.c.b16 %v7038, %v7037
    %v7229 = vpack.c.b16 %v7040, %v7039
    %v7230 = vpack.c.b16 %v7042, %v7041
    %v7231 = vpack.c.b16 %v7044, %v7043
    %v7232 = vpack.c.b16 %v7046, %v7045
    %v7233 = vpack.c.b16 %v7048, %v7047
    %v7234 = vpack.c.b16 %v7050, %v7049
    %v7235 = vpack.c.b16 %v7052, %v7051
    %v7236 = vpack.c.b16 %v7054, %v7053
    %v7237 = vpack.c.b16 %v7056, %v7055
    %v7238 = vpack.c.b16 %v7058, %v7057
    %v7239 = vpack.c.b16 %v7060, %v7059
    %v7240 = vpack.c.b16 %v7062, %v7061
    %v7241 = vpack.c.b16 %v7064, %v7063
    %v7242 = vpack.c.b16 %v7066, %v7065
    %v7243 = vpack.c.b16 %v7068, %v7067
    %v7244 = vpack.c.b16 %v7070, %v7069
    %v7245 = vpack.c.b16 %v7072, %v7071
    %v7246 = vpack.c.b16 %v7074, %v7073
    %v7247 = vpack.c.b16 %v7076, %v7075
    %v7248 = vpack.c.b16 %v7078, %v7077
    %v7249 = vpack.c.b16 %v7080, %v7079
    %v7250 = vpack.c.b16 %v7082, %v7081
    %v7251 = vpack.c.b16 %v7084, %v7083
    %v7252 = vpack.c.b16 %v7086, %v7085
    %v7253 = vpack.c.b16 %v7088, %v7087
    %v7254 = vpack.c.b16 %v7090, %v7089
    %v7255 = vpack.c.b16 %v7092, %v7091
    %v7256 = vpack.c.b16 %v7094, %v7093
    %v7257 = vpack.c.b16 %v7096, %v7095
    %v7258 = vpack.c.b16 %v7098, %v7097
    %v7259 = vpack.c.b16 %v7100, %v7099
    %v7260 = vpack.c.b16 %v7102, %v7101
    %v7261 = vpack.c.b16 %v7104, %v7103
    %v7262 = vpack.c.b16 %v7106, %v7105
    %v7263 = vpack.c.b16 %v7108, %v7107
    %v7264 = vpack.c.b16 %v7110, %v7109
    %v7265 = vpack.c.b16 %v7112, %v7111
    %v7266 = vpack.c.b16 %v7114, %v7113
    %v7267 = vpack.c.b16 %v7116, %v7115
    %v7268 = vpack.c.b16 %v7118, %v7117
    %v7269 = vpack.c.b16 %v7120, %v7119
    %v7270 = vpack.c.b16 %v7122, %v7121
    %v7271 = vpack.c.b16 %v7124, %v7123
    %v7272 = vpack.c.b16 %v7126, %v7125
    %v7273 = vpack.c.b16 %v7128, %v7127
    %v7274 = vpack.c.b16 %v7130, %v7129
    %v7275 = vpack.c.b16 %v7132, %v7131
    %v7276 = vpack.c.b16 %v7134, %v7133
    %v7277 = vpack.c.b16 %v7136, %v7135
    %v7278 = vpack.c.b16 %v7138, %v7137
    %v7279 = vpack.c.b16 %v7140, %v7139
    %v7280 = vpack.c.b16 %v7142, %v7141
    %v7281 = vpack.c.b16 %v7144, %v7143
    %v7282 = vpack.c.b16 %v7146, %v7145
    %v7283 = vpack.c.b16 %v7148, %v7147
    %v7284 = vpack.c.b16 %v7150, %v7149
    %v7285 = vpack.c.b16 %v7152, %v7151
    %v7286 = vpack.c.b16 %v7154, %v7153
    %v7287 = vpack.c.b16 %v7156, %v7155
    %v7288 = vpack.c.b16 %v7158, %v7157
    %v7289 = vpack.c.b16 %v7160, %v7159
    %v7290 = vpack.c.b16 %v7162, %v7161
    %7419 = vmatprep.subr.bf16.mxu0 0
    %7420 = vmatpush1.bf16.msra.mxu0 %v7163
    %7421 = vmatprep.subr.bf16.mxu0 0
    %7422 = vmatpush1.bf16.msra.mxu0 %v7164
    %7423 = vmatprep.subr.bf16.mxu0 0
    %7424 = vmatpush1.bf16.msra.mxu0 %v7165
    %7425 = vmatprep.subr.bf16.mxu0 0
    %7426 = vmatpush1.bf16.msra.mxu0 %v7166
    %7427 = vmatprep.subr.bf16.mxu0 0
    %7428 = vmatpush1.bf16.msra.mxu0 %v7167
    %7429 = vmatprep.subr.bf16.mxu0 0
    %7430 = vmatpush1.bf16.msra.mxu0 %v7168
    %7431 = vmatprep.subr.bf16.mxu0 0
    %7432 = vmatpush1.bf16.msra.mxu0 %v7169
    %7433 = vmatprep.subr.bf16.mxu0 0
    %7434 = vmatpush1.bf16.msra.mxu0 %v7170
    %7435 = vmatprep.subr.bf16.mxu0 0
    %7436 = vmatpush1.bf16.msra.mxu0 %v7171
    %7437 = vmatprep.subr.bf16.mxu0 0
    %7438 = vmatpush1.bf16.msra.mxu0 %v7172
    %7439 = vmatprep.subr.bf16.mxu0 0
    %7440 = vmatpush1.bf16.msra.mxu0 %v7173
    %7441 = vmatprep.subr.bf16.mxu0 0
    %7442 = vmatpush1.bf16.msra.mxu0 %v7174
    %7443 = vmatprep.subr.bf16.mxu0 0
    %7444 = vmatpush1.bf16.msra.mxu0 %v7175
    %7445 = vmatprep.subr.bf16.mxu0 0
    %7446 = vmatpush1.bf16.msra.mxu0 %v7176
    %7447 = vmatprep.subr.bf16.mxu0 0
    %7448 = vmatpush1.bf16.msra.mxu0 %v7177
    %7449 = vmatprep.subr.bf16.mxu0 0
    %7450 = vmatpush1.bf16.msra.mxu0 %v7178
    %7451 = vmatprep.mubr.bf16.mxu0 %v6630
    %7452 = vmatmul.mubr.bf16.gmra.mrb[0].mxu0 %v6629
    %v7453 = vpop.f32.mrb[0].mxu0
    %v7454 = vadd.f32 %v6649, %v7453
    %v7455 = vpop.f32.mrb[0].mxu0
    %v7456 = vpop.f32.mrb[0].mxu0
    %v7457 = vadd.f32 %v6649, %v7456
    %v7458 = vpop.f32.mrb[0].mxu0
    %7459 = vdwg.mxu0
    %7460 = vmatprep.subr.bf16.mxu0 0
    %7461 = vmatpush1.bf16.msra.mxu0 %v7179
    %7462 = vmatprep.subr.bf16.mxu0 0
    %7463 = vmatpush1.bf16.msra.mxu0 %v7180
    %7464 = vmatprep.subr.bf16.mxu0 0
    %7465 = vmatpush1.bf16.msra.mxu0 %v7181
    %7466 = vmatprep.subr.bf16.mxu0 0
    %7467 = vmatpush1.bf16.msra.mxu0 %v7182
    %7468 = vmatprep.subr.bf16.mxu0 0
    %7469 = vmatpush1.bf16.msra.mxu0 %v7183
    %7470 = vmatprep.subr.bf16.mxu0 0
    %7471 = vmatpush1.bf16.msra.mxu0 %v7184
    %7472 = vmatprep.subr.bf16.mxu0 0
    %7473 = vmatpush1.bf16.msra.mxu0 %v7185
    %7474 = vmatprep.subr.bf16.mxu0 0
    %7475 = vmatpush1.bf16.msra.mxu0 %v7186
    %7476 = vmatprep.subr.bf16.mxu0 0
    %7477 = vmatpush1.bf16.msra.mxu0 %v7187
    %7478 = vmatprep.subr.bf16.mxu0 0
    %7479 = vmatpush1.bf16.msra.mxu0 %v7188
    %7480 = vmatprep.subr.bf16.mxu0 0
    %7481 = vmatpush1.bf16.msra.mxu0 %v7189
    %7482 = vmatprep.subr.bf16.mxu0 0
    %7483 = vmatpush1.bf16.msra.mxu0 %v7190
    %7484 = vmatprep.subr.bf16.mxu0 0
    %7485 = vmatpush1.bf16.msra.mxu0 %v7191
    %7486 = vmatprep.subr.bf16.mxu0 0
    %7487 = vmatpush1.bf16.msra.mxu0 %v7192
    %7488 = vmatprep.subr.bf16.mxu0 0
    %7489 = vmatpush1.bf16.msra.mxu0 %v7193
    %7490 = vmatprep.subr.bf16.mxu0 0
    %7491 = vmatpush1.bf16.msra.mxu0 %v7194
    %7492 = vmatprep.mubr.bf16.mxu0 %v6632
    %7493 = vmatmul.mubr.bf16.gmra.mrb[0].mxu0 %v6631
    %v7494 = vpop.f32.mrb[0].mxu0
    %v7495 = vadd.f32 %v7454, %v7494
    %v7496 = vpop.f32.mrb[0].mxu0
    %v7497 = vpop.f32.mrb[0].mxu0
    %v7498 = vadd.f32 %v7457, %v7497
    %v7499 = vpop.f32.mrb[0].mxu0
    %7500 = vdwg.mxu0
    %7501 = vmatprep.subr.bf16.mxu0 0
    %7502 = vmatpush1.bf16.msra.mxu0 %v7195
    %7503 = vmatprep.subr.bf16.mxu0 0
    %7504 = vmatpush1.bf16.msra.mxu0 %v7196
    %7505 = vmatprep.subr.bf16.mxu0 0
    %7506 = vmatpush1.bf16.msra.mxu0 %v7197
    %7507 = vmatprep.subr.bf16.mxu0 0
    %7508 = vmatpush1.bf16.msra.mxu0 %v7198
    %7509 = vmatprep.subr.bf16.mxu0 0
    %7510 = vmatpush1.bf16.msra.mxu0 %v7199
    %7511 = vmatprep.subr.bf16.mxu0 0
    %7512 = vmatpush1.bf16.msra.mxu0 %v7200
    %7513 = vmatprep.subr.bf16.mxu0 0
    %7514 = vmatpush1.bf16.msra.mxu0 %v7201
    %7515 = vmatprep.subr.bf16.mxu0 0
    %7516 = vmatpush1.bf16.msra.mxu0 %v7202
    %7517 = vmatprep.subr.bf16.mxu0 0
    %7518 = vmatpush1.bf16.msra.mxu0 %v7203
    %7519 = vmatprep.subr.bf16.mxu0 0
    %7520 = vmatpush1.bf16.msra.mxu0 %v7204
    %7521 = vmatprep.subr.bf16.mxu0 0
    %7522 = vmatpush1.bf16.msra.mxu0 %v7205
    %7523 = vmatprep.subr.bf16.mxu0 0
    %7524 = vmatpush1.bf16.msra.mxu0 %v7206
    %7525 = vmatprep.subr.bf16.mxu0 0
    %7526 = vmatpush1.bf16.msra.mxu0 %v7207
    %7527 = vmatprep.subr.bf16.mxu0 0
    %7528 = vmatpush1.bf16.msra.mxu0 %v7208
    %7529 = vmatprep.subr.bf16.mxu0 0
    %7530 = vmatpush1.bf16.msra.mxu0 %v7209
    %7531 = vmatprep.subr.bf16.mxu0 0
    %7532 = vmatpush1.bf16.msra.mxu0 %v7210
    %7533 = vmatprep.mubr.bf16.mxu0 %v6634
    %7534 = vmatmul.mubr.bf16.gmra.mrb[0].mxu0 %v6633
    %v7535 = vpop.f32.mrb[0].mxu0
    %v7536 = vadd.f32 %v7495, %v7535
    %v7537 = vpop.f32.mrb[0].mxu0
    %v7538 = vpop.f32.mrb[0].mxu0
    %v7539 = vadd.f32 %v7498, %v7538
    %v7540 = vpop.f32.mrb[0].mxu0
    %7541 = vdwg.mxu0
    %7542 = vmatprep.subr.bf16.mxu0 0
    %7543 = vmatpush1.bf16.msra.mxu0 %v7211
    %7544 = vmatprep.subr.bf16.mxu0 0
    %7545 = vmatpush1.bf16.msra.mxu0 %v7212
    %7546 = vmatprep.subr.bf16.mxu0 0
    %7547 = vmatpush1.bf16.msra.mxu0 %v7213
    %7548 = vmatprep.subr.bf16.mxu0 0
    %7549 = vmatpush1.bf16.msra.mxu0 %v7214
    %7550 = vmatprep.subr.bf16.mxu0 0
    %7551 = vmatpush1.bf16.msra.mxu0 %v7215
    %7552 = vmatprep.subr.bf16.mxu0 0
    %7553 = vmatpush1.bf16.msra.mxu0 %v7216
    %7554 = vmatprep.subr.bf16.mxu0 0
    %7555 = vmatpush1.bf16.msra.mxu0 %v7217
    %7556 = vmatprep.subr.bf16.mxu0 0
    %7557 = vmatpush1.bf16.msra.mxu0 %v7218
    %7558 = vmatprep.subr.bf16.mxu0 0
    %7559 = vmatpush1.bf16.msra.mxu0 %v7219
    %7560 = vmatprep.subr.bf16.mxu0 0
    %7561 = vmatpush1.bf16.msra.mxu0 %v7220
    %7562 = vmatprep.subr.bf16.mxu0 0
    %7563 = vmatpush1.bf16.msra.mxu0 %v7221
    %7564 = vmatprep.subr.bf16.mxu0 0
    %7565 = vmatpush1.bf16.msra.mxu0 %v7222
    %7566 = vmatprep.subr.bf16.mxu0 0
    %7567 = vmatpush1.bf16.msra.mxu0 %v7223
    %7568 = vmatprep.subr.bf16.mxu0 0
    %7569 = vmatpush1.bf16.msra.mxu0 %v7224
    %7570 = vmatprep.subr.bf16.mxu0 0
    %7571 = vmatpush1.bf16.msra.mxu0 %v7225
    %7572 = vmatprep.subr.bf16.mxu0 0
    %7573 = vmatpush1.bf16.msra.mxu0 %v7226
    %7574 = vmatprep.mubr.bf16.mxu0 %v6636
    %7575 = vmatmul.mubr.bf16.gmra.mrb[0].mxu0 %v6635
    %v7576 = vpop.f32.mrb[0].mxu0
    %v7577 = vadd.f32 %v7536, %v7576
    %v7578 = vpop.f32.mrb[0].mxu0
    %v7579 = vpop.f32.mrb[0].mxu0
    %v7580 = vadd.f32 %v7539, %v7579
    %v7581 = vpop.f32.mrb[0].mxu0
    %7582 = vdwg.mxu0
    %7583 = vmatprep.subr.bf16.mxu0 0
    %7584 = vmatpush1.bf16.msra.mxu0 %v7227
    %7585 = vmatprep.subr.bf16.mxu0 0
    %7586 = vmatpush1.bf16.msra.mxu0 %v7228
    %7587 = vmatprep.subr.bf16.mxu0 0
    %7588 = vmatpush1.bf16.msra.mxu0 %v7229
    %7589 = vmatprep.subr.bf16.mxu0 0
    %7590 = vmatpush1.bf16.msra.mxu0 %v7230
    %7591 = vmatprep.subr.bf16.mxu0 0
    %7592 = vmatpush1.bf16.msra.mxu0 %v7231
    %7593 = vmatprep.subr.bf16.mxu0 0
    %7594 = vmatpush1.bf16.msra.mxu0 %v7232
    %7595 = vmatprep.subr.bf16.mxu0 0
    %7596 = vmatpush1.bf16.msra.mxu0 %v7233
    %7597 = vmatprep.subr.bf16.mxu0 0
    %7598 = vmatpush1.bf16.msra.mxu0 %v7234
    %7599 = vmatprep.subr.bf16.mxu0 0
    %7600 = vmatpush1.bf16.msra.mxu0 %v7235
    %7601 = vmatprep.subr.bf16.mxu0 0
    %7602 = vmatpush1.bf16.msra.mxu0 %v7236
    %7603 = vmatprep.subr.bf16.mxu0 0
    %7604 = vmatpush1.bf16.msra.mxu0 %v7237
    %7605 = vmatprep.subr.bf16.mxu0 0
    %7606 = vmatpush1.bf16.msra.mxu0 %v7238
    %7607 = vmatprep.subr.bf16.mxu0 0
    %7608 = vmatpush1.bf16.msra.mxu0 %v7239
    %7609 = vmatprep.subr.bf16.mxu0 0
    %7610 = vmatpush1.bf16.msra.mxu0 %v7240
    %7611 = vmatprep.subr.bf16.mxu0 0
    %7612 = vmatpush1.bf16.msra.mxu0 %v7241
    %7613 = vmatprep.subr.bf16.mxu0 0
    %7614 = vmatpush1.bf16.msra.mxu0 %v7242
    %7615 = vmatprep.mubr.bf16.mxu0 %v6638
    %7616 = vmatmul.mubr.bf16.gmra.mrb[0].mxu0 %v6637
    %v7617 = vpop.f32.mrb[0].mxu0
    %v7618 = vadd.f32 %v7577, %v7617
    %v7619 = vpop.f32.mrb[0].mxu0
    %v7620 = vpop.f32.mrb[0].mxu0
    %v7621 = vadd.f32 %v7580, %v7620
    %v7622 = vpop.f32.mrb[0].mxu0
    %7623 = vdwg.mxu0
    %7624 = vmatprep.subr.bf16.mxu0 0
    %7625 = vmatpush1.bf16.msra.mxu0 %v7243
    %7626 = vmatprep.subr.bf16.mxu0 0
    %7627 = vmatpush1.bf16.msra.mxu0 %v7244
    %7628 = vmatprep.subr.bf16.mxu0 0
    %7629 = vmatpush1.bf16.msra.mxu0 %v7245
    %7630 = vmatprep.subr.bf16.mxu0 0
    %7631 = vmatpush1.bf16.msra.mxu0 %v7246
    %7632 = vmatprep.subr.bf16.mxu0 0
    %7633 = vmatpush1.bf16.msra.mxu0 %v7247
    %7634 = vmatprep.subr.bf16.mxu0 0
    %7635 = vmatpush1.bf16.msra.mxu0 %v7248
    %7636 = vmatprep.subr.bf16.mxu0 0
    %7637 = vmatpush1.bf16.msra.mxu0 %v7249
    %7638 = vmatprep.subr.bf16.mxu0 0
    %7639 = vmatpush1.bf16.msra.mxu0 %v7250
    %7640 = vmatprep.subr.bf16.mxu0 0
    %7641 = vmatpush1.bf16.msra.mxu0 %v7251
    %7642 = vmatprep.subr.bf16.mxu0 0
    %7643 = vmatpush1.bf16.msra.mxu0 %v7252
    %7644 = vmatprep.subr.bf16.mxu0 0
    %7645 = vmatpush1.bf16.msra.mxu0 %v7253
    %7646 = vmatprep.subr.bf16.mxu0 0
    %7647 = vmatpush1.bf16.msra.mxu0 %v7254
    %7648 = vmatprep.subr.bf16.mxu0 0
    %7649 = vmatpush1.bf16.msra.mxu0 %v7255
    %7650 = vmatprep.subr.bf16.mxu0 0
    %7651 = vmatpush1.bf16.msra.mxu0 %v7256
    %7652 = vmatprep.subr.bf16.mxu0 0
    %7653 = vmatpush1.bf16.msra.mxu0 %v7257
    %7654 = vmatprep.subr.bf16.mxu0 0
    %7655 = vmatpush1.bf16.msra.mxu0 %v7258
    %7656 = vmatprep.mubr.bf16.mxu0 %v6640
    %7657 = vmatmul.mubr.bf16.gmra.mrb[0].mxu0 %v6639
    %v7658 = vpop.f32.mrb[0].mxu0
    %v7659 = vadd.f32 %v7618, %v7658
    %v7660 = vpop.f32.mrb[0].mxu0
    %v7661 = vpop.f32.mrb[0].mxu0
    %v7662 = vadd.f32 %v7621, %v7661
    %v7663 = vpop.f32.mrb[0].mxu0
    %7664 = vdwg.mxu0
    %7665 = vmatprep.subr.bf16.mxu0 0
    %7666 = vmatpush1.bf16.msra.mxu0 %v7259
    %7667 = vmatprep.subr.bf16.mxu0 0
    %7668 = vmatpush1.bf16.msra.mxu0 %v7260
    %7669 = vmatprep.subr.bf16.mxu0 0
    %7670 = vmatpush1.bf16.msra.mxu0 %v7261
    %7671 = vmatprep.subr.bf16.mxu0 0
    %7672 = vmatpush1.bf16.msra.mxu0 %v7262
    %7673 = vmatprep.subr.bf16.mxu0 0
    %7674 = vmatpush1.bf16.msra.mxu0 %v7263
    %7675 = vmatprep.subr.bf16.mxu0 0
    %7676 = vmatpush1.bf16.msra.mxu0 %v7264
    %7677 = vmatprep.subr.bf16.mxu0 0
    %7678 = vmatpush1.bf16.msra.mxu0 %v7265
    %7679 = vmatprep.subr.bf16.mxu0 0
    %7680 = vmatpush1.bf16.msra.mxu0 %v7266
    %7681 = vmatprep.subr.bf16.mxu0 0
    %7682 = vmatpush1.bf16.msra.mxu0 %v7267
    %7683 = vmatprep.subr.bf16.mxu0 0
    %7684 = vmatpush1.bf16.msra.mxu0 %v7268
    %7685 = vmatprep.subr.bf16.mxu0 0
    %7686 = vmatpush1.bf16.msra.mxu0 %v7269
    %7687 = vmatprep.subr.bf16.mxu0 0
    %7688 = vmatpush1.bf16.msra.mxu0 %v7270
    %7689 = vmatprep.subr.bf16.mxu0 0
    %7690 = vmatpush1.bf16.msra.mxu0 %v7271
    %7691 = vmatprep.subr.bf16.mxu0 0
    %7692 = vmatpush1.bf16.msra.mxu0 %v7272
    %7693 = vmatprep.subr.bf16.mxu0 0
    %7694 = vmatpush1.bf16.msra.mxu0 %v7273
    %7695 = vmatprep.subr.bf16.mxu0 0
    %7696 = vmatpush1.bf16.msra.mxu0 %v7274
    %7697 = vmatprep.mubr.bf16.mxu0 %v6642
    %7698 = vmatmul.mubr.bf16.gmra.mrb[0].mxu0 %v6641
    %v7699 = vpop.f32.mrb[0].mxu0
    %v7700 = vadd.f32 %v7659, %v7699
    %v7701 = vpop.f32.mrb[0].mxu0
    %v7702 = vpop.f32.mrb[0].mxu0
    %v7703 = vadd.f32 %v7662, %v7702
    %v7704 = vpop.f32.mrb[0].mxu0
    %7705 = vdwg.mxu0
    %7706 = vmatprep.subr.bf16.mxu0 0
    %7707 = vmatpush1.bf16.msra.mxu0 %v7275
    %7708 = vmatprep.subr.bf16.mxu0 0
    %7709 = vmatpush1.bf16.msra.mxu0 %v7276
    %7710 = vmatprep.subr.bf16.mxu0 0
    %7711 = vmatpush1.bf16.msra.mxu0 %v7277
    %7712 = vmatprep.subr.bf16.mxu0 0
    %7713 = vmatpush1.bf16.msra.mxu0 %v7278
    %7714 = vmatprep.subr.bf16.mxu0 0
    %7715 = vmatpush1.bf16.msra.mxu0 %v7279
    %7716 = vmatprep.subr.bf16.mxu0 0
    %7717 = vmatpush1.bf16.msra.mxu0 %v7280
    %7718 = vmatprep.subr.bf16.mxu0 0
    %7719 = vmatpush1.bf16.msra.mxu0 %v7281
    %7720 = vmatprep.subr.bf16.mxu0 0
    %7721 = vmatpush1.bf16.msra.mxu0 %v7282
    %7722 = vmatprep.subr.bf16.mxu0 0
    %7723 = vmatpush1.bf16.msra.mxu0 %v7283
    %7724 = vmatprep.subr.bf16.mxu0 0
    %7725 = vmatpush1.bf16.msra.mxu0 %v7284
    %7726 = vmatprep.subr.bf16.mxu0 0
    %7727 = vmatpush1.bf16.msra.mxu0 %v7285
    %7728 = vmatprep.subr.bf16.mxu0 0
    %7729 = vmatpush1.bf16.msra.mxu0 %v7286
    %7730 = vmatprep.subr.bf16.mxu0 0
    %7731 = vmatpush1.bf16.msra.mxu0 %v7287
    %7732 = vmatprep.subr.bf16.mxu0 0
    %7733 = vmatpush1.bf16.msra.mxu0 %v7288
    %7734 = vmatprep.subr.bf16.mxu0 0
    %7735 = vmatpush1.bf16.msra.mxu0 %v7289
    %7736 = vmatprep.subr.bf16.mxu0 0
    %7737 = vmatpush1.bf16.msra.mxu0 %v7290
    %7738 = vmatprep.mubr.bf16.mxu0 %v6644
    %7739 = vmatmul.mubr.bf16.gmra.mrb[0].mxu0 %v6643
    %v7740 = vpop.f32.mrb[0].mxu0
    %v7741 = vadd.f32 %v7700, %v7740
    %v7742 = vpop.f32.mrb[0].mxu0
    %v7743 = vpop.f32.mrb[0].mxu0
    %v7744 = vadd.f32 %v7703, %v7743
    %v7745 = vpop.f32.mrb[0].mxu0
    %7746 = vdwg.mxu0
    %v7747 = vadd.f32 %v5650, %v7741
    %v7748 = vadd.f32 %v5651, %v7744
    %v7749 = vld [vmem:[%s21] sm:$0x1]
    %v7750 = vld [vmem:[%s22] sm:$0x1]
    %v7751 = vsel %vm145, %v7747, 0.0
    %7752 = vadd.xlane.f32.xlu0 %v7751
    %v7753 = vpop.xlane.xlu0 %7752
    %v7754 = vsel %vm145, %v7748, 0.0
    %7755 = vadd.xlane.f32.xlu0 %v7754
    %v7756 = vpop.xlane.xlu0 %7755
    %v7757 = vmul.f32 %v7753, %v152
    %v7758 = vmul.f32 %v7756, %v152
    %v7759 = vsub.f32 %v7747, %v7757
    %v7760 = vsub.f32 %v7748, %v7758
    %v7761 = vmul.f32 %v7759, %v7759
    %v7762 = vmul.f32 %v7760, %v7760
    %v7763 = vsel %vm145, %v7761, 0.0
    %7764 = vadd.xlane.f32.xlu0 %v7763
    %v7765 = vpop.xlane.xlu0 %7764
    %v7766 = vsel %vm145, %v7762, 0.0
    %7767 = vadd.xlane.f32.xlu0 %v7766
    %v7768 = vpop.xlane.xlu0 %7767
    %v7769 = vmul.f32 %v7765, %v165
    %v7770 = vmul.f32 %v7768, %v165
    %v7771 = vrsqrt.pop %v7769
    %v7772 = vmul.f32 %v7769, %v7771
    %vm7773 = vcmp.eq.f32.partialorder %v7769, inf
    %v7774 = vsel %vm7773, %v7769, %v7772
    %vm7775 = vcmp.eq.f32.partialorder %v7769, 0.0
    %v7776 = vand.u32 %v7769, 2147483648
    %v7777 = vsel %vm7775, %v7776, %v7774
    %v7778 = vrsqrt.pop %v7770
    %v7779 = vmul.f32 %v7770, %v7778
    %vm7780 = vcmp.eq.f32.partialorder %v7770, inf
    %v7781 = vsel %vm7780, %v7770, %v7779
    %vm7782 = vcmp.eq.f32.partialorder %v7770, 0.0
    %v7783 = vand.u32 %v7770, 2147483648
    %v7784 = vsel %vm7782, %v7783, %v7781
    %v7785 = vadd.f32 %v7777, 1e-06
    %v7786 = vadd.f32 %v7784, 1e-06
    %v7787 = vrcp.pop %v7785
    %v7788 = vrcp.pop %v7786
    %v7790 = vlaneseq
    %v7791 = vshrl.u32 %v7790, 7
    %v7792 = vsub.s32 0, %v7791
    %v7793 = vrot.slane %v7749, %v7792
    %v7795 = vmul.f32 %v7793, %v7759
    %v7796 = vmul.f32 %v7793, %v7760
    %v7797 = vmul.f32 %v7795, %v7787
    %v7798 = vmul.f32 %v7796, %v7788
    %v7800 = vlaneseq
    %v7801 = vshrl.u32 %v7800, 7
    %v7802 = vsub.s32 0, %v7801
    %v7803 = vrot.slane %v7750, %v7802
    %v7805 = vadd.f32 %v7797, %v7803
    %v7806 = vadd.f32 %v7798, %v7803
    %7807 = vst.msk [vmem:[#allocation3] sm:$0xff] %vm145, %v7805
    %7808 = vst.msk [vmem:[#allocation3 + $0x8] sm:$0xff] %vm145, %v7806
    // Predicated region
    $region94: #{encoder_forward.1} parent=1 // pred_check
      _
    $region95: #{encoder_forward.1} parent=1 // pred_check_branch
      %7810 = sbr.rel (0) target = $region97
    $region96: #{encoder_forward.1} parent=1 // pred_region
      %s7812 = ssub.s32 256, 256
      %7813 = vsyncadd [#allocation4], %s7812
      %s7814 = sshll.u32 [#allocation3], 4
      %s7815 = int_to_ptr.vmem [resolvable:$true] %s7814
      %7820 = dma.vmem_to_hbm [thread:$0]  %s7815, 256, %s23, [#allocation4], 128, 128, 8
    $region97: #{encoder_forward.1} parent=1 // pred_fallthru
      _
    // Predicated region
    $region98: #{encoder_forward.1} parent=1 // pred_check
      _
    $region99: #{encoder_forward.1} parent=1 // pred_check_branch
      %7822 = sbr.rel (0) target = $region101
    $region100: #{encoder_forward.1} parent=1 // pred_region
      %7823 = dma.done [#allocation4], 256
    $region101: #{encoder_forward.1} parent=1 // pred_fallthru
      _
    %7824 = vsyncpa [#allocation4], 1

</llo_original>
